<compile_context>
chip_gen: v7x
topology: tpu7x:2x2x1
jax: 0.10.0
libtpu: 0.0.40
codegen_flags: <defaults>
</compile_context>

<pallas_src>
import jax
import jax.numpy as jnp
from jax.experimental import pallas as pl
from jax.experimental.pallas import tpu as pltpu


# ---------------------------------------------------------------------------
# Fused kernel: implicit-im2col conv (16 shifted matmuls) + bias + ReLU + 3x3/s2 maxpool
# ---------------------------------------------------------------------------
def _make_stem_kernel(Ho, Wo, Ho2, Wo2, Cin4, Cout):
    def kernel(xs_ref, w_ref, b_ref, o_ref):
        # xs_ref: (1, Hp2, Wp2, Cin4)   space-to-depth padded input, bf16
        # w_ref : (16, Cin4, Cout)      scale-folded weights, one slab per (qy,qx) shift, bf16
        # b_ref : (1, Cout)             folded BN bias, f32
        # o_ref : (1, Ho2, Wo2*Cout)    pooled output, lane-dense last dim, f32
        xs = xs_ref[0]                                      # (Hp2, Wp2, Cin4)

        # --- conv1 (7x7/s2) as a stride-1 4x4 conv on the space-to-depth view ---
        acc = jnp.zeros((Ho * Wo, Cout), jnp.float32)
        for qy in range(4):
            for qx in range(4):
                blk = xs[qy:qy + Ho, qx:qx + Wo, :]         # (Ho, Wo, Cin4), static slice
                acc = acc + jnp.dot(blk.reshape(Ho * Wo, Cin4),
                                    w_ref[qy * 4 + qx],
                                    preferred_element_type=jnp.float32)

        # --- folded-BN bias + ReLU ---
        y = jnp.maximum(acc + b_ref[...], 0.0)              # (Ho*Wo, Cout), f32

        # --- maxpool 3x3 / stride 2 / pad 1 (zero pad is exact post-ReLU) ---
        # split conv rows/cols into even/odd phases: y5[r, pr, s, pc, c] = conv[2r+pr, 2s+pc, c]
        y5 = y.reshape(Ho2, 2, Wo2, 2, Cout)
        a00 = y5[:, 0, :, 0]                                # conv[2r  , 2s  ]
        a01 = y5[:, 0, :, 1]                                # conv[2r  , 2s+1]
        a10 = y5[:, 1, :, 0]                                # conv[2r+1, 2s  ]
        a11 = y5[:, 1, :, 1]                                # conv[2r+1, 2s+1]

        zero_row = jnp.zeros((1, Wo2, Cout), jnp.float32)
        zero_col = jnp.zeros((Ho2, 1, Cout), jnp.float32)
        shift_r = lambda t: jnp.concatenate([zero_row, t[:-1]], axis=0)     # t[r-1, s]
        shift_c = lambda t: jnp.concatenate([zero_col, t[:, :-1]], axis=1)  # t[r, s-1]

        m_cur = jnp.maximum(jnp.maximum(a00, a01), jnp.maximum(a10, a11))
        m_left = shift_c(jnp.maximum(a01, a11))             # cols 2s-1, rows 2r / 2r+1
        m_up = shift_r(jnp.maximum(a10, a11))               # row 2r-1, cols 2s / 2s+1
        m_ul = shift_r(shift_c(a11))                        # conv[2r-1, 2s-1]
        pooled = jnp.maximum(jnp.maximum(m_cur, m_left), jnp.maximum(m_up, m_ul))

        # lane-dense store: last dim Wo2*Cout (>=128 lanes) avoids masked partial stores
        o_ref[0] = pooled.reshape(Ho2, Wo2 * Cout).astype(o_ref.dtype)

    return kernel


# ---------------------------------------------------------------------------
# Parameter construction (deterministic, synthetic — NOT a checkpoint load)
# ---------------------------------------------------------------------------
def make_params(key):
    k1, k2, k3, k4, k5 = jax.random.split(key, 5)
    conv_w = 0.05 * jax.random.normal(k1, (64, 3, 7, 7), jnp.float32)     # OIHW like PyTorch
    bn_gamma = 1.0 + 0.1 * jax.random.uniform(k2, (64,), jnp.float32)
    bn_beta = 0.1 * jax.random.normal(k3, (64,), jnp.float32)
    bn_mean = 0.1 * jax.random.normal(k4, (64,), jnp.float32)
    bn_var = 1.0 + 0.5 * jax.random.uniform(k5, (64,), jnp.float32)
    return dict(conv_w=conv_w, gamma=bn_gamma, beta=bn_beta,
                mean=bn_mean, var=bn_var, eps=1e-5)


# ---------------------------------------------------------------------------
# Forward wrapper (layout plumbing only; all compute is inside the fused kernel)
# ---------------------------------------------------------------------------
def stem_forward(x_nchw, params):
    N, Cin, H, W = x_nchw.shape
    Cout = params["conv_w"].shape[0]

    Ho = (H + 2 * 3 - 7) // 2 + 1                       # conv1 7x7/s2/p3
    Wo = (W + 2 * 3 - 7) // 2 + 1
    Ho2 = (Ho + 2 * 1 - 3) // 2 + 1                     # maxpool 3x3/s2/p1
    Wo2 = (Wo + 2 * 1 - 3) // 2 + 1
    assert Ho % 2 == 0 and Wo % 2 == 0, "kernel assumes even conv output (even H, W input)"

    # NCHW -> NHWC, pad by 3, round padded dims up to even, space-to-depth 2x2 -> channels.
    x = jnp.transpose(x_nchw, (0, 2, 3, 1)).astype(jnp.float32)
    Hp = H + 6 + ((H + 6) % 2)
    Wp = W + 6 + ((W + 6) % 2)
    x_pad = jnp.pad(x, ((0, 0), (3, Hp - H - 3), (3, Wp - W - 3), (0, 0)))
    Hp2, Wp2 = Hp // 2, Wp // 2
    Cin4 = 4 * Cin
    xs = (x_pad.reshape(N, Hp2, 2, Wp2, 2, Cin)
               .transpose(0, 1, 3, 2, 4, 5)
               .reshape(N, Hp2, Wp2, Cin4)).astype(jnp.bfloat16)

    # Weights: OIHW -> HWIO, fold BN scale, regroup into the 16 (qy,qx) shift slabs (bf16).
    scale = params["gamma"] / jnp.sqrt(params["var"] + params["eps"])
    bias = (params["beta"] - params["mean"] * scale).reshape(1, Cout).astype(jnp.float32)
    w_hwio = jnp.transpose(params["conv_w"], (2, 3, 1, 0)) * scale        # (7,7,Cin,Cout)
    w_pad = jnp.pad(w_hwio, ((0, 1), (0, 1), (0, 0), (0, 0)))             # zero taps at ky/kx = 7
    wq = (w_pad.reshape(4, 2, 4, 2, Cin, Cout)
               .transpose(0, 2, 1, 3, 4, 5)
               .reshape(16, Cin4, Cout)).astype(jnp.bfloat16)

    kernel = _make_stem_kernel(Ho, Wo, Ho2, Wo2, Cin4, Cout)
    pooled = pl.pallas_call(
        kernel,
        out_shape=jax.ShapeDtypeStruct((N, Ho2, Wo2 * Cout), jnp.float32),
        grid=(N,),
        in_specs=[
            pl.BlockSpec((1, Hp2, Wp2, Cin4), lambda n: (n, 0, 0, 0)),
            pl.BlockSpec((16, Cin4, Cout), lambda n: (0, 0, 0)),
            pl.BlockSpec((1, Cout), lambda n: (0, 0)),
        ],
        out_specs=pl.BlockSpec((1, Ho2, Wo2 * Cout), lambda n: (n, 0, 0)),
        compiler_params=pltpu.CompilerParams(dimension_semantics=("parallel",)),
    )(xs, wq, bias)

    # free reshape back to NHWC, then NCHW like the PyTorch module
    return jnp.transpose(pooled.reshape(N, Ho2, Wo2, Cout), (0, 3, 1, 2))


# ---------------------------------------------------------------------------
# Pure-JAX reference (f32) for a correctness check
# ---------------------------------------------------------------------------
def stem_reference(x_nchw, params):
    x = jnp.transpose(x_nchw, (0, 2, 3, 1)).astype(jnp.float32)
    w = jnp.transpose(params["conv_w"], (2, 3, 1, 0))
    y = jax.lax.conv_general_dilated(
        x, w, window_strides=(2, 2), padding=((3, 3), (3, 3)),
        dimension_numbers=("NHWC", "HWIO", "NHWC"))
    scale = params["gamma"] / jnp.sqrt(params["var"] + params["eps"])
    bias = params["beta"] - params["mean"] * scale
    y = jnp.maximum(y * scale + bias, 0.0)
    y = jax.lax.reduce_window(
        y, -jnp.inf, jax.lax.max,
        window_dimensions=(1, 3, 3, 1), window_strides=(1, 2, 2, 1),
        padding=((0, 0), (1, 1), (1, 1), (0, 0)))
    return jnp.transpose(y, (0, 3, 1, 2))


if __name__ == "__main__":
    key = jax.random.PRNGKey(0)
    k_param, k_x = jax.random.split(key)

    params = make_params(k_param)
    # share_net=1 path: stem expects a 3-channel NCHW image batch
    x = jax.random.normal(k_x, (2, 3, 32, 32), jnp.float32)

    out = jax.block_until_ready(stem_forward(x, params))
    assert out.shape == (2, 64, 8, 8), out.shape

    ref = jax.block_until_ready(stem_reference(x, params))
    max_err = float(jnp.max(jnp.abs(out - ref)))
    assert max_err < 1e-1, f"max abs error vs f32 reference: {max_err}"

    print("KERNEL_OK")
</pallas_src>

<mosaic_0001>
module attributes {stable_mosaic.version = 11 : i64} {
  func.func @kernel(%arg0: i32, %arg1: memref<1x19x19x12xbf16, #tpu.memory_space<vmem>>, %arg2: memref<16x12x64xbf16, #tpu.memory_space<vmem>>, %arg3: memref<1x64xf32, #tpu.memory_space<vmem>>, %arg4: memref<1x8x512xf32, #tpu.memory_space<vmem>>) attributes {dimension_semantics = [#tpu.dimension_semantics<parallel>], iteration_bounds = array<i64: 2>, scalar_prefetch = 0 : i64, scratch_operands = 0 : i64, tpu.core_type = #tpu.core_type<tc>, window_params = [{transform_indices = @transform_0, window_bounds = array<i64: 1, 19, 19, 12>}, {pipeline_mode = #tpu.pipeline_mode<synchronous>, transform_indices = @transform_1, window_bounds = array<i64: 16, 12, 64>}, {pipeline_mode = #tpu.pipeline_mode<synchronous>, transform_indices = @transform_2, window_bounds = array<i64: 1, 64>}, {transform_indices = @transform_3, window_bounds = array<i64: 1, 8, 512>}]} {
    %c0 = arith.constant 0 : index
    %c0_0 = arith.constant 0 : index
    %c0_1 = arith.constant 0 : index
    %c0_2 = arith.constant 0 : index
    %0 = vector.load %arg1[%c0, %c0_0, %c0_1, %c0_2] : memref<1x19x19x12xbf16, #tpu.memory_space<vmem>>, vector<1x19x19x12xbf16>
    %1 = vector.shape_cast %0 : vector<1x19x19x12xbf16> to vector<19x19x12xbf16>
    %cst = arith.constant 0.000000e+00 : f32
    %2 = vector.broadcast %cst : f32 to vector<256x64xf32>
    %3 = vector.extract_strided_slice %1 {offsets = [0, 0, 0], sizes = [16, 16, 12], strides = [1, 1, 1]} : vector<19x19x12xbf16> to vector<16x16x12xbf16>
    %4 = vector.shape_cast %3 : vector<16x16x12xbf16> to vector<256x12xbf16>
    %c0_3 = arith.constant 0 : index
    %c0_4 = arith.constant 0 : index
    %c0_5 = arith.constant 0 : index
    %5 = vector.load %arg2[%c0_3, %c0_4, %c0_5] : memref<16x12x64xbf16, #tpu.memory_space<vmem>>, vector<1x12x64xbf16>
    %6 = vector.shape_cast %5 : vector<1x12x64xbf16> to vector<12x64xbf16>
    %cst_6 = arith.constant dense<0.000000e+00> : vector<256x64xf32>
    %7 = tpu.matmul %4, %6, %cst_6 {dimension_numbers = #tpu.dot_dimension_numbers<[1], [0], [0], [1], [0, 0, 1, 1], [], []>} : vector<256x12xbf16>, vector<12x64xbf16>, vector<256x64xf32> -> vector<256x64xf32>
    %8 = arith.addf %2, %7 : vector<256x64xf32>
    %9 = vector.extract_strided_slice %1 {offsets = [0, 1, 0], sizes = [16, 16, 12], strides = [1, 1, 1]} : vector<19x19x12xbf16> to vector<16x16x12xbf16>
    %10 = vector.shape_cast %9 : vector<16x16x12xbf16> to vector<256x12xbf16>
    %c1 = arith.constant 1 : index
    %c0_7 = arith.constant 0 : index
    %c0_8 = arith.constant 0 : index
    %11 = vector.load %arg2[%c1, %c0_7, %c0_8] : memref<16x12x64xbf16, #tpu.memory_space<vmem>>, vector<1x12x64xbf16>
    %12 = vector.shape_cast %11 : vector<1x12x64xbf16> to vector<12x64xbf16>
    %cst_9 = arith.constant dense<0.000000e+00> : vector<256x64xf32>
    %13 = tpu.matmul %10, %12, %cst_9 {dimension_numbers = #tpu.dot_dimension_numbers<[1], [0], [0], [1], [0, 0, 1, 1], [], []>} : vector<256x12xbf16>, vector<12x64xbf16>, vector<256x64xf32> -> vector<256x64xf32>
    %14 = arith.addf %8, %13 : vector<256x64xf32>
    %15 = vector.extract_strided_slice %1 {offsets = [0, 2, 0], sizes = [16, 16, 12], strides = [1, 1, 1]} : vector<19x19x12xbf16> to vector<16x16x12xbf16>
    %16 = vector.shape_cast %15 : vector<16x16x12xbf16> to vector<256x12xbf16>
    %c2 = arith.constant 2 : index
    %c0_10 = arith.constant 0 : index
    %c0_11 = arith.constant 0 : index
    %17 = vector.load %arg2[%c2, %c0_10, %c0_11] : memref<16x12x64xbf16, #tpu.memory_space<vmem>>, vector<1x12x64xbf16>
    %18 = vector.shape_cast %17 : vector<1x12x64xbf16> to vector<12x64xbf16>
    %cst_12 = arith.constant dense<0.000000e+00> : vector<256x64xf32>
    %19 = tpu.matmul %16, %18, %cst_12 {dimension_numbers = #tpu.dot_dimension_numbers<[1], [0], [0], [1], [0, 0, 1, 1], [], []>} : vector<256x12xbf16>, vector<12x64xbf16>, vector<256x64xf32> -> vector<256x64xf32>
    %20 = arith.addf %14, %19 : vector<256x64xf32>
    %21 = vector.extract_strided_slice %1 {offsets = [0, 3, 0], sizes = [16, 16, 12], strides = [1, 1, 1]} : vector<19x19x12xbf16> to vector<16x16x12xbf16>
    %22 = vector.shape_cast %21 : vector<16x16x12xbf16> to vector<256x12xbf16>
    %c3 = arith.constant 3 : index
    %c0_13 = arith.constant 0 : index
    %c0_14 = arith.constant 0 : index
    %23 = vector.load %arg2[%c3, %c0_13, %c0_14] : memref<16x12x64xbf16, #tpu.memory_space<vmem>>, vector<1x12x64xbf16>
    %24 = vector.shape_cast %23 : vector<1x12x64xbf16> to vector<12x64xbf16>
    %cst_15 = arith.constant dense<0.000000e+00> : vector<256x64xf32>
    %25 = tpu.matmul %22, %24, %cst_15 {dimension_numbers = #tpu.dot_dimension_numbers<[1], [0], [0], [1], [0, 0, 1, 1], [], []>} : vector<256x12xbf16>, vector<12x64xbf16>, vector<256x64xf32> -> vector<256x64xf32>
    %26 = arith.addf %20, %25 : vector<256x64xf32>
    %27 = vector.extract_strided_slice %1 {offsets = [1, 0, 0], sizes = [16, 16, 12], strides = [1, 1, 1]} : vector<19x19x12xbf16> to vector<16x16x12xbf16>
    %28 = vector.shape_cast %27 : vector<16x16x12xbf16> to vector<256x12xbf16>
    %c4 = arith.constant 4 : index
    %c0_16 = arith.constant 0 : index
    %c0_17 = arith.constant 0 : index
    %29 = vector.load %arg2[%c4, %c0_16, %c0_17] : memref<16x12x64xbf16, #tpu.memory_space<vmem>>, vector<1x12x64xbf16>
    %30 = vector.shape_cast %29 : vector<1x12x64xbf16> to vector<12x64xbf16>
    %cst_18 = arith.constant dense<0.000000e+00> : vector<256x64xf32>
    %31 = tpu.matmul %28, %30, %cst_18 {dimension_numbers = #tpu.dot_dimension_numbers<[1], [0], [0], [1], [0, 0, 1, 1], [], []>} : vector<256x12xbf16>, vector<12x64xbf16>, vector<256x64xf32> -> vector<256x64xf32>
    %32 = arith.addf %26, %31 : vector<256x64xf32>
    %33 = vector.extract_strided_slice %1 {offsets = [1, 1, 0], sizes = [16, 16, 12], strides = [1, 1, 1]} : vector<19x19x12xbf16> to vector<16x16x12xbf16>
    %34 = vector.shape_cast %33 : vector<16x16x12xbf16> to vector<256x12xbf16>
    %c5 = arith.constant 5 : index
    %c0_19 = arith.constant 0 : index
    %c0_20 = arith.constant 0 : index
    %35 = vector.load %arg2[%c5, %c0_19, %c0_20] : memref<16x12x64xbf16, #tpu.memory_space<vmem>>, vector<1x12x64xbf16>
    %36 = vector.shape_cast %35 : vector<1x12x64xbf16> to vector<12x64xbf16>
    %cst_21 = arith.constant dense<0.000000e+00> : vector<256x64xf32>
    %37 = tpu.matmul %34, %36, %cst_21 {dimension_numbers = #tpu.dot_dimension_numbers<[1], [0], [0], [1], [0, 0, 1, 1], [], []>} : vector<256x12xbf16>, vector<12x64xbf16>, vector<256x64xf32> -> vector<256x64xf32>
    %38 = arith.addf %32, %37 : vector<256x64xf32>
    %39 = vector.extract_strided_slice %1 {offsets = [1, 2, 0], sizes = [16, 16, 12], strides = [1, 1, 1]} : vector<19x19x12xbf16> to vector<16x16x12xbf16>
    %40 = vector.shape_cast %39 : vector<16x16x12xbf16> to vector<256x12xbf16>
    %c6 = arith.constant 6 : index
    %c0_22 = arith.constant 0 : index
    %c0_23 = arith.constant 0 : index
    %41 = vector.load %arg2[%c6, %c0_22, %c0_23] : memref<16x12x64xbf16, #tpu.memory_space<vmem>>, vector<1x12x64xbf16>
    %42 = vector.shape_cast %41 : vector<1x12x64xbf16> to vector<12x64xbf16>
    %cst_24 = arith.constant dense<0.000000e+00> : vector<256x64xf32>
    %43 = tpu.matmul %40, %42, %cst_24 {dimension_numbers = #tpu.dot_dimension_numbers<[1], [0], [0], [1], [0, 0, 1, 1], [], []>} : vector<256x12xbf16>, vector<12x64xbf16>, vector<256x64xf32> -> vector<256x64xf32>
    %44 = arith.addf %38, %43 : vector<256x64xf32>
    %45 = vector.extract_strided_slice %1 {offsets = [1, 3, 0], sizes = [16, 16, 12], strides = [1, 1, 1]} : vector<19x19x12xbf16> to vector<16x16x12xbf16>
    %46 = vector.shape_cast %45 : vector<16x16x12xbf16> to vector<256x12xbf16>
    %c7 = arith.constant 7 : index
    %c0_25 = arith.constant 0 : index
    %c0_26 = arith.constant 0 : index
    %47 = vector.load %arg2[%c7, %c0_25, %c0_26] : memref<16x12x64xbf16, #tpu.memory_space<vmem>>, vector<1x12x64xbf16>
    %48 = vector.shape_cast %47 : vector<1x12x64xbf16> to vector<12x64xbf16>
    %cst_27 = arith.constant dense<0.000000e+00> : vector<256x64xf32>
    %49 = tpu.matmul %46, %48, %cst_27 {dimension_numbers = #tpu.dot_dimension_numbers<[1], [0], [0], [1], [0, 0, 1, 1], [], []>} : vector<256x12xbf16>, vector<12x64xbf16>, vector<256x64xf32> -> vector<256x64xf32>
    %50 = arith.addf %44, %49 : vector<256x64xf32>
    %51 = vector.extract_strided_slice %1 {offsets = [2, 0, 0], sizes = [16, 16, 12], strides = [1, 1, 1]} : vector<19x19x12xbf16> to vector<16x16x12xbf16>
    %52 = vector.shape_cast %51 : vector<16x16x12xbf16> to vector<256x12xbf16>
    %c8 = arith.constant 8 : index
    %c0_28 = arith.constant 0 : index
    %c0_29 = arith.constant 0 : index
    %53 = vector.load %arg2[%c8, %c0_28, %c0_29] : memref<16x12x64xbf16, #tpu.memory_space<vmem>>, vector<1x12x64xbf16>
    %54 = vector.shape_cast %53 : vector<1x12x64xbf16> to vector<12x64xbf16>
    %cst_30 = arith.constant dense<0.000000e+00> : vector<256x64xf32>
    %55 = tpu.matmul %52, %54, %cst_30 {dimension_numbers = #tpu.dot_dimension_numbers<[1], [0], [0], [1], [0, 0, 1, 1], [], []>} : vector<256x12xbf16>, vector<12x64xbf16>, vector<256x64xf32> -> vector<256x64xf32>
    %56 = arith.addf %50, %55 : vector<256x64xf32>
    %57 = vector.extract_strided_slice %1 {offsets = [2, 1, 0], sizes = [16, 16, 12], strides = [1, 1, 1]} : vector<19x19x12xbf16> to vector<16x16x12xbf16>
    %58 = vector.shape_cast %57 : vector<16x16x12xbf16> to vector<256x12xbf16>
    %c9 = arith.constant 9 : index
    %c0_31 = arith.constant 0 : index
    %c0_32 = arith.constant 0 : index
    %59 = vector.load %arg2[%c9, %c0_31, %c0_32] : memref<16x12x64xbf16, #tpu.memory_space<vmem>>, vector<1x12x64xbf16>
    %60 = vector.shape_cast %59 : vector<1x12x64xbf16> to vector<12x64xbf16>
    %cst_33 = arith.constant dense<0.000000e+00> : vector<256x64xf32>
    %61 = tpu.matmul %58, %60, %cst_33 {dimension_numbers = #tpu.dot_dimension_numbers<[1], [0], [0], [1], [0, 0, 1, 1], [], []>} : vector<256x12xbf16>, vector<12x64xbf16>, vector<256x64xf32> -> vector<256x64xf32>
    %62 = arith.addf %56, %61 : vector<256x64xf32>
    %63 = vector.extract_strided_slice %1 {offsets = [2, 2, 0], sizes = [16, 16, 12], strides = [1, 1, 1]} : vector<19x19x12xbf16> to vector<16x16x12xbf16>
    %64 = vector.shape_cast %63 : vector<16x16x12xbf16> to vector<256x12xbf16>
    %c10 = arith.constant 10 : index
    %c0_34 = arith.constant 0 : index
    %c0_35 = arith.constant 0 : index
    %65 = vector.load %arg2[%c10, %c0_34, %c0_35] : memref<16x12x64xbf16, #tpu.memory_space<vmem>>, vector<1x12x64xbf16>
    %66 = vector.shape_cast %65 : vector<1x12x64xbf16> to vector<12x64xbf16>
    %cst_36 = arith.constant dense<0.000000e+00> : vector<256x64xf32>
    %67 = tpu.matmul %64, %66, %cst_36 {dimension_numbers = #tpu.dot_dimension_numbers<[1], [0], [0], [1], [0, 0, 1, 1], [], []>} : vector<256x12xbf16>, vector<12x64xbf16>, vector<256x64xf32> -> vector<256x64xf32>
    %68 = arith.addf %62, %67 : vector<256x64xf32>
    %69 = vector.extract_strided_slice %1 {offsets = [2, 3, 0], sizes = [16, 16, 12], strides = [1, 1, 1]} : vector<19x19x12xbf16> to vector<16x16x12xbf16>
    %70 = vector.shape_cast %69 : vector<16x16x12xbf16> to vector<256x12xbf16>
    %c11 = arith.constant 11 : index
    %c0_37 = arith.constant 0 : index
    %c0_38 = arith.constant 0 : index
    %71 = vector.load %arg2[%c11, %c0_37, %c0_38] : memref<16x12x64xbf16, #tpu.memory_space<vmem>>, vector<1x12x64xbf16>
    %72 = vector.shape_cast %71 : vector<1x12x64xbf16> to vector<12x64xbf16>
    %cst_39 = arith.constant dense<0.000000e+00> : vector<256x64xf32>
    %73 = tpu.matmul %70, %72, %cst_39 {dimension_numbers = #tpu.dot_dimension_numbers<[1], [0], [0], [1], [0, 0, 1, 1], [], []>} : vector<256x12xbf16>, vector<12x64xbf16>, vector<256x64xf32> -> vector<256x64xf32>
    %74 = arith.addf %68, %73 : vector<256x64xf32>
    %75 = vector.extract_strided_slice %1 {offsets = [3, 0, 0], sizes = [16, 16, 12], strides = [1, 1, 1]} : vector<19x19x12xbf16> to vector<16x16x12xbf16>
    %76 = vector.shape_cast %75 : vector<16x16x12xbf16> to vector<256x12xbf16>
    %c12 = arith.constant 12 : index
    %c0_40 = arith.constant 0 : index
    %c0_41 = arith.constant 0 : index
    %77 = vector.load %arg2[%c12, %c0_40, %c0_41] : memref<16x12x64xbf16, #tpu.memory_space<vmem>>, vector<1x12x64xbf16>
    %78 = vector.shape_cast %77 : vector<1x12x64xbf16> to vector<12x64xbf16>
    %cst_42 = arith.constant dense<0.000000e+00> : vector<256x64xf32>
    %79 = tpu.matmul %76, %78, %cst_42 {dimension_numbers = #tpu.dot_dimension_numbers<[1], [0], [0], [1], [0, 0, 1, 1], [], []>} : vector<256x12xbf16>, vector<12x64xbf16>, vector<256x64xf32> -> vector<256x64xf32>
    %80 = arith.addf %74, %79 : vector<256x64xf32>
    %81 = vector.extract_strided_slice %1 {offsets = [3, 1, 0], sizes = [16, 16, 12], strides = [1, 1, 1]} : vector<19x19x12xbf16> to vector<16x16x12xbf16>
    %82 = vector.shape_cast %81 : vector<16x16x12xbf16> to vector<256x12xbf16>
    %c13 = arith.constant 13 : index
    %c0_43 = arith.constant 0 : index
    %c0_44 = arith.constant 0 : index
    %83 = vector.load %arg2[%c13, %c0_43, %c0_44] : memref<16x12x64xbf16, #tpu.memory_space<vmem>>, vector<1x12x64xbf16>
    %84 = vector.shape_cast %83 : vector<1x12x64xbf16> to vector<12x64xbf16>
    %cst_45 = arith.constant dense<0.000000e+00> : vector<256x64xf32>
    %85 = tpu.matmul %82, %84, %cst_45 {dimension_numbers = #tpu.dot_dimension_numbers<[1], [0], [0], [1], [0, 0, 1, 1], [], []>} : vector<256x12xbf16>, vector<12x64xbf16>, vector<256x64xf32> -> vector<256x64xf32>
    %86 = arith.addf %80, %85 : vector<256x64xf32>
    %87 = vector.extract_strided_slice %1 {offsets = [3, 2, 0], sizes = [16, 16, 12], strides = [1, 1, 1]} : vector<19x19x12xbf16> to vector<16x16x12xbf16>
    %88 = vector.shape_cast %87 : vector<16x16x12xbf16> to vector<256x12xbf16>
    %c14 = arith.constant 14 : index
    %c0_46 = arith.constant 0 : index
    %c0_47 = arith.constant 0 : index
    %89 = vector.load %arg2[%c14, %c0_46, %c0_47] : memref<16x12x64xbf16, #tpu.memory_space<vmem>>, vector<1x12x64xbf16>
    %90 = vector.shape_cast %89 : vector<1x12x64xbf16> to vector<12x64xbf16>
    %cst_48 = arith.constant dense<0.000000e+00> : vector<256x64xf32>
    %91 = tpu.matmul %88, %90, %cst_48 {dimension_numbers = #tpu.dot_dimension_numbers<[1], [0], [0], [1], [0, 0, 1, 1], [], []>} : vector<256x12xbf16>, vector<12x64xbf16>, vector<256x64xf32> -> vector<256x64xf32>
    %92 = arith.addf %86, %91 : vector<256x64xf32>
    %93 = vector.extract_strided_slice %1 {offsets = [3, 3, 0], sizes = [16, 16, 12], strides = [1, 1, 1]} : vector<19x19x12xbf16> to vector<16x16x12xbf16>
    %94 = vector.shape_cast %93 : vector<16x16x12xbf16> to vector<256x12xbf16>
    %c15 = arith.constant 15 : index
    %c0_49 = arith.constant 0 : index
    %c0_50 = arith.constant 0 : index
    %95 = vector.load %arg2[%c15, %c0_49, %c0_50] : memref<16x12x64xbf16, #tpu.memory_space<vmem>>, vector<1x12x64xbf16>
    %96 = vector.shape_cast %95 : vector<1x12x64xbf16> to vector<12x64xbf16>
    %cst_51 = arith.constant dense<0.000000e+00> : vector<256x64xf32>
    %97 = tpu.matmul %94, %96, %cst_51 {dimension_numbers = #tpu.dot_dimension_numbers<[1], [0], [0], [1], [0, 0, 1, 1], [], []>} : vector<256x12xbf16>, vector<12x64xbf16>, vector<256x64xf32> -> vector<256x64xf32>
    %98 = arith.addf %92, %97 : vector<256x64xf32>
    %c0_52 = arith.constant 0 : index
    %c0_53 = arith.constant 0 : index
    %99 = vector.load %arg3[%c0_52, %c0_53] : memref<1x64xf32, #tpu.memory_space<vmem>>, vector<1x64xf32>
    %100 = vector.broadcast %99 : vector<1x64xf32> to vector<256x64xf32>
    %101 = arith.addf %98, %100 : vector<256x64xf32>
    %cst_54 = arith.constant 0.000000e+00 : f32
    %102 = vector.broadcast %cst_54 : f32 to vector<256x64xf32>
    %103 = arith.maximumf %101, %102 : vector<256x64xf32>
    %104 = vector.shape_cast %103 : vector<256x64xf32> to vector<8x2x8x2x64xf32>
    %105 = vector.extract_strided_slice %104 {offsets = [0, 0, 0, 0, 0], sizes = [8, 1, 8, 1, 64], strides = [1, 1, 1, 1, 1]} : vector<8x2x8x2x64xf32> to vector<8x1x8x1x64xf32>
    %106 = vector.shape_cast %105 : vector<8x1x8x1x64xf32> to vector<8x8x64xf32>
    %107 = vector.extract_strided_slice %104 {offsets = [0, 0, 0, 1, 0], sizes = [8, 1, 8, 1, 64], strides = [1, 1, 1, 1, 1]} : vector<8x2x8x2x64xf32> to vector<8x1x8x1x64xf32>
    %108 = vector.shape_cast %107 : vector<8x1x8x1x64xf32> to vector<8x8x64xf32>
    %109 = vector.extract_strided_slice %104 {offsets = [0, 1, 0, 0, 0], sizes = [8, 1, 8, 1, 64], strides = [1, 1, 1, 1, 1]} : vector<8x2x8x2x64xf32> to vector<8x1x8x1x64xf32>
    %110 = vector.shape_cast %109 : vector<8x1x8x1x64xf32> to vector<8x8x64xf32>
    %111 = vector.extract_strided_slice %104 {offsets = [0, 1, 0, 1, 0], sizes = [8, 1, 8, 1, 64], strides = [1, 1, 1, 1, 1]} : vector<8x2x8x2x64xf32> to vector<8x1x8x1x64xf32>
    %112 = vector.shape_cast %111 : vector<8x1x8x1x64xf32> to vector<8x8x64xf32>
    %cst_55 = arith.constant 0.000000e+00 : f32
    %113 = vector.broadcast %cst_55 : f32 to vector<1x8x64xf32>
    %cst_56 = arith.constant 0.000000e+00 : f32
    %114 = vector.broadcast %cst_56 : f32 to vector<8x1x64xf32>
    %115 = arith.maximumf %106, %108 : vector<8x8x64xf32>
    %116 = arith.maximumf %110, %112 : vector<8x8x64xf32>
    %117 = arith.maximumf %115, %116 : vector<8x8x64xf32>
    %118 = arith.maximumf %108, %112 : vector<8x8x64xf32>
    %119 = vector.extract_strided_slice %118 {offsets = [0, 0, 0], sizes = [8, 7, 64], strides = [1, 1, 1]} : vector<8x8x64xf32> to vector<8x7x64xf32>
    %120 = tpu.concatenate %114, %119 in 1 : vector<8x1x64xf32>, vector<8x7x64xf32> -> vector<8x8x64xf32>
    %121 = arith.maximumf %110, %112 : vector<8x8x64xf32>
    %122 = vector.extract_strided_slice %121 {offsets = [0, 0, 0], sizes = [7, 8, 64], strides = [1, 1, 1]} : vector<8x8x64xf32> to vector<7x8x64xf32>
    %123 = tpu.concatenate %113, %122 in 0 : vector<1x8x64xf32>, vector<7x8x64xf32> -> vector<8x8x64xf32>
    %124 = vector.extract_strided_slice %112 {offsets = [0, 0, 0], sizes = [8, 7, 64], strides = [1, 1, 1]} : vector<8x8x64xf32> to vector<8x7x64xf32>
    %125 = tpu.concatenate %114, %124 in 1 : vector<8x1x64xf32>, vector<8x7x64xf32> -> vector<8x8x64xf32>
    %126 = vector.extract_strided_slice %125 {offsets = [0, 0, 0], sizes = [7, 8, 64], strides = [1, 1, 1]} : vector<8x8x64xf32> to vector<7x8x64xf32>
    %127 = tpu.concatenate %113, %126 in 0 : vector<1x8x64xf32>, vector<7x8x64xf32> -> vector<8x8x64xf32>
    %128 = arith.maximumf %117, %120 : vector<8x8x64xf32>
    %129 = arith.maximumf %123, %127 : vector<8x8x64xf32>
    %130 = arith.maximumf %128, %129 : vector<8x8x64xf32>
    %131 = vector.shape_cast %130 : vector<8x8x64xf32> to vector<8x512xf32>
    %c0_57 = arith.constant 0 : index
    %c0_58 = arith.constant 0 : index
    %c0_59 = arith.constant 0 : index
    %132 = vector.load %arg4[%c0_57, %c0_58, %c0_59] : memref<1x8x512xf32, #tpu.memory_space<vmem>>, vector<1x8x512xf32>
    %133 = vector.shape_cast %132 : vector<1x8x512xf32> to vector<8x512xf32>
    %134 = vector.shape_cast %131 : vector<8x512xf32> to vector<1x8x512xf32>
    tpu.vector_store %arg4[%c0_57, %c0_58, %c0_59], %134 {strides = array<i32>} : memref<1x8x512xf32, #tpu.memory_space<vmem>>, vector<1x8x512xf32>,
    return
  }
  func.func @transform_0(%arg0: i32) -> (i32, i32, i32, i32) {
    %c0_i32 = arith.constant 0 : i32
    %c0_i32_0 = arith.constant 0 : i32
    %c0_i32_1 = arith.constant 0 : i32
    %c0_i32_2 = arith.constant 0 : i32
    return %arg0, %c0_i32, %c0_i32_0, %c0_i32_1 : i32, i32, i32, i32
  }
  func.func @transform_1(%arg0: i32) -> (i32, i32, i32) {
    %c0_i32 = arith.constant 0 : i32
    %c0_i32_0 = arith.constant 0 : i32
    %c0_i32_1 = arith.constant 0 : i32
    %c0_i32_2 = arith.constant 0 : i32
    return %c0_i32, %c0_i32_0, %c0_i32_1 : i32, i32, i32
  }
  func.func @transform_2(%arg0: i32) -> (i32, i32) {
    %c0_i32 = arith.constant 0 : i32
    %c0_i32_0 = arith.constant 0 : i32
    %c0_i32_1 = arith.constant 0 : i32
    return %c0_i32, %c0_i32_0 : i32, i32
  }
  func.func @transform_3(%arg0: i32) -> (i32, i32, i32) {
    %c0_i32 = arith.constant 0 : i32
    %c0_i32_0 = arith.constant 0 : i32
    %c0_i32_1 = arith.constant 0 : i32
    return %arg0, %c0_i32, %c0_i32_0 : i32, i32, i32
  }
}

</mosaic_0001>

<llo_original>
// kernel: tpu_custom_call.1
$region0: #{tpu_custom_call.1}
  #allocation0 [shape = 'u32[]', space=smem, size = 0x4, offset = 0x4, fixed_abs, tag = 'smem constant byte address 0x4 - core index']
  #allocation1 [shape = 'u32[144,128]{1,0:T(1,128)}', space=vmem, size = 0x12000, scoped, tag = 'internal scratch']
  %s0 = inlined_call_operand.vmem [shape: bf16[2,19,19,12], index: 0, kind: input, shape index: {}]
  %s1 = inlined_call_operand.vmem [shape: bf16[16,12,64], index: 1, kind: input, shape index: {}]
  %s2 = inlined_call_operand.vmem [shape: f32[1,64], index: 2, kind: input, shape index: {}]
  %s3 = inlined_call_operand.hbm [shape: f32[2,8,512], index: 3, kind: output, shape index: {}]
  %s4 = sld [smem:[#allocation0]]
  $region45: #{tpu_custom_call.1} parent=0
    _
  %s6 = ssub.s32 1, %s4
  %s7 = scalar_select 0, %s6, %s4
  $region1: #{tpu_custom_call.1} parent=0
    #allocation2 [shape = 'u8[32768]{0}', space=vmem, size = 0x8000, scoped, tag = 'output window, operand 0']
    #allocation3 [shape = 's32[2]{0}', space=sflag, size = 0x8, scoped, tag = 'scoped memory for tpu_custom_call.1']
    %8 = vsyncpa [#allocation3], 0
    %s9 = scalar_lea.sflag [#allocation3], 1
    %10 = vsyncpa %s9, 0
    loop: start=0, step=1, limit=4
    $region2: #{tpu_custom_call.1} parent=1 // loop_pre_header
      _
    $region3: #{tpu_custom_call.1} parent=1 // loop_header
      %s12 = sphi 0, %s16
      %p13 = scmp.ge.s32.totalorder %s12, 4
      %s22 = sphi 0, %s24
      %s25 = sphi 0, %s22
      %s26 = sphi 0, %s25
      %s42 = sphi 0, %s26
      %s46 = sphi 0, %s46
      %s48 = sphi 0, %s46
      %s49 = sphi 0, %s48
      %s63 = sphi 0, %s49
      %s67 = sphi 0, %s67
      %s69 = sphi 0, %s67
      %s70 = sphi 0, %s69
      %s84 = sphi 0, %s70
      %s90 = sphi 0, %s92
      %s93 = sphi 0, %s90
      %s94 = sphi 0, %s93
      %s110 = sphi 0, %s94
    $region4: #{tpu_custom_call.1} parent=1 // loop_header_branch
      %15 = sbr.rel (%p13) target = $region8
    $region5: #{tpu_custom_call.1} parent=1 // loop_body
      %s17 = ssub.s32 %s12, 1
      %s18 = ssub.s32 %s12, 2
      %s19 = sadd.s32 %s12, 1
      %s20 = ssub.s32 %s12, %s19
      %p21 = scmp.eq.s32.totalorder %s20, 0
      %s23 = sadd.s32 %s22, 1
      %s24 = scalar_select %p21, %s22, %s23
      %p27 = pneg %p21
      %p28 = scmp.eq.s32.totalorder %s12, 1
      %p29 = por %p27, %p28
      %p30 = scmp.ne.s32.totalorder %s22, %s25
      %p31 = scmp.eq.s32.totalorder %s12, 0
      %p32 = por %p30, %p31
      %p33 = scmp.ne.s32.totalorder %s22, %s25
      %p34 = scmp.eq.s32.totalorder %s17, 1
      %p35 = por %p33, %p34
      %p36 = scmp.ne.s32.totalorder %s25, %s26
      %p37 = scmp.eq.s32.totalorder %s17, 0
      %p38 = por %p36, %p37
      %p39 = scmp.ne.s32.totalorder %s25, %s26
      %p40 = scmp.eq.s32.totalorder %s18, 1
      %p41 = por %p39, %p40
      %p43 = scmp.ne.s32.totalorder %s26, %s42
      %p44 = scmp.eq.s32.totalorder %s18, 0
      %p45 = por %p43, %p44
      %s47 = sadd.s32 %s46, 1
      %p50 = scmp.eq.s32.totalorder %s12, 1
      %p51 = scmp.ne.s32.totalorder %s46, %s48
      %p52 = scmp.eq.s32.totalorder %s12, 0
      %p53 = por %p51, %p52
      %p54 = scmp.ne.s32.totalorder %s46, %s48
      %p55 = scmp.eq.s32.totalorder %s17, 1
      %p56 = por %p54, %p55
      %p57 = scmp.ne.s32.totalorder %s48, %s49
      %p58 = scmp.eq.s32.totalorder %s17, 0
      %p59 = por %p57, %p58
      %p60 = scmp.ne.s32.totalorder %s48, %s49
      %p61 = scmp.eq.s32.totalorder %s18, 1
      %p62 = por %p60, %p61
      %p64 = scmp.ne.s32.totalorder %s49, %s63
      %p65 = scmp.eq.s32.totalorder %s18, 0
      %p66 = por %p64, %p65
      %s68 = sadd.s32 %s67, 1
      %p71 = scmp.eq.s32.totalorder %s12, 1
      %p72 = scmp.ne.s32.totalorder %s67, %s69
      %p73 = scmp.eq.s32.totalorder %s12, 0
      %p74 = por %p72, %p73
      %p75 = scmp.ne.s32.totalorder %s67, %s69
      %p76 = scmp.eq.s32.totalorder %s17, 1
      %p77 = por %p75, %p76
      %p78 = scmp.ne.s32.totalorder %s69, %s70
      %p79 = scmp.eq.s32.totalorder %s17, 0
      %p80 = por %p78, %p79
      %p81 = scmp.ne.s32.totalorder %s69, %s70
      %p82 = scmp.eq.s32.totalorder %s18, 1
      %p83 = por %p81, %p82
      %p85 = scmp.ne.s32.totalorder %s70, %s84
      %p86 = scmp.eq.s32.totalorder %s18, 0
      %p87 = por %p85, %p86
      %s88 = ssub.s32 %s12, %s19
      %p89 = scmp.eq.s32.totalorder %s88, 0
      %s91 = sadd.s32 %s90, 1
      %s92 = scalar_select %p89, %s90, %s91
      %p95 = pneg %p89
      %p96 = scmp.eq.s32.totalorder %s12, 1
      %p97 = por %p95, %p96
      %p98 = scmp.ne.s32.totalorder %s90, %s93
      %p99 = scmp.eq.s32.totalorder %s12, 0
      %p100 = por %p98, %p99
      %p101 = scmp.ne.s32.totalorder %s90, %s93
      %p102 = scmp.eq.s32.totalorder %s17, 1
      %p103 = por %p101, %p102
      %p104 = scmp.ne.s32.totalorder %s93, %s94
      %p105 = scmp.eq.s32.totalorder %s17, 0
      %p106 = por %p104, %p105
      %p107 = scmp.ne.s32.totalorder %s93, %s94
      %p108 = scmp.eq.s32.totalorder %s18, 1
      %p109 = por %p107, %p108
      %p111 = scmp.ne.s32.totalorder %s94, %s110
      %p112 = scmp.eq.s32.totalorder %s18, 0
      %p113 = por %p111, %p112
      %p114 = scmp.le.s32.totalorder 1, %s12
      %p115 = scmp.lt.s32.totalorder %s12, 3
      %p116 = pnand %p114, %p115
      %p117 = pneg %p116
      // Predicated region
      $region9: #{tpu_custom_call.1} parent=5 // pred_check
        _
      $region10: #{tpu_custom_call.1} parent=5 // pred_check_branch
        %119 = sbr.rel (%p116) target = $region12
      $region11: #{tpu_custom_call.1} parent=5 // pred_region
        %s120 = ssub.s32 %s12, 1
        // Predicated region
        $region13: #{tpu_custom_call.1} parent=11 // pred_check
          %p121 = pneg %p59
        $region14: #{tpu_custom_call.1} parent=11 // pred_check_branch
          %123 = sbr.rel (%p121) target = $region16
        $region15: #{tpu_custom_call.1} parent=11 // pred_region
          _
        $region16: #{tpu_custom_call.1} parent=11 // pred_fallthru
          _
        // Predicated region
        $region17: #{tpu_custom_call.1} parent=11 // pred_check
          %p124 = pneg %p80
        $region18: #{tpu_custom_call.1} parent=11 // pred_check_branch
          %126 = sbr.rel (%p124) target = $region20
        $region19: #{tpu_custom_call.1} parent=11 // pred_region
          _
        $region20: #{tpu_custom_call.1} parent=11 // pred_fallthru
          _
      $region12: #{tpu_custom_call.1} parent=5 // pred_fallthru
        _
      %p127 = scmp.lt.s32.totalorder %s12, 2
      // Predicated region
      $region21: #{tpu_custom_call.1} parent=5 // pred_check
        %p128 = pneg %p127
      $region22: #{tpu_custom_call.1} parent=5 // pred_check_branch
        %130 = sbr.rel (%p128) target = $region24
      $region23: #{tpu_custom_call.1} parent=5 // pred_region
        // Predicated region
        $region25: #{tpu_custom_call.1} parent=23 // pred_check
          %p131 = pneg %p32
        $region26: #{tpu_custom_call.1} parent=23 // pred_check_branch
          %133 = sbr.rel (%p131) target = $region28
        $region27: #{tpu_custom_call.1} parent=23 // pred_region
          %p134 = scmp.lt.s32.totalorder %s12, 1
          %s135 = scalar_select %p134, %s12, 1
          %s136 = smul.addr %s135, 57
          %s137 = smul.addr %s136, 4
          %s138 = scalar_lea.vmem %s0, %s137
        $region28: #{tpu_custom_call.1} parent=23 // pred_fallthru
          _
      $region24: #{tpu_custom_call.1} parent=5 // pred_fallthru
        _
      %p139 = scmp.le.s32.totalorder 1, %s12
      %p140 = scmp.lt.s32.totalorder %s12, 3
      %p141 = pnand %p139, %p140
      %p142 = pneg %p141
      // Predicated region
      $region29: #{tpu_custom_call.1} parent=5 // pred_check
        _
      $region30: #{tpu_custom_call.1} parent=5 // pred_check_branch
        %144 = sbr.rel (%p141) target = $region32
      $region31: #{tpu_custom_call.1} parent=5 // pred_region
        %s145 = ssub.s32 %s12, 1
        %p146 = scmp.lt.s32.totalorder %s17, 1
        %s147 = scalar_select %p146, %s17, 1
        %s148 = smul.addr %s147, 57
        %s149 = smul.addr %s148, 4
        %s150 = scalar_lea.vmem %s0, %s149
        %p151 = pneg %p38
        %p152 = pneg %p35
        %p153 = pneg %p59
        %p154 = pneg %p56
        %p155 = pneg %p80
        %p156 = pneg %p77
        %p157 = pneg %p106
        %p158 = pneg %p103
        %s159 = sand.u32 %s93, 1
        %s160 = scalar_lea.sflag [#allocation3], %s159
        %s161 = sand.u32 %s93, 1
        %s162 = smul.addr %s161, 32
        %s163 = scalar_lea.vmem [#allocation2], %s162
        %p164 = scmp.lt.s32.totalorder %s17, 1
        %s165 = scalar_select %p164, %s17, 1
        %s166 = smul.addr %s165, 57
        %s167 = smul.addr %s166, 4
        %s168 = scalar_lea.vmem %s0, %s167
        %v170 = vld [vmem:[%s168] sm:$0xf]
        %v171 = vld [vmem:[%s168 + $0x4] sm:$0xf]
        %v172 = vld [vmem:[%s168 + $0x8] sm:$0x3]
        %v173 = vld [vmem:[%s168 + $0xc] sm:$0xf]
        %v174 = vld [vmem:[%s168 + $0x10] sm:$0xf]
        %v175 = vld [vmem:[%s168 + $0x14] sm:$0x3]
        %v176 = vld [vmem:[%s168 + $0x18] sm:$0xf]
        %v177 = vld [vmem:[%s168 + $0x1c] sm:$0xf]
        %v178 = vld [vmem:[%s168 + $0x20] sm:$0x3]
        %v179 = vld [vmem:[%s168 + $0x24] sm:$0xf]
        %v180 = vld [vmem:[%s168 + $0x28] sm:$0xf]
        %v181 = vld [vmem:[%s168 + $0x2c] sm:$0x3]
        %v182 = vld [vmem:[%s168 + $0x30] sm:$0xf]
        %v183 = vld [vmem:[%s168 + $0x34] sm:$0xf]
        %v184 = vld [vmem:[%s168 + $0x38] sm:$0x3]
        %v185 = vld [vmem:[%s168 + $0x3c] sm:$0xf]
        %v186 = vld [vmem:[%s168 + $0x40] sm:$0xf]
        %v187 = vld [vmem:[%s168 + $0x44] sm:$0x3]
        %v188 = vld [vmem:[%s168 + $0x48] sm:$0xf]
        %v189 = vld [vmem:[%s168 + $0x4c] sm:$0xf]
        %v190 = vld [vmem:[%s168 + $0x50] sm:$0x3]
        %v191 = vld [vmem:[%s168 + $0x54] sm:$0xf]
        %v192 = vld [vmem:[%s168 + $0x58] sm:$0xf]
        %v193 = vld [vmem:[%s168 + $0x5c] sm:$0x3]
        %v194 = vld [vmem:[%s168 + $0x60] sm:$0xf]
        %v195 = vld [vmem:[%s168 + $0x64] sm:$0xf]
        %v196 = vld [vmem:[%s168 + $0x68] sm:$0x3]
        %v197 = vld [vmem:[%s168 + $0x6c] sm:$0xf]
        %v198 = vld [vmem:[%s168 + $0x70] sm:$0xf]
        %v199 = vld [vmem:[%s168 + $0x74] sm:$0x3]
        %v200 = vld [vmem:[%s168 + $0x78] sm:$0xf]
        %v201 = vld [vmem:[%s168 + $0x7c] sm:$0xf]
        %v202 = vld [vmem:[%s168 + $0x80] sm:$0x3]
        %v203 = vld [vmem:[%s168 + $0x84] sm:$0xf]
        %v204 = vld [vmem:[%s168 + $0x88] sm:$0xf]
        %v205 = vld [vmem:[%s168 + $0x8c] sm:$0x3]
        %v206 = vld [vmem:[%s168 + $0x90] sm:$0xf]
        %v207 = vld [vmem:[%s168 + $0x94] sm:$0xf]
        %v208 = vld [vmem:[%s168 + $0x98] sm:$0x3]
        %v209 = vld [vmem:[%s168 + $0x9c] sm:$0xf]
        %v210 = vld [vmem:[%s168 + $0xa0] sm:$0xf]
        %v211 = vld [vmem:[%s168 + $0xa4] sm:$0x3]
        %v212 = vld [vmem:[%s168 + $0xa8] sm:$0xf]
        %v213 = vld [vmem:[%s168 + $0xac] sm:$0xf]
        %v214 = vld [vmem:[%s168 + $0xb0] sm:$0x3]
        %v215 = vld [vmem:[%s168 + $0xb4] sm:$0xf]
        %v216 = vld [vmem:[%s168 + $0xb8] sm:$0xf]
        %v217 = vld [vmem:[%s168 + $0xbc] sm:$0x3]
        %v218 = vld [vmem:[%s168 + $0xc0] sm:$0xf]
        %v219 = vld [vmem:[%s168 + $0xc4] sm:$0xf]
        %v220 = vld [vmem:[%s168 + $0xc8] sm:$0x3]
        %v221 = vld [vmem:[%s168 + $0xcc] sm:$0xf]
        %v222 = vld [vmem:[%s168 + $0xd0] sm:$0xf]
        %v223 = vld [vmem:[%s168 + $0xd4] sm:$0x3]
        %v224 = vld [vmem:[%s168 + $0xd8] sm:$0xf]
        %v225 = vld [vmem:[%s168 + $0xdc] sm:$0xf]
        %v226 = vld [vmem:[%s168 + $0xe0] sm:$0x3]
        %v227 = vld [vmem:[%s1] sm:$0xf]
        %v228 = vld [vmem:[%s1 + $0x4] sm:$0x3]
        %vm229 = vsmask.f32 3328
        %vm230 = vsmask.f32 7440
        %vm231 = vmor %vm229, %vm230
        %v233 = vshrl.u32 %v170, 16
        %v235 = vrot.slane %v233, 4
        %v236 = vshll.u32 %v170, 16
        %v238 = vrot.slane %v236, 5
        %v239 = vor.u32 %v235, %v238
        %v240 = vrot.slane %v239, 4
        %v242 = vshll.u32 %v171, 16
        %v244 = vrot.slane %v242, 5
        %v245 = vsel %vm231, %v240, %v244
        %v246 = vshrl.u32 %v171, 16
        %v248 = vrot.slane %v246, 4
        %v249 = vor.u32 %v248, %v244
        %v250 = vrot.slane %v249, 4
        %v252 = vshll.u32 %v172, 16
        %v254 = vrot.slane %v252, 5
        %v255 = vsel %vm231, %v250, %v254
        %v257 = vshrl.u32 %v173, 16
        %v259 = vrot.slane %v257, 4
        %v260 = vshll.u32 %v173, 16
        %v262 = vrot.slane %v260, 5
        %v263 = vor.u32 %v259, %v262
        %v264 = vrot.slane %v263, 4
        %v266 = vshll.u32 %v174, 16
        %v268 = vrot.slane %v266, 5
        %v269 = vsel %vm231, %v264, %v268
        %v270 = vshrl.u32 %v174, 16
        %v272 = vrot.slane %v270, 4
        %v273 = vor.u32 %v272, %v268
        %v274 = vrot.slane %v273, 4
        %v276 = vshll.u32 %v175, 16
        %v278 = vrot.slane %v276, 5
        %v279 = vsel %vm231, %v274, %v278
        %v281 = vshrl.u32 %v176, 16
        %v283 = vrot.slane %v281, 4
        %v284 = vshll.u32 %v176, 16
        %v286 = vrot.slane %v284, 5
        %v287 = vor.u32 %v283, %v286
        %v288 = vrot.slane %v287, 4
        %v290 = vshll.u32 %v177, 16
        %v292 = vrot.slane %v290, 5
        %v293 = vsel %vm231, %v288, %v292
        %v294 = vshrl.u32 %v177, 16
        %v296 = vrot.slane %v294, 4
        %v297 = vor.u32 %v296, %v292
        %v298 = vrot.slane %v297, 4
        %v300 = vshll.u32 %v178, 16
        %v302 = vrot.slane %v300, 5
        %v303 = vsel %vm231, %v298, %v302
        %v305 = vshrl.u32 %v179, 16
        %v307 = vrot.slane %v305, 4
        %v308 = vshll.u32 %v179, 16
        %v310 = vrot.slane %v308, 5
        %v311 = vor.u32 %v307, %v310
        %v312 = vrot.slane %v311, 4
        %v314 = vshll.u32 %v180, 16
        %v316 = vrot.slane %v314, 5
        %v317 = vsel %vm231, %v312, %v316
        %v318 = vshrl.u32 %v180, 16
        %v320 = vrot.slane %v318, 4
        %v321 = vor.u32 %v320, %v316
        %v322 = vrot.slane %v321, 4
        %v324 = vshll.u32 %v181, 16
        %v326 = vrot.slane %v324, 5
        %v327 = vsel %vm231, %v322, %v326
        %v329 = vshrl.u32 %v182, 16
        %v331 = vrot.slane %v329, 4
        %v332 = vshll.u32 %v182, 16
        %v334 = vrot.slane %v332, 5
        %v335 = vor.u32 %v331, %v334
        %v336 = vrot.slane %v335, 4
        %v338 = vshll.u32 %v183, 16
        %v340 = vrot.slane %v338, 5
        %v341 = vsel %vm231, %v336, %v340
        %v342 = vshrl.u32 %v183, 16
        %v344 = vrot.slane %v342, 4
        %v345 = vor.u32 %v344, %v340
        %v346 = vrot.slane %v345, 4
        %v348 = vshll.u32 %v184, 16
        %v350 = vrot.slane %v348, 5
        %v351 = vsel %vm231, %v346, %v350
        %v353 = vshrl.u32 %v185, 16
        %v355 = vrot.slane %v353, 4
        %v356 = vshll.u32 %v185, 16
        %v358 = vrot.slane %v356, 5
        %v359 = vor.u32 %v355, %v358
        %v360 = vrot.slane %v359, 4
        %v362 = vshll.u32 %v186, 16
        %v364 = vrot.slane %v362, 5
        %v365 = vsel %vm231, %v360, %v364
        %v366 = vshrl.u32 %v186, 16
        %v368 = vrot.slane %v366, 4
        %v369 = vor.u32 %v368, %v364
        %v370 = vrot.slane %v369, 4
        %v372 = vshll.u32 %v187, 16
        %v374 = vrot.slane %v372, 5
        %v375 = vsel %vm231, %v370, %v374
        %v377 = vshrl.u32 %v188, 16
        %v379 = vrot.slane %v377, 4
        %v380 = vshll.u32 %v188, 16
        %v382 = vrot.slane %v380, 5
        %v383 = vor.u32 %v379, %v382
        %v384 = vrot.slane %v383, 4
        %v386 = vshll.u32 %v189, 16
        %v388 = vrot.slane %v386, 5
        %v389 = vsel %vm231, %v384, %v388
        %v390 = vshrl.u32 %v189, 16
        %v392 = vrot.slane %v390, 4
        %v393 = vor.u32 %v392, %v388
        %v394 = vrot.slane %v393, 4
        %v396 = vshll.u32 %v190, 16
        %v398 = vrot.slane %v396, 5
        %v399 = vsel %vm231, %v394, %v398
        %v401 = vshrl.u32 %v191, 16
        %v403 = vrot.slane %v401, 4
        %v404 = vshll.u32 %v191, 16
        %v406 = vrot.slane %v404, 5
        %v407 = vor.u32 %v403, %v406
        %v408 = vrot.slane %v407, 4
        %v410 = vshll.u32 %v192, 16
        %v412 = vrot.slane %v410, 5
        %v413 = vsel %vm231, %v408, %v412
        %v414 = vshrl.u32 %v192, 16
        %v416 = vrot.slane %v414, 4
        %v417 = vor.u32 %v416, %v412
        %v418 = vrot.slane %v417, 4
        %v420 = vshll.u32 %v193, 16
        %v422 = vrot.slane %v420, 5
        %v423 = vsel %vm231, %v418, %v422
        %v425 = vshrl.u32 %v194, 16
        %v427 = vrot.slane %v425, 4
        %v428 = vshll.u32 %v194, 16
        %v430 = vrot.slane %v428, 5
        %v431 = vor.u32 %v427, %v430
        %v432 = vrot.slane %v431, 4
        %v434 = vshll.u32 %v195, 16
        %v436 = vrot.slane %v434, 5
        %v437 = vsel %vm231, %v432, %v436
        %v438 = vshrl.u32 %v195, 16
        %v440 = vrot.slane %v438, 4
        %v441 = vor.u32 %v440, %v436
        %v442 = vrot.slane %v441, 4
        %v444 = vshll.u32 %v196, 16
        %v446 = vrot.slane %v444, 5
        %v447 = vsel %vm231, %v442, %v446
        %v449 = vshrl.u32 %v197, 16
        %v451 = vrot.slane %v449, 4
        %v452 = vshll.u32 %v197, 16
        %v454 = vrot.slane %v452, 5
        %v455 = vor.u32 %v451, %v454
        %v456 = vrot.slane %v455, 4
        %v458 = vshll.u32 %v198, 16
        %v460 = vrot.slane %v458, 5
        %v461 = vsel %vm231, %v456, %v460
        %v462 = vshrl.u32 %v198, 16
        %v464 = vrot.slane %v462, 4
        %v465 = vor.u32 %v464, %v460
        %v466 = vrot.slane %v465, 4
        %v468 = vshll.u32 %v199, 16
        %v470 = vrot.slane %v468, 5
        %v471 = vsel %vm231, %v466, %v470
        %v473 = vshrl.u32 %v200, 16
        %v475 = vrot.slane %v473, 4
        %v476 = vshll.u32 %v200, 16
        %v478 = vrot.slane %v476, 5
        %v479 = vor.u32 %v475, %v478
        %v480 = vrot.slane %v479, 4
        %v482 = vshll.u32 %v201, 16
        %v484 = vrot.slane %v482, 5
        %v485 = vsel %vm231, %v480, %v484
        %v486 = vshrl.u32 %v201, 16
        %v488 = vrot.slane %v486, 4
        %v489 = vor.u32 %v488, %v484
        %v490 = vrot.slane %v489, 4
        %v492 = vshll.u32 %v202, 16
        %v494 = vrot.slane %v492, 5
        %v495 = vsel %vm231, %v490, %v494
        %v497 = vshrl.u32 %v203, 16
        %v499 = vrot.slane %v497, 4
        %v500 = vshll.u32 %v203, 16
        %v502 = vrot.slane %v500, 5
        %v503 = vor.u32 %v499, %v502
        %v504 = vrot.slane %v503, 4
        %v506 = vshll.u32 %v204, 16
        %v508 = vrot.slane %v506, 5
        %v509 = vsel %vm231, %v504, %v508
        %v510 = vshrl.u32 %v204, 16
        %v512 = vrot.slane %v510, 4
        %v513 = vor.u32 %v512, %v508
        %v514 = vrot.slane %v513, 4
        %v516 = vshll.u32 %v205, 16
        %v518 = vrot.slane %v516, 5
        %v519 = vsel %vm231, %v514, %v518
        %v521 = vshrl.u32 %v206, 16
        %v523 = vrot.slane %v521, 4
        %v524 = vshll.u32 %v206, 16
        %v526 = vrot.slane %v524, 5
        %v527 = vor.u32 %v523, %v526
        %v528 = vrot.slane %v527, 4
        %v530 = vshll.u32 %v207, 16
        %v532 = vrot.slane %v530, 5
        %v533 = vsel %vm231, %v528, %v532
        %v534 = vshrl.u32 %v207, 16
        %v536 = vrot.slane %v534, 4
        %v537 = vor.u32 %v536, %v532
        %v538 = vrot.slane %v537, 4
        %v540 = vshll.u32 %v208, 16
        %v542 = vrot.slane %v540, 5
        %v543 = vsel %vm231, %v538, %v542
        %v545 = vshrl.u32 %v209, 16
        %v547 = vrot.slane %v545, 4
        %v548 = vshll.u32 %v209, 16
        %v550 = vrot.slane %v548, 5
        %v551 = vor.u32 %v547, %v550
        %v552 = vrot.slane %v551, 4
        %v554 = vshll.u32 %v210, 16
        %v556 = vrot.slane %v554, 5
        %v557 = vsel %vm231, %v552, %v556
        %v558 = vshrl.u32 %v210, 16
        %v560 = vrot.slane %v558, 4
        %v561 = vor.u32 %v560, %v556
        %v562 = vrot.slane %v561, 4
        %v564 = vshll.u32 %v211, 16
        %v566 = vrot.slane %v564, 5
        %v567 = vsel %vm231, %v562, %v566
        %v569 = vshrl.u32 %v212, 16
        %v571 = vrot.slane %v569, 4
        %v572 = vshll.u32 %v212, 16
        %v574 = vrot.slane %v572, 5
        %v575 = vor.u32 %v571, %v574
        %v576 = vrot.slane %v575, 4
        %v578 = vshll.u32 %v213, 16
        %v580 = vrot.slane %v578, 5
        %v581 = vsel %vm231, %v576, %v580
        %v582 = vshrl.u32 %v213, 16
        %v584 = vrot.slane %v582, 4
        %v585 = vor.u32 %v584, %v580
        %v586 = vrot.slane %v585, 4
        %v588 = vshll.u32 %v214, 16
        %v590 = vrot.slane %v588, 5
        %v591 = vsel %vm231, %v586, %v590
        %v593 = vshrl.u32 %v215, 16
        %v595 = vrot.slane %v593, 4
        %v596 = vshll.u32 %v215, 16
        %v598 = vrot.slane %v596, 5
        %v599 = vor.u32 %v595, %v598
        %v600 = vrot.slane %v599, 4
        %v602 = vshll.u32 %v216, 16
        %v604 = vrot.slane %v602, 5
        %v605 = vsel %vm231, %v600, %v604
        %v606 = vshrl.u32 %v216, 16
        %v608 = vrot.slane %v606, 4
        %v609 = vor.u32 %v608, %v604
        %v610 = vrot.slane %v609, 4
        %v612 = vshll.u32 %v217, 16
        %v614 = vrot.slane %v612, 5
        %v615 = vsel %vm231, %v610, %v614
        %s616 = scalar_lea.vmem %s1, 8
        %v617 = vld [vmem:[%s616] sm:$0xf]
        %v618 = vld [vmem:[%s616 + $0x4] sm:$0x3]
        %v619 = vunpack.c.l.b16 %v245
        %v620 = vunpack.c.l.b16 %v255
        %v621 = vunpack.c.l.b16 %v269
        %v622 = vunpack.c.l.b16 %v279
        %v623 = vunpack.c.l.b16 %v293
        %v624 = vunpack.c.l.b16 %v303
        %v625 = vunpack.c.l.b16 %v317
        %v626 = vunpack.c.l.b16 %v327
        %v627 = vunpack.c.l.b16 %v341
        %v628 = vunpack.c.l.b16 %v351
        %v629 = vunpack.c.l.b16 %v365
        %v630 = vunpack.c.l.b16 %v375
        %v631 = vunpack.c.l.b16 %v389
        %v632 = vunpack.c.l.b16 %v399
        %v633 = vunpack.c.l.b16 %v413
        %v634 = vunpack.c.l.b16 %v423
        %v635 = vunpack.c.l.b16 %v437
        %v636 = vunpack.c.l.b16 %v447
        %v637 = vunpack.c.l.b16 %v461
        %v638 = vunpack.c.l.b16 %v471
        %v639 = vunpack.c.l.b16 %v485
        %v640 = vunpack.c.l.b16 %v495
        %v641 = vunpack.c.l.b16 %v509
        %v642 = vunpack.c.l.b16 %v519
        %v643 = vunpack.c.l.b16 %v533
        %v644 = vunpack.c.l.b16 %v543
        %v645 = vunpack.c.l.b16 %v557
        %v646 = vunpack.c.l.b16 %v567
        %v647 = vunpack.c.l.b16 %v581
        %v648 = vunpack.c.l.b16 %v591
        %v649 = vunpack.c.l.b16 %v605
        %v650 = vunpack.c.l.b16 %v615
        %v651 = vpack.c.b16 %v620, %v619
        %v652 = vpack.c.b16 %v622, %v621
        %v653 = vpack.c.b16 %v624, %v623
        %v654 = vpack.c.b16 %v626, %v625
        %v655 = vpack.c.b16 %v628, %v627
        %v656 = vpack.c.b16 %v630, %v629
        %v657 = vpack.c.b16 %v632, %v631
        %v658 = vpack.c.b16 %v634, %v633
        %v659 = vpack.c.b16 %v636, %v635
        %v660 = vpack.c.b16 %v638, %v637
        %v661 = vpack.c.b16 %v640, %v639
        %v662 = vpack.c.b16 %v642, %v641
        %v663 = vpack.c.b16 %v644, %v643
        %v664 = vpack.c.b16 %v646, %v645
        %v665 = vpack.c.b16 %v648, %v647
        %v666 = vpack.c.b16 %v650, %v649
        %v669 = vunpack.c.l.b16 %v617
        %v670 = vunpack.c.l.b16 %v618
        %v671 = vpack.c.b16 %v670, %v669
        %vm672 = vcmask 97280
        %v674 = vsel %vm672, %v651, 0
        %v677 = vsel %vm672, %v652, 0
        %v680 = vsel %vm672, %v653, 0
        %v683 = vsel %vm672, %v654, 0
        %v686 = vsel %vm672, %v655, 0
        %v689 = vsel %vm672, %v656, 0
        %v692 = vsel %vm672, %v657, 0
        %v695 = vsel %vm672, %v658, 0
        %v698 = vsel %vm672, %v659, 0
        %v701 = vsel %vm672, %v660, 0
        %v704 = vsel %vm672, %v661, 0
        %v707 = vsel %vm672, %v662, 0
        %v710 = vsel %vm672, %v663, 0
        %v713 = vsel %vm672, %v664, 0
        %v716 = vsel %vm672, %v665, 0
        %v719 = vsel %vm672, %v666, 0
        %vm721 = vcmask 1045504
        %v723 = vsel %vm721, %v671, 0
        %725 = vmatprep.subr.bf16.mxu0 0
        %726 = vmatpush1.bf16.msra.mxu0 %v723
        %727 = vmatprep.subr.bf16.mxu0 0
        %728 = vmatpush1.bf16.msra.mxu0 0
        %729 = vmatprep.subr.bf16.mxu0 0
        %730 = vmatpush1.bf16.msra.mxu0 0
        %731 = vmatprep.subr.bf16.mxu0 0
        %732 = vmatpush1.bf16.msra.mxu0 0
        %733 = vmatprep.subr.bf16.mxu0 0
        %734 = vmatpush1.bf16.msra.mxu0 0
        %735 = vmatprep.subr.bf16.mxu0 0
        %736 = vmatpush1.bf16.msra.mxu0 0
        %737 = vmatprep.subr.bf16.mxu0 0
        %738 = vmatpush1.bf16.msra.mxu0 0
        %739 = vmatprep.subr.bf16.mxu0 0
        %740 = vmatpush1.bf16.msra.mxu0 0
        %741 = vmatprep.subr.bf16.mxu0 0
        %742 = vmatpush1.bf16.msra.mxu0 0
        %743 = vmatprep.subr.bf16.mxu0 0
        %744 = vmatpush1.bf16.msra.mxu0 0
        %745 = vmatprep.subr.bf16.mxu0 0
        %746 = vmatpush1.bf16.msra.mxu0 0
        %747 = vmatprep.subr.bf16.mxu0 0
        %748 = vmatpush1.bf16.msra.mxu0 0
        %749 = vmatprep.subr.bf16.mxu0 0
        %750 = vmatpush1.bf16.msra.mxu0 0
        %751 = vmatprep.subr.bf16.mxu0 0
        %752 = vmatpush1.bf16.msra.mxu0 0
        %753 = vmatprep.subr.bf16.mxu0 0
        %754 = vmatpush1.bf16.msra.mxu0 0
        %755 = vmatprep.subr.bf16.mxu0 0
        %756 = vmatpush1.bf16.msra.mxu0 0
        %757 = vmatprep.mubr.bf16.mxu0 0
        %758 = vmatmul.mubr.bf16.gmra.mrb[0].mxu0 %v674
        %v759 = vpop.f32.mrb[0].mxu0
        %v760 = vadd.f32 0.0, %v759
        %v761 = vpop.f32.mrb[0].mxu0
        %v762 = vpop.f32.mrb[0].mxu0
        %v763 = vadd.f32 0.0, %v762
        %v764 = vpop.f32.mrb[0].mxu0
        %765 = vmatprep.mubr.bf16.mxu0 0
        %766 = vmatmul.mubr.bf16.gmra.mrb[0].mxu0 %v677
        %v767 = vpop.f32.mrb[0].mxu0
        %v768 = vadd.f32 0.0, %v767
        %v769 = vpop.f32.mrb[0].mxu0
        %v770 = vpop.f32.mrb[0].mxu0
        %v771 = vadd.f32 0.0, %v770
        %v772 = vpop.f32.mrb[0].mxu0
        %773 = vmatprep.mubr.bf16.mxu0 0
        %774 = vmatmul.mubr.bf16.gmra.mrb[0].mxu0 %v680
        %v775 = vpop.f32.mrb[0].mxu0
        %v776 = vadd.f32 0.0, %v775
        %v777 = vpop.f32.mrb[0].mxu0
        %v778 = vpop.f32.mrb[0].mxu0
        %v779 = vadd.f32 0.0, %v778
        %v780 = vpop.f32.mrb[0].mxu0
        %781 = vmatprep.mubr.bf16.mxu0 0
        %782 = vmatmul.mubr.bf16.gmra.mrb[0].mxu0 %v683
        %v783 = vpop.f32.mrb[0].mxu0
        %v784 = vadd.f32 0.0, %v783
        %v785 = vpop.f32.mrb[0].mxu0
        %v786 = vpop.f32.mrb[0].mxu0
        %v787 = vadd.f32 0.0, %v786
        %v788 = vpop.f32.mrb[0].mxu0
        %789 = vmatprep.mubr.bf16.mxu0 0
        %790 = vmatmul.mubr.bf16.gmra.mrb[0].mxu0 %v686
        %v791 = vpop.f32.mrb[0].mxu0
        %v792 = vadd.f32 0.0, %v791
        %v793 = vpop.f32.mrb[0].mxu0
        %v794 = vpop.f32.mrb[0].mxu0
        %v795 = vadd.f32 0.0, %v794
        %v796 = vpop.f32.mrb[0].mxu0
        %797 = vmatprep.mubr.bf16.mxu0 0
        %798 = vmatmul.mubr.bf16.gmra.mrb[0].mxu0 %v689
        %v799 = vpop.f32.mrb[0].mxu0
        %v800 = vadd.f32 0.0, %v799
        %v801 = vpop.f32.mrb[0].mxu0
        %v802 = vpop.f32.mrb[0].mxu0
        %v803 = vadd.f32 0.0, %v802
        %v804 = vpop.f32.mrb[0].mxu0
        %805 = vmatprep.mubr.bf16.mxu0 0
        %806 = vmatmul.mubr.bf16.gmra.mrb[0].mxu0 %v692
        %v807 = vpop.f32.mrb[0].mxu0
        %v808 = vadd.f32 0.0, %v807
        %v809 = vpop.f32.mrb[0].mxu0
        %v810 = vpop.f32.mrb[0].mxu0
        %v811 = vadd.f32 0.0, %v810
        %v812 = vpop.f32.mrb[0].mxu0
        %813 = vmatprep.mubr.bf16.mxu0 0
        %814 = vmatmul.mubr.bf16.gmra.mrb[0].mxu0 %v695
        %v815 = vpop.f32.mrb[0].mxu0
        %v816 = vadd.f32 0.0, %v815
        %v817 = vpop.f32.mrb[0].mxu0
        %v818 = vpop.f32.mrb[0].mxu0
        %v819 = vadd.f32 0.0, %v818
        %v820 = vpop.f32.mrb[0].mxu0
        %821 = vmatprep.mubr.bf16.mxu0 0
        %822 = vmatmul.mubr.bf16.gmra.mrb[0].mxu0 %v698
        %v823 = vpop.f32.mrb[0].mxu0
        %v824 = vadd.f32 0.0, %v823
        %v825 = vpop.f32.mrb[0].mxu0
        %v826 = vpop.f32.mrb[0].mxu0
        %v827 = vadd.f32 0.0, %v826
        %v828 = vpop.f32.mrb[0].mxu0
        %829 = vmatprep.mubr.bf16.mxu0 0
        %830 = vmatmul.mubr.bf16.gmra.mrb[0].mxu0 %v701
        %v831 = vpop.f32.mrb[0].mxu0
        %v832 = vadd.f32 0.0, %v831
        %v833 = vpop.f32.mrb[0].mxu0
        %v834 = vpop.f32.mrb[0].mxu0
        %v835 = vadd.f32 0.0, %v834
        %v836 = vpop.f32.mrb[0].mxu0
        %837 = vmatprep.mubr.bf16.mxu0 0
        %838 = vmatmul.mubr.bf16.gmra.mrb[0].mxu0 %v704
        %v839 = vpop.f32.mrb[0].mxu0
        %v840 = vadd.f32 0.0, %v839
        %v841 = vpop.f32.mrb[0].mxu0
        %v842 = vpop.f32.mrb[0].mxu0
        %v843 = vadd.f32 0.0, %v842
        %v844 = vpop.f32.mrb[0].mxu0
        %845 = vmatprep.mubr.bf16.mxu0 0
        %846 = vmatmul.mubr.bf16.gmra.mrb[0].mxu0 %v707
        %v847 = vpop.f32.mrb[0].mxu0
        %v848 = vadd.f32 0.0, %v847
        %v849 = vpop.f32.mrb[0].mxu0
        %v850 = vpop.f32.mrb[0].mxu0
        %v851 = vadd.f32 0.0, %v850
        %v852 = vpop.f32.mrb[0].mxu0
        %853 = vmatprep.mubr.bf16.mxu0 0
        %854 = vmatmul.mubr.bf16.gmra.mrb[0].mxu0 %v710
        %v855 = vpop.f32.mrb[0].mxu0
        %v856 = vadd.f32 0.0, %v855
        %v857 = vpop.f32.mrb[0].mxu0
        %v858 = vpop.f32.mrb[0].mxu0
        %v859 = vadd.f32 0.0, %v858
        %v860 = vpop.f32.mrb[0].mxu0
        %861 = vmatprep.mubr.bf16.mxu0 0
        %862 = vmatmul.mubr.bf16.gmra.mrb[0].mxu0 %v713
        %v863 = vpop.f32.mrb[0].mxu0
        %v864 = vadd.f32 0.0, %v863
        %v865 = vpop.f32.mrb[0].mxu0
        %v866 = vpop.f32.mrb[0].mxu0
        %v867 = vadd.f32 0.0, %v866
        %v868 = vpop.f32.mrb[0].mxu0
        %869 = vmatprep.mubr.bf16.mxu0 0
        %870 = vmatmul.mubr.bf16.gmra.mrb[0].mxu0 %v716
        %v871 = vpop.f32.mrb[0].mxu0
        %v872 = vadd.f32 0.0, %v871
        %v873 = vpop.f32.mrb[0].mxu0
        %v874 = vpop.f32.mrb[0].mxu0
        %v875 = vadd.f32 0.0, %v874
        %v876 = vpop.f32.mrb[0].mxu0
        %877 = vmatprep.mubr.bf16.mxu0 0
        %878 = vmatmul.mubr.bf16.gmra.mrb[0].mxu0 %v719
        %v879 = vpop.f32.mrb[0].mxu0
        %v880 = vadd.f32 0.0, %v879
        %v881 = vpop.f32.mrb[0].mxu0
        %v882 = vpop.f32.mrb[0].mxu0
        %v883 = vadd.f32 0.0, %v882
        %v884 = vpop.f32.mrb[0].mxu0
        %885 = vdwg.mxu0
        %v918 = vunpack.c.l.b16 %v170
        %v919 = vunpack.c.l.b16 %v171
        %v920 = vunpack.c.l.b16 %v173
        %v921 = vunpack.c.l.b16 %v174
        %v922 = vunpack.c.l.b16 %v176
        %v923 = vunpack.c.l.b16 %v177
        %v924 = vunpack.c.l.b16 %v179
        %v925 = vunpack.c.l.b16 %v180
        %v926 = vunpack.c.l.b16 %v182
        %v927 = vunpack.c.l.b16 %v183
        %v928 = vunpack.c.l.b16 %v185
        %v929 = vunpack.c.l.b16 %v186
        %v930 = vunpack.c.l.b16 %v188
        %v931 = vunpack.c.l.b16 %v189
        %v932 = vunpack.c.l.b16 %v191
        %v933 = vunpack.c.l.b16 %v192
        %v934 = vunpack.c.l.b16 %v194
        %v935 = vunpack.c.l.b16 %v195
        %v936 = vunpack.c.l.b16 %v197
        %v937 = vunpack.c.l.b16 %v198
        %v938 = vunpack.c.l.b16 %v200
        %v939 = vunpack.c.l.b16 %v201
        %v940 = vunpack.c.l.b16 %v203
        %v941 = vunpack.c.l.b16 %v204
        %v942 = vunpack.c.l.b16 %v206
        %v943 = vunpack.c.l.b16 %v207
        %v944 = vunpack.c.l.b16 %v209
        %v945 = vunpack.c.l.b16 %v210
        %v946 = vunpack.c.l.b16 %v212
        %v947 = vunpack.c.l.b16 %v213
        %v948 = vunpack.c.l.b16 %v215
        %v949 = vunpack.c.l.b16 %v216
        %v950 = vpack.c.b16 %v919, %v918
        %v951 = vpack.c.b16 %v921, %v920
        %v952 = vpack.c.b16 %v923, %v922
        %v953 = vpack.c.b16 %v925, %v924
        %v954 = vpack.c.b16 %v927, %v926
        %v955 = vpack.c.b16 %v929, %v928
        %v956 = vpack.c.b16 %v931, %v930
        %v957 = vpack.c.b16 %v933, %v932
        %v958 = vpack.c.b16 %v935, %v934
        %v959 = vpack.c.b16 %v937, %v936
        %v960 = vpack.c.b16 %v939, %v938
        %v961 = vpack.c.b16 %v941, %v940
        %v962 = vpack.c.b16 %v943, %v942
        %v963 = vpack.c.b16 %v945, %v944
        %v964 = vpack.c.b16 %v947, %v946
        %v965 = vpack.c.b16 %v949, %v948
        %v968 = vunpack.c.l.b16 %v227
        %v969 = vunpack.c.l.b16 %v228
        %v970 = vpack.c.b16 %v969, %v968
        %v972 = vsel %vm672, %v950, 0
        %v975 = vsel %vm672, %v951, 0
        %v978 = vsel %vm672, %v952, 0
        %v981 = vsel %vm672, %v953, 0
        %v984 = vsel %vm672, %v954, 0
        %v987 = vsel %vm672, %v955, 0
        %v990 = vsel %vm672, %v956, 0
        %v993 = vsel %vm672, %v957, 0
        %v996 = vsel %vm672, %v958, 0
        %v999 = vsel %vm672, %v959, 0
        %v1002 = vsel %vm672, %v960, 0
        %v1005 = vsel %vm672, %v961, 0
        %v1008 = vsel %vm672, %v962, 0
        %v1011 = vsel %vm672, %v963, 0
        %v1014 = vsel %vm672, %v964, 0
        %v1017 = vsel %vm672, %v965, 0
        %v1020 = vsel %vm721, %v970, 0
        %1022 = vmatprep.subr.bf16.mxu0 0
        %1023 = vmatpush1.bf16.msra.mxu0 %v1020
        %1024 = vmatprep.subr.bf16.mxu0 0
        %1025 = vmatpush1.bf16.msra.mxu0 0
        %1026 = vmatprep.subr.bf16.mxu0 0
        %1027 = vmatpush1.bf16.msra.mxu0 0
        %1028 = vmatprep.subr.bf16.mxu0 0
        %1029 = vmatpush1.bf16.msra.mxu0 0
        %1030 = vmatprep.subr.bf16.mxu0 0
        %1031 = vmatpush1.bf16.msra.mxu0 0
        %1032 = vmatprep.subr.bf16.mxu0 0
        %1033 = vmatpush1.bf16.msra.mxu0 0
        %1034 = vmatprep.subr.bf16.mxu0 0
        %1035 = vmatpush1.bf16.msra.mxu0 0
        %1036 = vmatprep.subr.bf16.mxu0 0
        %1037 = vmatpush1.bf16.msra.mxu0 0
        %1038 = vmatprep.subr.bf16.mxu0 0
        %1039 = vmatpush1.bf16.msra.mxu0 0
        %1040 = vmatprep.subr.bf16.mxu0 0
        %1041 = vmatpush1.bf16.msra.mxu0 0
        %1042 = vmatprep.subr.bf16.mxu0 0
        %1043 = vmatpush1.bf16.msra.mxu0 0
        %1044 = vmatprep.subr.bf16.mxu0 0
        %1045 = vmatpush1.bf16.msra.mxu0 0
        %1046 = vmatprep.subr.bf16.mxu0 0
        %1047 = vmatpush1.bf16.msra.mxu0 0
        %1048 = vmatprep.subr.bf16.mxu0 0
        %1049 = vmatpush1.bf16.msra.mxu0 0
        %1050 = vmatprep.subr.bf16.mxu0 0
        %1051 = vmatpush1.bf16.msra.mxu0 0
        %1052 = vmatprep.subr.bf16.mxu0 0
        %1053 = vmatpush1.bf16.msra.mxu0 0
        %1054 = vmatprep.mubr.bf16.mxu0 0
        %1055 = vmatmul.mubr.bf16.gmra.mrb[0].mxu0 %v972
        %v1056 = vpop.f32.mrb[0].mxu0
        %v1057 = vadd.f32 %v760, %v1056
        %v1058 = vpop.f32.mrb[0].mxu0
        %v1059 = vpop.f32.mrb[0].mxu0
        %v1060 = vadd.f32 %v763, %v1059
        %v1061 = vpop.f32.mrb[0].mxu0
        %1062 = vmatprep.mubr.bf16.mxu0 0
        %1063 = vmatmul.mubr.bf16.gmra.mrb[0].mxu0 %v975
        %v1064 = vpop.f32.mrb[0].mxu0
        %v1065 = vadd.f32 %v768, %v1064
        %v1066 = vpop.f32.mrb[0].mxu0
        %v1067 = vpop.f32.mrb[0].mxu0
        %v1068 = vadd.f32 %v771, %v1067
        %v1069 = vpop.f32.mrb[0].mxu0
        %1070 = vmatprep.mubr.bf16.mxu0 0
        %1071 = vmatmul.mubr.bf16.gmra.mrb[0].mxu0 %v978
        %v1072 = vpop.f32.mrb[0].mxu0
        %v1073 = vadd.f32 %v776, %v1072
        %v1074 = vpop.f32.mrb[0].mxu0
        %v1075 = vpop.f32.mrb[0].mxu0
        %v1076 = vadd.f32 %v779, %v1075
        %v1077 = vpop.f32.mrb[0].mxu0
        %1078 = vmatprep.mubr.bf16.mxu0 0
        %1079 = vmatmul.mubr.bf16.gmra.mrb[0].mxu0 %v981
        %v1080 = vpop.f32.mrb[0].mxu0
        %v1081 = vadd.f32 %v784, %v1080
        %v1082 = vpop.f32.mrb[0].mxu0
        %v1083 = vpop.f32.mrb[0].mxu0
        %v1084 = vadd.f32 %v787, %v1083
        %v1085 = vpop.f32.mrb[0].mxu0
        %1086 = vmatprep.mubr.bf16.mxu0 0
        %1087 = vmatmul.mubr.bf16.gmra.mrb[0].mxu0 %v984
        %v1088 = vpop.f32.mrb[0].mxu0
        %v1089 = vadd.f32 %v792, %v1088
        %v1090 = vpop.f32.mrb[0].mxu0
        %v1091 = vpop.f32.mrb[0].mxu0
        %v1092 = vadd.f32 %v795, %v1091
        %v1093 = vpop.f32.mrb[0].mxu0
        %1094 = vmatprep.mubr.bf16.mxu0 0
        %1095 = vmatmul.mubr.bf16.gmra.mrb[0].mxu0 %v987
        %v1096 = vpop.f32.mrb[0].mxu0
        %v1097 = vadd.f32 %v800, %v1096
        %v1098 = vpop.f32.mrb[0].mxu0
        %v1099 = vpop.f32.mrb[0].mxu0
        %v1100 = vadd.f32 %v803, %v1099
        %v1101 = vpop.f32.mrb[0].mxu0
        %1102 = vmatprep.mubr.bf16.mxu0 0
        %1103 = vmatmul.mubr.bf16.gmra.mrb[0].mxu0 %v990
        %v1104 = vpop.f32.mrb[0].mxu0
        %v1105 = vadd.f32 %v808, %v1104
        %v1106 = vpop.f32.mrb[0].mxu0
        %v1107 = vpop.f32.mrb[0].mxu0
        %v1108 = vadd.f32 %v811, %v1107
        %v1109 = vpop.f32.mrb[0].mxu0
        %1110 = vmatprep.mubr.bf16.mxu0 0
        %1111 = vmatmul.mubr.bf16.gmra.mrb[0].mxu0 %v993
        %v1112 = vpop.f32.mrb[0].mxu0
        %v1113 = vadd.f32 %v816, %v1112
        %v1114 = vpop.f32.mrb[0].mxu0
        %v1115 = vpop.f32.mrb[0].mxu0
        %v1116 = vadd.f32 %v819, %v1115
        %v1117 = vpop.f32.mrb[0].mxu0
        %1118 = vmatprep.mubr.bf16.mxu0 0
        %1119 = vmatmul.mubr.bf16.gmra.mrb[0].mxu0 %v996
        %v1120 = vpop.f32.mrb[0].mxu0
        %v1121 = vadd.f32 %v824, %v1120
        %v1122 = vpop.f32.mrb[0].mxu0
        %v1123 = vpop.f32.mrb[0].mxu0
        %v1124 = vadd.f32 %v827, %v1123
        %v1125 = vpop.f32.mrb[0].mxu0
        %1126 = vmatprep.mubr.bf16.mxu0 0
        %1127 = vmatmul.mubr.bf16.gmra.mrb[0].mxu0 %v999
        %v1128 = vpop.f32.mrb[0].mxu0
        %v1129 = vadd.f32 %v832, %v1128
        %v1130 = vpop.f32.mrb[0].mxu0
        %v1131 = vpop.f32.mrb[0].mxu0
        %v1132 = vadd.f32 %v835, %v1131
        %v1133 = vpop.f32.mrb[0].mxu0
        %1134 = vmatprep.mubr.bf16.mxu0 0
        %1135 = vmatmul.mubr.bf16.gmra.mrb[0].mxu0 %v1002
        %v1136 = vpop.f32.mrb[0].mxu0
        %v1137 = vadd.f32 %v840, %v1136
        %v1138 = vpop.f32.mrb[0].mxu0
        %v1139 = vpop.f32.mrb[0].mxu0
        %v1140 = vadd.f32 %v843, %v1139
        %v1141 = vpop.f32.mrb[0].mxu0
        %1142 = vmatprep.mubr.bf16.mxu0 0
        %1143 = vmatmul.mubr.bf16.gmra.mrb[0].mxu0 %v1005
        %v1144 = vpop.f32.mrb[0].mxu0
        %v1145 = vadd.f32 %v848, %v1144
        %v1146 = vpop.f32.mrb[0].mxu0
        %v1147 = vpop.f32.mrb[0].mxu0
        %v1148 = vadd.f32 %v851, %v1147
        %v1149 = vpop.f32.mrb[0].mxu0
        %1150 = vmatprep.mubr.bf16.mxu0 0
        %1151 = vmatmul.mubr.bf16.gmra.mrb[0].mxu0 %v1008
        %v1152 = vpop.f32.mrb[0].mxu0
        %v1153 = vadd.f32 %v856, %v1152
        %v1154 = vpop.f32.mrb[0].mxu0
        %v1155 = vpop.f32.mrb[0].mxu0
        %v1156 = vadd.f32 %v859, %v1155
        %v1157 = vpop.f32.mrb[0].mxu0
        %1158 = vmatprep.mubr.bf16.mxu0 0
        %1159 = vmatmul.mubr.bf16.gmra.mrb[0].mxu0 %v1011
        %v1160 = vpop.f32.mrb[0].mxu0
        %v1161 = vadd.f32 %v864, %v1160
        %v1162 = vpop.f32.mrb[0].mxu0
        %v1163 = vpop.f32.mrb[0].mxu0
        %v1164 = vadd.f32 %v867, %v1163
        %v1165 = vpop.f32.mrb[0].mxu0
        %1166 = vmatprep.mubr.bf16.mxu0 0
        %1167 = vmatmul.mubr.bf16.gmra.mrb[0].mxu0 %v1014
        %v1168 = vpop.f32.mrb[0].mxu0
        %v1169 = vadd.f32 %v872, %v1168
        %v1170 = vpop.f32.mrb[0].mxu0
        %v1171 = vpop.f32.mrb[0].mxu0
        %v1172 = vadd.f32 %v875, %v1171
        %v1173 = vpop.f32.mrb[0].mxu0
        %1174 = vmatprep.mubr.bf16.mxu0 0
        %1175 = vmatmul.mubr.bf16.gmra.mrb[0].mxu0 %v1017
        %v1176 = vpop.f32.mrb[0].mxu0
        %v1177 = vadd.f32 %v880, %v1176
        %v1178 = vpop.f32.mrb[0].mxu0
        %v1179 = vpop.f32.mrb[0].mxu0
        %v1180 = vadd.f32 %v883, %v1179
        %v1181 = vpop.f32.mrb[0].mxu0
        %1182 = vdwg.mxu0
        %vm1199 = vcmask 1042432
        %vm1200 = vcmask 1046532
        %vm1201 = vmor %vm1199, %vm1200
        %v1202 = vrot.slane %v170, 5
        %v1203 = vrot.slane %v1202, 4
        %v1204 = vrot.slane %v171, 5
        %v1205 = vsel %vm1201, %v1203, %v1204
        %v1206 = vrot.slane %v1204, 4
        %v1207 = vrot.slane %v172, 5
        %v1208 = vsel %vm1201, %v1206, %v1207
        %v1209 = vrot.slane %v173, 5
        %v1210 = vrot.slane %v1209, 4
        %v1211 = vrot.slane %v174, 5
        %v1212 = vsel %vm1201, %v1210, %v1211
        %v1213 = vrot.slane %v1211, 4
        %v1214 = vrot.slane %v175, 5
        %v1215 = vsel %vm1201, %v1213, %v1214
        %v1216 = vrot.slane %v176, 5
        %v1217 = vrot.slane %v1216, 4
        %v1218 = vrot.slane %v177, 5
        %v1219 = vsel %vm1201, %v1217, %v1218
        %v1220 = vrot.slane %v1218, 4
        %v1221 = vrot.slane %v178, 5
        %v1222 = vsel %vm1201, %v1220, %v1221
        %v1223 = vrot.slane %v179, 5
        %v1224 = vrot.slane %v1223, 4
        %v1225 = vrot.slane %v180, 5
        %v1226 = vsel %vm1201, %v1224, %v1225
        %v1227 = vrot.slane %v1225, 4
        %v1228 = vrot.slane %v181, 5
        %v1229 = vsel %vm1201, %v1227, %v1228
        %v1230 = vrot.slane %v182, 5
        %v1231 = vrot.slane %v1230, 4
        %v1232 = vrot.slane %v183, 5
        %v1233 = vsel %vm1201, %v1231, %v1232
        %v1234 = vrot.slane %v1232, 4
        %v1235 = vrot.slane %v184, 5
        %v1236 = vsel %vm1201, %v1234, %v1235
        %v1237 = vrot.slane %v185, 5
        %v1238 = vrot.slane %v1237, 4
        %v1239 = vrot.slane %v186, 5
        %v1240 = vsel %vm1201, %v1238, %v1239
        %v1241 = vrot.slane %v1239, 4
        %v1242 = vrot.slane %v187, 5
        %v1243 = vsel %vm1201, %v1241, %v1242
        %v1244 = vrot.slane %v188, 5
        %v1245 = vrot.slane %v1244, 4
        %v1246 = vrot.slane %v189, 5
        %v1247 = vsel %vm1201, %v1245, %v1246
        %v1248 = vrot.slane %v1246, 4
        %v1249 = vrot.slane %v190, 5
        %v1250 = vsel %vm1201, %v1248, %v1249
        %v1251 = vrot.slane %v191, 5
        %v1252 = vrot.slane %v1251, 4
        %v1253 = vrot.slane %v192, 5
        %v1254 = vsel %vm1201, %v1252, %v1253
        %v1255 = vrot.slane %v1253, 4
        %v1256 = vrot.slane %v193, 5
        %v1257 = vsel %vm1201, %v1255, %v1256
        %v1258 = vrot.slane %v194, 5
        %v1259 = vrot.slane %v1258, 4
        %v1260 = vrot.slane %v195, 5
        %v1261 = vsel %vm1201, %v1259, %v1260
        %v1262 = vrot.slane %v1260, 4
        %v1263 = vrot.slane %v196, 5
        %v1264 = vsel %vm1201, %v1262, %v1263
        %v1265 = vrot.slane %v197, 5
        %v1266 = vrot.slane %v1265, 4
        %v1267 = vrot.slane %v198, 5
        %v1268 = vsel %vm1201, %v1266, %v1267
        %v1269 = vrot.slane %v1267, 4
        %v1270 = vrot.slane %v199, 5
        %v1271 = vsel %vm1201, %v1269, %v1270
        %v1272 = vrot.slane %v200, 5
        %v1273 = vrot.slane %v1272, 4
        %v1274 = vrot.slane %v201, 5
        %v1275 = vsel %vm1201, %v1273, %v1274
        %v1276 = vrot.slane %v1274, 4
        %v1277 = vrot.slane %v202, 5
        %v1278 = vsel %vm1201, %v1276, %v1277
        %v1279 = vrot.slane %v203, 5
        %v1280 = vrot.slane %v1279, 4
        %v1281 = vrot.slane %v204, 5
        %v1282 = vsel %vm1201, %v1280, %v1281
        %v1283 = vrot.slane %v1281, 4
        %v1284 = vrot.slane %v205, 5
        %v1285 = vsel %vm1201, %v1283, %v1284
        %v1286 = vrot.slane %v206, 5
        %v1287 = vrot.slane %v1286, 4
        %v1288 = vrot.slane %v207, 5
        %v1289 = vsel %vm1201, %v1287, %v1288
        %v1290 = vrot.slane %v1288, 4
        %v1291 = vrot.slane %v208, 5
        %v1292 = vsel %vm1201, %v1290, %v1291
        %v1293 = vrot.slane %v209, 5
        %v1294 = vrot.slane %v1293, 4
        %v1295 = vrot.slane %v210, 5
        %v1296 = vsel %vm1201, %v1294, %v1295
        %v1297 = vrot.slane %v1295, 4
        %v1298 = vrot.slane %v211, 5
        %v1299 = vsel %vm1201, %v1297, %v1298
        %v1300 = vrot.slane %v212, 5
        %v1301 = vrot.slane %v1300, 4
        %v1302 = vrot.slane %v213, 5
        %v1303 = vsel %vm1201, %v1301, %v1302
        %v1304 = vrot.slane %v1302, 4
        %v1305 = vrot.slane %v214, 5
        %v1306 = vsel %vm1201, %v1304, %v1305
        %v1307 = vrot.slane %v215, 5
        %v1308 = vrot.slane %v1307, 4
        %v1309 = vrot.slane %v216, 5
        %v1310 = vsel %vm1201, %v1308, %v1309
        %v1311 = vrot.slane %v1309, 4
        %v1312 = vrot.slane %v217, 5
        %v1313 = vsel %vm1201, %v1311, %v1312
        %s1314 = scalar_lea.vmem %s1, 16
        %v1315 = vld [vmem:[%s1314] sm:$0xf]
        %v1316 = vld [vmem:[%s1314 + $0x4] sm:$0x3]
        %v1317 = vunpack.c.l.b16 %v1205
        %v1318 = vunpack.c.l.b16 %v1208
        %v1319 = vunpack.c.l.b16 %v1212
        %v1320 = vunpack.c.l.b16 %v1215
        %v1321 = vunpack.c.l.b16 %v1219
        %v1322 = vunpack.c.l.b16 %v1222
        %v1323 = vunpack.c.l.b16 %v1226
        %v1324 = vunpack.c.l.b16 %v1229
        %v1325 = vunpack.c.l.b16 %v1233
        %v1326 = vunpack.c.l.b16 %v1236
        %v1327 = vunpack.c.l.b16 %v1240
        %v1328 = vunpack.c.l.b16 %v1243
        %v1329 = vunpack.c.l.b16 %v1247
        %v1330 = vunpack.c.l.b16 %v1250
        %v1331 = vunpack.c.l.b16 %v1254
        %v1332 = vunpack.c.l.b16 %v1257
        %v1333 = vunpack.c.l.b16 %v1261
        %v1334 = vunpack.c.l.b16 %v1264
        %v1335 = vunpack.c.l.b16 %v1268
        %v1336 = vunpack.c.l.b16 %v1271
        %v1337 = vunpack.c.l.b16 %v1275
        %v1338 = vunpack.c.l.b16 %v1278
        %v1339 = vunpack.c.l.b16 %v1282
        %v1340 = vunpack.c.l.b16 %v1285
        %v1341 = vunpack.c.l.b16 %v1289
        %v1342 = vunpack.c.l.b16 %v1292
        %v1343 = vunpack.c.l.b16 %v1296
        %v1344 = vunpack.c.l.b16 %v1299
        %v1345 = vunpack.c.l.b16 %v1303
        %v1346 = vunpack.c.l.b16 %v1306
        %v1347 = vunpack.c.l.b16 %v1310
        %v1348 = vunpack.c.l.b16 %v1313
        %v1349 = vpack.c.b16 %v1318, %v1317
        %v1350 = vpack.c.b16 %v1320, %v1319
        %v1351 = vpack.c.b16 %v1322, %v1321
        %v1352 = vpack.c.b16 %v1324, %v1323
        %v1353 = vpack.c.b16 %v1326, %v1325
        %v1354 = vpack.c.b16 %v1328, %v1327
        %v1355 = vpack.c.b16 %v1330, %v1329
        %v1356 = vpack.c.b16 %v1332, %v1331
        %v1357 = vpack.c.b16 %v1334, %v1333
        %v1358 = vpack.c.b16 %v1336, %v1335
        %v1359 = vpack.c.b16 %v1338, %v1337
        %v1360 = vpack.c.b16 %v1340, %v1339
        %v1361 = vpack.c.b16 %v1342, %v1341
        %v1362 = vpack.c.b16 %v1344, %v1343
        %v1363 = vpack.c.b16 %v1346, %v1345
        %v1364 = vpack.c.b16 %v1348, %v1347
        %v1367 = vunpack.c.l.b16 %v1315
        %v1368 = vunpack.c.l.b16 %v1316
        %v1369 = vpack.c.b16 %v1368, %v1367
        %v1371 = vsel %vm672, %v1349, 0
        %v1374 = vsel %vm672, %v1350, 0
        %v1377 = vsel %vm672, %v1351, 0
        %v1380 = vsel %vm672, %v1352, 0
        %v1383 = vsel %vm672, %v1353, 0
        %v1386 = vsel %vm672, %v1354, 0
        %v1389 = vsel %vm672, %v1355, 0
        %v1392 = vsel %vm672, %v1356, 0
        %v1395 = vsel %vm672, %v1357, 0
        %v1398 = vsel %vm672, %v1358, 0
        %v1401 = vsel %vm672, %v1359, 0
        %v1404 = vsel %vm672, %v1360, 0
        %v1407 = vsel %vm672, %v1361, 0
        %v1410 = vsel %vm672, %v1362, 0
        %v1413 = vsel %vm672, %v1363, 0
        %v1416 = vsel %vm672, %v1364, 0
        %v1419 = vsel %vm721, %v1369, 0
        %1421 = vmatprep.subr.bf16.mxu0 0
        %1422 = vmatpush1.bf16.msra.mxu0 %v1419
        %1423 = vmatprep.subr.bf16.mxu0 0
        %1424 = vmatpush1.bf16.msra.mxu0 0
        %1425 = vmatprep.subr.bf16.mxu0 0
        %1426 = vmatpush1.bf16.msra.mxu0 0
        %1427 = vmatprep.subr.bf16.mxu0 0
        %1428 = vmatpush1.bf16.msra.mxu0 0
        %1429 = vmatprep.subr.bf16.mxu0 0
        %1430 = vmatpush1.bf16.msra.mxu0 0
        %1431 = vmatprep.subr.bf16.mxu0 0
        %1432 = vmatpush1.bf16.msra.mxu0 0
        %1433 = vmatprep.subr.bf16.mxu0 0
        %1434 = vmatpush1.bf16.msra.mxu0 0
        %1435 = vmatprep.subr.bf16.mxu0 0
        %1436 = vmatpush1.bf16.msra.mxu0 0
        %1437 = vmatprep.subr.bf16.mxu0 0
        %1438 = vmatpush1.bf16.msra.mxu0 0
        %1439 = vmatprep.subr.bf16.mxu0 0
        %1440 = vmatpush1.bf16.msra.mxu0 0
        %1441 = vmatprep.subr.bf16.mxu0 0
        %1442 = vmatpush1.bf16.msra.mxu0 0
        %1443 = vmatprep.subr.bf16.mxu0 0
        %1444 = vmatpush1.bf16.msra.mxu0 0
        %1445 = vmatprep.subr.bf16.mxu0 0
        %1446 = vmatpush1.bf16.msra.mxu0 0
        %1447 = vmatprep.subr.bf16.mxu0 0
        %1448 = vmatpush1.bf16.msra.mxu0 0
        %1449 = vmatprep.subr.bf16.mxu0 0
        %1450 = vmatpush1.bf16.msra.mxu0 0
        %1451 = vmatprep.subr.bf16.mxu0 0
        %1452 = vmatpush1.bf16.msra.mxu0 0
        %1453 = vmatprep.mubr.bf16.mxu0 0
        %1454 = vmatmul.mubr.bf16.gmra.mrb[0].mxu0 %v1371
        %v1455 = vpop.f32.mrb[0].mxu0
        %v1456 = vadd.f32 0.0, %v1455
        %v1457 = vpop.f32.mrb[0].mxu0
        %v1458 = vpop.f32.mrb[0].mxu0
        %v1459 = vadd.f32 0.0, %v1458
        %v1460 = vpop.f32.mrb[0].mxu0
        %1461 = vmatprep.mubr.bf16.mxu0 0
        %1462 = vmatmul.mubr.bf16.gmra.mrb[0].mxu0 %v1374
        %v1463 = vpop.f32.mrb[0].mxu0
        %v1464 = vadd.f32 0.0, %v1463
        %v1465 = vpop.f32.mrb[0].mxu0
        %v1466 = vpop.f32.mrb[0].mxu0
        %v1467 = vadd.f32 0.0, %v1466
        %v1468 = vpop.f32.mrb[0].mxu0
        %1469 = vmatprep.mubr.bf16.mxu0 0
        %1470 = vmatmul.mubr.bf16.gmra.mrb[0].mxu0 %v1377
        %v1471 = vpop.f32.mrb[0].mxu0
        %v1472 = vadd.f32 0.0, %v1471
        %v1473 = vpop.f32.mrb[0].mxu0
        %v1474 = vpop.f32.mrb[0].mxu0
        %v1475 = vadd.f32 0.0, %v1474
        %v1476 = vpop.f32.mrb[0].mxu0
        %1477 = vmatprep.mubr.bf16.mxu0 0
        %1478 = vmatmul.mubr.bf16.gmra.mrb[0].mxu0 %v1380
        %v1479 = vpop.f32.mrb[0].mxu0
        %v1480 = vadd.f32 0.0, %v1479
        %v1481 = vpop.f32.mrb[0].mxu0
        %v1482 = vpop.f32.mrb[0].mxu0
        %v1483 = vadd.f32 0.0, %v1482
        %v1484 = vpop.f32.mrb[0].mxu0
        %1485 = vmatprep.mubr.bf16.mxu0 0
        %1486 = vmatmul.mubr.bf16.gmra.mrb[0].mxu0 %v1383
        %v1487 = vpop.f32.mrb[0].mxu0
        %v1488 = vadd.f32 0.0, %v1487
        %v1489 = vpop.f32.mrb[0].mxu0
        %v1490 = vpop.f32.mrb[0].mxu0
        %v1491 = vadd.f32 0.0, %v1490
        %v1492 = vpop.f32.mrb[0].mxu0
        %1493 = vmatprep.mubr.bf16.mxu0 0
        %1494 = vmatmul.mubr.bf16.gmra.mrb[0].mxu0 %v1386
        %v1495 = vpop.f32.mrb[0].mxu0
        %v1496 = vadd.f32 0.0, %v1495
        %v1497 = vpop.f32.mrb[0].mxu0
        %v1498 = vpop.f32.mrb[0].mxu0
        %v1499 = vadd.f32 0.0, %v1498
        %v1500 = vpop.f32.mrb[0].mxu0
        %1501 = vmatprep.mubr.bf16.mxu0 0
        %1502 = vmatmul.mubr.bf16.gmra.mrb[0].mxu0 %v1389
        %v1503 = vpop.f32.mrb[0].mxu0
        %v1504 = vadd.f32 0.0, %v1503
        %v1505 = vpop.f32.mrb[0].mxu0
        %v1506 = vpop.f32.mrb[0].mxu0
        %v1507 = vadd.f32 0.0, %v1506
        %v1508 = vpop.f32.mrb[0].mxu0
        %1509 = vmatprep.mubr.bf16.mxu0 0
        %1510 = vmatmul.mubr.bf16.gmra.mrb[0].mxu0 %v1392
        %v1511 = vpop.f32.mrb[0].mxu0
        %v1512 = vadd.f32 0.0, %v1511
        %v1513 = vpop.f32.mrb[0].mxu0
        %v1514 = vpop.f32.mrb[0].mxu0
        %v1515 = vadd.f32 0.0, %v1514
        %v1516 = vpop.f32.mrb[0].mxu0
        %1517 = vmatprep.mubr.bf16.mxu0 0
        %1518 = vmatmul.mubr.bf16.gmra.mrb[0].mxu0 %v1395
        %v1519 = vpop.f32.mrb[0].mxu0
        %v1520 = vadd.f32 0.0, %v1519
        %v1521 = vpop.f32.mrb[0].mxu0
        %v1522 = vpop.f32.mrb[0].mxu0
        %v1523 = vadd.f32 0.0, %v1522
        %v1524 = vpop.f32.mrb[0].mxu0
        %1525 = vmatprep.mubr.bf16.mxu0 0
        %1526 = vmatmul.mubr.bf16.gmra.mrb[0].mxu0 %v1398
        %v1527 = vpop.f32.mrb[0].mxu0
        %v1528 = vadd.f32 0.0, %v1527
        %v1529 = vpop.f32.mrb[0].mxu0
        %v1530 = vpop.f32.mrb[0].mxu0
        %v1531 = vadd.f32 0.0, %v1530
        %v1532 = vpop.f32.mrb[0].mxu0
        %1533 = vmatprep.mubr.bf16.mxu0 0
        %1534 = vmatmul.mubr.bf16.gmra.mrb[0].mxu0 %v1401
        %v1535 = vpop.f32.mrb[0].mxu0
        %v1536 = vadd.f32 0.0, %v1535
        %v1537 = vpop.f32.mrb[0].mxu0
        %v1538 = vpop.f32.mrb[0].mxu0
        %v1539 = vadd.f32 0.0, %v1538
        %v1540 = vpop.f32.mrb[0].mxu0
        %1541 = vmatprep.mubr.bf16.mxu0 0
        %1542 = vmatmul.mubr.bf16.gmra.mrb[0].mxu0 %v1404
        %v1543 = vpop.f32.mrb[0].mxu0
        %v1544 = vadd.f32 0.0, %v1543
        %v1545 = vpop.f32.mrb[0].mxu0
        %v1546 = vpop.f32.mrb[0].mxu0
        %v1547 = vadd.f32 0.0, %v1546
        %v1548 = vpop.f32.mrb[0].mxu0
        %1549 = vmatprep.mubr.bf16.mxu0 0
        %1550 = vmatmul.mubr.bf16.gmra.mrb[0].mxu0 %v1407
        %v1551 = vpop.f32.mrb[0].mxu0
        %v1552 = vadd.f32 0.0, %v1551
        %v1553 = vpop.f32.mrb[0].mxu0
        %v1554 = vpop.f32.mrb[0].mxu0
        %v1555 = vadd.f32 0.0, %v1554
        %v1556 = vpop.f32.mrb[0].mxu0
        %1557 = vmatprep.mubr.bf16.mxu0 0
        %1558 = vmatmul.mubr.bf16.gmra.mrb[0].mxu0 %v1410
        %v1559 = vpop.f32.mrb[0].mxu0
        %v1560 = vadd.f32 0.0, %v1559
        %v1561 = vpop.f32.mrb[0].mxu0
        %v1562 = vpop.f32.mrb[0].mxu0
        %v1563 = vadd.f32 0.0, %v1562
        %v1564 = vpop.f32.mrb[0].mxu0
        %1565 = vmatprep.mubr.bf16.mxu0 0
        %1566 = vmatmul.mubr.bf16.gmra.mrb[0].mxu0 %v1413
        %v1567 = vpop.f32.mrb[0].mxu0
        %v1568 = vadd.f32 0.0, %v1567
        %v1569 = vpop.f32.mrb[0].mxu0
        %v1570 = vpop.f32.mrb[0].mxu0
        %v1571 = vadd.f32 0.0, %v1570
        %v1572 = vpop.f32.mrb[0].mxu0
        %1573 = vmatprep.mubr.bf16.mxu0 0
        %1574 = vmatmul.mubr.bf16.gmra.mrb[0].mxu0 %v1416
        %v1575 = vpop.f32.mrb[0].mxu0
        %v1576 = vadd.f32 0.0, %v1575
        %v1577 = vpop.f32.mrb[0].mxu0
        %v1578 = vpop.f32.mrb[0].mxu0
        %v1579 = vadd.f32 0.0, %v1578
        %v1580 = vpop.f32.mrb[0].mxu0
        %1581 = vdwg.mxu0
        %v1582 = vadd.f32 %v1057, %v1456
        %v1583 = vadd.f32 %v1060, %v1459
        %v1584 = vadd.f32 %v1065, %v1464
        %v1585 = vadd.f32 %v1068, %v1467
        %v1586 = vadd.f32 %v1073, %v1472
        %v1587 = vadd.f32 %v1076, %v1475
        %v1588 = vadd.f32 %v1081, %v1480
        %v1589 = vadd.f32 %v1084, %v1483
        %v1590 = vadd.f32 %v1089, %v1488
        %v1591 = vadd.f32 %v1092, %v1491
        %v1592 = vadd.f32 %v1097, %v1496
        %v1593 = vadd.f32 %v1100, %v1499
        %v1594 = vadd.f32 %v1105, %v1504
        %v1595 = vadd.f32 %v1108, %v1507
        %v1596 = vadd.f32 %v1113, %v1512
        %v1597 = vadd.f32 %v1116, %v1515
        %v1598 = vadd.f32 %v1121, %v1520
        %v1599 = vadd.f32 %v1124, %v1523
        %v1600 = vadd.f32 %v1129, %v1528
        %v1601 = vadd.f32 %v1132, %v1531
        %v1602 = vadd.f32 %v1137, %v1536
        %v1603 = vadd.f32 %v1140, %v1539
        %v1604 = vadd.f32 %v1145, %v1544
        %v1605 = vadd.f32 %v1148, %v1547
        %v1606 = vadd.f32 %v1153, %v1552
        %v1607 = vadd.f32 %v1156, %v1555
        %v1608 = vadd.f32 %v1161, %v1560
        %v1609 = vadd.f32 %v1164, %v1563
        %v1610 = vadd.f32 %v1169, %v1568
        %v1611 = vadd.f32 %v1172, %v1571
        %v1612 = vadd.f32 %v1177, %v1576
        %v1613 = vadd.f32 %v1180, %v1579
        %vm1614 = vsmask.f32 2304
        %vm1615 = vsmask.f32 6416
        %vm1616 = vmor %vm1614, %vm1615
        %v1617 = vrot.slane %v233, 5
        %v1618 = vrot.slane %v236, 6
        %v1619 = vor.u32 %v1617, %v1618
        %v1620 = vrot.slane %v1619, 4
        %v1621 = vrot.slane %v246, 5
        %v1622 = vrot.slane %v242, 6
        %v1623 = vor.u32 %v1621, %v1622
        %v1624 = vsel %vm1616, %v1620, %v1623
        %v1625 = vrot.slane %v1623, 4
        %v1626 = vshrl.u32 %v172, 16
        %v1628 = vrot.slane %v1626, 5
        %v1629 = vrot.slane %v252, 6
        %v1630 = vor.u32 %v1628, %v1629
        %v1631 = vsel %vm1616, %v1625, %v1630
        %v1632 = vrot.slane %v257, 5
        %v1633 = vrot.slane %v260, 6
        %v1634 = vor.u32 %v1632, %v1633
        %v1635 = vrot.slane %v1634, 4
        %v1636 = vrot.slane %v270, 5
        %v1637 = vrot.slane %v266, 6
        %v1638 = vor.u32 %v1636, %v1637
        %v1639 = vsel %vm1616, %v1635, %v1638
        %v1640 = vrot.slane %v1638, 4
        %v1641 = vshrl.u32 %v175, 16
        %v1643 = vrot.slane %v1641, 5
        %v1644 = vrot.slane %v276, 6
        %v1645 = vor.u32 %v1643, %v1644
        %v1646 = vsel %vm1616, %v1640, %v1645
        %v1647 = vrot.slane %v281, 5
        %v1648 = vrot.slane %v284, 6
        %v1649 = vor.u32 %v1647, %v1648
        %v1650 = vrot.slane %v1649, 4
        %v1651 = vrot.slane %v294, 5
        %v1652 = vrot.slane %v290, 6
        %v1653 = vor.u32 %v1651, %v1652
        %v1654 = vsel %vm1616, %v1650, %v1653
        %v1655 = vrot.slane %v1653, 4
        %v1656 = vshrl.u32 %v178, 16
        %v1658 = vrot.slane %v1656, 5
        %v1659 = vrot.slane %v300, 6
        %v1660 = vor.u32 %v1658, %v1659
        %v1661 = vsel %vm1616, %v1655, %v1660
        %v1662 = vrot.slane %v305, 5
        %v1663 = vrot.slane %v308, 6
        %v1664 = vor.u32 %v1662, %v1663
        %v1665 = vrot.slane %v1664, 4
        %v1666 = vrot.slane %v318, 5
        %v1667 = vrot.slane %v314, 6
        %v1668 = vor.u32 %v1666, %v1667
        %v1669 = vsel %vm1616, %v1665, %v1668
        %v1670 = vrot.slane %v1668, 4
        %v1671 = vshrl.u32 %v181, 16
        %v1673 = vrot.slane %v1671, 5
        %v1674 = vrot.slane %v324, 6
        %v1675 = vor.u32 %v1673, %v1674
        %v1676 = vsel %vm1616, %v1670, %v1675
        %v1677 = vrot.slane %v329, 5
        %v1678 = vrot.slane %v332, 6
        %v1679 = vor.u32 %v1677, %v1678
        %v1680 = vrot.slane %v1679, 4
        %v1681 = vrot.slane %v342, 5
        %v1682 = vrot.slane %v338, 6
        %v1683 = vor.u32 %v1681, %v1682
        %v1684 = vsel %vm1616, %v1680, %v1683
        %v1685 = vrot.slane %v1683, 4
        %v1686 = vshrl.u32 %v184, 16
        %v1688 = vrot.slane %v1686, 5
        %v1689 = vrot.slane %v348, 6
        %v1690 = vor.u32 %v1688, %v1689
        %v1691 = vsel %vm1616, %v1685, %v1690
        %v1692 = vrot.slane %v353, 5
        %v1693 = vrot.slane %v356, 6
        %v1694 = vor.u32 %v1692, %v1693
        %v1695 = vrot.slane %v1694, 4
        %v1696 = vrot.slane %v366, 5
        %v1697 = vrot.slane %v362, 6
        %v1698 = vor.u32 %v1696, %v1697
        %v1699 = vsel %vm1616, %v1695, %v1698
        %v1700 = vrot.slane %v1698, 4
        %v1701 = vshrl.u32 %v187, 16
        %v1703 = vrot.slane %v1701, 5
        %v1704 = vrot.slane %v372, 6
        %v1705 = vor.u32 %v1703, %v1704
        %v1706 = vsel %vm1616, %v1700, %v1705
        %v1707 = vrot.slane %v377, 5
        %v1708 = vrot.slane %v380, 6
        %v1709 = vor.u32 %v1707, %v1708
        %v1710 = vrot.slane %v1709, 4
        %v1711 = vrot.slane %v390, 5
        %v1712 = vrot.slane %v386, 6
        %v1713 = vor.u32 %v1711, %v1712
        %v1714 = vsel %vm1616, %v1710, %v1713
        %v1715 = vrot.slane %v1713, 4
        %v1716 = vshrl.u32 %v190, 16
        %v1718 = vrot.slane %v1716, 5
        %v1719 = vrot.slane %v396, 6
        %v1720 = vor.u32 %v1718, %v1719
        %v1721 = vsel %vm1616, %v1715, %v1720
        %v1722 = vrot.slane %v401, 5
        %v1723 = vrot.slane %v404, 6
        %v1724 = vor.u32 %v1722, %v1723
        %v1725 = vrot.slane %v1724, 4
        %v1726 = vrot.slane %v414, 5
        %v1727 = vrot.slane %v410, 6
        %v1728 = vor.u32 %v1726, %v1727
        %v1729 = vsel %vm1616, %v1725, %v1728
        %v1730 = vrot.slane %v1728, 4
        %v1731 = vshrl.u32 %v193, 16
        %v1733 = vrot.slane %v1731, 5
        %v1734 = vrot.slane %v420, 6
        %v1735 = vor.u32 %v1733, %v1734
        %v1736 = vsel %vm1616, %v1730, %v1735
        %v1737 = vrot.slane %v425, 5
        %v1738 = vrot.slane %v428, 6
        %v1739 = vor.u32 %v1737, %v1738
        %v1740 = vrot.slane %v1739, 4
        %v1741 = vrot.slane %v438, 5
        %v1742 = vrot.slane %v434, 6
        %v1743 = vor.u32 %v1741, %v1742
        %v1744 = vsel %vm1616, %v1740, %v1743
        %v1745 = vrot.slane %v1743, 4
        %v1746 = vshrl.u32 %v196, 16
        %v1748 = vrot.slane %v1746, 5
        %v1749 = vrot.slane %v444, 6
        %v1750 = vor.u32 %v1748, %v1749
        %v1751 = vsel %vm1616, %v1745, %v1750
        %v1752 = vrot.slane %v449, 5
        %v1753 = vrot.slane %v452, 6
        %v1754 = vor.u32 %v1752, %v1753
        %v1755 = vrot.slane %v1754, 4
        %v1756 = vrot.slane %v462, 5
        %v1757 = vrot.slane %v458, 6
        %v1758 = vor.u32 %v1756, %v1757
        %v1759 = vsel %vm1616, %v1755, %v1758
        %v1760 = vrot.slane %v1758, 4
        %v1761 = vshrl.u32 %v199, 16
        %v1763 = vrot.slane %v1761, 5
        %v1764 = vrot.slane %v468, 6
        %v1765 = vor.u32 %v1763, %v1764
        %v1766 = vsel %vm1616, %v1760, %v1765
        %v1767 = vrot.slane %v473, 5
        %v1768 = vrot.slane %v476, 6
        %v1769 = vor.u32 %v1767, %v1768
        %v1770 = vrot.slane %v1769, 4
        %v1771 = vrot.slane %v486, 5
        %v1772 = vrot.slane %v482, 6
        %v1773 = vor.u32 %v1771, %v1772
        %v1774 = vsel %vm1616, %v1770, %v1773
        %v1775 = vrot.slane %v1773, 4
        %v1776 = vshrl.u32 %v202, 16
        %v1778 = vrot.slane %v1776, 5
        %v1779 = vrot.slane %v492, 6
        %v1780 = vor.u32 %v1778, %v1779
        %v1781 = vsel %vm1616, %v1775, %v1780
        %v1782 = vrot.slane %v497, 5
        %v1783 = vrot.slane %v500, 6
        %v1784 = vor.u32 %v1782, %v1783
        %v1785 = vrot.slane %v1784, 4
        %v1786 = vrot.slane %v510, 5
        %v1787 = vrot.slane %v506, 6
        %v1788 = vor.u32 %v1786, %v1787
        %v1789 = vsel %vm1616, %v1785, %v1788
        %v1790 = vrot.slane %v1788, 4
        %v1791 = vshrl.u32 %v205, 16
        %v1793 = vrot.slane %v1791, 5
        %v1794 = vrot.slane %v516, 6
        %v1795 = vor.u32 %v1793, %v1794
        %v1796 = vsel %vm1616, %v1790, %v1795
        %v1797 = vrot.slane %v521, 5
        %v1798 = vrot.slane %v524, 6
        %v1799 = vor.u32 %v1797, %v1798
        %v1800 = vrot.slane %v1799, 4
        %v1801 = vrot.slane %v534, 5
        %v1802 = vrot.slane %v530, 6
        %v1803 = vor.u32 %v1801, %v1802
        %v1804 = vsel %vm1616, %v1800, %v1803
        %v1805 = vrot.slane %v1803, 4
        %v1806 = vshrl.u32 %v208, 16
        %v1808 = vrot.slane %v1806, 5
        %v1809 = vrot.slane %v540, 6
        %v1810 = vor.u32 %v1808, %v1809
        %v1811 = vsel %vm1616, %v1805, %v1810
        %v1812 = vrot.slane %v545, 5
        %v1813 = vrot.slane %v548, 6
        %v1814 = vor.u32 %v1812, %v1813
        %v1815 = vrot.slane %v1814, 4
        %v1816 = vrot.slane %v558, 5
        %v1817 = vrot.slane %v554, 6
        %v1818 = vor.u32 %v1816, %v1817
        %v1819 = vsel %vm1616, %v1815, %v1818
        %v1820 = vrot.slane %v1818, 4
        %v1821 = vshrl.u32 %v211, 16
        %v1823 = vrot.slane %v1821, 5
        %v1824 = vrot.slane %v564, 6
        %v1825 = vor.u32 %v1823, %v1824
        %v1826 = vsel %vm1616, %v1820, %v1825
        %v1827 = vrot.slane %v569, 5
        %v1828 = vrot.slane %v572, 6
        %v1829 = vor.u32 %v1827, %v1828
        %v1830 = vrot.slane %v1829, 4
        %v1831 = vrot.slane %v582, 5
        %v1832 = vrot.slane %v578, 6
        %v1833 = vor.u32 %v1831, %v1832
        %v1834 = vsel %vm1616, %v1830, %v1833
        %v1835 = vrot.slane %v1833, 4
        %v1836 = vshrl.u32 %v214, 16
        %v1838 = vrot.slane %v1836, 5
        %v1839 = vrot.slane %v588, 6
        %v1840 = vor.u32 %v1838, %v1839
        %v1841 = vsel %vm1616, %v1835, %v1840
        %v1842 = vrot.slane %v593, 5
        %v1843 = vrot.slane %v596, 6
        %v1844 = vor.u32 %v1842, %v1843
        %v1845 = vrot.slane %v1844, 4
        %v1846 = vrot.slane %v606, 5
        %v1847 = vrot.slane %v602, 6
        %v1848 = vor.u32 %v1846, %v1847
        %v1849 = vsel %vm1616, %v1845, %v1848
        %v1850 = vrot.slane %v1848, 4
        %v1851 = vshrl.u32 %v217, 16
        %v1853 = vrot.slane %v1851, 5
        %v1854 = vrot.slane %v612, 6
        %v1855 = vor.u32 %v1853, %v1854
        %v1856 = vsel %vm1616, %v1850, %v1855
        %s1857 = scalar_lea.vmem %s1, 24
        %v1858 = vld [vmem:[%s1857] sm:$0xf]
        %v1859 = vld [vmem:[%s1857 + $0x4] sm:$0x3]
        %v1860 = vunpack.c.l.b16 %v1624
        %v1861 = vunpack.c.l.b16 %v1631
        %v1862 = vunpack.c.l.b16 %v1639
        %v1863 = vunpack.c.l.b16 %v1646
        %v1864 = vunpack.c.l.b16 %v1654
        %v1865 = vunpack.c.l.b16 %v1661
        %v1866 = vunpack.c.l.b16 %v1669
        %v1867 = vunpack.c.l.b16 %v1676
        %v1868 = vunpack.c.l.b16 %v1684
        %v1869 = vunpack.c.l.b16 %v1691
        %v1870 = vunpack.c.l.b16 %v1699
        %v1871 = vunpack.c.l.b16 %v1706
        %v1872 = vunpack.c.l.b16 %v1714
        %v1873 = vunpack.c.l.b16 %v1721
        %v1874 = vunpack.c.l.b16 %v1729
        %v1875 = vunpack.c.l.b16 %v1736
        %v1876 = vunpack.c.l.b16 %v1744
        %v1877 = vunpack.c.l.b16 %v1751
        %v1878 = vunpack.c.l.b16 %v1759
        %v1879 = vunpack.c.l.b16 %v1766
        %v1880 = vunpack.c.l.b16 %v1774
        %v1881 = vunpack.c.l.b16 %v1781
        %v1882 = vunpack.c.l.b16 %v1789
        %v1883 = vunpack.c.l.b16 %v1796
        %v1884 = vunpack.c.l.b16 %v1804
        %v1885 = vunpack.c.l.b16 %v1811
        %v1886 = vunpack.c.l.b16 %v1819
        %v1887 = vunpack.c.l.b16 %v1826
        %v1888 = vunpack.c.l.b16 %v1834
        %v1889 = vunpack.c.l.b16 %v1841
        %v1890 = vunpack.c.l.b16 %v1849
        %v1891 = vunpack.c.l.b16 %v1856
        %v1892 = vpack.c.b16 %v1861, %v1860
        %v1893 = vpack.c.b16 %v1863, %v1862
        %v1894 = vpack.c.b16 %v1865, %v1864
        %v1895 = vpack.c.b16 %v1867, %v1866
        %v1896 = vpack.c.b16 %v1869, %v1868
        %v1897 = vpack.c.b16 %v1871, %v1870
        %v1898 = vpack.c.b16 %v1873, %v1872
        %v1899 = vpack.c.b16 %v1875, %v1874
        %v1900 = vpack.c.b16 %v1877, %v1876
        %v1901 = vpack.c.b16 %v1879, %v1878
        %v1902 = vpack.c.b16 %v1881, %v1880
        %v1903 = vpack.c.b16 %v1883, %v1882
        %v1904 = vpack.c.b16 %v1885, %v1884
        %v1905 = vpack.c.b16 %v1887, %v1886
        %v1906 = vpack.c.b16 %v1889, %v1888
        %v1907 = vpack.c.b16 %v1891, %v1890
        %v1910 = vunpack.c.l.b16 %v1858
        %v1911 = vunpack.c.l.b16 %v1859
        %v1912 = vpack.c.b16 %v1911, %v1910
        %v1914 = vsel %vm672, %v1892, 0
        %v1917 = vsel %vm672, %v1893, 0
        %v1920 = vsel %vm672, %v1894, 0
        %v1923 = vsel %vm672, %v1895, 0
        %v1926 = vsel %vm672, %v1896, 0
        %v1929 = vsel %vm672, %v1897, 0
        %v1932 = vsel %vm672, %v1898, 0
        %v1935 = vsel %vm672, %v1899, 0
        %v1938 = vsel %vm672, %v1900, 0
        %v1941 = vsel %vm672, %v1901, 0
        %v1944 = vsel %vm672, %v1902, 0
        %v1947 = vsel %vm672, %v1903, 0
        %v1950 = vsel %vm672, %v1904, 0
        %v1953 = vsel %vm672, %v1905, 0
        %v1956 = vsel %vm672, %v1906, 0
        %v1959 = vsel %vm672, %v1907, 0
        %v1962 = vsel %vm721, %v1912, 0
        %1964 = vmatprep.subr.bf16.mxu0 0
        %1965 = vmatpush1.bf16.msra.mxu0 %v1962
        %1966 = vmatprep.subr.bf16.mxu0 0
        %1967 = vmatpush1.bf16.msra.mxu0 0
        %1968 = vmatprep.subr.bf16.mxu0 0
        %1969 = vmatpush1.bf16.msra.mxu0 0
        %1970 = vmatprep.subr.bf16.mxu0 0
        %1971 = vmatpush1.bf16.msra.mxu0 0
        %1972 = vmatprep.subr.bf16.mxu0 0
        %1973 = vmatpush1.bf16.msra.mxu0 0
        %1974 = vmatprep.subr.bf16.mxu0 0
        %1975 = vmatpush1.bf16.msra.mxu0 0
        %1976 = vmatprep.subr.bf16.mxu0 0
        %1977 = vmatpush1.bf16.msra.mxu0 0
        %1978 = vmatprep.subr.bf16.mxu0 0
        %1979 = vmatpush1.bf16.msra.mxu0 0
        %1980 = vmatprep.subr.bf16.mxu0 0
        %1981 = vmatpush1.bf16.msra.mxu0 0
        %1982 = vmatprep.subr.bf16.mxu0 0
        %1983 = vmatpush1.bf16.msra.mxu0 0
        %1984 = vmatprep.subr.bf16.mxu0 0
        %1985 = vmatpush1.bf16.msra.mxu0 0
        %1986 = vmatprep.subr.bf16.mxu0 0
        %1987 = vmatpush1.bf16.msra.mxu0 0
        %1988 = vmatprep.subr.bf16.mxu0 0
        %1989 = vmatpush1.bf16.msra.mxu0 0
        %1990 = vmatprep.subr.bf16.mxu0 0
        %1991 = vmatpush1.bf16.msra.mxu0 0
        %1992 = vmatprep.subr.bf16.mxu0 0
        %1993 = vmatpush1.bf16.msra.mxu0 0
        %1994 = vmatprep.subr.bf16.mxu0 0
        %1995 = vmatpush1.bf16.msra.mxu0 0
        %1996 = vmatprep.mubr.bf16.mxu0 0
        %1997 = vmatmul.mubr.bf16.gmra.mrb[0].mxu0 %v1914
        %v1998 = vpop.f32.mrb[0].mxu0
        %v1999 = vadd.f32 0.0, %v1998
        %v2000 = vpop.f32.mrb[0].mxu0
        %v2001 = vpop.f32.mrb[0].mxu0
        %v2002 = vadd.f32 0.0, %v2001
        %v2003 = vpop.f32.mrb[0].mxu0
        %2004 = vmatprep.mubr.bf16.mxu0 0
        %2005 = vmatmul.mubr.bf16.gmra.mrb[0].mxu0 %v1917
        %v2006 = vpop.f32.mrb[0].mxu0
        %v2007 = vadd.f32 0.0, %v2006
        %v2008 = vpop.f32.mrb[0].mxu0
        %v2009 = vpop.f32.mrb[0].mxu0
        %v2010 = vadd.f32 0.0, %v2009
        %v2011 = vpop.f32.mrb[0].mxu0
        %2012 = vmatprep.mubr.bf16.mxu0 0
        %2013 = vmatmul.mubr.bf16.gmra.mrb[0].mxu0 %v1920
        %v2014 = vpop.f32.mrb[0].mxu0
        %v2015 = vadd.f32 0.0, %v2014
        %v2016 = vpop.f32.mrb[0].mxu0
        %v2017 = vpop.f32.mrb[0].mxu0
        %v2018 = vadd.f32 0.0, %v2017
        %v2019 = vpop.f32.mrb[0].mxu0
        %2020 = vmatprep.mubr.bf16.mxu0 0
        %2021 = vmatmul.mubr.bf16.gmra.mrb[0].mxu0 %v1923
        %v2022 = vpop.f32.mrb[0].mxu0
        %v2023 = vadd.f32 0.0, %v2022
        %v2024 = vpop.f32.mrb[0].mxu0
        %v2025 = vpop.f32.mrb[0].mxu0
        %v2026 = vadd.f32 0.0, %v2025
        %v2027 = vpop.f32.mrb[0].mxu0
        %2028 = vmatprep.mubr.bf16.mxu0 0
        %2029 = vmatmul.mubr.bf16.gmra.mrb[0].mxu0 %v1926
        %v2030 = vpop.f32.mrb[0].mxu0
        %v2031 = vadd.f32 0.0, %v2030
        %v2032 = vpop.f32.mrb[0].mxu0
        %v2033 = vpop.f32.mrb[0].mxu0
        %v2034 = vadd.f32 0.0, %v2033
        %v2035 = vpop.f32.mrb[0].mxu0
        %2036 = vmatprep.mubr.bf16.mxu0 0
        %2037 = vmatmul.mubr.bf16.gmra.mrb[0].mxu0 %v1929
        %v2038 = vpop.f32.mrb[0].mxu0
        %v2039 = vadd.f32 0.0, %v2038
        %v2040 = vpop.f32.mrb[0].mxu0
        %v2041 = vpop.f32.mrb[0].mxu0
        %v2042 = vadd.f32 0.0, %v2041
        %v2043 = vpop.f32.mrb[0].mxu0
        %2044 = vmatprep.mubr.bf16.mxu0 0
        %2045 = vmatmul.mubr.bf16.gmra.mrb[0].mxu0 %v1932
        %v2046 = vpop.f32.mrb[0].mxu0
        %v2047 = vadd.f32 0.0, %v2046
        %v2048 = vpop.f32.mrb[0].mxu0
        %v2049 = vpop.f32.mrb[0].mxu0
        %v2050 = vadd.f32 0.0, %v2049
        %v2051 = vpop.f32.mrb[0].mxu0
        %2052 = vmatprep.mubr.bf16.mxu0 0
        %2053 = vmatmul.mubr.bf16.gmra.mrb[0].mxu0 %v1935
        %v2054 = vpop.f32.mrb[0].mxu0
        %v2055 = vadd.f32 0.0, %v2054
        %v2056 = vpop.f32.mrb[0].mxu0
        %v2057 = vpop.f32.mrb[0].mxu0
        %v2058 = vadd.f32 0.0, %v2057
        %v2059 = vpop.f32.mrb[0].mxu0
        %2060 = vmatprep.mubr.bf16.mxu0 0
        %2061 = vmatmul.mubr.bf16.gmra.mrb[0].mxu0 %v1938
        %v2062 = vpop.f32.mrb[0].mxu0
        %v2063 = vadd.f32 0.0, %v2062
        %v2064 = vpop.f32.mrb[0].mxu0
        %v2065 = vpop.f32.mrb[0].mxu0
        %v2066 = vadd.f32 0.0, %v2065
        %v2067 = vpop.f32.mrb[0].mxu0
        %2068 = vmatprep.mubr.bf16.mxu0 0
        %2069 = vmatmul.mubr.bf16.gmra.mrb[0].mxu0 %v1941
        %v2070 = vpop.f32.mrb[0].mxu0
        %v2071 = vadd.f32 0.0, %v2070
        %v2072 = vpop.f32.mrb[0].mxu0
        %v2073 = vpop.f32.mrb[0].mxu0
        %v2074 = vadd.f32 0.0, %v2073
        %v2075 = vpop.f32.mrb[0].mxu0
        %2076 = vmatprep.mubr.bf16.mxu0 0
        %2077 = vmatmul.mubr.bf16.gmra.mrb[0].mxu0 %v1944
        %v2078 = vpop.f32.mrb[0].mxu0
        %v2079 = vadd.f32 0.0, %v2078
        %v2080 = vpop.f32.mrb[0].mxu0
        %v2081 = vpop.f32.mrb[0].mxu0
        %v2082 = vadd.f32 0.0, %v2081
        %v2083 = vpop.f32.mrb[0].mxu0
        %2084 = vmatprep.mubr.bf16.mxu0 0
        %2085 = vmatmul.mubr.bf16.gmra.mrb[0].mxu0 %v1947
        %v2086 = vpop.f32.mrb[0].mxu0
        %v2087 = vadd.f32 0.0, %v2086
        %v2088 = vpop.f32.mrb[0].mxu0
        %v2089 = vpop.f32.mrb[0].mxu0
        %v2090 = vadd.f32 0.0, %v2089
        %v2091 = vpop.f32.mrb[0].mxu0
        %2092 = vmatprep.mubr.bf16.mxu0 0
        %2093 = vmatmul.mubr.bf16.gmra.mrb[0].mxu0 %v1950
        %v2094 = vpop.f32.mrb[0].mxu0
        %v2095 = vadd.f32 0.0, %v2094
        %v2096 = vpop.f32.mrb[0].mxu0
        %v2097 = vpop.f32.mrb[0].mxu0
        %v2098 = vadd.f32 0.0, %v2097
        %v2099 = vpop.f32.mrb[0].mxu0
        %2100 = vmatprep.mubr.bf16.mxu0 0
        %2101 = vmatmul.mubr.bf16.gmra.mrb[0].mxu0 %v1953
        %v2102 = vpop.f32.mrb[0].mxu0
        %v2103 = vadd.f32 0.0, %v2102
        %v2104 = vpop.f32.mrb[0].mxu0
        %v2105 = vpop.f32.mrb[0].mxu0
        %v2106 = vadd.f32 0.0, %v2105
        %v2107 = vpop.f32.mrb[0].mxu0
        %2108 = vmatprep.mubr.bf16.mxu0 0
        %2109 = vmatmul.mubr.bf16.gmra.mrb[0].mxu0 %v1956
        %v2110 = vpop.f32.mrb[0].mxu0
        %v2111 = vadd.f32 0.0, %v2110
        %v2112 = vpop.f32.mrb[0].mxu0
        %v2113 = vpop.f32.mrb[0].mxu0
        %v2114 = vadd.f32 0.0, %v2113
        %v2115 = vpop.f32.mrb[0].mxu0
        %2116 = vmatprep.mubr.bf16.mxu0 0
        %2117 = vmatmul.mubr.bf16.gmra.mrb[0].mxu0 %v1959
        %v2118 = vpop.f32.mrb[0].mxu0
        %v2119 = vadd.f32 0.0, %v2118
        %v2120 = vpop.f32.mrb[0].mxu0
        %v2121 = vpop.f32.mrb[0].mxu0
        %v2122 = vadd.f32 0.0, %v2121
        %v2123 = vpop.f32.mrb[0].mxu0
        %2124 = vdwg.mxu0
        %v2125 = vadd.f32 %v1582, %v1999
        %v2126 = vadd.f32 %v1583, %v2002
        %v2127 = vadd.f32 %v1584, %v2007
        %v2128 = vadd.f32 %v1585, %v2010
        %v2129 = vadd.f32 %v1586, %v2015
        %v2130 = vadd.f32 %v1587, %v2018
        %v2131 = vadd.f32 %v1588, %v2023
        %v2132 = vadd.f32 %v1589, %v2026
        %v2133 = vadd.f32 %v1590, %v2031
        %v2134 = vadd.f32 %v1591, %v2034
        %v2135 = vadd.f32 %v1592, %v2039
        %v2136 = vadd.f32 %v1593, %v2042
        %v2137 = vadd.f32 %v1594, %v2047
        %v2138 = vadd.f32 %v1595, %v2050
        %v2139 = vadd.f32 %v1596, %v2055
        %v2140 = vadd.f32 %v1597, %v2058
        %v2141 = vadd.f32 %v1598, %v2063
        %v2142 = vadd.f32 %v1599, %v2066
        %v2143 = vadd.f32 %v1600, %v2071
        %v2144 = vadd.f32 %v1601, %v2074
        %v2145 = vadd.f32 %v1602, %v2079
        %v2146 = vadd.f32 %v1603, %v2082
        %v2147 = vadd.f32 %v1604, %v2087
        %v2148 = vadd.f32 %v1605, %v2090
        %v2149 = vadd.f32 %v1606, %v2095
        %v2150 = vadd.f32 %v1607, %v2098
        %v2151 = vadd.f32 %v1608, %v2103
        %v2152 = vadd.f32 %v1609, %v2106
        %v2153 = vadd.f32 %v1610, %v2111
        %v2154 = vadd.f32 %v1611, %v2114
        %v2155 = vadd.f32 %v1612, %v2119
        %v2156 = vadd.f32 %v1613, %v2122
        %s2157 = scalar_lea.vmem %s1, 32
        %v2158 = vld [vmem:[%s2157] sm:$0xf]
        %v2159 = vld [vmem:[%s2157 + $0x4] sm:$0x3]
        %v2162 = vunpack.c.l.b16 %v218
        %v2163 = vunpack.c.l.b16 %v219
        %v2164 = vpack.c.b16 %v2163, %v2162
        %v2167 = vunpack.c.l.b16 %v2158
        %v2168 = vunpack.c.l.b16 %v2159
        %v2169 = vpack.c.b16 %v2168, %v2167
        %v2171 = vsel %vm672, %v2164, 0
        %v2174 = vsel %vm721, %v2169, 0
        %2176 = vmatprep.subr.bf16.mxu0 0
        %2177 = vmatpush1.bf16.msra.mxu0 %v2174
        %2178 = vmatprep.subr.bf16.mxu0 0
        %2179 = vmatpush1.bf16.msra.mxu0 0
        %2180 = vmatprep.subr.bf16.mxu0 0
        %2181 = vmatpush1.bf16.msra.mxu0 0
        %2182 = vmatprep.subr.bf16.mxu0 0
        %2183 = vmatpush1.bf16.msra.mxu0 0
        %2184 = vmatprep.subr.bf16.mxu0 0
        %2185 = vmatpush1.bf16.msra.mxu0 0
        %2186 = vmatprep.subr.bf16.mxu0 0
        %2187 = vmatpush1.bf16.msra.mxu0 0
        %2188 = vmatprep.subr.bf16.mxu0 0
        %2189 = vmatpush1.bf16.msra.mxu0 0
        %2190 = vmatprep.subr.bf16.mxu0 0
        %2191 = vmatpush1.bf16.msra.mxu0 0
        %2192 = vmatprep.subr.bf16.mxu0 0
        %2193 = vmatpush1.bf16.msra.mxu0 0
        %2194 = vmatprep.subr.bf16.mxu0 0
        %2195 = vmatpush1.bf16.msra.mxu0 0
        %2196 = vmatprep.subr.bf16.mxu0 0
        %2197 = vmatpush1.bf16.msra.mxu0 0
        %2198 = vmatprep.subr.bf16.mxu0 0
        %2199 = vmatpush1.bf16.msra.mxu0 0
        %2200 = vmatprep.subr.bf16.mxu0 0
        %2201 = vmatpush1.bf16.msra.mxu0 0
        %2202 = vmatprep.subr.bf16.mxu0 0
        %2203 = vmatpush1.bf16.msra.mxu0 0
        %2204 = vmatprep.subr.bf16.mxu0 0
        %2205 = vmatpush1.bf16.msra.mxu0 0
        %2206 = vmatprep.subr.bf16.mxu0 0
        %2207 = vmatpush1.bf16.msra.mxu0 0
        %2208 = vmatprep.mubr.bf16.mxu0 0
        %2209 = vmatmul.mubr.bf16.gmra.mrb[0].mxu0 %v975
        %v2210 = vpop.f32.mrb[0].mxu0
        %v2211 = vadd.f32 0.0, %v2210
        %v2212 = vpop.f32.mrb[0].mxu0
        %v2213 = vpop.f32.mrb[0].mxu0
        %v2214 = vadd.f32 0.0, %v2213
        %v2215 = vpop.f32.mrb[0].mxu0
        %2216 = vmatprep.mubr.bf16.mxu0 0
        %2217 = vmatmul.mubr.bf16.gmra.mrb[0].mxu0 %v978
        %v2218 = vpop.f32.mrb[0].mxu0
        %v2219 = vadd.f32 0.0, %v2218
        %v2220 = vpop.f32.mrb[0].mxu0
        %v2221 = vpop.f32.mrb[0].mxu0
        %v2222 = vadd.f32 0.0, %v2221
        %v2223 = vpop.f32.mrb[0].mxu0
        %2224 = vmatprep.mubr.bf16.mxu0 0
        %2225 = vmatmul.mubr.bf16.gmra.mrb[0].mxu0 %v981
        %v2226 = vpop.f32.mrb[0].mxu0
        %v2227 = vadd.f32 0.0, %v2226
        %v2228 = vpop.f32.mrb[0].mxu0
        %v2229 = vpop.f32.mrb[0].mxu0
        %v2230 = vadd.f32 0.0, %v2229
        %v2231 = vpop.f32.mrb[0].mxu0
        %2232 = vmatprep.mubr.bf16.mxu0 0
        %2233 = vmatmul.mubr.bf16.gmra.mrb[0].mxu0 %v984
        %v2234 = vpop.f32.mrb[0].mxu0
        %v2235 = vadd.f32 0.0, %v2234
        %v2236 = vpop.f32.mrb[0].mxu0
        %v2237 = vpop.f32.mrb[0].mxu0
        %v2238 = vadd.f32 0.0, %v2237
        %v2239 = vpop.f32.mrb[0].mxu0
        %2240 = vmatprep.mubr.bf16.mxu0 0
        %2241 = vmatmul.mubr.bf16.gmra.mrb[0].mxu0 %v987
        %v2242 = vpop.f32.mrb[0].mxu0
        %v2243 = vadd.f32 0.0, %v2242
        %v2244 = vpop.f32.mrb[0].mxu0
        %v2245 = vpop.f32.mrb[0].mxu0
        %v2246 = vadd.f32 0.0, %v2245
        %v2247 = vpop.f32.mrb[0].mxu0
        %2248 = vmatprep.mubr.bf16.mxu0 0
        %2249 = vmatmul.mubr.bf16.gmra.mrb[0].mxu0 %v990
        %v2250 = vpop.f32.mrb[0].mxu0
        %v2251 = vadd.f32 0.0, %v2250
        %v2252 = vpop.f32.mrb[0].mxu0
        %v2253 = vpop.f32.mrb[0].mxu0
        %v2254 = vadd.f32 0.0, %v2253
        %v2255 = vpop.f32.mrb[0].mxu0
        %2256 = vmatprep.mubr.bf16.mxu0 0
        %2257 = vmatmul.mubr.bf16.gmra.mrb[0].mxu0 %v993
        %v2258 = vpop.f32.mrb[0].mxu0
        %v2259 = vadd.f32 0.0, %v2258
        %v2260 = vpop.f32.mrb[0].mxu0
        %v2261 = vpop.f32.mrb[0].mxu0
        %v2262 = vadd.f32 0.0, %v2261
        %v2263 = vpop.f32.mrb[0].mxu0
        %2264 = vmatprep.mubr.bf16.mxu0 0
        %2265 = vmatmul.mubr.bf16.gmra.mrb[0].mxu0 %v996
        %v2266 = vpop.f32.mrb[0].mxu0
        %v2267 = vadd.f32 0.0, %v2266
        %v2268 = vpop.f32.mrb[0].mxu0
        %v2269 = vpop.f32.mrb[0].mxu0
        %v2270 = vadd.f32 0.0, %v2269
        %v2271 = vpop.f32.mrb[0].mxu0
        %2272 = vmatprep.mubr.bf16.mxu0 0
        %2273 = vmatmul.mubr.bf16.gmra.mrb[0].mxu0 %v999
        %v2274 = vpop.f32.mrb[0].mxu0
        %v2275 = vadd.f32 0.0, %v2274
        %v2276 = vpop.f32.mrb[0].mxu0
        %v2277 = vpop.f32.mrb[0].mxu0
        %v2278 = vadd.f32 0.0, %v2277
        %v2279 = vpop.f32.mrb[0].mxu0
        %2280 = vmatprep.mubr.bf16.mxu0 0
        %2281 = vmatmul.mubr.bf16.gmra.mrb[0].mxu0 %v1002
        %v2282 = vpop.f32.mrb[0].mxu0
        %v2283 = vadd.f32 0.0, %v2282
        %v2284 = vpop.f32.mrb[0].mxu0
        %v2285 = vpop.f32.mrb[0].mxu0
        %v2286 = vadd.f32 0.0, %v2285
        %v2287 = vpop.f32.mrb[0].mxu0
        %2288 = vmatprep.mubr.bf16.mxu0 0
        %2289 = vmatmul.mubr.bf16.gmra.mrb[0].mxu0 %v1005
        %v2290 = vpop.f32.mrb[0].mxu0
        %v2291 = vadd.f32 0.0, %v2290
        %v2292 = vpop.f32.mrb[0].mxu0
        %v2293 = vpop.f32.mrb[0].mxu0
        %v2294 = vadd.f32 0.0, %v2293
        %v2295 = vpop.f32.mrb[0].mxu0
        %2296 = vmatprep.mubr.bf16.mxu0 0
        %2297 = vmatmul.mubr.bf16.gmra.mrb[0].mxu0 %v1008
        %v2298 = vpop.f32.mrb[0].mxu0
        %v2299 = vadd.f32 0.0, %v2298
        %v2300 = vpop.f32.mrb[0].mxu0
        %v2301 = vpop.f32.mrb[0].mxu0
        %v2302 = vadd.f32 0.0, %v2301
        %v2303 = vpop.f32.mrb[0].mxu0
        %2304 = vmatprep.mubr.bf16.mxu0 0
        %2305 = vmatmul.mubr.bf16.gmra.mrb[0].mxu0 %v1011
        %v2306 = vpop.f32.mrb[0].mxu0
        %v2307 = vadd.f32 0.0, %v2306
        %v2308 = vpop.f32.mrb[0].mxu0
        %v2309 = vpop.f32.mrb[0].mxu0
        %v2310 = vadd.f32 0.0, %v2309
        %v2311 = vpop.f32.mrb[0].mxu0
        %2312 = vmatprep.mubr.bf16.mxu0 0
        %2313 = vmatmul.mubr.bf16.gmra.mrb[0].mxu0 %v1014
        %v2314 = vpop.f32.mrb[0].mxu0
        %v2315 = vadd.f32 0.0, %v2314
        %v2316 = vpop.f32.mrb[0].mxu0
        %v2317 = vpop.f32.mrb[0].mxu0
        %v2318 = vadd.f32 0.0, %v2317
        %v2319 = vpop.f32.mrb[0].mxu0
        %2320 = vmatprep.mubr.bf16.mxu0 0
        %2321 = vmatmul.mubr.bf16.gmra.mrb[0].mxu0 %v1017
        %v2322 = vpop.f32.mrb[0].mxu0
        %v2323 = vadd.f32 0.0, %v2322
        %v2324 = vpop.f32.mrb[0].mxu0
        %v2325 = vpop.f32.mrb[0].mxu0
        %v2326 = vadd.f32 0.0, %v2325
        %v2327 = vpop.f32.mrb[0].mxu0
        %2328 = vmatprep.mubr.bf16.mxu0 0
        %2329 = vmatmul.mubr.bf16.gmra.mrb[0].mxu0 %v2171
        %v2330 = vpop.f32.mrb[0].mxu0
        %v2331 = vadd.f32 0.0, %v2330
        %v2332 = vpop.f32.mrb[0].mxu0
        %v2333 = vpop.f32.mrb[0].mxu0
        %v2334 = vadd.f32 0.0, %v2333
        %v2335 = vpop.f32.mrb[0].mxu0
        %2336 = vdwg.mxu0
        %v2337 = vadd.f32 %v2125, %v2211
        %v2338 = vadd.f32 %v2126, %v2214
        %v2339 = vadd.f32 %v2127, %v2219
        %v2340 = vadd.f32 %v2128, %v2222
        %v2341 = vadd.f32 %v2129, %v2227
        %v2342 = vadd.f32 %v2130, %v2230
        %v2343 = vadd.f32 %v2131, %v2235
        %v2344 = vadd.f32 %v2132, %v2238
        %v2345 = vadd.f32 %v2133, %v2243
        %v2346 = vadd.f32 %v2134, %v2246
        %v2347 = vadd.f32 %v2135, %v2251
        %v2348 = vadd.f32 %v2136, %v2254
        %v2349 = vadd.f32 %v2137, %v2259
        %v2350 = vadd.f32 %v2138, %v2262
        %v2351 = vadd.f32 %v2139, %v2267
        %v2352 = vadd.f32 %v2140, %v2270
        %v2353 = vadd.f32 %v2141, %v2275
        %v2354 = vadd.f32 %v2142, %v2278
        %v2355 = vadd.f32 %v2143, %v2283
        %v2356 = vadd.f32 %v2144, %v2286
        %v2357 = vadd.f32 %v2145, %v2291
        %v2358 = vadd.f32 %v2146, %v2294
        %v2359 = vadd.f32 %v2147, %v2299
        %v2360 = vadd.f32 %v2148, %v2302
        %v2361 = vadd.f32 %v2149, %v2307
        %v2362 = vadd.f32 %v2150, %v2310
        %v2363 = vadd.f32 %v2151, %v2315
        %v2364 = vadd.f32 %v2152, %v2318
        %v2365 = vadd.f32 %v2153, %v2323
        %v2366 = vadd.f32 %v2154, %v2326
        %v2367 = vadd.f32 %v2155, %v2331
        %v2368 = vadd.f32 %v2156, %v2334
        %v2370 = vshrl.u32 %v218, 16
        %v2372 = vrot.slane %v2370, 4
        %v2373 = vshll.u32 %v218, 16
        %v2375 = vrot.slane %v2373, 5
        %v2376 = vor.u32 %v2372, %v2375
        %v2377 = vrot.slane %v2376, 4
        %v2379 = vshll.u32 %v219, 16
        %v2381 = vrot.slane %v2379, 5
        %v2382 = vsel %vm231, %v2377, %v2381
        %v2383 = vshrl.u32 %v219, 16
        %v2385 = vrot.slane %v2383, 4
        %v2386 = vor.u32 %v2385, %v2381
        %v2387 = vrot.slane %v2386, 4
        %v2389 = vshll.u32 %v220, 16
        %v2391 = vrot.slane %v2389, 5
        %v2392 = vsel %vm231, %v2387, %v2391
        %s2393 = scalar_lea.vmem %s1, 40
        %v2394 = vld [vmem:[%s2393] sm:$0xf]
        %v2395 = vld [vmem:[%s2393 + $0x4] sm:$0x3]
        %v2396 = vunpack.c.l.b16 %v2382
        %v2397 = vunpack.c.l.b16 %v2392
        %v2398 = vpack.c.b16 %v2397, %v2396
        %v2401 = vunpack.c.l.b16 %v2394
        %v2402 = vunpack.c.l.b16 %v2395
        %v2403 = vpack.c.b16 %v2402, %v2401
        %v2405 = vsel %vm672, %v2398, 0
        %v2408 = vsel %vm721, %v2403, 0
        %2410 = vmatprep.subr.bf16.mxu0 0
        %2411 = vmatpush1.bf16.msra.mxu0 %v2408
        %2412 = vmatprep.subr.bf16.mxu0 0
        %2413 = vmatpush1.bf16.msra.mxu0 0
        %2414 = vmatprep.subr.bf16.mxu0 0
        %2415 = vmatpush1.bf16.msra.mxu0 0
        %2416 = vmatprep.subr.bf16.mxu0 0
        %2417 = vmatpush1.bf16.msra.mxu0 0
        %2418 = vmatprep.subr.bf16.mxu0 0
        %2419 = vmatpush1.bf16.msra.mxu0 0
        %2420 = vmatprep.subr.bf16.mxu0 0
        %2421 = vmatpush1.bf16.msra.mxu0 0
        %2422 = vmatprep.subr.bf16.mxu0 0
        %2423 = vmatpush1.bf16.msra.mxu0 0
        %2424 = vmatprep.subr.bf16.mxu0 0
        %2425 = vmatpush1.bf16.msra.mxu0 0
        %2426 = vmatprep.subr.bf16.mxu0 0
        %2427 = vmatpush1.bf16.msra.mxu0 0
        %2428 = vmatprep.subr.bf16.mxu0 0
        %2429 = vmatpush1.bf16.msra.mxu0 0
        %2430 = vmatprep.subr.bf16.mxu0 0
        %2431 = vmatpush1.bf16.msra.mxu0 0
        %2432 = vmatprep.subr.bf16.mxu0 0
        %2433 = vmatpush1.bf16.msra.mxu0 0
        %2434 = vmatprep.subr.bf16.mxu0 0
        %2435 = vmatpush1.bf16.msra.mxu0 0
        %2436 = vmatprep.subr.bf16.mxu0 0
        %2437 = vmatpush1.bf16.msra.mxu0 0
        %2438 = vmatprep.subr.bf16.mxu0 0
        %2439 = vmatpush1.bf16.msra.mxu0 0
        %2440 = vmatprep.subr.bf16.mxu0 0
        %2441 = vmatpush1.bf16.msra.mxu0 0
        %2442 = vmatprep.mubr.bf16.mxu0 0
        %2443 = vmatmul.mubr.bf16.gmra.mrb[0].mxu0 %v677
        %v2444 = vpop.f32.mrb[0].mxu0
        %v2445 = vadd.f32 0.0, %v2444
        %v2446 = vpop.f32.mrb[0].mxu0
        %v2447 = vpop.f32.mrb[0].mxu0
        %v2448 = vadd.f32 0.0, %v2447
        %v2449 = vpop.f32.mrb[0].mxu0
        %2450 = vmatprep.mubr.bf16.mxu0 0
        %2451 = vmatmul.mubr.bf16.gmra.mrb[0].mxu0 %v680
        %v2452 = vpop.f32.mrb[0].mxu0
        %v2453 = vadd.f32 0.0, %v2452
        %v2454 = vpop.f32.mrb[0].mxu0
        %v2455 = vpop.f32.mrb[0].mxu0
        %v2456 = vadd.f32 0.0, %v2455
        %v2457 = vpop.f32.mrb[0].mxu0
        %2458 = vmatprep.mubr.bf16.mxu0 0
        %2459 = vmatmul.mubr.bf16.gmra.mrb[0].mxu0 %v683
        %v2460 = vpop.f32.mrb[0].mxu0
        %v2461 = vadd.f32 0.0, %v2460
        %v2462 = vpop.f32.mrb[0].mxu0
        %v2463 = vpop.f32.mrb[0].mxu0
        %v2464 = vadd.f32 0.0, %v2463
        %v2465 = vpop.f32.mrb[0].mxu0
        %2466 = vmatprep.mubr.bf16.mxu0 0
        %2467 = vmatmul.mubr.bf16.gmra.mrb[0].mxu0 %v686
        %v2468 = vpop.f32.mrb[0].mxu0
        %v2469 = vadd.f32 0.0, %v2468
        %v2470 = vpop.f32.mrb[0].mxu0
        %v2471 = vpop.f32.mrb[0].mxu0
        %v2472 = vadd.f32 0.0, %v2471
        %v2473 = vpop.f32.mrb[0].mxu0
        %2474 = vmatprep.mubr.bf16.mxu0 0
        %2475 = vmatmul.mubr.bf16.gmra.mrb[0].mxu0 %v689
        %v2476 = vpop.f32.mrb[0].mxu0
        %v2477 = vadd.f32 0.0, %v2476
        %v2478 = vpop.f32.mrb[0].mxu0
        %v2479 = vpop.f32.mrb[0].mxu0
        %v2480 = vadd.f32 0.0, %v2479
        %v2481 = vpop.f32.mrb[0].mxu0
        %2482 = vmatprep.mubr.bf16.mxu0 0
        %2483 = vmatmul.mubr.bf16.gmra.mrb[0].mxu0 %v692
        %v2484 = vpop.f32.mrb[0].mxu0
        %v2485 = vadd.f32 0.0, %v2484
        %v2486 = vpop.f32.mrb[0].mxu0
        %v2487 = vpop.f32.mrb[0].mxu0
        %v2488 = vadd.f32 0.0, %v2487
        %v2489 = vpop.f32.mrb[0].mxu0
        %2490 = vmatprep.mubr.bf16.mxu0 0
        %2491 = vmatmul.mubr.bf16.gmra.mrb[0].mxu0 %v695
        %v2492 = vpop.f32.mrb[0].mxu0
        %v2493 = vadd.f32 0.0, %v2492
        %v2494 = vpop.f32.mrb[0].mxu0
        %v2495 = vpop.f32.mrb[0].mxu0
        %v2496 = vadd.f32 0.0, %v2495
        %v2497 = vpop.f32.mrb[0].mxu0
        %2498 = vmatprep.mubr.bf16.mxu0 0
        %2499 = vmatmul.mubr.bf16.gmra.mrb[0].mxu0 %v698
        %v2500 = vpop.f32.mrb[0].mxu0
        %v2501 = vadd.f32 0.0, %v2500
        %v2502 = vpop.f32.mrb[0].mxu0
        %v2503 = vpop.f32.mrb[0].mxu0
        %v2504 = vadd.f32 0.0, %v2503
        %v2505 = vpop.f32.mrb[0].mxu0
        %2506 = vmatprep.mubr.bf16.mxu0 0
        %2507 = vmatmul.mubr.bf16.gmra.mrb[0].mxu0 %v701
        %v2508 = vpop.f32.mrb[0].mxu0
        %v2509 = vadd.f32 0.0, %v2508
        %v2510 = vpop.f32.mrb[0].mxu0
        %v2511 = vpop.f32.mrb[0].mxu0
        %v2512 = vadd.f32 0.0, %v2511
        %v2513 = vpop.f32.mrb[0].mxu0
        %2514 = vmatprep.mubr.bf16.mxu0 0
        %2515 = vmatmul.mubr.bf16.gmra.mrb[0].mxu0 %v704
        %v2516 = vpop.f32.mrb[0].mxu0
        %v2517 = vadd.f32 0.0, %v2516
        %v2518 = vpop.f32.mrb[0].mxu0
        %v2519 = vpop.f32.mrb[0].mxu0
        %v2520 = vadd.f32 0.0, %v2519
        %v2521 = vpop.f32.mrb[0].mxu0
        %2522 = vmatprep.mubr.bf16.mxu0 0
        %2523 = vmatmul.mubr.bf16.gmra.mrb[0].mxu0 %v707
        %v2524 = vpop.f32.mrb[0].mxu0
        %v2525 = vadd.f32 0.0, %v2524
        %v2526 = vpop.f32.mrb[0].mxu0
        %v2527 = vpop.f32.mrb[0].mxu0
        %v2528 = vadd.f32 0.0, %v2527
        %v2529 = vpop.f32.mrb[0].mxu0
        %2530 = vmatprep.mubr.bf16.mxu0 0
        %2531 = vmatmul.mubr.bf16.gmra.mrb[0].mxu0 %v710
        %v2532 = vpop.f32.mrb[0].mxu0
        %v2533 = vadd.f32 0.0, %v2532
        %v2534 = vpop.f32.mrb[0].mxu0
        %v2535 = vpop.f32.mrb[0].mxu0
        %v2536 = vadd.f32 0.0, %v2535
        %v2537 = vpop.f32.mrb[0].mxu0
        %2538 = vmatprep.mubr.bf16.mxu0 0
        %2539 = vmatmul.mubr.bf16.gmra.mrb[0].mxu0 %v713
        %v2540 = vpop.f32.mrb[0].mxu0
        %v2541 = vadd.f32 0.0, %v2540
        %v2542 = vpop.f32.mrb[0].mxu0
        %v2543 = vpop.f32.mrb[0].mxu0
        %v2544 = vadd.f32 0.0, %v2543
        %v2545 = vpop.f32.mrb[0].mxu0
        %2546 = vmatprep.mubr.bf16.mxu0 0
        %2547 = vmatmul.mubr.bf16.gmra.mrb[0].mxu0 %v716
        %v2548 = vpop.f32.mrb[0].mxu0
        %v2549 = vadd.f32 0.0, %v2548
        %v2550 = vpop.f32.mrb[0].mxu0
        %v2551 = vpop.f32.mrb[0].mxu0
        %v2552 = vadd.f32 0.0, %v2551
        %v2553 = vpop.f32.mrb[0].mxu0
        %2554 = vmatprep.mubr.bf16.mxu0 0
        %2555 = vmatmul.mubr.bf16.gmra.mrb[0].mxu0 %v719
        %v2556 = vpop.f32.mrb[0].mxu0
        %v2557 = vadd.f32 0.0, %v2556
        %v2558 = vpop.f32.mrb[0].mxu0
        %v2559 = vpop.f32.mrb[0].mxu0
        %v2560 = vadd.f32 0.0, %v2559
        %v2561 = vpop.f32.mrb[0].mxu0
        %2562 = vmatprep.mubr.bf16.mxu0 0
        %2563 = vmatmul.mubr.bf16.gmra.mrb[0].mxu0 %v2405
        %v2564 = vpop.f32.mrb[0].mxu0
        %v2565 = vadd.f32 0.0, %v2564
        %v2566 = vpop.f32.mrb[0].mxu0
        %v2567 = vpop.f32.mrb[0].mxu0
        %v2568 = vadd.f32 0.0, %v2567
        %v2569 = vpop.f32.mrb[0].mxu0
        %2570 = vdwg.mxu0
        %v2571 = vadd.f32 %v2337, %v2445
        %v2572 = vadd.f32 %v2338, %v2448
        %v2573 = vadd.f32 %v2339, %v2453
        %v2574 = vadd.f32 %v2340, %v2456
        %v2575 = vadd.f32 %v2341, %v2461
        %v2576 = vadd.f32 %v2342, %v2464
        %v2577 = vadd.f32 %v2343, %v2469
        %v2578 = vadd.f32 %v2344, %v2472
        %v2579 = vadd.f32 %v2345, %v2477
        %v2580 = vadd.f32 %v2346, %v2480
        %v2581 = vadd.f32 %v2347, %v2485
        %v2582 = vadd.f32 %v2348, %v2488
        %v2583 = vadd.f32 %v2349, %v2493
        %v2584 = vadd.f32 %v2350, %v2496
        %v2585 = vadd.f32 %v2351, %v2501
        %v2586 = vadd.f32 %v2352, %v2504
        %v2587 = vadd.f32 %v2353, %v2509
        %v2588 = vadd.f32 %v2354, %v2512
        %v2589 = vadd.f32 %v2355, %v2517
        %v2590 = vadd.f32 %v2356, %v2520
        %v2591 = vadd.f32 %v2357, %v2525
        %v2592 = vadd.f32 %v2358, %v2528
        %v2593 = vadd.f32 %v2359, %v2533
        %v2594 = vadd.f32 %v2360, %v2536
        %v2595 = vadd.f32 %v2361, %v2541
        %v2596 = vadd.f32 %v2362, %v2544
        %v2597 = vadd.f32 %v2363, %v2549
        %v2598 = vadd.f32 %v2364, %v2552
        %v2599 = vadd.f32 %v2365, %v2557
        %v2600 = vadd.f32 %v2366, %v2560
        %v2601 = vadd.f32 %v2367, %v2565
        %v2602 = vadd.f32 %v2368, %v2568
        %v2604 = vrot.slane %v218, 5
        %v2605 = vrot.slane %v2604, 4
        %v2606 = vrot.slane %v219, 5
        %v2607 = vsel %vm1201, %v2605, %v2606
        %v2608 = vrot.slane %v2606, 4
        %v2609 = vrot.slane %v220, 5
        %v2610 = vsel %vm1201, %v2608, %v2609
        %s2611 = scalar_lea.vmem %s1, 48
        %v2612 = vld [vmem:[%s2611] sm:$0xf]
        %v2613 = vld [vmem:[%s2611 + $0x4] sm:$0x3]
        %v2614 = vunpack.c.l.b16 %v2607
        %v2615 = vunpack.c.l.b16 %v2610
        %v2616 = vpack.c.b16 %v2615, %v2614
        %v2619 = vunpack.c.l.b16 %v2612
        %v2620 = vunpack.c.l.b16 %v2613
        %v2621 = vpack.c.b16 %v2620, %v2619
        %v2623 = vsel %vm672, %v2616, 0
        %v2626 = vsel %vm721, %v2621, 0
        %2628 = vmatprep.subr.bf16.mxu0 0
        %2629 = vmatpush1.bf16.msra.mxu0 %v2626
        %2630 = vmatprep.subr.bf16.mxu0 0
        %2631 = vmatpush1.bf16.msra.mxu0 0
        %2632 = vmatprep.subr.bf16.mxu0 0
        %2633 = vmatpush1.bf16.msra.mxu0 0
        %2634 = vmatprep.subr.bf16.mxu0 0
        %2635 = vmatpush1.bf16.msra.mxu0 0
        %2636 = vmatprep.subr.bf16.mxu0 0
        %2637 = vmatpush1.bf16.msra.mxu0 0
        %2638 = vmatprep.subr.bf16.mxu0 0
        %2639 = vmatpush1.bf16.msra.mxu0 0
        %2640 = vmatprep.subr.bf16.mxu0 0
        %2641 = vmatpush1.bf16.msra.mxu0 0
        %2642 = vmatprep.subr.bf16.mxu0 0
        %2643 = vmatpush1.bf16.msra.mxu0 0
        %2644 = vmatprep.subr.bf16.mxu0 0
        %2645 = vmatpush1.bf16.msra.mxu0 0
        %2646 = vmatprep.subr.bf16.mxu0 0
        %2647 = vmatpush1.bf16.msra.mxu0 0
        %2648 = vmatprep.subr.bf16.mxu0 0
        %2649 = vmatpush1.bf16.msra.mxu0 0
        %2650 = vmatprep.subr.bf16.mxu0 0
        %2651 = vmatpush1.bf16.msra.mxu0 0
        %2652 = vmatprep.subr.bf16.mxu0 0
        %2653 = vmatpush1.bf16.msra.mxu0 0
        %2654 = vmatprep.subr.bf16.mxu0 0
        %2655 = vmatpush1.bf16.msra.mxu0 0
        %2656 = vmatprep.subr.bf16.mxu0 0
        %2657 = vmatpush1.bf16.msra.mxu0 0
        %2658 = vmatprep.subr.bf16.mxu0 0
        %2659 = vmatpush1.bf16.msra.mxu0 0
        %2660 = vmatprep.mubr.bf16.mxu0 0
        %2661 = vmatmul.mubr.bf16.gmra.mrb[0].mxu0 %v1374
        %v2662 = vpop.f32.mrb[0].mxu0
        %v2663 = vadd.f32 0.0, %v2662
        %v2664 = vpop.f32.mrb[0].mxu0
        %v2665 = vpop.f32.mrb[0].mxu0
        %v2666 = vadd.f32 0.0, %v2665
        %v2667 = vpop.f32.mrb[0].mxu0
        %2668 = vmatprep.mubr.bf16.mxu0 0
        %2669 = vmatmul.mubr.bf16.gmra.mrb[0].mxu0 %v1377
        %v2670 = vpop.f32.mrb[0].mxu0
        %v2671 = vadd.f32 0.0, %v2670
        %v2672 = vpop.f32.mrb[0].mxu0
        %v2673 = vpop.f32.mrb[0].mxu0
        %v2674 = vadd.f32 0.0, %v2673
        %v2675 = vpop.f32.mrb[0].mxu0
        %2676 = vmatprep.mubr.bf16.mxu0 0
        %2677 = vmatmul.mubr.bf16.gmra.mrb[0].mxu0 %v1380
        %v2678 = vpop.f32.mrb[0].mxu0
        %v2679 = vadd.f32 0.0, %v2678
        %v2680 = vpop.f32.mrb[0].mxu0
        %v2681 = vpop.f32.mrb[0].mxu0
        %v2682 = vadd.f32 0.0, %v2681
        %v2683 = vpop.f32.mrb[0].mxu0
        %2684 = vmatprep.mubr.bf16.mxu0 0
        %2685 = vmatmul.mubr.bf16.gmra.mrb[0].mxu0 %v1383
        %v2686 = vpop.f32.mrb[0].mxu0
        %v2687 = vadd.f32 0.0, %v2686
        %v2688 = vpop.f32.mrb[0].mxu0
        %v2689 = vpop.f32.mrb[0].mxu0
        %v2690 = vadd.f32 0.0, %v2689
        %v2691 = vpop.f32.mrb[0].mxu0
        %2692 = vmatprep.mubr.bf16.mxu0 0
        %2693 = vmatmul.mubr.bf16.gmra.mrb[0].mxu0 %v1386
        %v2694 = vpop.f32.mrb[0].mxu0
        %v2695 = vadd.f32 0.0, %v2694
        %v2696 = vpop.f32.mrb[0].mxu0
        %v2697 = vpop.f32.mrb[0].mxu0
        %v2698 = vadd.f32 0.0, %v2697
        %v2699 = vpop.f32.mrb[0].mxu0
        %2700 = vmatprep.mubr.bf16.mxu0 0
        %2701 = vmatmul.mubr.bf16.gmra.mrb[0].mxu0 %v1389
        %v2702 = vpop.f32.mrb[0].mxu0
        %v2703 = vadd.f32 0.0, %v2702
        %v2704 = vpop.f32.mrb[0].mxu0
        %v2705 = vpop.f32.mrb[0].mxu0
        %v2706 = vadd.f32 0.0, %v2705
        %v2707 = vpop.f32.mrb[0].mxu0
        %2708 = vmatprep.mubr.bf16.mxu0 0
        %2709 = vmatmul.mubr.bf16.gmra.mrb[0].mxu0 %v1392
        %v2710 = vpop.f32.mrb[0].mxu0
        %v2711 = vadd.f32 0.0, %v2710
        %v2712 = vpop.f32.mrb[0].mxu0
        %v2713 = vpop.f32.mrb[0].mxu0
        %v2714 = vadd.f32 0.0, %v2713
        %v2715 = vpop.f32.mrb[0].mxu0
        %2716 = vmatprep.mubr.bf16.mxu0 0
        %2717 = vmatmul.mubr.bf16.gmra.mrb[0].mxu0 %v1395
        %v2718 = vpop.f32.mrb[0].mxu0
        %v2719 = vadd.f32 0.0, %v2718
        %v2720 = vpop.f32.mrb[0].mxu0
        %v2721 = vpop.f32.mrb[0].mxu0
        %v2722 = vadd.f32 0.0, %v2721
        %v2723 = vpop.f32.mrb[0].mxu0
        %2724 = vmatprep.mubr.bf16.mxu0 0
        %2725 = vmatmul.mubr.bf16.gmra.mrb[0].mxu0 %v1398
        %v2726 = vpop.f32.mrb[0].mxu0
        %v2727 = vadd.f32 0.0, %v2726
        %v2728 = vpop.f32.mrb[0].mxu0
        %v2729 = vpop.f32.mrb[0].mxu0
        %v2730 = vadd.f32 0.0, %v2729
        %v2731 = vpop.f32.mrb[0].mxu0
        %2732 = vmatprep.mubr.bf16.mxu0 0
        %2733 = vmatmul.mubr.bf16.gmra.mrb[0].mxu0 %v1401
        %v2734 = vpop.f32.mrb[0].mxu0
        %v2735 = vadd.f32 0.0, %v2734
        %v2736 = vpop.f32.mrb[0].mxu0
        %v2737 = vpop.f32.mrb[0].mxu0
        %v2738 = vadd.f32 0.0, %v2737
        %v2739 = vpop.f32.mrb[0].mxu0
        %2740 = vmatprep.mubr.bf16.mxu0 0
        %2741 = vmatmul.mubr.bf16.gmra.mrb[0].mxu0 %v1404
        %v2742 = vpop.f32.mrb[0].mxu0
        %v2743 = vadd.f32 0.0, %v2742
        %v2744 = vpop.f32.mrb[0].mxu0
        %v2745 = vpop.f32.mrb[0].mxu0
        %v2746 = vadd.f32 0.0, %v2745
        %v2747 = vpop.f32.mrb[0].mxu0
        %2748 = vmatprep.mubr.bf16.mxu0 0
        %2749 = vmatmul.mubr.bf16.gmra.mrb[0].mxu0 %v1407
        %v2750 = vpop.f32.mrb[0].mxu0
        %v2751 = vadd.f32 0.0, %v2750
        %v2752 = vpop.f32.mrb[0].mxu0
        %v2753 = vpop.f32.mrb[0].mxu0
        %v2754 = vadd.f32 0.0, %v2753
        %v2755 = vpop.f32.mrb[0].mxu0
        %2756 = vmatprep.mubr.bf16.mxu0 0
        %2757 = vmatmul.mubr.bf16.gmra.mrb[0].mxu0 %v1410
        %v2758 = vpop.f32.mrb[0].mxu0
        %v2759 = vadd.f32 0.0, %v2758
        %v2760 = vpop.f32.mrb[0].mxu0
        %v2761 = vpop.f32.mrb[0].mxu0
        %v2762 = vadd.f32 0.0, %v2761
        %v2763 = vpop.f32.mrb[0].mxu0
        %2764 = vmatprep.mubr.bf16.mxu0 0
        %2765 = vmatmul.mubr.bf16.gmra.mrb[0].mxu0 %v1413
        %v2766 = vpop.f32.mrb[0].mxu0
        %v2767 = vadd.f32 0.0, %v2766
        %v2768 = vpop.f32.mrb[0].mxu0
        %v2769 = vpop.f32.mrb[0].mxu0
        %v2770 = vadd.f32 0.0, %v2769
        %v2771 = vpop.f32.mrb[0].mxu0
        %2772 = vmatprep.mubr.bf16.mxu0 0
        %2773 = vmatmul.mubr.bf16.gmra.mrb[0].mxu0 %v1416
        %v2774 = vpop.f32.mrb[0].mxu0
        %v2775 = vadd.f32 0.0, %v2774
        %v2776 = vpop.f32.mrb[0].mxu0
        %v2777 = vpop.f32.mrb[0].mxu0
        %v2778 = vadd.f32 0.0, %v2777
        %v2779 = vpop.f32.mrb[0].mxu0
        %2780 = vmatprep.mubr.bf16.mxu0 0
        %2781 = vmatmul.mubr.bf16.gmra.mrb[0].mxu0 %v2623
        %v2782 = vpop.f32.mrb[0].mxu0
        %v2783 = vadd.f32 0.0, %v2782
        %v2784 = vpop.f32.mrb[0].mxu0
        %v2785 = vpop.f32.mrb[0].mxu0
        %v2786 = vadd.f32 0.0, %v2785
        %v2787 = vpop.f32.mrb[0].mxu0
        %2788 = vdwg.mxu0
        %v2789 = vadd.f32 %v2571, %v2663
        %v2790 = vadd.f32 %v2572, %v2666
        %v2791 = vadd.f32 %v2573, %v2671
        %v2792 = vadd.f32 %v2574, %v2674
        %v2793 = vadd.f32 %v2575, %v2679
        %v2794 = vadd.f32 %v2576, %v2682
        %v2795 = vadd.f32 %v2577, %v2687
        %v2796 = vadd.f32 %v2578, %v2690
        %v2797 = vadd.f32 %v2579, %v2695
        %v2798 = vadd.f32 %v2580, %v2698
        %v2799 = vadd.f32 %v2581, %v2703
        %v2800 = vadd.f32 %v2582, %v2706
        %v2801 = vadd.f32 %v2583, %v2711
        %v2802 = vadd.f32 %v2584, %v2714
        %v2803 = vadd.f32 %v2585, %v2719
        %v2804 = vadd.f32 %v2586, %v2722
        %v2805 = vadd.f32 %v2587, %v2727
        %v2806 = vadd.f32 %v2588, %v2730
        %v2807 = vadd.f32 %v2589, %v2735
        %v2808 = vadd.f32 %v2590, %v2738
        %v2809 = vadd.f32 %v2591, %v2743
        %v2810 = vadd.f32 %v2592, %v2746
        %v2811 = vadd.f32 %v2593, %v2751
        %v2812 = vadd.f32 %v2594, %v2754
        %v2813 = vadd.f32 %v2595, %v2759
        %v2814 = vadd.f32 %v2596, %v2762
        %v2815 = vadd.f32 %v2597, %v2767
        %v2816 = vadd.f32 %v2598, %v2770
        %v2817 = vadd.f32 %v2599, %v2775
        %v2818 = vadd.f32 %v2600, %v2778
        %v2819 = vadd.f32 %v2601, %v2783
        %v2820 = vadd.f32 %v2602, %v2786
        %v2821 = vrot.slane %v2370, 5
        %v2822 = vrot.slane %v2373, 6
        %v2823 = vor.u32 %v2821, %v2822
        %v2824 = vrot.slane %v2823, 4
        %v2825 = vrot.slane %v2383, 5
        %v2826 = vrot.slane %v2379, 6
        %v2827 = vor.u32 %v2825, %v2826
        %v2828 = vsel %vm1616, %v2824, %v2827
        %v2829 = vrot.slane %v2827, 4
        %v2830 = vshrl.u32 %v220, 16
        %v2832 = vrot.slane %v2830, 5
        %v2833 = vrot.slane %v2389, 6
        %v2834 = vor.u32 %v2832, %v2833
        %v2835 = vsel %vm1616, %v2829, %v2834
        %s2836 = scalar_lea.vmem %s1, 56
        %v2837 = vld [vmem:[%s2836] sm:$0xf]
        %v2838 = vld [vmem:[%s2836 + $0x4] sm:$0x3]
        %v2839 = vunpack.c.l.b16 %v2828
        %v2840 = vunpack.c.l.b16 %v2835
        %v2841 = vpack.c.b16 %v2840, %v2839
        %v2844 = vunpack.c.l.b16 %v2837
        %v2845 = vunpack.c.l.b16 %v2838
        %v2846 = vpack.c.b16 %v2845, %v2844
        %v2848 = vsel %vm672, %v2841, 0
        %v2851 = vsel %vm721, %v2846, 0
        %2853 = vmatprep.subr.bf16.mxu0 0
        %2854 = vmatpush1.bf16.msra.mxu0 %v2851
        %2855 = vmatprep.subr.bf16.mxu0 0
        %2856 = vmatpush1.bf16.msra.mxu0 0
        %2857 = vmatprep.subr.bf16.mxu0 0
        %2858 = vmatpush1.bf16.msra.mxu0 0
        %2859 = vmatprep.subr.bf16.mxu0 0
        %2860 = vmatpush1.bf16.msra.mxu0 0
        %2861 = vmatprep.subr.bf16.mxu0 0
        %2862 = vmatpush1.bf16.msra.mxu0 0
        %2863 = vmatprep.subr.bf16.mxu0 0
        %2864 = vmatpush1.bf16.msra.mxu0 0
        %2865 = vmatprep.subr.bf16.mxu0 0
        %2866 = vmatpush1.bf16.msra.mxu0 0
        %2867 = vmatprep.subr.bf16.mxu0 0
        %2868 = vmatpush1.bf16.msra.mxu0 0
        %2869 = vmatprep.subr.bf16.mxu0 0
        %2870 = vmatpush1.bf16.msra.mxu0 0
        %2871 = vmatprep.subr.bf16.mxu0 0
        %2872 = vmatpush1.bf16.msra.mxu0 0
        %2873 = vmatprep.subr.bf16.mxu0 0
        %2874 = vmatpush1.bf16.msra.mxu0 0
        %2875 = vmatprep.subr.bf16.mxu0 0
        %2876 = vmatpush1.bf16.msra.mxu0 0
        %2877 = vmatprep.subr.bf16.mxu0 0
        %2878 = vmatpush1.bf16.msra.mxu0 0
        %2879 = vmatprep.subr.bf16.mxu0 0
        %2880 = vmatpush1.bf16.msra.mxu0 0
        %2881 = vmatprep.subr.bf16.mxu0 0
        %2882 = vmatpush1.bf16.msra.mxu0 0
        %2883 = vmatprep.subr.bf16.mxu0 0
        %2884 = vmatpush1.bf16.msra.mxu0 0
        %2885 = vmatprep.mubr.bf16.mxu0 0
        %2886 = vmatmul.mubr.bf16.gmra.mrb[0].mxu0 %v1917
        %v2887 = vpop.f32.mrb[0].mxu0
        %v2888 = vadd.f32 0.0, %v2887
        %v2889 = vpop.f32.mrb[0].mxu0
        %v2890 = vpop.f32.mrb[0].mxu0
        %v2891 = vadd.f32 0.0, %v2890
        %v2892 = vpop.f32.mrb[0].mxu0
        %2893 = vmatprep.mubr.bf16.mxu0 0
        %2894 = vmatmul.mubr.bf16.gmra.mrb[0].mxu0 %v1920
        %v2895 = vpop.f32.mrb[0].mxu0
        %v2896 = vadd.f32 0.0, %v2895
        %v2897 = vpop.f32.mrb[0].mxu0
        %v2898 = vpop.f32.mrb[0].mxu0
        %v2899 = vadd.f32 0.0, %v2898
        %v2900 = vpop.f32.mrb[0].mxu0
        %2901 = vmatprep.mubr.bf16.mxu0 0
        %2902 = vmatmul.mubr.bf16.gmra.mrb[0].mxu0 %v1923
        %v2903 = vpop.f32.mrb[0].mxu0
        %v2904 = vadd.f32 0.0, %v2903
        %v2905 = vpop.f32.mrb[0].mxu0
        %v2906 = vpop.f32.mrb[0].mxu0
        %v2907 = vadd.f32 0.0, %v2906
        %v2908 = vpop.f32.mrb[0].mxu0
        %2909 = vmatprep.mubr.bf16.mxu0 0
        %2910 = vmatmul.mubr.bf16.gmra.mrb[0].mxu0 %v1926
        %v2911 = vpop.f32.mrb[0].mxu0
        %v2912 = vadd.f32 0.0, %v2911
        %v2913 = vpop.f32.mrb[0].mxu0
        %v2914 = vpop.f32.mrb[0].mxu0
        %v2915 = vadd.f32 0.0, %v2914
        %v2916 = vpop.f32.mrb[0].mxu0
        %2917 = vmatprep.mubr.bf16.mxu0 0
        %2918 = vmatmul.mubr.bf16.gmra.mrb[0].mxu0 %v1929
        %v2919 = vpop.f32.mrb[0].mxu0
        %v2920 = vadd.f32 0.0, %v2919
        %v2921 = vpop.f32.mrb[0].mxu0
        %v2922 = vpop.f32.mrb[0].mxu0
        %v2923 = vadd.f32 0.0, %v2922
        %v2924 = vpop.f32.mrb[0].mxu0
        %2925 = vmatprep.mubr.bf16.mxu0 0
        %2926 = vmatmul.mubr.bf16.gmra.mrb[0].mxu0 %v1932
        %v2927 = vpop.f32.mrb[0].mxu0
        %v2928 = vadd.f32 0.0, %v2927
        %v2929 = vpop.f32.mrb[0].mxu0
        %v2930 = vpop.f32.mrb[0].mxu0
        %v2931 = vadd.f32 0.0, %v2930
        %v2932 = vpop.f32.mrb[0].mxu0
        %2933 = vmatprep.mubr.bf16.mxu0 0
        %2934 = vmatmul.mubr.bf16.gmra.mrb[0].mxu0 %v1935
        %v2935 = vpop.f32.mrb[0].mxu0
        %v2936 = vadd.f32 0.0, %v2935
        %v2937 = vpop.f32.mrb[0].mxu0
        %v2938 = vpop.f32.mrb[0].mxu0
        %v2939 = vadd.f32 0.0, %v2938
        %v2940 = vpop.f32.mrb[0].mxu0
        %2941 = vmatprep.mubr.bf16.mxu0 0
        %2942 = vmatmul.mubr.bf16.gmra.mrb[0].mxu0 %v1938
        %v2943 = vpop.f32.mrb[0].mxu0
        %v2944 = vadd.f32 0.0, %v2943
        %v2945 = vpop.f32.mrb[0].mxu0
        %v2946 = vpop.f32.mrb[0].mxu0
        %v2947 = vadd.f32 0.0, %v2946
        %v2948 = vpop.f32.mrb[0].mxu0
        %2949 = vmatprep.mubr.bf16.mxu0 0
        %2950 = vmatmul.mubr.bf16.gmra.mrb[0].mxu0 %v1941
        %v2951 = vpop.f32.mrb[0].mxu0
        %v2952 = vadd.f32 0.0, %v2951
        %v2953 = vpop.f32.mrb[0].mxu0
        %v2954 = vpop.f32.mrb[0].mxu0
        %v2955 = vadd.f32 0.0, %v2954
        %v2956 = vpop.f32.mrb[0].mxu0
        %2957 = vmatprep.mubr.bf16.mxu0 0
        %2958 = vmatmul.mubr.bf16.gmra.mrb[0].mxu0 %v1944
        %v2959 = vpop.f32.mrb[0].mxu0
        %v2960 = vadd.f32 0.0, %v2959
        %v2961 = vpop.f32.mrb[0].mxu0
        %v2962 = vpop.f32.mrb[0].mxu0
        %v2963 = vadd.f32 0.0, %v2962
        %v2964 = vpop.f32.mrb[0].mxu0
        %2965 = vmatprep.mubr.bf16.mxu0 0
        %2966 = vmatmul.mubr.bf16.gmra.mrb[0].mxu0 %v1947
        %v2967 = vpop.f32.mrb[0].mxu0
        %v2968 = vadd.f32 0.0, %v2967
        %v2969 = vpop.f32.mrb[0].mxu0
        %v2970 = vpop.f32.mrb[0].mxu0
        %v2971 = vadd.f32 0.0, %v2970
        %v2972 = vpop.f32.mrb[0].mxu0
        %2973 = vmatprep.mubr.bf16.mxu0 0
        %2974 = vmatmul.mubr.bf16.gmra.mrb[0].mxu0 %v1950
        %v2975 = vpop.f32.mrb[0].mxu0
        %v2976 = vadd.f32 0.0, %v2975
        %v2977 = vpop.f32.mrb[0].mxu0
        %v2978 = vpop.f32.mrb[0].mxu0
        %v2979 = vadd.f32 0.0, %v2978
        %v2980 = vpop.f32.mrb[0].mxu0
        %2981 = vmatprep.mubr.bf16.mxu0 0
        %2982 = vmatmul.mubr.bf16.gmra.mrb[0].mxu0 %v1953
        %v2983 = vpop.f32.mrb[0].mxu0
        %v2984 = vadd.f32 0.0, %v2983
        %v2985 = vpop.f32.mrb[0].mxu0
        %v2986 = vpop.f32.mrb[0].mxu0
        %v2987 = vadd.f32 0.0, %v2986
        %v2988 = vpop.f32.mrb[0].mxu0
        %2989 = vmatprep.mubr.bf16.mxu0 0
        %2990 = vmatmul.mubr.bf16.gmra.mrb[0].mxu0 %v1956
        %v2991 = vpop.f32.mrb[0].mxu0
        %v2992 = vadd.f32 0.0, %v2991
        %v2993 = vpop.f32.mrb[0].mxu0
        %v2994 = vpop.f32.mrb[0].mxu0
        %v2995 = vadd.f32 0.0, %v2994
        %v2996 = vpop.f32.mrb[0].mxu0
        %2997 = vmatprep.mubr.bf16.mxu0 0
        %2998 = vmatmul.mubr.bf16.gmra.mrb[0].mxu0 %v1959
        %v2999 = vpop.f32.mrb[0].mxu0
        %v3000 = vadd.f32 0.0, %v2999
        %v3001 = vpop.f32.mrb[0].mxu0
        %v3002 = vpop.f32.mrb[0].mxu0
        %v3003 = vadd.f32 0.0, %v3002
        %v3004 = vpop.f32.mrb[0].mxu0
        %3005 = vmatprep.mubr.bf16.mxu0 0
        %3006 = vmatmul.mubr.bf16.gmra.mrb[0].mxu0 %v2848
        %v3007 = vpop.f32.mrb[0].mxu0
        %v3008 = vadd.f32 0.0, %v3007
        %v3009 = vpop.f32.mrb[0].mxu0
        %v3010 = vpop.f32.mrb[0].mxu0
        %v3011 = vadd.f32 0.0, %v3010
        %v3012 = vpop.f32.mrb[0].mxu0
        %3013 = vdwg.mxu0
        %v3014 = vadd.f32 %v2789, %v2888
        %v3015 = vadd.f32 %v2790, %v2891
        %v3016 = vadd.f32 %v2791, %v2896
        %v3017 = vadd.f32 %v2792, %v2899
        %v3018 = vadd.f32 %v2793, %v2904
        %v3019 = vadd.f32 %v2794, %v2907
        %v3020 = vadd.f32 %v2795, %v2912
        %v3021 = vadd.f32 %v2796, %v2915
        %v3022 = vadd.f32 %v2797, %v2920
        %v3023 = vadd.f32 %v2798, %v2923
        %v3024 = vadd.f32 %v2799, %v2928
        %v3025 = vadd.f32 %v2800, %v2931
        %v3026 = vadd.f32 %v2801, %v2936
        %v3027 = vadd.f32 %v2802, %v2939
        %v3028 = vadd.f32 %v2803, %v2944
        %v3029 = vadd.f32 %v2804, %v2947
        %v3030 = vadd.f32 %v2805, %v2952
        %v3031 = vadd.f32 %v2806, %v2955
        %v3032 = vadd.f32 %v2807, %v2960
        %v3033 = vadd.f32 %v2808, %v2963
        %v3034 = vadd.f32 %v2809, %v2968
        %v3035 = vadd.f32 %v2810, %v2971
        %v3036 = vadd.f32 %v2811, %v2976
        %v3037 = vadd.f32 %v2812, %v2979
        %v3038 = vadd.f32 %v2813, %v2984
        %v3039 = vadd.f32 %v2814, %v2987
        %v3040 = vadd.f32 %v2815, %v2992
        %v3041 = vadd.f32 %v2816, %v2995
        %v3042 = vadd.f32 %v2817, %v3000
        %v3043 = vadd.f32 %v2818, %v3003
        %v3044 = vadd.f32 %v2819, %v3008
        %v3045 = vadd.f32 %v2820, %v3011
        %s3046 = scalar_lea.vmem %s1, 64
        %v3047 = vld [vmem:[%s3046] sm:$0xf]
        %v3048 = vld [vmem:[%s3046 + $0x4] sm:$0x3]
        %v3051 = vunpack.c.l.b16 %v221
        %v3052 = vunpack.c.l.b16 %v222
        %v3053 = vpack.c.b16 %v3052, %v3051
        %v3056 = vunpack.c.l.b16 %v3047
        %v3057 = vunpack.c.l.b16 %v3048
        %v3058 = vpack.c.b16 %v3057, %v3056
        %v3060 = vsel %vm672, %v3053, 0
        %v3063 = vsel %vm721, %v3058, 0
        %3065 = vmatprep.subr.bf16.mxu0 0
        %3066 = vmatpush1.bf16.msra.mxu0 %v3063
        %3067 = vmatprep.subr.bf16.mxu0 0
        %3068 = vmatpush1.bf16.msra.mxu0 0
        %3069 = vmatprep.subr.bf16.mxu0 0
        %3070 = vmatpush1.bf16.msra.mxu0 0
        %3071 = vmatprep.subr.bf16.mxu0 0
        %3072 = vmatpush1.bf16.msra.mxu0 0
        %3073 = vmatprep.subr.bf16.mxu0 0
        %3074 = vmatpush1.bf16.msra.mxu0 0
        %3075 = vmatprep.subr.bf16.mxu0 0
        %3076 = vmatpush1.bf16.msra.mxu0 0
        %3077 = vmatprep.subr.bf16.mxu0 0
        %3078 = vmatpush1.bf16.msra.mxu0 0
        %3079 = vmatprep.subr.bf16.mxu0 0
        %3080 = vmatpush1.bf16.msra.mxu0 0
        %3081 = vmatprep.subr.bf16.mxu0 0
        %3082 = vmatpush1.bf16.msra.mxu0 0
        %3083 = vmatprep.subr.bf16.mxu0 0
        %3084 = vmatpush1.bf16.msra.mxu0 0
        %3085 = vmatprep.subr.bf16.mxu0 0
        %3086 = vmatpush1.bf16.msra.mxu0 0
        %3087 = vmatprep.subr.bf16.mxu0 0
        %3088 = vmatpush1.bf16.msra.mxu0 0
        %3089 = vmatprep.subr.bf16.mxu0 0
        %3090 = vmatpush1.bf16.msra.mxu0 0
        %3091 = vmatprep.subr.bf16.mxu0 0
        %3092 = vmatpush1.bf16.msra.mxu0 0
        %3093 = vmatprep.subr.bf16.mxu0 0
        %3094 = vmatpush1.bf16.msra.mxu0 0
        %3095 = vmatprep.subr.bf16.mxu0 0
        %3096 = vmatpush1.bf16.msra.mxu0 0
        %3097 = vmatprep.mubr.bf16.mxu0 0
        %3098 = vmatmul.mubr.bf16.gmra.mrb[0].mxu0 %v978
        %v3099 = vpop.f32.mrb[0].mxu0
        %v3100 = vadd.f32 0.0, %v3099
        %v3101 = vpop.f32.mrb[0].mxu0
        %v3102 = vpop.f32.mrb[0].mxu0
        %v3103 = vadd.f32 0.0, %v3102
        %v3104 = vpop.f32.mrb[0].mxu0
        %3105 = vmatprep.mubr.bf16.mxu0 0
        %3106 = vmatmul.mubr.bf16.gmra.mrb[0].mxu0 %v981
        %v3107 = vpop.f32.mrb[0].mxu0
        %v3108 = vadd.f32 0.0, %v3107
        %v3109 = vpop.f32.mrb[0].mxu0
        %v3110 = vpop.f32.mrb[0].mxu0
        %v3111 = vadd.f32 0.0, %v3110
        %v3112 = vpop.f32.mrb[0].mxu0
        %3113 = vmatprep.mubr.bf16.mxu0 0
        %3114 = vmatmul.mubr.bf16.gmra.mrb[0].mxu0 %v984
        %v3115 = vpop.f32.mrb[0].mxu0
        %v3116 = vadd.f32 0.0, %v3115
        %v3117 = vpop.f32.mrb[0].mxu0
        %v3118 = vpop.f32.mrb[0].mxu0
        %v3119 = vadd.f32 0.0, %v3118
        %v3120 = vpop.f32.mrb[0].mxu0
        %3121 = vmatprep.mubr.bf16.mxu0 0
        %3122 = vmatmul.mubr.bf16.gmra.mrb[0].mxu0 %v987
        %v3123 = vpop.f32.mrb[0].mxu0
        %v3124 = vadd.f32 0.0, %v3123
        %v3125 = vpop.f32.mrb[0].mxu0
        %v3126 = vpop.f32.mrb[0].mxu0
        %v3127 = vadd.f32 0.0, %v3126
        %v3128 = vpop.f32.mrb[0].mxu0
        %3129 = vmatprep.mubr.bf16.mxu0 0
        %3130 = vmatmul.mubr.bf16.gmra.mrb[0].mxu0 %v990
        %v3131 = vpop.f32.mrb[0].mxu0
        %v3132 = vadd.f32 0.0, %v3131
        %v3133 = vpop.f32.mrb[0].mxu0
        %v3134 = vpop.f32.mrb[0].mxu0
        %v3135 = vadd.f32 0.0, %v3134
        %v3136 = vpop.f32.mrb[0].mxu0
        %3137 = vmatprep.mubr.bf16.mxu0 0
        %3138 = vmatmul.mubr.bf16.gmra.mrb[0].mxu0 %v993
        %v3139 = vpop.f32.mrb[0].mxu0
        %v3140 = vadd.f32 0.0, %v3139
        %v3141 = vpop.f32.mrb[0].mxu0
        %v3142 = vpop.f32.mrb[0].mxu0
        %v3143 = vadd.f32 0.0, %v3142
        %v3144 = vpop.f32.mrb[0].mxu0
        %3145 = vmatprep.mubr.bf16.mxu0 0
        %3146 = vmatmul.mubr.bf16.gmra.mrb[0].mxu0 %v996
        %v3147 = vpop.f32.mrb[0].mxu0
        %v3148 = vadd.f32 0.0, %v3147
        %v3149 = vpop.f32.mrb[0].mxu0
        %v3150 = vpop.f32.mrb[0].mxu0
        %v3151 = vadd.f32 0.0, %v3150
        %v3152 = vpop.f32.mrb[0].mxu0
        %3153 = vmatprep.mubr.bf16.mxu0 0
        %3154 = vmatmul.mubr.bf16.gmra.mrb[0].mxu0 %v999
        %v3155 = vpop.f32.mrb[0].mxu0
        %v3156 = vadd.f32 0.0, %v3155
        %v3157 = vpop.f32.mrb[0].mxu0
        %v3158 = vpop.f32.mrb[0].mxu0
        %v3159 = vadd.f32 0.0, %v3158
        %v3160 = vpop.f32.mrb[0].mxu0
        %3161 = vmatprep.mubr.bf16.mxu0 0
        %3162 = vmatmul.mubr.bf16.gmra.mrb[0].mxu0 %v1002
        %v3163 = vpop.f32.mrb[0].mxu0
        %v3164 = vadd.f32 0.0, %v3163
        %v3165 = vpop.f32.mrb[0].mxu0
        %v3166 = vpop.f32.mrb[0].mxu0
        %v3167 = vadd.f32 0.0, %v3166
        %v3168 = vpop.f32.mrb[0].mxu0
        %3169 = vmatprep.mubr.bf16.mxu0 0
        %3170 = vmatmul.mubr.bf16.gmra.mrb[0].mxu0 %v1005
        %v3171 = vpop.f32.mrb[0].mxu0
        %v3172 = vadd.f32 0.0, %v3171
        %v3173 = vpop.f32.mrb[0].mxu0
        %v3174 = vpop.f32.mrb[0].mxu0
        %v3175 = vadd.f32 0.0, %v3174
        %v3176 = vpop.f32.mrb[0].mxu0
        %3177 = vmatprep.mubr.bf16.mxu0 0
        %3178 = vmatmul.mubr.bf16.gmra.mrb[0].mxu0 %v1008
        %v3179 = vpop.f32.mrb[0].mxu0
        %v3180 = vadd.f32 0.0, %v3179
        %v3181 = vpop.f32.mrb[0].mxu0
        %v3182 = vpop.f32.mrb[0].mxu0
        %v3183 = vadd.f32 0.0, %v3182
        %v3184 = vpop.f32.mrb[0].mxu0
        %3185 = vmatprep.mubr.bf16.mxu0 0
        %3186 = vmatmul.mubr.bf16.gmra.mrb[0].mxu0 %v1011
        %v3187 = vpop.f32.mrb[0].mxu0
        %v3188 = vadd.f32 0.0, %v3187
        %v3189 = vpop.f32.mrb[0].mxu0
        %v3190 = vpop.f32.mrb[0].mxu0
        %v3191 = vadd.f32 0.0, %v3190
        %v3192 = vpop.f32.mrb[0].mxu0
        %3193 = vmatprep.mubr.bf16.mxu0 0
        %3194 = vmatmul.mubr.bf16.gmra.mrb[0].mxu0 %v1014
        %v3195 = vpop.f32.mrb[0].mxu0
        %v3196 = vadd.f32 0.0, %v3195
        %v3197 = vpop.f32.mrb[0].mxu0
        %v3198 = vpop.f32.mrb[0].mxu0
        %v3199 = vadd.f32 0.0, %v3198
        %v3200 = vpop.f32.mrb[0].mxu0
        %3201 = vmatprep.mubr.bf16.mxu0 0
        %3202 = vmatmul.mubr.bf16.gmra.mrb[0].mxu0 %v1017
        %v3203 = vpop.f32.mrb[0].mxu0
        %v3204 = vadd.f32 0.0, %v3203
        %v3205 = vpop.f32.mrb[0].mxu0
        %v3206 = vpop.f32.mrb[0].mxu0
        %v3207 = vadd.f32 0.0, %v3206
        %v3208 = vpop.f32.mrb[0].mxu0
        %3209 = vmatprep.mubr.bf16.mxu0 0
        %3210 = vmatmul.mubr.bf16.gmra.mrb[0].mxu0 %v2171
        %v3211 = vpop.f32.mrb[0].mxu0
        %v3212 = vadd.f32 0.0, %v3211
        %v3213 = vpop.f32.mrb[0].mxu0
        %v3214 = vpop.f32.mrb[0].mxu0
        %v3215 = vadd.f32 0.0, %v3214
        %v3216 = vpop.f32.mrb[0].mxu0
        %3217 = vmatprep.mubr.bf16.mxu0 0
        %3218 = vmatmul.mubr.bf16.gmra.mrb[0].mxu0 %v3060
        %v3219 = vpop.f32.mrb[0].mxu0
        %v3220 = vadd.f32 0.0, %v3219
        %v3221 = vpop.f32.mrb[0].mxu0
        %v3222 = vpop.f32.mrb[0].mxu0
        %v3223 = vadd.f32 0.0, %v3222
        %v3224 = vpop.f32.mrb[0].mxu0
        %3225 = vdwg.mxu0
        %v3226 = vadd.f32 %v3014, %v3100
        %v3227 = vadd.f32 %v3015, %v3103
        %v3228 = vadd.f32 %v3016, %v3108
        %v3229 = vadd.f32 %v3017, %v3111
        %v3230 = vadd.f32 %v3018, %v3116
        %v3231 = vadd.f32 %v3019, %v3119
        %v3232 = vadd.f32 %v3020, %v3124
        %v3233 = vadd.f32 %v3021, %v3127
        %v3234 = vadd.f32 %v3022, %v3132
        %v3235 = vadd.f32 %v3023, %v3135
        %v3236 = vadd.f32 %v3024, %v3140
        %v3237 = vadd.f32 %v3025, %v3143
        %v3238 = vadd.f32 %v3026, %v3148
        %v3239 = vadd.f32 %v3027, %v3151
        %v3240 = vadd.f32 %v3028, %v3156
        %v3241 = vadd.f32 %v3029, %v3159
        %v3242 = vadd.f32 %v3030, %v3164
        %v3243 = vadd.f32 %v3031, %v3167
        %v3244 = vadd.f32 %v3032, %v3172
        %v3245 = vadd.f32 %v3033, %v3175
        %v3246 = vadd.f32 %v3034, %v3180
        %v3247 = vadd.f32 %v3035, %v3183
        %v3248 = vadd.f32 %v3036, %v3188
        %v3249 = vadd.f32 %v3037, %v3191
        %v3250 = vadd.f32 %v3038, %v3196
        %v3251 = vadd.f32 %v3039, %v3199
        %v3252 = vadd.f32 %v3040, %v3204
        %v3253 = vadd.f32 %v3041, %v3207
        %v3254 = vadd.f32 %v3042, %v3212
        %v3255 = vadd.f32 %v3043, %v3215
        %v3256 = vadd.f32 %v3044, %v3220
        %v3257 = vadd.f32 %v3045, %v3223
        %v3259 = vshrl.u32 %v221, 16
        %v3261 = vrot.slane %v3259, 4
        %v3262 = vshll.u32 %v221, 16
        %v3264 = vrot.slane %v3262, 5
        %v3265 = vor.u32 %v3261, %v3264
        %v3266 = vrot.slane %v3265, 4
        %v3268 = vshll.u32 %v222, 16
        %v3270 = vrot.slane %v3268, 5
        %v3271 = vsel %vm231, %v3266, %v3270
        %v3272 = vshrl.u32 %v222, 16
        %v3274 = vrot.slane %v3272, 4
        %v3275 = vor.u32 %v3274, %v3270
        %v3276 = vrot.slane %v3275, 4
        %v3278 = vshll.u32 %v223, 16
        %v3280 = vrot.slane %v3278, 5
        %v3281 = vsel %vm231, %v3276, %v3280
        %s3282 = scalar_lea.vmem %s1, 72
        %v3283 = vld [vmem:[%s3282] sm:$0xf]
        %v3284 = vld [vmem:[%s3282 + $0x4] sm:$0x3]
        %v3285 = vunpack.c.l.b16 %v3271
        %v3286 = vunpack.c.l.b16 %v3281
        %v3287 = vpack.c.b16 %v3286, %v3285
        %v3290 = vunpack.c.l.b16 %v3283
        %v3291 = vunpack.c.l.b16 %v3284
        %v3292 = vpack.c.b16 %v3291, %v3290
        %v3294 = vsel %vm672, %v3287, 0
        %v3297 = vsel %vm721, %v3292, 0
        %3299 = vmatprep.subr.bf16.mxu0 0
        %3300 = vmatpush1.bf16.msra.mxu0 %v3297
        %3301 = vmatprep.subr.bf16.mxu0 0
        %3302 = vmatpush1.bf16.msra.mxu0 0
        %3303 = vmatprep.subr.bf16.mxu0 0
        %3304 = vmatpush1.bf16.msra.mxu0 0
        %3305 = vmatprep.subr.bf16.mxu0 0
        %3306 = vmatpush1.bf16.msra.mxu0 0
        %3307 = vmatprep.subr.bf16.mxu0 0
        %3308 = vmatpush1.bf16.msra.mxu0 0
        %3309 = vmatprep.subr.bf16.mxu0 0
        %3310 = vmatpush1.bf16.msra.mxu0 0
        %3311 = vmatprep.subr.bf16.mxu0 0
        %3312 = vmatpush1.bf16.msra.mxu0 0
        %3313 = vmatprep.subr.bf16.mxu0 0
        %3314 = vmatpush1.bf16.msra.mxu0 0
        %3315 = vmatprep.subr.bf16.mxu0 0
        %3316 = vmatpush1.bf16.msra.mxu0 0
        %3317 = vmatprep.subr.bf16.mxu0 0
        %3318 = vmatpush1.bf16.msra.mxu0 0
        %3319 = vmatprep.subr.bf16.mxu0 0
        %3320 = vmatpush1.bf16.msra.mxu0 0
        %3321 = vmatprep.subr.bf16.mxu0 0
        %3322 = vmatpush1.bf16.msra.mxu0 0
        %3323 = vmatprep.subr.bf16.mxu0 0
        %3324 = vmatpush1.bf16.msra.mxu0 0
        %3325 = vmatprep.subr.bf16.mxu0 0
        %3326 = vmatpush1.bf16.msra.mxu0 0
        %3327 = vmatprep.subr.bf16.mxu0 0
        %3328 = vmatpush1.bf16.msra.mxu0 0
        %3329 = vmatprep.subr.bf16.mxu0 0
        %3330 = vmatpush1.bf16.msra.mxu0 0
        %3331 = vmatprep.mubr.bf16.mxu0 0
        %3332 = vmatmul.mubr.bf16.gmra.mrb[0].mxu0 %v680
        %v3333 = vpop.f32.mrb[0].mxu0
        %v3334 = vadd.f32 0.0, %v3333
        %v3335 = vpop.f32.mrb[0].mxu0
        %v3336 = vpop.f32.mrb[0].mxu0
        %v3337 = vadd.f32 0.0, %v3336
        %v3338 = vpop.f32.mrb[0].mxu0
        %3339 = vmatprep.mubr.bf16.mxu0 0
        %3340 = vmatmul.mubr.bf16.gmra.mrb[0].mxu0 %v683
        %v3341 = vpop.f32.mrb[0].mxu0
        %v3342 = vadd.f32 0.0, %v3341
        %v3343 = vpop.f32.mrb[0].mxu0
        %v3344 = vpop.f32.mrb[0].mxu0
        %v3345 = vadd.f32 0.0, %v3344
        %v3346 = vpop.f32.mrb[0].mxu0
        %3347 = vmatprep.mubr.bf16.mxu0 0
        %3348 = vmatmul.mubr.bf16.gmra.mrb[0].mxu0 %v686
        %v3349 = vpop.f32.mrb[0].mxu0
        %v3350 = vadd.f32 0.0, %v3349
        %v3351 = vpop.f32.mrb[0].mxu0
        %v3352 = vpop.f32.mrb[0].mxu0
        %v3353 = vadd.f32 0.0, %v3352
        %v3354 = vpop.f32.mrb[0].mxu0
        %3355 = vmatprep.mubr.bf16.mxu0 0
        %3356 = vmatmul.mubr.bf16.gmra.mrb[0].mxu0 %v689
        %v3357 = vpop.f32.mrb[0].mxu0
        %v3358 = vadd.f32 0.0, %v3357
        %v3359 = vpop.f32.mrb[0].mxu0
        %v3360 = vpop.f32.mrb[0].mxu0
        %v3361 = vadd.f32 0.0, %v3360
        %v3362 = vpop.f32.mrb[0].mxu0
        %3363 = vmatprep.mubr.bf16.mxu0 0
        %3364 = vmatmul.mubr.bf16.gmra.mrb[0].mxu0 %v692
        %v3365 = vpop.f32.mrb[0].mxu0
        %v3366 = vadd.f32 0.0, %v3365
        %v3367 = vpop.f32.mrb[0].mxu0
        %v3368 = vpop.f32.mrb[0].mxu0
        %v3369 = vadd.f32 0.0, %v3368
        %v3370 = vpop.f32.mrb[0].mxu0
        %3371 = vmatprep.mubr.bf16.mxu0 0
        %3372 = vmatmul.mubr.bf16.gmra.mrb[0].mxu0 %v695
        %v3373 = vpop.f32.mrb[0].mxu0
        %v3374 = vadd.f32 0.0, %v3373
        %v3375 = vpop.f32.mrb[0].mxu0
        %v3376 = vpop.f32.mrb[0].mxu0
        %v3377 = vadd.f32 0.0, %v3376
        %v3378 = vpop.f32.mrb[0].mxu0
        %3379 = vmatprep.mubr.bf16.mxu0 0
        %3380 = vmatmul.mubr.bf16.gmra.mrb[0].mxu0 %v698
        %v3381 = vpop.f32.mrb[0].mxu0
        %v3382 = vadd.f32 0.0, %v3381
        %v3383 = vpop.f32.mrb[0].mxu0
        %v3384 = vpop.f32.mrb[0].mxu0
        %v3385 = vadd.f32 0.0, %v3384
        %v3386 = vpop.f32.mrb[0].mxu0
        %3387 = vmatprep.mubr.bf16.mxu0 0
        %3388 = vmatmul.mubr.bf16.gmra.mrb[0].mxu0 %v701
        %v3389 = vpop.f32.mrb[0].mxu0
        %v3390 = vadd.f32 0.0, %v3389
        %v3391 = vpop.f32.mrb[0].mxu0
        %v3392 = vpop.f32.mrb[0].mxu0
        %v3393 = vadd.f32 0.0, %v3392
        %v3394 = vpop.f32.mrb[0].mxu0
        %3395 = vmatprep.mubr.bf16.mxu0 0
        %3396 = vmatmul.mubr.bf16.gmra.mrb[0].mxu0 %v704
        %v3397 = vpop.f32.mrb[0].mxu0
        %v3398 = vadd.f32 0.0, %v3397
        %v3399 = vpop.f32.mrb[0].mxu0
        %v3400 = vpop.f32.mrb[0].mxu0
        %v3401 = vadd.f32 0.0, %v3400
        %v3402 = vpop.f32.mrb[0].mxu0
        %3403 = vmatprep.mubr.bf16.mxu0 0
        %3404 = vmatmul.mubr.bf16.gmra.mrb[0].mxu0 %v707
        %v3405 = vpop.f32.mrb[0].mxu0
        %v3406 = vadd.f32 0.0, %v3405
        %v3407 = vpop.f32.mrb[0].mxu0
        %v3408 = vpop.f32.mrb[0].mxu0
        %v3409 = vadd.f32 0.0, %v3408
        %v3410 = vpop.f32.mrb[0].mxu0
        %3411 = vmatprep.mubr.bf16.mxu0 0
        %3412 = vmatmul.mubr.bf16.gmra.mrb[0].mxu0 %v710
        %v3413 = vpop.f32.mrb[0].mxu0
        %v3414 = vadd.f32 0.0, %v3413
        %v3415 = vpop.f32.mrb[0].mxu0
        %v3416 = vpop.f32.mrb[0].mxu0
        %v3417 = vadd.f32 0.0, %v3416
        %v3418 = vpop.f32.mrb[0].mxu0
        %3419 = vmatprep.mubr.bf16.mxu0 0
        %3420 = vmatmul.mubr.bf16.gmra.mrb[0].mxu0 %v713
        %v3421 = vpop.f32.mrb[0].mxu0
        %v3422 = vadd.f32 0.0, %v3421
        %v3423 = vpop.f32.mrb[0].mxu0
        %v3424 = vpop.f32.mrb[0].mxu0
        %v3425 = vadd.f32 0.0, %v3424
        %v3426 = vpop.f32.mrb[0].mxu0
        %3427 = vmatprep.mubr.bf16.mxu0 0
        %3428 = vmatmul.mubr.bf16.gmra.mrb[0].mxu0 %v716
        %v3429 = vpop.f32.mrb[0].mxu0
        %v3430 = vadd.f32 0.0, %v3429
        %v3431 = vpop.f32.mrb[0].mxu0
        %v3432 = vpop.f32.mrb[0].mxu0
        %v3433 = vadd.f32 0.0, %v3432
        %v3434 = vpop.f32.mrb[0].mxu0
        %3435 = vmatprep.mubr.bf16.mxu0 0
        %3436 = vmatmul.mubr.bf16.gmra.mrb[0].mxu0 %v719
        %v3437 = vpop.f32.mrb[0].mxu0
        %v3438 = vadd.f32 0.0, %v3437
        %v3439 = vpop.f32.mrb[0].mxu0
        %v3440 = vpop.f32.mrb[0].mxu0
        %v3441 = vadd.f32 0.0, %v3440
        %v3442 = vpop.f32.mrb[0].mxu0
        %3443 = vmatprep.mubr.bf16.mxu0 0
        %3444 = vmatmul.mubr.bf16.gmra.mrb[0].mxu0 %v2405
        %v3445 = vpop.f32.mrb[0].mxu0
        %v3446 = vadd.f32 0.0, %v3445
        %v3447 = vpop.f32.mrb[0].mxu0
        %v3448 = vpop.f32.mrb[0].mxu0
        %v3449 = vadd.f32 0.0, %v3448
        %v3450 = vpop.f32.mrb[0].mxu0
        %3451 = vmatprep.mubr.bf16.mxu0 0
        %3452 = vmatmul.mubr.bf16.gmra.mrb[0].mxu0 %v3294
        %v3453 = vpop.f32.mrb[0].mxu0
        %v3454 = vadd.f32 0.0, %v3453
        %v3455 = vpop.f32.mrb[0].mxu0
        %v3456 = vpop.f32.mrb[0].mxu0
        %v3457 = vadd.f32 0.0, %v3456
        %v3458 = vpop.f32.mrb[0].mxu0
        %3459 = vdwg.mxu0
        %v3460 = vadd.f32 %v3226, %v3334
        %v3461 = vadd.f32 %v3227, %v3337
        %v3462 = vadd.f32 %v3228, %v3342
        %v3463 = vadd.f32 %v3229, %v3345
        %v3464 = vadd.f32 %v3230, %v3350
        %v3465 = vadd.f32 %v3231, %v3353
        %v3466 = vadd.f32 %v3232, %v3358
        %v3467 = vadd.f32 %v3233, %v3361
        %v3468 = vadd.f32 %v3234, %v3366
        %v3469 = vadd.f32 %v3235, %v3369
        %v3470 = vadd.f32 %v3236, %v3374
        %v3471 = vadd.f32 %v3237, %v3377
        %v3472 = vadd.f32 %v3238, %v3382
        %v3473 = vadd.f32 %v3239, %v3385
        %v3474 = vadd.f32 %v3240, %v3390
        %v3475 = vadd.f32 %v3241, %v3393
        %v3476 = vadd.f32 %v3242, %v3398
        %v3477 = vadd.f32 %v3243, %v3401
        %v3478 = vadd.f32 %v3244, %v3406
        %v3479 = vadd.f32 %v3245, %v3409
        %v3480 = vadd.f32 %v3246, %v3414
        %v3481 = vadd.f32 %v3247, %v3417
        %v3482 = vadd.f32 %v3248, %v3422
        %v3483 = vadd.f32 %v3249, %v3425
        %v3484 = vadd.f32 %v3250, %v3430
        %v3485 = vadd.f32 %v3251, %v3433
        %v3486 = vadd.f32 %v3252, %v3438
        %v3487 = vadd.f32 %v3253, %v3441
        %v3488 = vadd.f32 %v3254, %v3446
        %v3489 = vadd.f32 %v3255, %v3449
        %v3490 = vadd.f32 %v3256, %v3454
        %v3491 = vadd.f32 %v3257, %v3457
        %v3493 = vrot.slane %v221, 5
        %v3494 = vrot.slane %v3493, 4
        %v3495 = vrot.slane %v222, 5
        %v3496 = vsel %vm1201, %v3494, %v3495
        %v3497 = vrot.slane %v3495, 4
        %v3498 = vrot.slane %v223, 5
        %v3499 = vsel %vm1201, %v3497, %v3498
        %s3500 = scalar_lea.vmem %s1, 80
        %v3501 = vld [vmem:[%s3500] sm:$0xf]
        %v3502 = vld [vmem:[%s3500 + $0x4] sm:$0x3]
        %v3503 = vunpack.c.l.b16 %v3496
        %v3504 = vunpack.c.l.b16 %v3499
        %v3505 = vpack.c.b16 %v3504, %v3503
        %v3508 = vunpack.c.l.b16 %v3501
        %v3509 = vunpack.c.l.b16 %v3502
        %v3510 = vpack.c.b16 %v3509, %v3508
        %v3512 = vsel %vm672, %v3505, 0
        %v3515 = vsel %vm721, %v3510, 0
        %3517 = vmatprep.subr.bf16.mxu0 0
        %3518 = vmatpush1.bf16.msra.mxu0 %v3515
        %3519 = vmatprep.subr.bf16.mxu0 0
        %3520 = vmatpush1.bf16.msra.mxu0 0
        %3521 = vmatprep.subr.bf16.mxu0 0
        %3522 = vmatpush1.bf16.msra.mxu0 0
        %3523 = vmatprep.subr.bf16.mxu0 0
        %3524 = vmatpush1.bf16.msra.mxu0 0
        %3525 = vmatprep.subr.bf16.mxu0 0
        %3526 = vmatpush1.bf16.msra.mxu0 0
        %3527 = vmatprep.subr.bf16.mxu0 0
        %3528 = vmatpush1.bf16.msra.mxu0 0
        %3529 = vmatprep.subr.bf16.mxu0 0
        %3530 = vmatpush1.bf16.msra.mxu0 0
        %3531 = vmatprep.subr.bf16.mxu0 0
        %3532 = vmatpush1.bf16.msra.mxu0 0
        %3533 = vmatprep.subr.bf16.mxu0 0
        %3534 = vmatpush1.bf16.msra.mxu0 0
        %3535 = vmatprep.subr.bf16.mxu0 0
        %3536 = vmatpush1.bf16.msra.mxu0 0
        %3537 = vmatprep.subr.bf16.mxu0 0
        %3538 = vmatpush1.bf16.msra.mxu0 0
        %3539 = vmatprep.subr.bf16.mxu0 0
        %3540 = vmatpush1.bf16.msra.mxu0 0
        %3541 = vmatprep.subr.bf16.mxu0 0
        %3542 = vmatpush1.bf16.msra.mxu0 0
        %3543 = vmatprep.subr.bf16.mxu0 0
        %3544 = vmatpush1.bf16.msra.mxu0 0
        %3545 = vmatprep.subr.bf16.mxu0 0
        %3546 = vmatpush1.bf16.msra.mxu0 0
        %3547 = vmatprep.subr.bf16.mxu0 0
        %3548 = vmatpush1.bf16.msra.mxu0 0
        %3549 = vmatprep.mubr.bf16.mxu0 0
        %3550 = vmatmul.mubr.bf16.gmra.mrb[0].mxu0 %v1377
        %v3551 = vpop.f32.mrb[0].mxu0
        %v3552 = vadd.f32 0.0, %v3551
        %v3553 = vpop.f32.mrb[0].mxu0
        %v3554 = vpop.f32.mrb[0].mxu0
        %v3555 = vadd.f32 0.0, %v3554
        %v3556 = vpop.f32.mrb[0].mxu0
        %3557 = vmatprep.mubr.bf16.mxu0 0
        %3558 = vmatmul.mubr.bf16.gmra.mrb[0].mxu0 %v1380
        %v3559 = vpop.f32.mrb[0].mxu0
        %v3560 = vadd.f32 0.0, %v3559
        %v3561 = vpop.f32.mrb[0].mxu0
        %v3562 = vpop.f32.mrb[0].mxu0
        %v3563 = vadd.f32 0.0, %v3562
        %v3564 = vpop.f32.mrb[0].mxu0
        %3565 = vmatprep.mubr.bf16.mxu0 0
        %3566 = vmatmul.mubr.bf16.gmra.mrb[0].mxu0 %v1383
        %v3567 = vpop.f32.mrb[0].mxu0
        %v3568 = vadd.f32 0.0, %v3567
        %v3569 = vpop.f32.mrb[0].mxu0
        %v3570 = vpop.f32.mrb[0].mxu0
        %v3571 = vadd.f32 0.0, %v3570
        %v3572 = vpop.f32.mrb[0].mxu0
        %3573 = vmatprep.mubr.bf16.mxu0 0
        %3574 = vmatmul.mubr.bf16.gmra.mrb[0].mxu0 %v1386
        %v3575 = vpop.f32.mrb[0].mxu0
        %v3576 = vadd.f32 0.0, %v3575
        %v3577 = vpop.f32.mrb[0].mxu0
        %v3578 = vpop.f32.mrb[0].mxu0
        %v3579 = vadd.f32 0.0, %v3578
        %v3580 = vpop.f32.mrb[0].mxu0
        %3581 = vmatprep.mubr.bf16.mxu0 0
        %3582 = vmatmul.mubr.bf16.gmra.mrb[0].mxu0 %v1389
        %v3583 = vpop.f32.mrb[0].mxu0
        %v3584 = vadd.f32 0.0, %v3583
        %v3585 = vpop.f32.mrb[0].mxu0
        %v3586 = vpop.f32.mrb[0].mxu0
        %v3587 = vadd.f32 0.0, %v3586
        %v3588 = vpop.f32.mrb[0].mxu0
        %3589 = vmatprep.mubr.bf16.mxu0 0
        %3590 = vmatmul.mubr.bf16.gmra.mrb[0].mxu0 %v1392
        %v3591 = vpop.f32.mrb[0].mxu0
        %v3592 = vadd.f32 0.0, %v3591
        %v3593 = vpop.f32.mrb[0].mxu0
        %v3594 = vpop.f32.mrb[0].mxu0
        %v3595 = vadd.f32 0.0, %v3594
        %v3596 = vpop.f32.mrb[0].mxu0
        %3597 = vmatprep.mubr.bf16.mxu0 0
        %3598 = vmatmul.mubr.bf16.gmra.mrb[0].mxu0 %v1395
        %v3599 = vpop.f32.mrb[0].mxu0
        %v3600 = vadd.f32 0.0, %v3599
        %v3601 = vpop.f32.mrb[0].mxu0
        %v3602 = vpop.f32.mrb[0].mxu0
        %v3603 = vadd.f32 0.0, %v3602
        %v3604 = vpop.f32.mrb[0].mxu0
        %3605 = vmatprep.mubr.bf16.mxu0 0
        %3606 = vmatmul.mubr.bf16.gmra.mrb[0].mxu0 %v1398
        %v3607 = vpop.f32.mrb[0].mxu0
        %v3608 = vadd.f32 0.0, %v3607
        %v3609 = vpop.f32.mrb[0].mxu0
        %v3610 = vpop.f32.mrb[0].mxu0
        %v3611 = vadd.f32 0.0, %v3610
        %v3612 = vpop.f32.mrb[0].mxu0
        %3613 = vmatprep.mubr.bf16.mxu0 0
        %3614 = vmatmul.mubr.bf16.gmra.mrb[0].mxu0 %v1401
        %v3615 = vpop.f32.mrb[0].mxu0
        %v3616 = vadd.f32 0.0, %v3615
        %v3617 = vpop.f32.mrb[0].mxu0
        %v3618 = vpop.f32.mrb[0].mxu0
        %v3619 = vadd.f32 0.0, %v3618
        %v3620 = vpop.f32.mrb[0].mxu0
        %3621 = vmatprep.mubr.bf16.mxu0 0
        %3622 = vmatmul.mubr.bf16.gmra.mrb[0].mxu0 %v1404
        %v3623 = vpop.f32.mrb[0].mxu0
        %v3624 = vadd.f32 0.0, %v3623
        %v3625 = vpop.f32.mrb[0].mxu0
        %v3626 = vpop.f32.mrb[0].mxu0
        %v3627 = vadd.f32 0.0, %v3626
        %v3628 = vpop.f32.mrb[0].mxu0
        %3629 = vmatprep.mubr.bf16.mxu0 0
        %3630 = vmatmul.mubr.bf16.gmra.mrb[0].mxu0 %v1407
        %v3631 = vpop.f32.mrb[0].mxu0
        %v3632 = vadd.f32 0.0, %v3631
        %v3633 = vpop.f32.mrb[0].mxu0
        %v3634 = vpop.f32.mrb[0].mxu0
        %v3635 = vadd.f32 0.0, %v3634
        %v3636 = vpop.f32.mrb[0].mxu0
        %3637 = vmatprep.mubr.bf16.mxu0 0
        %3638 = vmatmul.mubr.bf16.gmra.mrb[0].mxu0 %v1410
        %v3639 = vpop.f32.mrb[0].mxu0
        %v3640 = vadd.f32 0.0, %v3639
        %v3641 = vpop.f32.mrb[0].mxu0
        %v3642 = vpop.f32.mrb[0].mxu0
        %v3643 = vadd.f32 0.0, %v3642
        %v3644 = vpop.f32.mrb[0].mxu0
        %3645 = vmatprep.mubr.bf16.mxu0 0
        %3646 = vmatmul.mubr.bf16.gmra.mrb[0].mxu0 %v1413
        %v3647 = vpop.f32.mrb[0].mxu0
        %v3648 = vadd.f32 0.0, %v3647
        %v3649 = vpop.f32.mrb[0].mxu0
        %v3650 = vpop.f32.mrb[0].mxu0
        %v3651 = vadd.f32 0.0, %v3650
        %v3652 = vpop.f32.mrb[0].mxu0
        %3653 = vmatprep.mubr.bf16.mxu0 0
        %3654 = vmatmul.mubr.bf16.gmra.mrb[0].mxu0 %v1416
        %v3655 = vpop.f32.mrb[0].mxu0
        %v3656 = vadd.f32 0.0, %v3655
        %v3657 = vpop.f32.mrb[0].mxu0
        %v3658 = vpop.f32.mrb[0].mxu0
        %v3659 = vadd.f32 0.0, %v3658
        %v3660 = vpop.f32.mrb[0].mxu0
        %3661 = vmatprep.mubr.bf16.mxu0 0
        %3662 = vmatmul.mubr.bf16.gmra.mrb[0].mxu0 %v2623
        %v3663 = vpop.f32.mrb[0].mxu0
        %v3664 = vadd.f32 0.0, %v3663
        %v3665 = vpop.f32.mrb[0].mxu0
        %v3666 = vpop.f32.mrb[0].mxu0
        %v3667 = vadd.f32 0.0, %v3666
        %v3668 = vpop.f32.mrb[0].mxu0
        %3669 = vmatprep.mubr.bf16.mxu0 0
        %3670 = vmatmul.mubr.bf16.gmra.mrb[0].mxu0 %v3512
        %v3671 = vpop.f32.mrb[0].mxu0
        %v3672 = vadd.f32 0.0, %v3671
        %v3673 = vpop.f32.mrb[0].mxu0
        %v3674 = vpop.f32.mrb[0].mxu0
        %v3675 = vadd.f32 0.0, %v3674
        %v3676 = vpop.f32.mrb[0].mxu0
        %3677 = vdwg.mxu0
        %v3678 = vadd.f32 %v3460, %v3552
        %v3679 = vadd.f32 %v3461, %v3555
        %v3680 = vadd.f32 %v3462, %v3560
        %v3681 = vadd.f32 %v3463, %v3563
        %v3682 = vadd.f32 %v3464, %v3568
        %v3683 = vadd.f32 %v3465, %v3571
        %v3684 = vadd.f32 %v3466, %v3576
        %v3685 = vadd.f32 %v3467, %v3579
        %v3686 = vadd.f32 %v3468, %v3584
        %v3687 = vadd.f32 %v3469, %v3587
        %v3688 = vadd.f32 %v3470, %v3592
        %v3689 = vadd.f32 %v3471, %v3595
        %v3690 = vadd.f32 %v3472, %v3600
        %v3691 = vadd.f32 %v3473, %v3603
        %v3692 = vadd.f32 %v3474, %v3608
        %v3693 = vadd.f32 %v3475, %v3611
        %v3694 = vadd.f32 %v3476, %v3616
        %v3695 = vadd.f32 %v3477, %v3619
        %v3696 = vadd.f32 %v3478, %v3624
        %v3697 = vadd.f32 %v3479, %v3627
        %v3698 = vadd.f32 %v3480, %v3632
        %v3699 = vadd.f32 %v3481, %v3635
        %v3700 = vadd.f32 %v3482, %v3640
        %v3701 = vadd.f32 %v3483, %v3643
        %v3702 = vadd.f32 %v3484, %v3648
        %v3703 = vadd.f32 %v3485, %v3651
        %v3704 = vadd.f32 %v3486, %v3656
        %v3705 = vadd.f32 %v3487, %v3659
        %v3706 = vadd.f32 %v3488, %v3664
        %v3707 = vadd.f32 %v3489, %v3667
        %v3708 = vadd.f32 %v3490, %v3672
        %v3709 = vadd.f32 %v3491, %v3675
        %v3710 = vrot.slane %v3259, 5
        %v3711 = vrot.slane %v3262, 6
        %v3712 = vor.u32 %v3710, %v3711
        %v3713 = vrot.slane %v3712, 4
        %v3714 = vrot.slane %v3272, 5
        %v3715 = vrot.slane %v3268, 6
        %v3716 = vor.u32 %v3714, %v3715
        %v3717 = vsel %vm1616, %v3713, %v3716
        %v3718 = vrot.slane %v3716, 4
        %v3719 = vshrl.u32 %v223, 16
        %v3721 = vrot.slane %v3719, 5
        %v3722 = vrot.slane %v3278, 6
        %v3723 = vor.u32 %v3721, %v3722
        %v3724 = vsel %vm1616, %v3718, %v3723
        %s3725 = scalar_lea.vmem %s1, 88
        %v3726 = vld [vmem:[%s3725] sm:$0xf]
        %v3727 = vld [vmem:[%s3725 + $0x4] sm:$0x3]
        %v3728 = vunpack.c.l.b16 %v3717
        %v3729 = vunpack.c.l.b16 %v3724
        %v3730 = vpack.c.b16 %v3729, %v3728
        %v3733 = vunpack.c.l.b16 %v3726
        %v3734 = vunpack.c.l.b16 %v3727
        %v3735 = vpack.c.b16 %v3734, %v3733
        %v3737 = vsel %vm672, %v3730, 0
        %v3740 = vsel %vm721, %v3735, 0
        %3742 = vmatprep.subr.bf16.mxu0 0
        %3743 = vmatpush1.bf16.msra.mxu0 %v3740
        %3744 = vmatprep.subr.bf16.mxu0 0
        %3745 = vmatpush1.bf16.msra.mxu0 0
        %3746 = vmatprep.subr.bf16.mxu0 0
        %3747 = vmatpush1.bf16.msra.mxu0 0
        %3748 = vmatprep.subr.bf16.mxu0 0
        %3749 = vmatpush1.bf16.msra.mxu0 0
        %3750 = vmatprep.subr.bf16.mxu0 0
        %3751 = vmatpush1.bf16.msra.mxu0 0
        %3752 = vmatprep.subr.bf16.mxu0 0
        %3753 = vmatpush1.bf16.msra.mxu0 0
        %3754 = vmatprep.subr.bf16.mxu0 0
        %3755 = vmatpush1.bf16.msra.mxu0 0
        %3756 = vmatprep.subr.bf16.mxu0 0
        %3757 = vmatpush1.bf16.msra.mxu0 0
        %3758 = vmatprep.subr.bf16.mxu0 0
        %3759 = vmatpush1.bf16.msra.mxu0 0
        %3760 = vmatprep.subr.bf16.mxu0 0
        %3761 = vmatpush1.bf16.msra.mxu0 0
        %3762 = vmatprep.subr.bf16.mxu0 0
        %3763 = vmatpush1.bf16.msra.mxu0 0
        %3764 = vmatprep.subr.bf16.mxu0 0
        %3765 = vmatpush1.bf16.msra.mxu0 0
        %3766 = vmatprep.subr.bf16.mxu0 0
        %3767 = vmatpush1.bf16.msra.mxu0 0
        %3768 = vmatprep.subr.bf16.mxu0 0
        %3769 = vmatpush1.bf16.msra.mxu0 0
        %3770 = vmatprep.subr.bf16.mxu0 0
        %3771 = vmatpush1.bf16.msra.mxu0 0
        %3772 = vmatprep.subr.bf16.mxu0 0
        %3773 = vmatpush1.bf16.msra.mxu0 0
        %3774 = vmatprep.mubr.bf16.mxu0 0
        %3775 = vmatmul.mubr.bf16.gmra.mrb[0].mxu0 %v1920
        %v3776 = vpop.f32.mrb[0].mxu0
        %v3777 = vadd.f32 0.0, %v3776
        %v3778 = vpop.f32.mrb[0].mxu0
        %v3779 = vpop.f32.mrb[0].mxu0
        %v3780 = vadd.f32 0.0, %v3779
        %v3781 = vpop.f32.mrb[0].mxu0
        %3782 = vmatprep.mubr.bf16.mxu0 0
        %3783 = vmatmul.mubr.bf16.gmra.mrb[0].mxu0 %v1923
        %v3784 = vpop.f32.mrb[0].mxu0
        %v3785 = vadd.f32 0.0, %v3784
        %v3786 = vpop.f32.mrb[0].mxu0
        %v3787 = vpop.f32.mrb[0].mxu0
        %v3788 = vadd.f32 0.0, %v3787
        %v3789 = vpop.f32.mrb[0].mxu0
        %3790 = vmatprep.mubr.bf16.mxu0 0
        %3791 = vmatmul.mubr.bf16.gmra.mrb[0].mxu0 %v1926
        %v3792 = vpop.f32.mrb[0].mxu0
        %v3793 = vadd.f32 0.0, %v3792
        %v3794 = vpop.f32.mrb[0].mxu0
        %v3795 = vpop.f32.mrb[0].mxu0
        %v3796 = vadd.f32 0.0, %v3795
        %v3797 = vpop.f32.mrb[0].mxu0
        %3798 = vmatprep.mubr.bf16.mxu0 0
        %3799 = vmatmul.mubr.bf16.gmra.mrb[0].mxu0 %v1929
        %v3800 = vpop.f32.mrb[0].mxu0
        %v3801 = vadd.f32 0.0, %v3800
        %v3802 = vpop.f32.mrb[0].mxu0
        %v3803 = vpop.f32.mrb[0].mxu0
        %v3804 = vadd.f32 0.0, %v3803
        %v3805 = vpop.f32.mrb[0].mxu0
        %3806 = vmatprep.mubr.bf16.mxu0 0
        %3807 = vmatmul.mubr.bf16.gmra.mrb[0].mxu0 %v1932
        %v3808 = vpop.f32.mrb[0].mxu0
        %v3809 = vadd.f32 0.0, %v3808
        %v3810 = vpop.f32.mrb[0].mxu0
        %v3811 = vpop.f32.mrb[0].mxu0
        %v3812 = vadd.f32 0.0, %v3811
        %v3813 = vpop.f32.mrb[0].mxu0
        %3814 = vmatprep.mubr.bf16.mxu0 0
        %3815 = vmatmul.mubr.bf16.gmra.mrb[0].mxu0 %v1935
        %v3816 = vpop.f32.mrb[0].mxu0
        %v3817 = vadd.f32 0.0, %v3816
        %v3818 = vpop.f32.mrb[0].mxu0
        %v3819 = vpop.f32.mrb[0].mxu0
        %v3820 = vadd.f32 0.0, %v3819
        %v3821 = vpop.f32.mrb[0].mxu0
        %3822 = vmatprep.mubr.bf16.mxu0 0
        %3823 = vmatmul.mubr.bf16.gmra.mrb[0].mxu0 %v1938
        %v3824 = vpop.f32.mrb[0].mxu0
        %v3825 = vadd.f32 0.0, %v3824
        %v3826 = vpop.f32.mrb[0].mxu0
        %v3827 = vpop.f32.mrb[0].mxu0
        %v3828 = vadd.f32 0.0, %v3827
        %v3829 = vpop.f32.mrb[0].mxu0
        %3830 = vmatprep.mubr.bf16.mxu0 0
        %3831 = vmatmul.mubr.bf16.gmra.mrb[0].mxu0 %v1941
        %v3832 = vpop.f32.mrb[0].mxu0
        %v3833 = vadd.f32 0.0, %v3832
        %v3834 = vpop.f32.mrb[0].mxu0
        %v3835 = vpop.f32.mrb[0].mxu0
        %v3836 = vadd.f32 0.0, %v3835
        %v3837 = vpop.f32.mrb[0].mxu0
        %3838 = vmatprep.mubr.bf16.mxu0 0
        %3839 = vmatmul.mubr.bf16.gmra.mrb[0].mxu0 %v1944
        %v3840 = vpop.f32.mrb[0].mxu0
        %v3841 = vadd.f32 0.0, %v3840
        %v3842 = vpop.f32.mrb[0].mxu0
        %v3843 = vpop.f32.mrb[0].mxu0
        %v3844 = vadd.f32 0.0, %v3843
        %v3845 = vpop.f32.mrb[0].mxu0
        %3846 = vmatprep.mubr.bf16.mxu0 0
        %3847 = vmatmul.mubr.bf16.gmra.mrb[0].mxu0 %v1947
        %v3848 = vpop.f32.mrb[0].mxu0
        %v3849 = vadd.f32 0.0, %v3848
        %v3850 = vpop.f32.mrb[0].mxu0
        %v3851 = vpop.f32.mrb[0].mxu0
        %v3852 = vadd.f32 0.0, %v3851
        %v3853 = vpop.f32.mrb[0].mxu0
        %3854 = vmatprep.mubr.bf16.mxu0 0
        %3855 = vmatmul.mubr.bf16.gmra.mrb[0].mxu0 %v1950
        %v3856 = vpop.f32.mrb[0].mxu0
        %v3857 = vadd.f32 0.0, %v3856
        %v3858 = vpop.f32.mrb[0].mxu0
        %v3859 = vpop.f32.mrb[0].mxu0
        %v3860 = vadd.f32 0.0, %v3859
        %v3861 = vpop.f32.mrb[0].mxu0
        %3862 = vmatprep.mubr.bf16.mxu0 0
        %3863 = vmatmul.mubr.bf16.gmra.mrb[0].mxu0 %v1953
        %v3864 = vpop.f32.mrb[0].mxu0
        %v3865 = vadd.f32 0.0, %v3864
        %v3866 = vpop.f32.mrb[0].mxu0
        %v3867 = vpop.f32.mrb[0].mxu0
        %v3868 = vadd.f32 0.0, %v3867
        %v3869 = vpop.f32.mrb[0].mxu0
        %3870 = vmatprep.mubr.bf16.mxu0 0
        %3871 = vmatmul.mubr.bf16.gmra.mrb[0].mxu0 %v1956
        %v3872 = vpop.f32.mrb[0].mxu0
        %v3873 = vadd.f32 0.0, %v3872
        %v3874 = vpop.f32.mrb[0].mxu0
        %v3875 = vpop.f32.mrb[0].mxu0
        %v3876 = vadd.f32 0.0, %v3875
        %v3877 = vpop.f32.mrb[0].mxu0
        %3878 = vmatprep.mubr.bf16.mxu0 0
        %3879 = vmatmul.mubr.bf16.gmra.mrb[0].mxu0 %v1959
        %v3880 = vpop.f32.mrb[0].mxu0
        %v3881 = vadd.f32 0.0, %v3880
        %v3882 = vpop.f32.mrb[0].mxu0
        %v3883 = vpop.f32.mrb[0].mxu0
        %v3884 = vadd.f32 0.0, %v3883
        %v3885 = vpop.f32.mrb[0].mxu0
        %3886 = vmatprep.mubr.bf16.mxu0 0
        %3887 = vmatmul.mubr.bf16.gmra.mrb[0].mxu0 %v2848
        %v3888 = vpop.f32.mrb[0].mxu0
        %v3889 = vadd.f32 0.0, %v3888
        %v3890 = vpop.f32.mrb[0].mxu0
        %v3891 = vpop.f32.mrb[0].mxu0
        %v3892 = vadd.f32 0.0, %v3891
        %v3893 = vpop.f32.mrb[0].mxu0
        %3894 = vmatprep.mubr.bf16.mxu0 0
        %3895 = vmatmul.mubr.bf16.gmra.mrb[0].mxu0 %v3737
        %v3896 = vpop.f32.mrb[0].mxu0
        %v3897 = vadd.f32 0.0, %v3896
        %v3898 = vpop.f32.mrb[0].mxu0
        %v3899 = vpop.f32.mrb[0].mxu0
        %v3900 = vadd.f32 0.0, %v3899
        %v3901 = vpop.f32.mrb[0].mxu0
        %3902 = vdwg.mxu0
        %v3903 = vadd.f32 %v3678, %v3777
        %v3904 = vadd.f32 %v3679, %v3780
        %v3905 = vadd.f32 %v3680, %v3785
        %v3906 = vadd.f32 %v3681, %v3788
        %v3907 = vadd.f32 %v3682, %v3793
        %v3908 = vadd.f32 %v3683, %v3796
        %v3909 = vadd.f32 %v3684, %v3801
        %v3910 = vadd.f32 %v3685, %v3804
        %v3911 = vadd.f32 %v3686, %v3809
        %v3912 = vadd.f32 %v3687, %v3812
        %v3913 = vadd.f32 %v3688, %v3817
        %v3914 = vadd.f32 %v3689, %v3820
        %v3915 = vadd.f32 %v3690, %v3825
        %v3916 = vadd.f32 %v3691, %v3828
        %v3917 = vadd.f32 %v3692, %v3833
        %v3918 = vadd.f32 %v3693, %v3836
        %v3919 = vadd.f32 %v3694, %v3841
        %v3920 = vadd.f32 %v3695, %v3844
        %v3921 = vadd.f32 %v3696, %v3849
        %v3922 = vadd.f32 %v3697, %v3852
        %v3923 = vadd.f32 %v3698, %v3857
        %v3924 = vadd.f32 %v3699, %v3860
        %v3925 = vadd.f32 %v3700, %v3865
        %v3926 = vadd.f32 %v3701, %v3868
        %v3927 = vadd.f32 %v3702, %v3873
        %v3928 = vadd.f32 %v3703, %v3876
        %v3929 = vadd.f32 %v3704, %v3881
        %v3930 = vadd.f32 %v3705, %v3884
        %v3931 = vadd.f32 %v3706, %v3889
        %v3932 = vadd.f32 %v3707, %v3892
        %v3933 = vadd.f32 %v3708, %v3897
        %v3934 = vadd.f32 %v3709, %v3900
        %s3935 = scalar_lea.vmem %s1, 96
        %v3936 = vld [vmem:[%s3935] sm:$0xf]
        %v3937 = vld [vmem:[%s3935 + $0x4] sm:$0x3]
        %v3940 = vunpack.c.l.b16 %v224
        %v3941 = vunpack.c.l.b16 %v225
        %v3942 = vpack.c.b16 %v3941, %v3940
        %v3945 = vunpack.c.l.b16 %v3936
        %v3946 = vunpack.c.l.b16 %v3937
        %v3947 = vpack.c.b16 %v3946, %v3945
        %v3949 = vsel %vm672, %v3942, 0
        %v3952 = vsel %vm721, %v3947, 0
        %3954 = vmatprep.subr.bf16.mxu0 0
        %3955 = vmatpush1.bf16.msra.mxu0 %v3952
        %3956 = vmatprep.subr.bf16.mxu0 0
        %3957 = vmatpush1.bf16.msra.mxu0 0
        %3958 = vmatprep.subr.bf16.mxu0 0
        %3959 = vmatpush1.bf16.msra.mxu0 0
        %3960 = vmatprep.subr.bf16.mxu0 0
        %3961 = vmatpush1.bf16.msra.mxu0 0
        %3962 = vmatprep.subr.bf16.mxu0 0
        %3963 = vmatpush1.bf16.msra.mxu0 0
        %3964 = vmatprep.subr.bf16.mxu0 0
        %3965 = vmatpush1.bf16.msra.mxu0 0
        %3966 = vmatprep.subr.bf16.mxu0 0
        %3967 = vmatpush1.bf16.msra.mxu0 0
        %3968 = vmatprep.subr.bf16.mxu0 0
        %3969 = vmatpush1.bf16.msra.mxu0 0
        %3970 = vmatprep.subr.bf16.mxu0 0
        %3971 = vmatpush1.bf16.msra.mxu0 0
        %3972 = vmatprep.subr.bf16.mxu0 0
        %3973 = vmatpush1.bf16.msra.mxu0 0
        %3974 = vmatprep.subr.bf16.mxu0 0
        %3975 = vmatpush1.bf16.msra.mxu0 0
        %3976 = vmatprep.subr.bf16.mxu0 0
        %3977 = vmatpush1.bf16.msra.mxu0 0
        %3978 = vmatprep.subr.bf16.mxu0 0
        %3979 = vmatpush1.bf16.msra.mxu0 0
        %3980 = vmatprep.subr.bf16.mxu0 0
        %3981 = vmatpush1.bf16.msra.mxu0 0
        %3982 = vmatprep.subr.bf16.mxu0 0
        %3983 = vmatpush1.bf16.msra.mxu0 0
        %3984 = vmatprep.subr.bf16.mxu0 0
        %3985 = vmatpush1.bf16.msra.mxu0 0
        %3986 = vmatprep.mubr.bf16.mxu0 0
        %3987 = vmatmul.mubr.bf16.gmra.mrb[0].mxu0 %v981
        %v3988 = vpop.f32.mrb[0].mxu0
        %v3989 = vadd.f32 0.0, %v3988
        %v3990 = vpop.f32.mrb[0].mxu0
        %v3991 = vpop.f32.mrb[0].mxu0
        %v3992 = vadd.f32 0.0, %v3991
        %v3993 = vpop.f32.mrb[0].mxu0
        %3994 = vmatprep.mubr.bf16.mxu0 0
        %3995 = vmatmul.mubr.bf16.gmra.mrb[0].mxu0 %v984
        %v3996 = vpop.f32.mrb[0].mxu0
        %v3997 = vadd.f32 0.0, %v3996
        %v3998 = vpop.f32.mrb[0].mxu0
        %v3999 = vpop.f32.mrb[0].mxu0
        %v4000 = vadd.f32 0.0, %v3999
        %v4001 = vpop.f32.mrb[0].mxu0
        %4002 = vmatprep.mubr.bf16.mxu0 0
        %4003 = vmatmul.mubr.bf16.gmra.mrb[0].mxu0 %v987
        %v4004 = vpop.f32.mrb[0].mxu0
        %v4005 = vadd.f32 0.0, %v4004
        %v4006 = vpop.f32.mrb[0].mxu0
        %v4007 = vpop.f32.mrb[0].mxu0
        %v4008 = vadd.f32 0.0, %v4007
        %v4009 = vpop.f32.mrb[0].mxu0
        %4010 = vmatprep.mubr.bf16.mxu0 0
        %4011 = vmatmul.mubr.bf16.gmra.mrb[0].mxu0 %v990
        %v4012 = vpop.f32.mrb[0].mxu0
        %v4013 = vadd.f32 0.0, %v4012
        %v4014 = vpop.f32.mrb[0].mxu0
        %v4015 = vpop.f32.mrb[0].mxu0
        %v4016 = vadd.f32 0.0, %v4015
        %v4017 = vpop.f32.mrb[0].mxu0
        %4018 = vmatprep.mubr.bf16.mxu0 0
        %4019 = vmatmul.mubr.bf16.gmra.mrb[0].mxu0 %v993
        %v4020 = vpop.f32.mrb[0].mxu0
        %v4021 = vadd.f32 0.0, %v4020
        %v4022 = vpop.f32.mrb[0].mxu0
        %v4023 = vpop.f32.mrb[0].mxu0
        %v4024 = vadd.f32 0.0, %v4023
        %v4025 = vpop.f32.mrb[0].mxu0
        %4026 = vmatprep.mubr.bf16.mxu0 0
        %4027 = vmatmul.mubr.bf16.gmra.mrb[0].mxu0 %v996
        %v4028 = vpop.f32.mrb[0].mxu0
        %v4029 = vadd.f32 0.0, %v4028
        %v4030 = vpop.f32.mrb[0].mxu0
        %v4031 = vpop.f32.mrb[0].mxu0
        %v4032 = vadd.f32 0.0, %v4031
        %v4033 = vpop.f32.mrb[0].mxu0
        %4034 = vmatprep.mubr.bf16.mxu0 0
        %4035 = vmatmul.mubr.bf16.gmra.mrb[0].mxu0 %v999
        %v4036 = vpop.f32.mrb[0].mxu0
        %v4037 = vadd.f32 0.0, %v4036
        %v4038 = vpop.f32.mrb[0].mxu0
        %v4039 = vpop.f32.mrb[0].mxu0
        %v4040 = vadd.f32 0.0, %v4039
        %v4041 = vpop.f32.mrb[0].mxu0
        %4042 = vmatprep.mubr.bf16.mxu0 0
        %4043 = vmatmul.mubr.bf16.gmra.mrb[0].mxu0 %v1002
        %v4044 = vpop.f32.mrb[0].mxu0
        %v4045 = vadd.f32 0.0, %v4044
        %v4046 = vpop.f32.mrb[0].mxu0
        %v4047 = vpop.f32.mrb[0].mxu0
        %v4048 = vadd.f32 0.0, %v4047
        %v4049 = vpop.f32.mrb[0].mxu0
        %4050 = vmatprep.mubr.bf16.mxu0 0
        %4051 = vmatmul.mubr.bf16.gmra.mrb[0].mxu0 %v1005
        %v4052 = vpop.f32.mrb[0].mxu0
        %v4053 = vadd.f32 0.0, %v4052
        %v4054 = vpop.f32.mrb[0].mxu0
        %v4055 = vpop.f32.mrb[0].mxu0
        %v4056 = vadd.f32 0.0, %v4055
        %v4057 = vpop.f32.mrb[0].mxu0
        %4058 = vmatprep.mubr.bf16.mxu0 0
        %4059 = vmatmul.mubr.bf16.gmra.mrb[0].mxu0 %v1008
        %v4060 = vpop.f32.mrb[0].mxu0
        %v4061 = vadd.f32 0.0, %v4060
        %v4062 = vpop.f32.mrb[0].mxu0
        %v4063 = vpop.f32.mrb[0].mxu0
        %v4064 = vadd.f32 0.0, %v4063
        %v4065 = vpop.f32.mrb[0].mxu0
        %4066 = vmatprep.mubr.bf16.mxu0 0
        %4067 = vmatmul.mubr.bf16.gmra.mrb[0].mxu0 %v1011
        %v4068 = vpop.f32.mrb[0].mxu0
        %v4069 = vadd.f32 0.0, %v4068
        %v4070 = vpop.f32.mrb[0].mxu0
        %v4071 = vpop.f32.mrb[0].mxu0
        %v4072 = vadd.f32 0.0, %v4071
        %v4073 = vpop.f32.mrb[0].mxu0
        %4074 = vmatprep.mubr.bf16.mxu0 0
        %4075 = vmatmul.mubr.bf16.gmra.mrb[0].mxu0 %v1014
        %v4076 = vpop.f32.mrb[0].mxu0
        %v4077 = vadd.f32 0.0, %v4076
        %v4078 = vpop.f32.mrb[0].mxu0
        %v4079 = vpop.f32.mrb[0].mxu0
        %v4080 = vadd.f32 0.0, %v4079
        %v4081 = vpop.f32.mrb[0].mxu0
        %4082 = vmatprep.mubr.bf16.mxu0 0
        %4083 = vmatmul.mubr.bf16.gmra.mrb[0].mxu0 %v1017
        %v4084 = vpop.f32.mrb[0].mxu0
        %v4085 = vadd.f32 0.0, %v4084
        %v4086 = vpop.f32.mrb[0].mxu0
        %v4087 = vpop.f32.mrb[0].mxu0
        %v4088 = vadd.f32 0.0, %v4087
        %v4089 = vpop.f32.mrb[0].mxu0
        %4090 = vmatprep.mubr.bf16.mxu0 0
        %4091 = vmatmul.mubr.bf16.gmra.mrb[0].mxu0 %v2171
        %v4092 = vpop.f32.mrb[0].mxu0
        %v4093 = vadd.f32 0.0, %v4092
        %v4094 = vpop.f32.mrb[0].mxu0
        %v4095 = vpop.f32.mrb[0].mxu0
        %v4096 = vadd.f32 0.0, %v4095
        %v4097 = vpop.f32.mrb[0].mxu0
        %4098 = vmatprep.mubr.bf16.mxu0 0
        %4099 = vmatmul.mubr.bf16.gmra.mrb[0].mxu0 %v3060
        %v4100 = vpop.f32.mrb[0].mxu0
        %v4101 = vadd.f32 0.0, %v4100
        %v4102 = vpop.f32.mrb[0].mxu0
        %v4103 = vpop.f32.mrb[0].mxu0
        %v4104 = vadd.f32 0.0, %v4103
        %v4105 = vpop.f32.mrb[0].mxu0
        %4106 = vmatprep.mubr.bf16.mxu0 0
        %4107 = vmatmul.mubr.bf16.gmra.mrb[0].mxu0 %v3949
        %v4108 = vpop.f32.mrb[0].mxu0
        %v4109 = vadd.f32 0.0, %v4108
        %v4110 = vpop.f32.mrb[0].mxu0
        %v4111 = vpop.f32.mrb[0].mxu0
        %v4112 = vadd.f32 0.0, %v4111
        %v4113 = vpop.f32.mrb[0].mxu0
        %4114 = vdwg.mxu0
        %v4115 = vadd.f32 %v3903, %v3989
        %v4116 = vadd.f32 %v3904, %v3992
        %v4117 = vadd.f32 %v3905, %v3997
        %v4118 = vadd.f32 %v3906, %v4000
        %v4119 = vadd.f32 %v3907, %v4005
        %v4120 = vadd.f32 %v3908, %v4008
        %v4121 = vadd.f32 %v3909, %v4013
        %v4122 = vadd.f32 %v3910, %v4016
        %v4123 = vadd.f32 %v3911, %v4021
        %v4124 = vadd.f32 %v3912, %v4024
        %v4125 = vadd.f32 %v3913, %v4029
        %v4126 = vadd.f32 %v3914, %v4032
        %v4127 = vadd.f32 %v3915, %v4037
        %v4128 = vadd.f32 %v3916, %v4040
        %v4129 = vadd.f32 %v3917, %v4045
        %v4130 = vadd.f32 %v3918, %v4048
        %v4131 = vadd.f32 %v3919, %v4053
        %v4132 = vadd.f32 %v3920, %v4056
        %v4133 = vadd.f32 %v3921, %v4061
        %v4134 = vadd.f32 %v3922, %v4064
        %v4135 = vadd.f32 %v3923, %v4069
        %v4136 = vadd.f32 %v3924, %v4072
        %v4137 = vadd.f32 %v3925, %v4077
        %v4138 = vadd.f32 %v3926, %v4080
        %v4139 = vadd.f32 %v3927, %v4085
        %v4140 = vadd.f32 %v3928, %v4088
        %v4141 = vadd.f32 %v3929, %v4093
        %v4142 = vadd.f32 %v3930, %v4096
        %v4143 = vadd.f32 %v3931, %v4101
        %v4144 = vadd.f32 %v3932, %v4104
        %v4145 = vadd.f32 %v3933, %v4109
        %v4146 = vadd.f32 %v3934, %v4112
        %v4148 = vshrl.u32 %v224, 16
        %v4150 = vrot.slane %v4148, 4
        %v4151 = vshll.u32 %v224, 16
        %v4153 = vrot.slane %v4151, 5
        %v4154 = vor.u32 %v4150, %v4153
        %v4155 = vrot.slane %v4154, 4
        %v4157 = vshll.u32 %v225, 16
        %v4159 = vrot.slane %v4157, 5
        %v4160 = vsel %vm231, %v4155, %v4159
        %v4161 = vshrl.u32 %v225, 16
        %v4163 = vrot.slane %v4161, 4
        %v4164 = vor.u32 %v4163, %v4159
        %v4165 = vrot.slane %v4164, 4
        %v4167 = vshll.u32 %v226, 16
        %v4169 = vrot.slane %v4167, 5
        %v4170 = vsel %vm231, %v4165, %v4169
        %s4171 = scalar_lea.vmem %s1, 104
        %v4172 = vld [vmem:[%s4171] sm:$0xf]
        %v4173 = vld [vmem:[%s4171 + $0x4] sm:$0x3]
        %v4174 = vunpack.c.l.b16 %v4160
        %v4175 = vunpack.c.l.b16 %v4170
        %v4176 = vpack.c.b16 %v4175, %v4174
        %v4179 = vunpack.c.l.b16 %v4172
        %v4180 = vunpack.c.l.b16 %v4173
        %v4181 = vpack.c.b16 %v4180, %v4179
        %v4183 = vsel %vm672, %v4176, 0
        %v4186 = vsel %vm721, %v4181, 0
        %4188 = vmatprep.subr.bf16.mxu0 0
        %4189 = vmatpush1.bf16.msra.mxu0 %v4186
        %4190 = vmatprep.subr.bf16.mxu0 0
        %4191 = vmatpush1.bf16.msra.mxu0 0
        %4192 = vmatprep.subr.bf16.mxu0 0
        %4193 = vmatpush1.bf16.msra.mxu0 0
        %4194 = vmatprep.subr.bf16.mxu0 0
        %4195 = vmatpush1.bf16.msra.mxu0 0
        %4196 = vmatprep.subr.bf16.mxu0 0
        %4197 = vmatpush1.bf16.msra.mxu0 0
        %4198 = vmatprep.subr.bf16.mxu0 0
        %4199 = vmatpush1.bf16.msra.mxu0 0
        %4200 = vmatprep.subr.bf16.mxu0 0
        %4201 = vmatpush1.bf16.msra.mxu0 0
        %4202 = vmatprep.subr.bf16.mxu0 0
        %4203 = vmatpush1.bf16.msra.mxu0 0
        %4204 = vmatprep.subr.bf16.mxu0 0
        %4205 = vmatpush1.bf16.msra.mxu0 0
        %4206 = vmatprep.subr.bf16.mxu0 0
        %4207 = vmatpush1.bf16.msra.mxu0 0
        %4208 = vmatprep.subr.bf16.mxu0 0
        %4209 = vmatpush1.bf16.msra.mxu0 0
        %4210 = vmatprep.subr.bf16.mxu0 0
        %4211 = vmatpush1.bf16.msra.mxu0 0
        %4212 = vmatprep.subr.bf16.mxu0 0
        %4213 = vmatpush1.bf16.msra.mxu0 0
        %4214 = vmatprep.subr.bf16.mxu0 0
        %4215 = vmatpush1.bf16.msra.mxu0 0
        %4216 = vmatprep.subr.bf16.mxu0 0
        %4217 = vmatpush1.bf16.msra.mxu0 0
        %4218 = vmatprep.subr.bf16.mxu0 0
        %4219 = vmatpush1.bf16.msra.mxu0 0
        %4220 = vmatprep.mubr.bf16.mxu0 0
        %4221 = vmatmul.mubr.bf16.gmra.mrb[0].mxu0 %v683
        %v4222 = vpop.f32.mrb[0].mxu0
        %v4223 = vadd.f32 0.0, %v4222
        %v4224 = vpop.f32.mrb[0].mxu0
        %v4225 = vpop.f32.mrb[0].mxu0
        %v4226 = vadd.f32 0.0, %v4225
        %v4227 = vpop.f32.mrb[0].mxu0
        %4228 = vmatprep.mubr.bf16.mxu0 0
        %4229 = vmatmul.mubr.bf16.gmra.mrb[0].mxu0 %v686
        %v4230 = vpop.f32.mrb[0].mxu0
        %v4231 = vadd.f32 0.0, %v4230
        %v4232 = vpop.f32.mrb[0].mxu0
        %v4233 = vpop.f32.mrb[0].mxu0
        %v4234 = vadd.f32 0.0, %v4233
        %v4235 = vpop.f32.mrb[0].mxu0
        %4236 = vmatprep.mubr.bf16.mxu0 0
        %4237 = vmatmul.mubr.bf16.gmra.mrb[0].mxu0 %v689
        %v4238 = vpop.f32.mrb[0].mxu0
        %v4239 = vadd.f32 0.0, %v4238
        %v4240 = vpop.f32.mrb[0].mxu0
        %v4241 = vpop.f32.mrb[0].mxu0
        %v4242 = vadd.f32 0.0, %v4241
        %v4243 = vpop.f32.mrb[0].mxu0
        %4244 = vmatprep.mubr.bf16.mxu0 0
        %4245 = vmatmul.mubr.bf16.gmra.mrb[0].mxu0 %v692
        %v4246 = vpop.f32.mrb[0].mxu0
        %v4247 = vadd.f32 0.0, %v4246
        %v4248 = vpop.f32.mrb[0].mxu0
        %v4249 = vpop.f32.mrb[0].mxu0
        %v4250 = vadd.f32 0.0, %v4249
        %v4251 = vpop.f32.mrb[0].mxu0
        %4252 = vmatprep.mubr.bf16.mxu0 0
        %4253 = vmatmul.mubr.bf16.gmra.mrb[0].mxu0 %v695
        %v4254 = vpop.f32.mrb[0].mxu0
        %v4255 = vadd.f32 0.0, %v4254
        %v4256 = vpop.f32.mrb[0].mxu0
        %v4257 = vpop.f32.mrb[0].mxu0
        %v4258 = vadd.f32 0.0, %v4257
        %v4259 = vpop.f32.mrb[0].mxu0
        %4260 = vmatprep.mubr.bf16.mxu0 0
        %4261 = vmatmul.mubr.bf16.gmra.mrb[0].mxu0 %v698
        %v4262 = vpop.f32.mrb[0].mxu0
        %v4263 = vadd.f32 0.0, %v4262
        %v4264 = vpop.f32.mrb[0].mxu0
        %v4265 = vpop.f32.mrb[0].mxu0
        %v4266 = vadd.f32 0.0, %v4265
        %v4267 = vpop.f32.mrb[0].mxu0
        %4268 = vmatprep.mubr.bf16.mxu0 0
        %4269 = vmatmul.mubr.bf16.gmra.mrb[0].mxu0 %v701
        %v4270 = vpop.f32.mrb[0].mxu0
        %v4271 = vadd.f32 0.0, %v4270
        %v4272 = vpop.f32.mrb[0].mxu0
        %v4273 = vpop.f32.mrb[0].mxu0
        %v4274 = vadd.f32 0.0, %v4273
        %v4275 = vpop.f32.mrb[0].mxu0
        %4276 = vmatprep.mubr.bf16.mxu0 0
        %4277 = vmatmul.mubr.bf16.gmra.mrb[0].mxu0 %v704
        %v4278 = vpop.f32.mrb[0].mxu0
        %v4279 = vadd.f32 0.0, %v4278
        %v4280 = vpop.f32.mrb[0].mxu0
        %v4281 = vpop.f32.mrb[0].mxu0
        %v4282 = vadd.f32 0.0, %v4281
        %v4283 = vpop.f32.mrb[0].mxu0
        %4284 = vmatprep.mubr.bf16.mxu0 0
        %4285 = vmatmul.mubr.bf16.gmra.mrb[0].mxu0 %v707
        %v4286 = vpop.f32.mrb[0].mxu0
        %v4287 = vadd.f32 0.0, %v4286
        %v4288 = vpop.f32.mrb[0].mxu0
        %v4289 = vpop.f32.mrb[0].mxu0
        %v4290 = vadd.f32 0.0, %v4289
        %v4291 = vpop.f32.mrb[0].mxu0
        %4292 = vmatprep.mubr.bf16.mxu0 0
        %4293 = vmatmul.mubr.bf16.gmra.mrb[0].mxu0 %v710
        %v4294 = vpop.f32.mrb[0].mxu0
        %v4295 = vadd.f32 0.0, %v4294
        %v4296 = vpop.f32.mrb[0].mxu0
        %v4297 = vpop.f32.mrb[0].mxu0
        %v4298 = vadd.f32 0.0, %v4297
        %v4299 = vpop.f32.mrb[0].mxu0
        %4300 = vmatprep.mubr.bf16.mxu0 0
        %4301 = vmatmul.mubr.bf16.gmra.mrb[0].mxu0 %v713
        %v4302 = vpop.f32.mrb[0].mxu0
        %v4303 = vadd.f32 0.0, %v4302
        %v4304 = vpop.f32.mrb[0].mxu0
        %v4305 = vpop.f32.mrb[0].mxu0
        %v4306 = vadd.f32 0.0, %v4305
        %v4307 = vpop.f32.mrb[0].mxu0
        %4308 = vmatprep.mubr.bf16.mxu0 0
        %4309 = vmatmul.mubr.bf16.gmra.mrb[0].mxu0 %v716
        %v4310 = vpop.f32.mrb[0].mxu0
        %v4311 = vadd.f32 0.0, %v4310
        %v4312 = vpop.f32.mrb[0].mxu0
        %v4313 = vpop.f32.mrb[0].mxu0
        %v4314 = vadd.f32 0.0, %v4313
        %v4315 = vpop.f32.mrb[0].mxu0
        %4316 = vmatprep.mubr.bf16.mxu0 0
        %4317 = vmatmul.mubr.bf16.gmra.mrb[0].mxu0 %v719
        %v4318 = vpop.f32.mrb[0].mxu0
        %v4319 = vadd.f32 0.0, %v4318
        %v4320 = vpop.f32.mrb[0].mxu0
        %v4321 = vpop.f32.mrb[0].mxu0
        %v4322 = vadd.f32 0.0, %v4321
        %v4323 = vpop.f32.mrb[0].mxu0
        %4324 = vmatprep.mubr.bf16.mxu0 0
        %4325 = vmatmul.mubr.bf16.gmra.mrb[0].mxu0 %v2405
        %v4326 = vpop.f32.mrb[0].mxu0
        %v4327 = vadd.f32 0.0, %v4326
        %v4328 = vpop.f32.mrb[0].mxu0
        %v4329 = vpop.f32.mrb[0].mxu0
        %v4330 = vadd.f32 0.0, %v4329
        %v4331 = vpop.f32.mrb[0].mxu0
        %4332 = vmatprep.mubr.bf16.mxu0 0
        %4333 = vmatmul.mubr.bf16.gmra.mrb[0].mxu0 %v3294
        %v4334 = vpop.f32.mrb[0].mxu0
        %v4335 = vadd.f32 0.0, %v4334
        %v4336 = vpop.f32.mrb[0].mxu0
        %v4337 = vpop.f32.mrb[0].mxu0
        %v4338 = vadd.f32 0.0, %v4337
        %v4339 = vpop.f32.mrb[0].mxu0
        %4340 = vmatprep.mubr.bf16.mxu0 0
        %4341 = vmatmul.mubr.bf16.gmra.mrb[0].mxu0 %v4183
        %v4342 = vpop.f32.mrb[0].mxu0
        %v4343 = vadd.f32 0.0, %v4342
        %v4344 = vpop.f32.mrb[0].mxu0
        %v4345 = vpop.f32.mrb[0].mxu0
        %v4346 = vadd.f32 0.0, %v4345
        %v4347 = vpop.f32.mrb[0].mxu0
        %4348 = vdwg.mxu0
        %v4349 = vadd.f32 %v4115, %v4223
        %v4350 = vadd.f32 %v4116, %v4226
        %v4351 = vadd.f32 %v4117, %v4231
        %v4352 = vadd.f32 %v4118, %v4234
        %v4353 = vadd.f32 %v4119, %v4239
        %v4354 = vadd.f32 %v4120, %v4242
        %v4355 = vadd.f32 %v4121, %v4247
        %v4356 = vadd.f32 %v4122, %v4250
        %v4357 = vadd.f32 %v4123, %v4255
        %v4358 = vadd.f32 %v4124, %v4258
        %v4359 = vadd.f32 %v4125, %v4263
        %v4360 = vadd.f32 %v4126, %v4266
        %v4361 = vadd.f32 %v4127, %v4271
        %v4362 = vadd.f32 %v4128, %v4274
        %v4363 = vadd.f32 %v4129, %v4279
        %v4364 = vadd.f32 %v4130, %v4282
        %v4365 = vadd.f32 %v4131, %v4287
        %v4366 = vadd.f32 %v4132, %v4290
        %v4367 = vadd.f32 %v4133, %v4295
        %v4368 = vadd.f32 %v4134, %v4298
        %v4369 = vadd.f32 %v4135, %v4303
        %v4370 = vadd.f32 %v4136, %v4306
        %v4371 = vadd.f32 %v4137, %v4311
        %v4372 = vadd.f32 %v4138, %v4314
        %v4373 = vadd.f32 %v4139, %v4319
        %v4374 = vadd.f32 %v4140, %v4322
        %v4375 = vadd.f32 %v4141, %v4327
        %v4376 = vadd.f32 %v4142, %v4330
        %v4377 = vadd.f32 %v4143, %v4335
        %v4378 = vadd.f32 %v4144, %v4338
        %v4379 = vadd.f32 %v4145, %v4343
        %v4380 = vadd.f32 %v4146, %v4346
        %v4382 = vrot.slane %v224, 5
        %v4383 = vrot.slane %v4382, 4
        %v4384 = vrot.slane %v225, 5
        %v4385 = vsel %vm1201, %v4383, %v4384
        %v4386 = vrot.slane %v4384, 4
        %v4387 = vrot.slane %v226, 5
        %v4388 = vsel %vm1201, %v4386, %v4387
        %s4389 = scalar_lea.vmem %s1, 112
        %v4390 = vld [vmem:[%s4389] sm:$0xf]
        %v4391 = vld [vmem:[%s4389 + $0x4] sm:$0x3]
        %v4392 = vunpack.c.l.b16 %v4385
        %v4393 = vunpack.c.l.b16 %v4388
        %v4394 = vpack.c.b16 %v4393, %v4392
        %v4397 = vunpack.c.l.b16 %v4390
        %v4398 = vunpack.c.l.b16 %v4391
        %v4399 = vpack.c.b16 %v4398, %v4397
        %v4401 = vsel %vm672, %v4394, 0
        %v4404 = vsel %vm721, %v4399, 0
        %4406 = vmatprep.subr.bf16.mxu0 0
        %4407 = vmatpush1.bf16.msra.mxu0 %v4404
        %4408 = vmatprep.subr.bf16.mxu0 0
        %4409 = vmatpush1.bf16.msra.mxu0 0
        %4410 = vmatprep.subr.bf16.mxu0 0
        %4411 = vmatpush1.bf16.msra.mxu0 0
        %4412 = vmatprep.subr.bf16.mxu0 0
        %4413 = vmatpush1.bf16.msra.mxu0 0
        %4414 = vmatprep.subr.bf16.mxu0 0
        %4415 = vmatpush1.bf16.msra.mxu0 0
        %4416 = vmatprep.subr.bf16.mxu0 0
        %4417 = vmatpush1.bf16.msra.mxu0 0
        %4418 = vmatprep.subr.bf16.mxu0 0
        %4419 = vmatpush1.bf16.msra.mxu0 0
        %4420 = vmatprep.subr.bf16.mxu0 0
        %4421 = vmatpush1.bf16.msra.mxu0 0
        %4422 = vmatprep.subr.bf16.mxu0 0
        %4423 = vmatpush1.bf16.msra.mxu0 0
        %4424 = vmatprep.subr.bf16.mxu0 0
        %4425 = vmatpush1.bf16.msra.mxu0 0
        %4426 = vmatprep.subr.bf16.mxu0 0
        %4427 = vmatpush1.bf16.msra.mxu0 0
        %4428 = vmatprep.subr.bf16.mxu0 0
        %4429 = vmatpush1.bf16.msra.mxu0 0
        %4430 = vmatprep.subr.bf16.mxu0 0
        %4431 = vmatpush1.bf16.msra.mxu0 0
        %4432 = vmatprep.subr.bf16.mxu0 0
        %4433 = vmatpush1.bf16.msra.mxu0 0
        %4434 = vmatprep.subr.bf16.mxu0 0
        %4435 = vmatpush1.bf16.msra.mxu0 0
        %4436 = vmatprep.subr.bf16.mxu0 0
        %4437 = vmatpush1.bf16.msra.mxu0 0
        %4438 = vmatprep.mubr.bf16.mxu0 0
        %4439 = vmatmul.mubr.bf16.gmra.mrb[0].mxu0 %v1380
        %v4440 = vpop.f32.mrb[0].mxu0
        %v4441 = vadd.f32 0.0, %v4440
        %v4442 = vpop.f32.mrb[0].mxu0
        %v4443 = vpop.f32.mrb[0].mxu0
        %v4444 = vadd.f32 0.0, %v4443
        %v4445 = vpop.f32.mrb[0].mxu0
        %4446 = vmatprep.mubr.bf16.mxu0 0
        %4447 = vmatmul.mubr.bf16.gmra.mrb[0].mxu0 %v1383
        %v4448 = vpop.f32.mrb[0].mxu0
        %v4449 = vadd.f32 0.0, %v4448
        %v4450 = vpop.f32.mrb[0].mxu0
        %v4451 = vpop.f32.mrb[0].mxu0
        %v4452 = vadd.f32 0.0, %v4451
        %v4453 = vpop.f32.mrb[0].mxu0
        %4454 = vmatprep.mubr.bf16.mxu0 0
        %4455 = vmatmul.mubr.bf16.gmra.mrb[0].mxu0 %v1386
        %v4456 = vpop.f32.mrb[0].mxu0
        %v4457 = vadd.f32 0.0, %v4456
        %v4458 = vpop.f32.mrb[0].mxu0
        %v4459 = vpop.f32.mrb[0].mxu0
        %v4460 = vadd.f32 0.0, %v4459
        %v4461 = vpop.f32.mrb[0].mxu0
        %4462 = vmatprep.mubr.bf16.mxu0 0
        %4463 = vmatmul.mubr.bf16.gmra.mrb[0].mxu0 %v1389
        %v4464 = vpop.f32.mrb[0].mxu0
        %v4465 = vadd.f32 0.0, %v4464
        %v4466 = vpop.f32.mrb[0].mxu0
        %v4467 = vpop.f32.mrb[0].mxu0
        %v4468 = vadd.f32 0.0, %v4467
        %v4469 = vpop.f32.mrb[0].mxu0
        %4470 = vmatprep.mubr.bf16.mxu0 0
        %4471 = vmatmul.mubr.bf16.gmra.mrb[0].mxu0 %v1392
        %v4472 = vpop.f32.mrb[0].mxu0
        %v4473 = vadd.f32 0.0, %v4472
        %v4474 = vpop.f32.mrb[0].mxu0
        %v4475 = vpop.f32.mrb[0].mxu0
        %v4476 = vadd.f32 0.0, %v4475
        %v4477 = vpop.f32.mrb[0].mxu0
        %4478 = vmatprep.mubr.bf16.mxu0 0
        %4479 = vmatmul.mubr.bf16.gmra.mrb[0].mxu0 %v1395
        %v4480 = vpop.f32.mrb[0].mxu0
        %v4481 = vadd.f32 0.0, %v4480
        %v4482 = vpop.f32.mrb[0].mxu0
        %v4483 = vpop.f32.mrb[0].mxu0
        %v4484 = vadd.f32 0.0, %v4483
        %v4485 = vpop.f32.mrb[0].mxu0
        %4486 = vmatprep.mubr.bf16.mxu0 0
        %4487 = vmatmul.mubr.bf16.gmra.mrb[0].mxu0 %v1398
        %v4488 = vpop.f32.mrb[0].mxu0
        %v4489 = vadd.f32 0.0, %v4488
        %v4490 = vpop.f32.mrb[0].mxu0
        %v4491 = vpop.f32.mrb[0].mxu0
        %v4492 = vadd.f32 0.0, %v4491
        %v4493 = vpop.f32.mrb[0].mxu0
        %4494 = vmatprep.mubr.bf16.mxu0 0
        %4495 = vmatmul.mubr.bf16.gmra.mrb[0].mxu0 %v1401
        %v4496 = vpop.f32.mrb[0].mxu0
        %v4497 = vadd.f32 0.0, %v4496
        %v4498 = vpop.f32.mrb[0].mxu0
        %v4499 = vpop.f32.mrb[0].mxu0
        %v4500 = vadd.f32 0.0, %v4499
        %v4501 = vpop.f32.mrb[0].mxu0
        %4502 = vmatprep.mubr.bf16.mxu0 0
        %4503 = vmatmul.mubr.bf16.gmra.mrb[0].mxu0 %v1404
        %v4504 = vpop.f32.mrb[0].mxu0
        %v4505 = vadd.f32 0.0, %v4504
        %v4506 = vpop.f32.mrb[0].mxu0
        %v4507 = vpop.f32.mrb[0].mxu0
        %v4508 = vadd.f32 0.0, %v4507
        %v4509 = vpop.f32.mrb[0].mxu0
        %4510 = vmatprep.mubr.bf16.mxu0 0
        %4511 = vmatmul.mubr.bf16.gmra.mrb[0].mxu0 %v1407
        %v4512 = vpop.f32.mrb[0].mxu0
        %v4513 = vadd.f32 0.0, %v4512
        %v4514 = vpop.f32.mrb[0].mxu0
        %v4515 = vpop.f32.mrb[0].mxu0
        %v4516 = vadd.f32 0.0, %v4515
        %v4517 = vpop.f32.mrb[0].mxu0
        %4518 = vmatprep.mubr.bf16.mxu0 0
        %4519 = vmatmul.mubr.bf16.gmra.mrb[0].mxu0 %v1410
        %v4520 = vpop.f32.mrb[0].mxu0
        %v4521 = vadd.f32 0.0, %v4520
        %v4522 = vpop.f32.mrb[0].mxu0
        %v4523 = vpop.f32.mrb[0].mxu0
        %v4524 = vadd.f32 0.0, %v4523
        %v4525 = vpop.f32.mrb[0].mxu0
        %4526 = vmatprep.mubr.bf16.mxu0 0
        %4527 = vmatmul.mubr.bf16.gmra.mrb[0].mxu0 %v1413
        %v4528 = vpop.f32.mrb[0].mxu0
        %v4529 = vadd.f32 0.0, %v4528
        %v4530 = vpop.f32.mrb[0].mxu0
        %v4531 = vpop.f32.mrb[0].mxu0
        %v4532 = vadd.f32 0.0, %v4531
        %v4533 = vpop.f32.mrb[0].mxu0
        %4534 = vmatprep.mubr.bf16.mxu0 0
        %4535 = vmatmul.mubr.bf16.gmra.mrb[0].mxu0 %v1416
        %v4536 = vpop.f32.mrb[0].mxu0
        %v4537 = vadd.f32 0.0, %v4536
        %v4538 = vpop.f32.mrb[0].mxu0
        %v4539 = vpop.f32.mrb[0].mxu0
        %v4540 = vadd.f32 0.0, %v4539
        %v4541 = vpop.f32.mrb[0].mxu0
        %4542 = vmatprep.mubr.bf16.mxu0 0
        %4543 = vmatmul.mubr.bf16.gmra.mrb[0].mxu0 %v2623
        %v4544 = vpop.f32.mrb[0].mxu0
        %v4545 = vadd.f32 0.0, %v4544
        %v4546 = vpop.f32.mrb[0].mxu0
        %v4547 = vpop.f32.mrb[0].mxu0
        %v4548 = vadd.f32 0.0, %v4547
        %v4549 = vpop.f32.mrb[0].mxu0
        %4550 = vmatprep.mubr.bf16.mxu0 0
        %4551 = vmatmul.mubr.bf16.gmra.mrb[0].mxu0 %v3512
        %v4552 = vpop.f32.mrb[0].mxu0
        %v4553 = vadd.f32 0.0, %v4552
        %v4554 = vpop.f32.mrb[0].mxu0
        %v4555 = vpop.f32.mrb[0].mxu0
        %v4556 = vadd.f32 0.0, %v4555
        %v4557 = vpop.f32.mrb[0].mxu0
        %4558 = vmatprep.mubr.bf16.mxu0 0
        %4559 = vmatmul.mubr.bf16.gmra.mrb[0].mxu0 %v4401
        %v4560 = vpop.f32.mrb[0].mxu0
        %v4561 = vadd.f32 0.0, %v4560
        %v4562 = vpop.f32.mrb[0].mxu0
        %v4563 = vpop.f32.mrb[0].mxu0
        %v4564 = vadd.f32 0.0, %v4563
        %v4565 = vpop.f32.mrb[0].mxu0
        %4566 = vdwg.mxu0
        %v4567 = vadd.f32 %v4349, %v4441
        %v4568 = vadd.f32 %v4350, %v4444
        %v4569 = vadd.f32 %v4351, %v4449
        %v4570 = vadd.f32 %v4352, %v4452
        %v4571 = vadd.f32 %v4353, %v4457
        %v4572 = vadd.f32 %v4354, %v4460
        %v4573 = vadd.f32 %v4355, %v4465
        %v4574 = vadd.f32 %v4356, %v4468
        %v4575 = vadd.f32 %v4357, %v4473
        %v4576 = vadd.f32 %v4358, %v4476
        %v4577 = vadd.f32 %v4359, %v4481
        %v4578 = vadd.f32 %v4360, %v4484
        %v4579 = vadd.f32 %v4361, %v4489
        %v4580 = vadd.f32 %v4362, %v4492
        %v4581 = vadd.f32 %v4363, %v4497
        %v4582 = vadd.f32 %v4364, %v4500
        %v4583 = vadd.f32 %v4365, %v4505
        %v4584 = vadd.f32 %v4366, %v4508
        %v4585 = vadd.f32 %v4367, %v4513
        %v4586 = vadd.f32 %v4368, %v4516
        %v4587 = vadd.f32 %v4369, %v4521
        %v4588 = vadd.f32 %v4370, %v4524
        %v4589 = vadd.f32 %v4371, %v4529
        %v4590 = vadd.f32 %v4372, %v4532
        %v4591 = vadd.f32 %v4373, %v4537
        %v4592 = vadd.f32 %v4374, %v4540
        %v4593 = vadd.f32 %v4375, %v4545
        %v4594 = vadd.f32 %v4376, %v4548
        %v4595 = vadd.f32 %v4377, %v4553
        %v4596 = vadd.f32 %v4378, %v4556
        %v4597 = vadd.f32 %v4379, %v4561
        %v4598 = vadd.f32 %v4380, %v4564
        %v4599 = vrot.slane %v4148, 5
        %v4600 = vrot.slane %v4151, 6
        %v4601 = vor.u32 %v4599, %v4600
        %v4602 = vrot.slane %v4601, 4
        %v4603 = vrot.slane %v4161, 5
        %v4604 = vrot.slane %v4157, 6
        %v4605 = vor.u32 %v4603, %v4604
        %v4606 = vsel %vm1616, %v4602, %v4605
        %v4607 = vrot.slane %v4605, 4
        %v4608 = vshrl.u32 %v226, 16
        %v4610 = vrot.slane %v4608, 5
        %v4611 = vrot.slane %v4167, 6
        %v4612 = vor.u32 %v4610, %v4611
        %v4613 = vsel %vm1616, %v4607, %v4612
        %s4614 = scalar_lea.vmem %s1, 120
        %v4615 = vld [vmem:[%s4614] sm:$0xf]
        %v4616 = vld [vmem:[%s4614 + $0x4] sm:$0x3]
        %v4617 = vunpack.c.l.b16 %v4606
        %v4618 = vunpack.c.l.b16 %v4613
        %v4619 = vpack.c.b16 %v4618, %v4617
        %v4622 = vunpack.c.l.b16 %v4615
        %v4623 = vunpack.c.l.b16 %v4616
        %v4624 = vpack.c.b16 %v4623, %v4622
        %v4626 = vsel %vm672, %v4619, 0
        %v4629 = vsel %vm721, %v4624, 0
        %4631 = vmatprep.subr.bf16.mxu0 0
        %4632 = vmatpush1.bf16.msra.mxu0 %v4629
        %4633 = vmatprep.subr.bf16.mxu0 0
        %4634 = vmatpush1.bf16.msra.mxu0 0
        %4635 = vmatprep.subr.bf16.mxu0 0
        %4636 = vmatpush1.bf16.msra.mxu0 0
        %4637 = vmatprep.subr.bf16.mxu0 0
        %4638 = vmatpush1.bf16.msra.mxu0 0
        %4639 = vmatprep.subr.bf16.mxu0 0
        %4640 = vmatpush1.bf16.msra.mxu0 0
        %4641 = vmatprep.subr.bf16.mxu0 0
        %4642 = vmatpush1.bf16.msra.mxu0 0
        %4643 = vmatprep.subr.bf16.mxu0 0
        %4644 = vmatpush1.bf16.msra.mxu0 0
        %4645 = vmatprep.subr.bf16.mxu0 0
        %4646 = vmatpush1.bf16.msra.mxu0 0
        %4647 = vmatprep.subr.bf16.mxu0 0
        %4648 = vmatpush1.bf16.msra.mxu0 0
        %4649 = vmatprep.subr.bf16.mxu0 0
        %4650 = vmatpush1.bf16.msra.mxu0 0
        %4651 = vmatprep.subr.bf16.mxu0 0
        %4652 = vmatpush1.bf16.msra.mxu0 0
        %4653 = vmatprep.subr.bf16.mxu0 0
        %4654 = vmatpush1.bf16.msra.mxu0 0
        %4655 = vmatprep.subr.bf16.mxu0 0
        %4656 = vmatpush1.bf16.msra.mxu0 0
        %4657 = vmatprep.subr.bf16.mxu0 0
        %4658 = vmatpush1.bf16.msra.mxu0 0
        %4659 = vmatprep.subr.bf16.mxu0 0
        %4660 = vmatpush1.bf16.msra.mxu0 0
        %4661 = vmatprep.subr.bf16.mxu0 0
        %4662 = vmatpush1.bf16.msra.mxu0 0
        %4663 = vmatprep.mubr.bf16.mxu0 0
        %4664 = vmatmul.mubr.bf16.gmra.mrb[0].mxu0 %v1923
        %v4665 = vpop.f32.mrb[0].mxu0
        %v4666 = vadd.f32 0.0, %v4665
        %v4667 = vpop.f32.mrb[0].mxu0
        %v4668 = vpop.f32.mrb[0].mxu0
        %v4669 = vadd.f32 0.0, %v4668
        %v4670 = vpop.f32.mrb[0].mxu0
        %4671 = vmatprep.mubr.bf16.mxu0 0
        %4672 = vmatmul.mubr.bf16.gmra.mrb[0].mxu0 %v1926
        %v4673 = vpop.f32.mrb[0].mxu0
        %v4674 = vadd.f32 0.0, %v4673
        %v4675 = vpop.f32.mrb[0].mxu0
        %v4676 = vpop.f32.mrb[0].mxu0
        %v4677 = vadd.f32 0.0, %v4676
        %v4678 = vpop.f32.mrb[0].mxu0
        %4679 = vmatprep.mubr.bf16.mxu0 0
        %4680 = vmatmul.mubr.bf16.gmra.mrb[0].mxu0 %v1929
        %v4681 = vpop.f32.mrb[0].mxu0
        %v4682 = vadd.f32 0.0, %v4681
        %v4683 = vpop.f32.mrb[0].mxu0
        %v4684 = vpop.f32.mrb[0].mxu0
        %v4685 = vadd.f32 0.0, %v4684
        %v4686 = vpop.f32.mrb[0].mxu0
        %4687 = vmatprep.mubr.bf16.mxu0 0
        %4688 = vmatmul.mubr.bf16.gmra.mrb[0].mxu0 %v1932
        %v4689 = vpop.f32.mrb[0].mxu0
        %v4690 = vadd.f32 0.0, %v4689
        %v4691 = vpop.f32.mrb[0].mxu0
        %v4692 = vpop.f32.mrb[0].mxu0
        %v4693 = vadd.f32 0.0, %v4692
        %v4694 = vpop.f32.mrb[0].mxu0
        %4695 = vmatprep.mubr.bf16.mxu0 0
        %4696 = vmatmul.mubr.bf16.gmra.mrb[0].mxu0 %v1935
        %v4697 = vpop.f32.mrb[0].mxu0
        %v4698 = vadd.f32 0.0, %v4697
        %v4699 = vpop.f32.mrb[0].mxu0
        %v4700 = vpop.f32.mrb[0].mxu0
        %v4701 = vadd.f32 0.0, %v4700
        %v4702 = vpop.f32.mrb[0].mxu0
        %4703 = vmatprep.mubr.bf16.mxu0 0
        %4704 = vmatmul.mubr.bf16.gmra.mrb[0].mxu0 %v1938
        %v4705 = vpop.f32.mrb[0].mxu0
        %v4706 = vadd.f32 0.0, %v4705
        %v4707 = vpop.f32.mrb[0].mxu0
        %v4708 = vpop.f32.mrb[0].mxu0
        %v4709 = vadd.f32 0.0, %v4708
        %v4710 = vpop.f32.mrb[0].mxu0
        %4711 = vmatprep.mubr.bf16.mxu0 0
        %4712 = vmatmul.mubr.bf16.gmra.mrb[0].mxu0 %v1941
        %v4713 = vpop.f32.mrb[0].mxu0
        %v4714 = vadd.f32 0.0, %v4713
        %v4715 = vpop.f32.mrb[0].mxu0
        %v4716 = vpop.f32.mrb[0].mxu0
        %v4717 = vadd.f32 0.0, %v4716
        %v4718 = vpop.f32.mrb[0].mxu0
        %4719 = vmatprep.mubr.bf16.mxu0 0
        %4720 = vmatmul.mubr.bf16.gmra.mrb[0].mxu0 %v1944
        %v4721 = vpop.f32.mrb[0].mxu0
        %v4722 = vadd.f32 0.0, %v4721
        %v4723 = vpop.f32.mrb[0].mxu0
        %v4724 = vpop.f32.mrb[0].mxu0
        %v4725 = vadd.f32 0.0, %v4724
        %v4726 = vpop.f32.mrb[0].mxu0
        %4727 = vmatprep.mubr.bf16.mxu0 0
        %4728 = vmatmul.mubr.bf16.gmra.mrb[0].mxu0 %v1947
        %v4729 = vpop.f32.mrb[0].mxu0
        %v4730 = vadd.f32 0.0, %v4729
        %v4731 = vpop.f32.mrb[0].mxu0
        %v4732 = vpop.f32.mrb[0].mxu0
        %v4733 = vadd.f32 0.0, %v4732
        %v4734 = vpop.f32.mrb[0].mxu0
        %4735 = vmatprep.mubr.bf16.mxu0 0
        %4736 = vmatmul.mubr.bf16.gmra.mrb[0].mxu0 %v1950
        %v4737 = vpop.f32.mrb[0].mxu0
        %v4738 = vadd.f32 0.0, %v4737
        %v4739 = vpop.f32.mrb[0].mxu0
        %v4740 = vpop.f32.mrb[0].mxu0
        %v4741 = vadd.f32 0.0, %v4740
        %v4742 = vpop.f32.mrb[0].mxu0
        %4743 = vmatprep.mubr.bf16.mxu0 0
        %4744 = vmatmul.mubr.bf16.gmra.mrb[0].mxu0 %v1953
        %v4745 = vpop.f32.mrb[0].mxu0
        %v4746 = vadd.f32 0.0, %v4745
        %v4747 = vpop.f32.mrb[0].mxu0
        %v4748 = vpop.f32.mrb[0].mxu0
        %v4749 = vadd.f32 0.0, %v4748
        %v4750 = vpop.f32.mrb[0].mxu0
        %4751 = vmatprep.mubr.bf16.mxu0 0
        %4752 = vmatmul.mubr.bf16.gmra.mrb[0].mxu0 %v1956
        %v4753 = vpop.f32.mrb[0].mxu0
        %v4754 = vadd.f32 0.0, %v4753
        %v4755 = vpop.f32.mrb[0].mxu0
        %v4756 = vpop.f32.mrb[0].mxu0
        %v4757 = vadd.f32 0.0, %v4756
        %v4758 = vpop.f32.mrb[0].mxu0
        %4759 = vmatprep.mubr.bf16.mxu0 0
        %4760 = vmatmul.mubr.bf16.gmra.mrb[0].mxu0 %v1959
        %v4761 = vpop.f32.mrb[0].mxu0
        %v4762 = vadd.f32 0.0, %v4761
        %v4763 = vpop.f32.mrb[0].mxu0
        %v4764 = vpop.f32.mrb[0].mxu0
        %v4765 = vadd.f32 0.0, %v4764
        %v4766 = vpop.f32.mrb[0].mxu0
        %4767 = vmatprep.mubr.bf16.mxu0 0
        %4768 = vmatmul.mubr.bf16.gmra.mrb[0].mxu0 %v2848
        %v4769 = vpop.f32.mrb[0].mxu0
        %v4770 = vadd.f32 0.0, %v4769
        %v4771 = vpop.f32.mrb[0].mxu0
        %v4772 = vpop.f32.mrb[0].mxu0
        %v4773 = vadd.f32 0.0, %v4772
        %v4774 = vpop.f32.mrb[0].mxu0
        %4775 = vmatprep.mubr.bf16.mxu0 0
        %4776 = vmatmul.mubr.bf16.gmra.mrb[0].mxu0 %v3737
        %v4777 = vpop.f32.mrb[0].mxu0
        %v4778 = vadd.f32 0.0, %v4777
        %v4779 = vpop.f32.mrb[0].mxu0
        %v4780 = vpop.f32.mrb[0].mxu0
        %v4781 = vadd.f32 0.0, %v4780
        %v4782 = vpop.f32.mrb[0].mxu0
        %4783 = vmatprep.mubr.bf16.mxu0 0
        %4784 = vmatmul.mubr.bf16.gmra.mrb[0].mxu0 %v4626
        %v4785 = vpop.f32.mrb[0].mxu0
        %v4786 = vadd.f32 0.0, %v4785
        %v4787 = vpop.f32.mrb[0].mxu0
        %v4788 = vpop.f32.mrb[0].mxu0
        %v4789 = vadd.f32 0.0, %v4788
        %v4790 = vpop.f32.mrb[0].mxu0
        %4791 = vdwg.mxu0
        %v4792 = vadd.f32 %v4567, %v4666
        %v4793 = vadd.f32 %v4568, %v4669
        %v4794 = vadd.f32 %v4569, %v4674
        %v4795 = vadd.f32 %v4570, %v4677
        %v4796 = vadd.f32 %v4571, %v4682
        %v4797 = vadd.f32 %v4572, %v4685
        %v4798 = vadd.f32 %v4573, %v4690
        %v4799 = vadd.f32 %v4574, %v4693
        %v4800 = vadd.f32 %v4575, %v4698
        %v4801 = vadd.f32 %v4576, %v4701
        %v4802 = vadd.f32 %v4577, %v4706
        %v4803 = vadd.f32 %v4578, %v4709
        %v4804 = vadd.f32 %v4579, %v4714
        %v4805 = vadd.f32 %v4580, %v4717
        %v4806 = vadd.f32 %v4581, %v4722
        %v4807 = vadd.f32 %v4582, %v4725
        %v4808 = vadd.f32 %v4583, %v4730
        %v4809 = vadd.f32 %v4584, %v4733
        %v4810 = vadd.f32 %v4585, %v4738
        %v4811 = vadd.f32 %v4586, %v4741
        %v4812 = vadd.f32 %v4587, %v4746
        %v4813 = vadd.f32 %v4588, %v4749
        %v4814 = vadd.f32 %v4589, %v4754
        %v4815 = vadd.f32 %v4590, %v4757
        %v4816 = vadd.f32 %v4591, %v4762
        %v4817 = vadd.f32 %v4592, %v4765
        %v4818 = vadd.f32 %v4593, %v4770
        %v4819 = vadd.f32 %v4594, %v4773
        %v4820 = vadd.f32 %v4595, %v4778
        %v4821 = vadd.f32 %v4596, %v4781
        %v4822 = vadd.f32 %v4597, %v4786
        %v4823 = vadd.f32 %v4598, %v4789
        %v4824 = vld [vmem:[%s2] sm:$0x1]
        %v4826 = vlaneseq
        %v4827 = vshrl.u32 %v4826, 7
        %v4828 = vsub.s32 0, %v4827
        %v4829 = vrot.slane %v4824, %v4828
        %v4831 = vadd.f32 %v4792, %v4829
        %v4832 = vadd.f32 %v4793, %v4829
        %v4833 = vadd.f32 %v4794, %v4829
        %v4834 = vadd.f32 %v4795, %v4829
        %v4835 = vadd.f32 %v4796, %v4829
        %v4836 = vadd.f32 %v4797, %v4829
        %v4837 = vadd.f32 %v4798, %v4829
        %v4838 = vadd.f32 %v4799, %v4829
        %v4839 = vadd.f32 %v4800, %v4829
        %v4840 = vadd.f32 %v4801, %v4829
        %v4841 = vadd.f32 %v4802, %v4829
        %v4842 = vadd.f32 %v4803, %v4829
        %v4843 = vadd.f32 %v4804, %v4829
        %v4844 = vadd.f32 %v4805, %v4829
        %v4845 = vadd.f32 %v4806, %v4829
        %v4846 = vadd.f32 %v4807, %v4829
        %v4847 = vadd.f32 %v4808, %v4829
        %v4848 = vadd.f32 %v4809, %v4829
        %v4849 = vadd.f32 %v4810, %v4829
        %v4850 = vadd.f32 %v4811, %v4829
        %v4851 = vadd.f32 %v4812, %v4829
        %v4852 = vadd.f32 %v4813, %v4829
        %v4853 = vadd.f32 %v4814, %v4829
        %v4854 = vadd.f32 %v4815, %v4829
        %v4855 = vadd.f32 %v4816, %v4829
        %v4856 = vadd.f32 %v4817, %v4829
        %v4857 = vadd.f32 %v4818, %v4829
        %v4858 = vadd.f32 %v4819, %v4829
        %v4859 = vadd.f32 %v4820, %v4829
        %v4860 = vadd.f32 %v4821, %v4829
        %v4861 = vadd.f32 %v4822, %v4829
        %v4862 = vadd.f32 %v4823, %v4829
        %v4863 = vmax.f32 %v4831, 0.0
        %v4864 = vmax.f32 %v4832, 0.0
        %v4865 = vmax.f32 %v4833, 0.0
        %v4866 = vmax.f32 %v4834, 0.0
        %v4867 = vmax.f32 %v4835, 0.0
        %v4868 = vmax.f32 %v4836, 0.0
        %v4869 = vmax.f32 %v4837, 0.0
        %v4870 = vmax.f32 %v4838, 0.0
        %v4871 = vmax.f32 %v4839, 0.0
        %v4872 = vmax.f32 %v4840, 0.0
        %v4873 = vmax.f32 %v4841, 0.0
        %v4874 = vmax.f32 %v4842, 0.0
        %v4875 = vmax.f32 %v4843, 0.0
        %v4876 = vmax.f32 %v4844, 0.0
        %v4877 = vmax.f32 %v4845, 0.0
        %v4878 = vmax.f32 %v4846, 0.0
        %v4879 = vmax.f32 %v4847, 0.0
        %v4880 = vmax.f32 %v4848, 0.0
        %v4881 = vmax.f32 %v4849, 0.0
        %v4882 = vmax.f32 %v4850, 0.0
        %v4883 = vmax.f32 %v4851, 0.0
        %v4884 = vmax.f32 %v4852, 0.0
        %v4885 = vmax.f32 %v4853, 0.0
        %v4886 = vmax.f32 %v4854, 0.0
        %v4887 = vmax.f32 %v4855, 0.0
        %v4888 = vmax.f32 %v4856, 0.0
        %v4889 = vmax.f32 %v4857, 0.0
        %v4890 = vmax.f32 %v4858, 0.0
        %v4891 = vmax.f32 %v4859, 0.0
        %v4892 = vmax.f32 %v4860, 0.0
        %v4893 = vmax.f32 %v4861, 0.0
        %v4894 = vmax.f32 %v4862, 0.0
        %v4927 = vcombine.high %v4863, %v4863
        %v4929 = vunpack.c.l.s4 1983009808
        %v4930 = vunpack.c.0.s8 %v4929
        %v4931 = vlaneseq
        %v4932 = vshrl.u32 %v4931, 7
        %v4933 = vsub.s32 %v4930, %v4932
        %v4934 = vrot.slane %v4863, %v4933
        %v4936 = vunpack.c.l.s4 1983009808
        %v4937 = vunpack.c.0.s8 %v4936
        %v4938 = vlaneseq
        %v4939 = vshrl.u32 %v4938, 7
        %v4940 = vsub.s32 %v4937, %v4939
        %v4941 = vrot.slane %v4927, %v4940
        %v4942 = vcombine.high %v4934, %v4934
        %v4943 = vcombine.high %v4941, %v4941
        %v4944 = vcombine.high %v4864, %v4864
        %v4946 = vunpack.c.l.s4 1983009808
        %v4947 = vunpack.c.0.s8 %v4946
        %v4948 = vlaneseq
        %v4949 = vshrl.u32 %v4948, 7
        %v4950 = vsub.s32 %v4947, %v4949
        %v4951 = vrot.slane %v4864, %v4950
        %v4953 = vunpack.c.l.s4 1983009808
        %v4954 = vunpack.c.0.s8 %v4953
        %v4955 = vlaneseq
        %v4956 = vshrl.u32 %v4955, 7
        %v4957 = vsub.s32 %v4954, %v4956
        %v4958 = vrot.slane %v4944, %v4957
        %v4959 = vcombine.high %v4951, %v4951
        %v4960 = vcombine.high %v4958, %v4958
        %v4961 = vcombine.high %v4865, %v4865
        %v4963 = vunpack.c.l.s4 1983009808
        %v4964 = vunpack.c.0.s8 %v4963
        %v4965 = vlaneseq
        %v4966 = vshrl.u32 %v4965, 7
        %v4967 = vsub.s32 %v4964, %v4966
        %v4968 = vrot.slane %v4865, %v4967
        %v4970 = vunpack.c.l.s4 1983009808
        %v4971 = vunpack.c.0.s8 %v4970
        %v4972 = vlaneseq
        %v4973 = vshrl.u32 %v4972, 7
        %v4974 = vsub.s32 %v4971, %v4973
        %v4975 = vrot.slane %v4961, %v4974
        %v4976 = vcombine.high %v4968, %v4968
        %v4977 = vcombine.high %v4975, %v4975
        %v4978 = vcombine.high %v4866, %v4866
        %v4980 = vunpack.c.l.s4 1983009808
        %v4981 = vunpack.c.0.s8 %v4980
        %v4982 = vlaneseq
        %v4983 = vshrl.u32 %v4982, 7
        %v4984 = vsub.s32 %v4981, %v4983
        %v4985 = vrot.slane %v4866, %v4984
        %v4987 = vunpack.c.l.s4 1983009808
        %v4988 = vunpack.c.0.s8 %v4987
        %v4989 = vlaneseq
        %v4990 = vshrl.u32 %v4989, 7
        %v4991 = vsub.s32 %v4988, %v4990
        %v4992 = vrot.slane %v4978, %v4991
        %v4993 = vcombine.high %v4985, %v4985
        %v4994 = vcombine.high %v4992, %v4992
        %v4995 = vcombine.high %v4867, %v4867
        %v4997 = vunpack.c.l.s4 1983009808
        %v4998 = vunpack.c.0.s8 %v4997
        %v4999 = vlaneseq
        %v5000 = vshrl.u32 %v4999, 7
        %v5001 = vsub.s32 %v4998, %v5000
        %v5002 = vrot.slane %v4867, %v5001
        %v5004 = vunpack.c.l.s4 1983009808
        %v5005 = vunpack.c.0.s8 %v5004
        %v5006 = vlaneseq
        %v5007 = vshrl.u32 %v5006, 7
        %v5008 = vsub.s32 %v5005, %v5007
        %v5009 = vrot.slane %v4995, %v5008
        %v5010 = vcombine.high %v5002, %v5002
        %v5011 = vcombine.high %v5009, %v5009
        %v5012 = vcombine.high %v4868, %v4868
        %v5014 = vunpack.c.l.s4 1983009808
        %v5015 = vunpack.c.0.s8 %v5014
        %v5016 = vlaneseq
        %v5017 = vshrl.u32 %v5016, 7
        %v5018 = vsub.s32 %v5015, %v5017
        %v5019 = vrot.slane %v4868, %v5018
        %v5021 = vunpack.c.l.s4 1983009808
        %v5022 = vunpack.c.0.s8 %v5021
        %v5023 = vlaneseq
        %v5024 = vshrl.u32 %v5023, 7
        %v5025 = vsub.s32 %v5022, %v5024
        %v5026 = vrot.slane %v5012, %v5025
        %v5027 = vcombine.high %v5019, %v5019
        %v5028 = vcombine.high %v5026, %v5026
        %v5029 = vcombine.high %v4869, %v4869
        %v5031 = vunpack.c.l.s4 1983009808
        %v5032 = vunpack.c.0.s8 %v5031
        %v5033 = vlaneseq
        %v5034 = vshrl.u32 %v5033, 7
        %v5035 = vsub.s32 %v5032, %v5034
        %v5036 = vrot.slane %v4869, %v5035
        %v5038 = vunpack.c.l.s4 1983009808
        %v5039 = vunpack.c.0.s8 %v5038
        %v5040 = vlaneseq
        %v5041 = vshrl.u32 %v5040, 7
        %v5042 = vsub.s32 %v5039, %v5041
        %v5043 = vrot.slane %v5029, %v5042
        %v5044 = vcombine.high %v5036, %v5036
        %v5045 = vcombine.high %v5043, %v5043
        %v5046 = vcombine.high %v4870, %v4870
        %v5048 = vunpack.c.l.s4 1983009808
        %v5049 = vunpack.c.0.s8 %v5048
        %v5050 = vlaneseq
        %v5051 = vshrl.u32 %v5050, 7
        %v5052 = vsub.s32 %v5049, %v5051
        %v5053 = vrot.slane %v4870, %v5052
        %v5055 = vunpack.c.l.s4 1983009808
        %v5056 = vunpack.c.0.s8 %v5055
        %v5057 = vlaneseq
        %v5058 = vshrl.u32 %v5057, 7
        %v5059 = vsub.s32 %v5056, %v5058
        %v5060 = vrot.slane %v5046, %v5059
        %v5061 = vcombine.high %v5053, %v5053
        %v5062 = vcombine.high %v5060, %v5060
        %v5063 = vcombine.high %v4871, %v4871
        %v5065 = vunpack.c.l.s4 1983009808
        %v5066 = vunpack.c.0.s8 %v5065
        %v5067 = vlaneseq
        %v5068 = vshrl.u32 %v5067, 7
        %v5069 = vsub.s32 %v5066, %v5068
        %v5070 = vrot.slane %v4871, %v5069
        %v5072 = vunpack.c.l.s4 1983009808
        %v5073 = vunpack.c.0.s8 %v5072
        %v5074 = vlaneseq
        %v5075 = vshrl.u32 %v5074, 7
        %v5076 = vsub.s32 %v5073, %v5075
        %v5077 = vrot.slane %v5063, %v5076
        %v5078 = vcombine.high %v5070, %v5070
        %v5079 = vcombine.high %v5077, %v5077
        %v5080 = vcombine.high %v4872, %v4872
        %v5082 = vunpack.c.l.s4 1983009808
        %v5083 = vunpack.c.0.s8 %v5082
        %v5084 = vlaneseq
        %v5085 = vshrl.u32 %v5084, 7
        %v5086 = vsub.s32 %v5083, %v5085
        %v5087 = vrot.slane %v4872, %v5086
        %v5089 = vunpack.c.l.s4 1983009808
        %v5090 = vunpack.c.0.s8 %v5089
        %v5091 = vlaneseq
        %v5092 = vshrl.u32 %v5091, 7
        %v5093 = vsub.s32 %v5090, %v5092
        %v5094 = vrot.slane %v5080, %v5093
        %v5095 = vcombine.high %v5087, %v5087
        %v5096 = vcombine.high %v5094, %v5094
        %v5097 = vcombine.high %v4873, %v4873
        %v5099 = vunpack.c.l.s4 1983009808
        %v5100 = vunpack.c.0.s8 %v5099
        %v5101 = vlaneseq
        %v5102 = vshrl.u32 %v5101, 7
        %v5103 = vsub.s32 %v5100, %v5102
        %v5104 = vrot.slane %v4873, %v5103
        %v5106 = vunpack.c.l.s4 1983009808
        %v5107 = vunpack.c.0.s8 %v5106
        %v5108 = vlaneseq
        %v5109 = vshrl.u32 %v5108, 7
        %v5110 = vsub.s32 %v5107, %v5109
        %v5111 = vrot.slane %v5097, %v5110
        %v5112 = vcombine.high %v5104, %v5104
        %v5113 = vcombine.high %v5111, %v5111
        %v5114 = vcombine.high %v4874, %v4874
        %v5116 = vunpack.c.l.s4 1983009808
        %v5117 = vunpack.c.0.s8 %v5116
        %v5118 = vlaneseq
        %v5119 = vshrl.u32 %v5118, 7
        %v5120 = vsub.s32 %v5117, %v5119
        %v5121 = vrot.slane %v4874, %v5120
        %v5123 = vunpack.c.l.s4 1983009808
        %v5124 = vunpack.c.0.s8 %v5123
        %v5125 = vlaneseq
        %v5126 = vshrl.u32 %v5125, 7
        %v5127 = vsub.s32 %v5124, %v5126
        %v5128 = vrot.slane %v5114, %v5127
        %v5129 = vcombine.high %v5121, %v5121
        %v5130 = vcombine.high %v5128, %v5128
        %v5131 = vcombine.high %v4875, %v4875
        %v5133 = vunpack.c.l.s4 1983009808
        %v5134 = vunpack.c.0.s8 %v5133
        %v5135 = vlaneseq
        %v5136 = vshrl.u32 %v5135, 7
        %v5137 = vsub.s32 %v5134, %v5136
        %v5138 = vrot.slane %v4875, %v5137
        %v5140 = vunpack.c.l.s4 1983009808
        %v5141 = vunpack.c.0.s8 %v5140
        %v5142 = vlaneseq
        %v5143 = vshrl.u32 %v5142, 7
        %v5144 = vsub.s32 %v5141, %v5143
        %v5145 = vrot.slane %v5131, %v5144
        %v5146 = vcombine.high %v5138, %v5138
        %v5147 = vcombine.high %v5145, %v5145
        %v5148 = vcombine.high %v4876, %v4876
        %v5150 = vunpack.c.l.s4 1983009808
        %v5151 = vunpack.c.0.s8 %v5150
        %v5152 = vlaneseq
        %v5153 = vshrl.u32 %v5152, 7
        %v5154 = vsub.s32 %v5151, %v5153
        %v5155 = vrot.slane %v4876, %v5154
        %v5157 = vunpack.c.l.s4 1983009808
        %v5158 = vunpack.c.0.s8 %v5157
        %v5159 = vlaneseq
        %v5160 = vshrl.u32 %v5159, 7
        %v5161 = vsub.s32 %v5158, %v5160
        %v5162 = vrot.slane %v5148, %v5161
        %v5163 = vcombine.high %v5155, %v5155
        %v5164 = vcombine.high %v5162, %v5162
        %v5165 = vcombine.high %v4877, %v4877
        %v5167 = vunpack.c.l.s4 1983009808
        %v5168 = vunpack.c.0.s8 %v5167
        %v5169 = vlaneseq
        %v5170 = vshrl.u32 %v5169, 7
        %v5171 = vsub.s32 %v5168, %v5170
        %v5172 = vrot.slane %v4877, %v5171
        %v5174 = vunpack.c.l.s4 1983009808
        %v5175 = vunpack.c.0.s8 %v5174
        %v5176 = vlaneseq
        %v5177 = vshrl.u32 %v5176, 7
        %v5178 = vsub.s32 %v5175, %v5177
        %v5179 = vrot.slane %v5165, %v5178
        %v5180 = vcombine.high %v5172, %v5172
        %v5181 = vcombine.high %v5179, %v5179
        %v5182 = vcombine.high %v4878, %v4878
        %v5184 = vunpack.c.l.s4 1983009808
        %v5185 = vunpack.c.0.s8 %v5184
        %v5186 = vlaneseq
        %v5187 = vshrl.u32 %v5186, 7
        %v5188 = vsub.s32 %v5185, %v5187
        %v5189 = vrot.slane %v4878, %v5188
        %v5191 = vunpack.c.l.s4 1983009808
        %v5192 = vunpack.c.0.s8 %v5191
        %v5193 = vlaneseq
        %v5194 = vshrl.u32 %v5193, 7
        %v5195 = vsub.s32 %v5192, %v5194
        %v5196 = vrot.slane %v5182, %v5195
        %v5197 = vcombine.high %v5189, %v5189
        %v5198 = vcombine.high %v5196, %v5196
        %v5199 = vcombine.high %v4879, %v4879
        %v5201 = vunpack.c.l.s4 1983009808
        %v5202 = vunpack.c.0.s8 %v5201
        %v5203 = vlaneseq
        %v5204 = vshrl.u32 %v5203, 7
        %v5205 = vsub.s32 %v5202, %v5204
        %v5206 = vrot.slane %v4879, %v5205
        %v5208 = vunpack.c.l.s4 1983009808
        %v5209 = vunpack.c.0.s8 %v5208
        %v5210 = vlaneseq
        %v5211 = vshrl.u32 %v5210, 7
        %v5212 = vsub.s32 %v5209, %v5211
        %v5213 = vrot.slane %v5199, %v5212
        %v5214 = vcombine.high %v5206, %v5206
        %v5215 = vcombine.high %v5213, %v5213
        %v5216 = vcombine.high %v4880, %v4880
        %v5218 = vunpack.c.l.s4 1983009808
        %v5219 = vunpack.c.0.s8 %v5218
        %v5220 = vlaneseq
        %v5221 = vshrl.u32 %v5220, 7
        %v5222 = vsub.s32 %v5219, %v5221
        %v5223 = vrot.slane %v4880, %v5222
        %v5225 = vunpack.c.l.s4 1983009808
        %v5226 = vunpack.c.0.s8 %v5225
        %v5227 = vlaneseq
        %v5228 = vshrl.u32 %v5227, 7
        %v5229 = vsub.s32 %v5226, %v5228
        %v5230 = vrot.slane %v5216, %v5229
        %v5231 = vcombine.high %v5223, %v5223
        %v5232 = vcombine.high %v5230, %v5230
        %v5233 = vcombine.high %v4881, %v4881
        %v5235 = vunpack.c.l.s4 1983009808
        %v5236 = vunpack.c.0.s8 %v5235
        %v5237 = vlaneseq
        %v5238 = vshrl.u32 %v5237, 7
        %v5239 = vsub.s32 %v5236, %v5238
        %v5240 = vrot.slane %v4881, %v5239
        %v5242 = vunpack.c.l.s4 1983009808
        %v5243 = vunpack.c.0.s8 %v5242
        %v5244 = vlaneseq
        %v5245 = vshrl.u32 %v5244, 7
        %v5246 = vsub.s32 %v5243, %v5245
        %v5247 = vrot.slane %v5233, %v5246
        %v5248 = vcombine.high %v5240, %v5240
        %v5249 = vcombine.high %v5247, %v5247
        %v5250 = vcombine.high %v4882, %v4882
        %v5252 = vunpack.c.l.s4 1983009808
        %v5253 = vunpack.c.0.s8 %v5252
        %v5254 = vlaneseq
        %v5255 = vshrl.u32 %v5254, 7
        %v5256 = vsub.s32 %v5253, %v5255
        %v5257 = vrot.slane %v4882, %v5256
        %v5259 = vunpack.c.l.s4 1983009808
        %v5260 = vunpack.c.0.s8 %v5259
        %v5261 = vlaneseq
        %v5262 = vshrl.u32 %v5261, 7
        %v5263 = vsub.s32 %v5260, %v5262
        %v5264 = vrot.slane %v5250, %v5263
        %v5265 = vcombine.high %v5257, %v5257
        %v5266 = vcombine.high %v5264, %v5264
        %v5267 = vcombine.high %v4883, %v4883
        %v5269 = vunpack.c.l.s4 1983009808
        %v5270 = vunpack.c.0.s8 %v5269
        %v5271 = vlaneseq
        %v5272 = vshrl.u32 %v5271, 7
        %v5273 = vsub.s32 %v5270, %v5272
        %v5274 = vrot.slane %v4883, %v5273
        %v5276 = vunpack.c.l.s4 1983009808
        %v5277 = vunpack.c.0.s8 %v5276
        %v5278 = vlaneseq
        %v5279 = vshrl.u32 %v5278, 7
        %v5280 = vsub.s32 %v5277, %v5279
        %v5281 = vrot.slane %v5267, %v5280
        %v5282 = vcombine.high %v5274, %v5274
        %v5283 = vcombine.high %v5281, %v5281
        %v5284 = vcombine.high %v4884, %v4884
        %v5286 = vunpack.c.l.s4 1983009808
        %v5287 = vunpack.c.0.s8 %v5286
        %v5288 = vlaneseq
        %v5289 = vshrl.u32 %v5288, 7
        %v5290 = vsub.s32 %v5287, %v5289
        %v5291 = vrot.slane %v4884, %v5290
        %v5293 = vunpack.c.l.s4 1983009808
        %v5294 = vunpack.c.0.s8 %v5293
        %v5295 = vlaneseq
        %v5296 = vshrl.u32 %v5295, 7
        %v5297 = vsub.s32 %v5294, %v5296
        %v5298 = vrot.slane %v5284, %v5297
        %v5299 = vcombine.high %v5291, %v5291
        %v5300 = vcombine.high %v5298, %v5298
        %v5301 = vcombine.high %v4885, %v4885
        %v5303 = vunpack.c.l.s4 1983009808
        %v5304 = vunpack.c.0.s8 %v5303
        %v5305 = vlaneseq
        %v5306 = vshrl.u32 %v5305, 7
        %v5307 = vsub.s32 %v5304, %v5306
        %v5308 = vrot.slane %v4885, %v5307
        %v5310 = vunpack.c.l.s4 1983009808
        %v5311 = vunpack.c.0.s8 %v5310
        %v5312 = vlaneseq
        %v5313 = vshrl.u32 %v5312, 7
        %v5314 = vsub.s32 %v5311, %v5313
        %v5315 = vrot.slane %v5301, %v5314
        %v5316 = vcombine.high %v5308, %v5308
        %v5317 = vcombine.high %v5315, %v5315
        %v5318 = vcombine.high %v4886, %v4886
        %v5320 = vunpack.c.l.s4 1983009808
        %v5321 = vunpack.c.0.s8 %v5320
        %v5322 = vlaneseq
        %v5323 = vshrl.u32 %v5322, 7
        %v5324 = vsub.s32 %v5321, %v5323
        %v5325 = vrot.slane %v4886, %v5324
        %v5327 = vunpack.c.l.s4 1983009808
        %v5328 = vunpack.c.0.s8 %v5327
        %v5329 = vlaneseq
        %v5330 = vshrl.u32 %v5329, 7
        %v5331 = vsub.s32 %v5328, %v5330
        %v5332 = vrot.slane %v5318, %v5331
        %v5333 = vcombine.high %v5325, %v5325
        %v5334 = vcombine.high %v5332, %v5332
        %v5335 = vcombine.high %v4887, %v4887
        %v5337 = vunpack.c.l.s4 1983009808
        %v5338 = vunpack.c.0.s8 %v5337
        %v5339 = vlaneseq
        %v5340 = vshrl.u32 %v5339, 7
        %v5341 = vsub.s32 %v5338, %v5340
        %v5342 = vrot.slane %v4887, %v5341
        %v5344 = vunpack.c.l.s4 1983009808
        %v5345 = vunpack.c.0.s8 %v5344
        %v5346 = vlaneseq
        %v5347 = vshrl.u32 %v5346, 7
        %v5348 = vsub.s32 %v5345, %v5347
        %v5349 = vrot.slane %v5335, %v5348
        %v5350 = vcombine.high %v5342, %v5342
        %v5351 = vcombine.high %v5349, %v5349
        %v5352 = vcombine.high %v4888, %v4888
        %v5354 = vunpack.c.l.s4 1983009808
        %v5355 = vunpack.c.0.s8 %v5354
        %v5356 = vlaneseq
        %v5357 = vshrl.u32 %v5356, 7
        %v5358 = vsub.s32 %v5355, %v5357
        %v5359 = vrot.slane %v4888, %v5358
        %v5361 = vunpack.c.l.s4 1983009808
        %v5362 = vunpack.c.0.s8 %v5361
        %v5363 = vlaneseq
        %v5364 = vshrl.u32 %v5363, 7
        %v5365 = vsub.s32 %v5362, %v5364
        %v5366 = vrot.slane %v5352, %v5365
        %v5367 = vcombine.high %v5359, %v5359
        %v5368 = vcombine.high %v5366, %v5366
        %v5369 = vcombine.high %v4889, %v4889
        %v5371 = vunpack.c.l.s4 1983009808
        %v5372 = vunpack.c.0.s8 %v5371
        %v5373 = vlaneseq
        %v5374 = vshrl.u32 %v5373, 7
        %v5375 = vsub.s32 %v5372, %v5374
        %v5376 = vrot.slane %v4889, %v5375
        %v5378 = vunpack.c.l.s4 1983009808
        %v5379 = vunpack.c.0.s8 %v5378
        %v5380 = vlaneseq
        %v5381 = vshrl.u32 %v5380, 7
        %v5382 = vsub.s32 %v5379, %v5381
        %v5383 = vrot.slane %v5369, %v5382
        %v5384 = vcombine.high %v5376, %v5376
        %v5385 = vcombine.high %v5383, %v5383
        %v5386 = vcombine.high %v4890, %v4890
        %v5388 = vunpack.c.l.s4 1983009808
        %v5389 = vunpack.c.0.s8 %v5388
        %v5390 = vlaneseq
        %v5391 = vshrl.u32 %v5390, 7
        %v5392 = vsub.s32 %v5389, %v5391
        %v5393 = vrot.slane %v4890, %v5392
        %v5395 = vunpack.c.l.s4 1983009808
        %v5396 = vunpack.c.0.s8 %v5395
        %v5397 = vlaneseq
        %v5398 = vshrl.u32 %v5397, 7
        %v5399 = vsub.s32 %v5396, %v5398
        %v5400 = vrot.slane %v5386, %v5399
        %v5401 = vcombine.high %v5393, %v5393
        %v5402 = vcombine.high %v5400, %v5400
        %v5403 = vcombine.high %v4891, %v4891
        %v5405 = vunpack.c.l.s4 1983009808
        %v5406 = vunpack.c.0.s8 %v5405
        %v5407 = vlaneseq
        %v5408 = vshrl.u32 %v5407, 7
        %v5409 = vsub.s32 %v5406, %v5408
        %v5410 = vrot.slane %v4891, %v5409
        %v5412 = vunpack.c.l.s4 1983009808
        %v5413 = vunpack.c.0.s8 %v5412
        %v5414 = vlaneseq
        %v5415 = vshrl.u32 %v5414, 7
        %v5416 = vsub.s32 %v5413, %v5415
        %v5417 = vrot.slane %v5403, %v5416
        %v5418 = vcombine.high %v5410, %v5410
        %v5419 = vcombine.high %v5417, %v5417
        %v5420 = vcombine.high %v4892, %v4892
        %v5422 = vunpack.c.l.s4 1983009808
        %v5423 = vunpack.c.0.s8 %v5422
        %v5424 = vlaneseq
        %v5425 = vshrl.u32 %v5424, 7
        %v5426 = vsub.s32 %v5423, %v5425
        %v5427 = vrot.slane %v4892, %v5426
        %v5429 = vunpack.c.l.s4 1983009808
        %v5430 = vunpack.c.0.s8 %v5429
        %v5431 = vlaneseq
        %v5432 = vshrl.u32 %v5431, 7
        %v5433 = vsub.s32 %v5430, %v5432
        %v5434 = vrot.slane %v5420, %v5433
        %v5435 = vcombine.high %v5427, %v5427
        %v5436 = vcombine.high %v5434, %v5434
        %v5437 = vcombine.high %v4893, %v4893
        %v5439 = vunpack.c.l.s4 1983009808
        %v5440 = vunpack.c.0.s8 %v5439
        %v5441 = vlaneseq
        %v5442 = vshrl.u32 %v5441, 7
        %v5443 = vsub.s32 %v5440, %v5442
        %v5444 = vrot.slane %v4893, %v5443
        %v5446 = vunpack.c.l.s4 1983009808
        %v5447 = vunpack.c.0.s8 %v5446
        %v5448 = vlaneseq
        %v5449 = vshrl.u32 %v5448, 7
        %v5450 = vsub.s32 %v5447, %v5449
        %v5451 = vrot.slane %v5437, %v5450
        %v5452 = vcombine.high %v5444, %v5444
        %v5453 = vcombine.high %v5451, %v5451
        %v5454 = vcombine.high %v4894, %v4894
        %v5456 = vunpack.c.l.s4 1983009808
        %v5457 = vunpack.c.0.s8 %v5456
        %v5458 = vlaneseq
        %v5459 = vshrl.u32 %v5458, 7
        %v5460 = vsub.s32 %v5457, %v5459
        %v5461 = vrot.slane %v4894, %v5460
        %v5463 = vunpack.c.l.s4 1983009808
        %v5464 = vunpack.c.0.s8 %v5463
        %v5465 = vlaneseq
        %v5466 = vshrl.u32 %v5465, 7
        %v5467 = vsub.s32 %v5464, %v5466
        %v5468 = vrot.slane %v5454, %v5467
        %v5469 = vcombine.high %v5461, %v5461
        %v5470 = vcombine.high %v5468, %v5468
        %v5599 = vrot.slane %v4934, 7
        %v5600 = vrot.slane %v5599, 2
        %v5601 = vrot.slane %v4942, 7
        %v5602 = vrot.slane %v5601, 2
        %v5603 = vrot.slane %v4941, 7
        %v5604 = vrot.slane %v5603, 2
        %v5605 = vrot.slane %v4943, 7
        %v5606 = vrot.slane %v5605, 2
        %v5607 = vrot.slane %v4951, 7
        %v5608 = vrot.slane %v5607, 2
        %v5609 = vrot.slane %v4959, 7
        %v5610 = vrot.slane %v5609, 2
        %v5611 = vrot.slane %v4958, 7
        %v5612 = vrot.slane %v5611, 2
        %v5613 = vrot.slane %v4960, 7
        %v5614 = vrot.slane %v5613, 2
        %v5615 = vrot.slane %v5002, 7
        %v5616 = vrot.slane %v5615, 2
        %v5617 = vrot.slane %v5010, 7
        %v5618 = vrot.slane %v5617, 2
        %v5619 = vrot.slane %v5009, 7
        %v5620 = vrot.slane %v5619, 2
        %v5621 = vrot.slane %v5011, 7
        %v5622 = vrot.slane %v5621, 2
        %v5623 = vrot.slane %v5019, 7
        %v5624 = vrot.slane %v5623, 2
        %v5625 = vrot.slane %v5027, 7
        %v5626 = vrot.slane %v5625, 2
        %v5627 = vrot.slane %v5026, 7
        %v5628 = vrot.slane %v5627, 2
        %v5629 = vrot.slane %v5028, 7
        %v5630 = vrot.slane %v5629, 2
        %v5631 = vrot.slane %v5070, 7
        %v5632 = vrot.slane %v5631, 2
        %v5633 = vrot.slane %v5078, 7
        %v5634 = vrot.slane %v5633, 2
        %v5635 = vrot.slane %v5077, 7
        %v5636 = vrot.slane %v5635, 2
        %v5637 = vrot.slane %v5079, 7
        %v5638 = vrot.slane %v5637, 2
        %v5639 = vrot.slane %v5087, 7
        %v5640 = vrot.slane %v5639, 2
        %v5641 = vrot.slane %v5095, 7
        %v5642 = vrot.slane %v5641, 2
        %v5643 = vrot.slane %v5094, 7
        %v5644 = vrot.slane %v5643, 2
        %v5645 = vrot.slane %v5096, 7
        %v5646 = vrot.slane %v5645, 2
        %v5647 = vrot.slane %v5138, 7
        %v5648 = vrot.slane %v5647, 2
        %v5649 = vrot.slane %v5146, 7
        %v5650 = vrot.slane %v5649, 2
        %v5651 = vrot.slane %v5145, 7
        %v5652 = vrot.slane %v5651, 2
        %v5653 = vrot.slane %v5147, 7
        %v5654 = vrot.slane %v5653, 2
        %v5655 = vrot.slane %v5155, 7
        %v5656 = vrot.slane %v5655, 2
        %v5657 = vrot.slane %v5163, 7
        %v5658 = vrot.slane %v5657, 2
        %v5659 = vrot.slane %v5162, 7
        %v5660 = vrot.slane %v5659, 2
        %v5661 = vrot.slane %v5164, 7
        %v5662 = vrot.slane %v5661, 2
        %v5663 = vrot.slane %v5206, 7
        %v5664 = vrot.slane %v5663, 2
        %v5665 = vrot.slane %v5214, 7
        %v5666 = vrot.slane %v5665, 2
        %v5667 = vrot.slane %v5213, 7
        %v5668 = vrot.slane %v5667, 2
        %v5669 = vrot.slane %v5215, 7
        %v5670 = vrot.slane %v5669, 2
        %v5671 = vrot.slane %v5223, 7
        %v5672 = vrot.slane %v5671, 2
        %v5673 = vrot.slane %v5231, 7
        %v5674 = vrot.slane %v5673, 2
        %v5675 = vrot.slane %v5230, 7
        %v5676 = vrot.slane %v5675, 2
        %v5677 = vrot.slane %v5232, 7
        %v5678 = vrot.slane %v5677, 2
        %v5679 = vrot.slane %v5274, 7
        %v5680 = vrot.slane %v5679, 2
        %v5681 = vrot.slane %v5282, 7
        %v5682 = vrot.slane %v5681, 2
        %v5683 = vrot.slane %v5281, 7
        %v5684 = vrot.slane %v5683, 2
        %v5685 = vrot.slane %v5283, 7
        %v5686 = vrot.slane %v5685, 2
        %v5687 = vrot.slane %v5291, 7
        %v5688 = vrot.slane %v5687, 2
        %v5689 = vrot.slane %v5299, 7
        %v5690 = vrot.slane %v5689, 2
        %v5691 = vrot.slane %v5298, 7
        %v5692 = vrot.slane %v5691, 2
        %v5693 = vrot.slane %v5300, 7
        %v5694 = vrot.slane %v5693, 2
        %v5695 = vrot.slane %v5342, 7
        %v5696 = vrot.slane %v5695, 2
        %v5697 = vrot.slane %v5350, 7
        %v5698 = vrot.slane %v5697, 2
        %v5699 = vrot.slane %v5349, 7
        %v5700 = vrot.slane %v5699, 2
        %v5701 = vrot.slane %v5351, 7
        %v5702 = vrot.slane %v5701, 2
        %v5703 = vrot.slane %v5359, 7
        %v5704 = vrot.slane %v5703, 2
        %v5705 = vrot.slane %v5367, 7
        %v5706 = vrot.slane %v5705, 2
        %v5707 = vrot.slane %v5366, 7
        %v5708 = vrot.slane %v5707, 2
        %v5709 = vrot.slane %v5368, 7
        %v5710 = vrot.slane %v5709, 2
        %v5711 = vrot.slane %v5410, 7
        %v5712 = vrot.slane %v5711, 2
        %v5713 = vrot.slane %v5418, 7
        %v5714 = vrot.slane %v5713, 2
        %v5715 = vrot.slane %v5417, 7
        %v5716 = vrot.slane %v5715, 2
        %v5717 = vrot.slane %v5419, 7
        %v5718 = vrot.slane %v5717, 2
        %v5719 = vrot.slane %v5427, 7
        %v5720 = vrot.slane %v5719, 2
        %v5721 = vrot.slane %v5435, 7
        %v5722 = vrot.slane %v5721, 2
        %v5723 = vrot.slane %v5434, 7
        %v5724 = vrot.slane %v5723, 2
        %v5725 = vrot.slane %v5436, 7
        %v5726 = vrot.slane %v5725, 2
        %v5791 = vmax.f32 %v4934, %v5600
        %v5792 = vmax.f32 %v4942, %v5602
        %v5793 = vmax.f32 %v4941, %v5604
        %v5794 = vmax.f32 %v4943, %v5606
        %v5795 = vmax.f32 %v4951, %v5608
        %v5796 = vmax.f32 %v4959, %v5610
        %v5797 = vmax.f32 %v4958, %v5612
        %v5798 = vmax.f32 %v4960, %v5614
        %v5799 = vmax.f32 %v5002, %v5616
        %v5800 = vmax.f32 %v5010, %v5618
        %v5801 = vmax.f32 %v5009, %v5620
        %v5802 = vmax.f32 %v5011, %v5622
        %v5803 = vmax.f32 %v5019, %v5624
        %v5804 = vmax.f32 %v5027, %v5626
        %v5805 = vmax.f32 %v5026, %v5628
        %v5806 = vmax.f32 %v5028, %v5630
        %v5807 = vmax.f32 %v5070, %v5632
        %v5808 = vmax.f32 %v5078, %v5634
        %v5809 = vmax.f32 %v5077, %v5636
        %v5810 = vmax.f32 %v5079, %v5638
        %v5811 = vmax.f32 %v5087, %v5640
        %v5812 = vmax.f32 %v5095, %v5642
        %v5813 = vmax.f32 %v5094, %v5644
        %v5814 = vmax.f32 %v5096, %v5646
        %v5815 = vmax.f32 %v5138, %v5648
        %v5816 = vmax.f32 %v5146, %v5650
        %v5817 = vmax.f32 %v5145, %v5652
        %v5818 = vmax.f32 %v5147, %v5654
        %v5819 = vmax.f32 %v5155, %v5656
        %v5820 = vmax.f32 %v5163, %v5658
        %v5821 = vmax.f32 %v5162, %v5660
        %v5822 = vmax.f32 %v5164, %v5662
        %v5823 = vmax.f32 %v5206, %v5664
        %v5824 = vmax.f32 %v5214, %v5666
        %v5825 = vmax.f32 %v5213, %v5668
        %v5826 = vmax.f32 %v5215, %v5670
        %v5827 = vmax.f32 %v5223, %v5672
        %v5828 = vmax.f32 %v5231, %v5674
        %v5829 = vmax.f32 %v5230, %v5676
        %v5830 = vmax.f32 %v5232, %v5678
        %v5831 = vmax.f32 %v5274, %v5680
        %v5832 = vmax.f32 %v5282, %v5682
        %v5833 = vmax.f32 %v5281, %v5684
        %v5834 = vmax.f32 %v5283, %v5686
        %v5835 = vmax.f32 %v5291, %v5688
        %v5836 = vmax.f32 %v5299, %v5690
        %v5837 = vmax.f32 %v5298, %v5692
        %v5838 = vmax.f32 %v5300, %v5694
        %v5839 = vmax.f32 %v5342, %v5696
        %v5840 = vmax.f32 %v5350, %v5698
        %v5841 = vmax.f32 %v5349, %v5700
        %v5842 = vmax.f32 %v5351, %v5702
        %v5843 = vmax.f32 %v5359, %v5704
        %v5844 = vmax.f32 %v5367, %v5706
        %v5845 = vmax.f32 %v5366, %v5708
        %v5846 = vmax.f32 %v5368, %v5710
        %v5847 = vmax.f32 %v5410, %v5712
        %v5848 = vmax.f32 %v5418, %v5714
        %v5849 = vmax.f32 %v5417, %v5716
        %v5850 = vmax.f32 %v5419, %v5718
        %v5851 = vmax.f32 %v5427, %v5720
        %v5852 = vmax.f32 %v5435, %v5722
        %v5853 = vmax.f32 %v5434, %v5724
        %v5854 = vmax.f32 %v5436, %v5726
        %v5855 = vrot.slane %v4968, 7
        %v5856 = vrot.slane %v5855, 2
        %v5857 = vrot.slane %v4976, 7
        %v5858 = vrot.slane %v5857, 2
        %v5859 = vrot.slane %v4975, 7
        %v5860 = vrot.slane %v5859, 2
        %v5861 = vrot.slane %v4977, 7
        %v5862 = vrot.slane %v5861, 2
        %v5863 = vrot.slane %v4985, 7
        %v5864 = vrot.slane %v5863, 2
        %v5865 = vrot.slane %v4993, 7
        %v5866 = vrot.slane %v5865, 2
        %v5867 = vrot.slane %v4992, 7
        %v5868 = vrot.slane %v5867, 2
        %v5869 = vrot.slane %v4994, 7
        %v5870 = vrot.slane %v5869, 2
        %v5871 = vrot.slane %v5036, 7
        %v5872 = vrot.slane %v5871, 2
        %v5873 = vrot.slane %v5044, 7
        %v5874 = vrot.slane %v5873, 2
        %v5875 = vrot.slane %v5043, 7
        %v5876 = vrot.slane %v5875, 2
        %v5877 = vrot.slane %v5045, 7
        %v5878 = vrot.slane %v5877, 2
        %v5879 = vrot.slane %v5053, 7
        %v5880 = vrot.slane %v5879, 2
        %v5881 = vrot.slane %v5061, 7
        %v5882 = vrot.slane %v5881, 2
        %v5883 = vrot.slane %v5060, 7
        %v5884 = vrot.slane %v5883, 2
        %v5885 = vrot.slane %v5062, 7
        %v5886 = vrot.slane %v5885, 2
        %v5887 = vrot.slane %v5104, 7
        %v5888 = vrot.slane %v5887, 2
        %v5889 = vrot.slane %v5112, 7
        %v5890 = vrot.slane %v5889, 2
        %v5891 = vrot.slane %v5111, 7
        %v5892 = vrot.slane %v5891, 2
        %v5893 = vrot.slane %v5113, 7
        %v5894 = vrot.slane %v5893, 2
        %v5895 = vrot.slane %v5121, 7
        %v5896 = vrot.slane %v5895, 2
        %v5897 = vrot.slane %v5129, 7
        %v5898 = vrot.slane %v5897, 2
        %v5899 = vrot.slane %v5128, 7
        %v5900 = vrot.slane %v5899, 2
        %v5901 = vrot.slane %v5130, 7
        %v5902 = vrot.slane %v5901, 2
        %v5903 = vrot.slane %v5172, 7
        %v5904 = vrot.slane %v5903, 2
        %v5905 = vrot.slane %v5180, 7
        %v5906 = vrot.slane %v5905, 2
        %v5907 = vrot.slane %v5179, 7
        %v5908 = vrot.slane %v5907, 2
        %v5909 = vrot.slane %v5181, 7
        %v5910 = vrot.slane %v5909, 2
        %v5911 = vrot.slane %v5189, 7
        %v5912 = vrot.slane %v5911, 2
        %v5913 = vrot.slane %v5197, 7
        %v5914 = vrot.slane %v5913, 2
        %v5915 = vrot.slane %v5196, 7
        %v5916 = vrot.slane %v5915, 2
        %v5917 = vrot.slane %v5198, 7
        %v5918 = vrot.slane %v5917, 2
        %v5919 = vrot.slane %v5240, 7
        %v5920 = vrot.slane %v5919, 2
        %v5921 = vrot.slane %v5248, 7
        %v5922 = vrot.slane %v5921, 2
        %v5923 = vrot.slane %v5247, 7
        %v5924 = vrot.slane %v5923, 2
        %v5925 = vrot.slane %v5249, 7
        %v5926 = vrot.slane %v5925, 2
        %v5927 = vrot.slane %v5257, 7
        %v5928 = vrot.slane %v5927, 2
        %v5929 = vrot.slane %v5265, 7
        %v5930 = vrot.slane %v5929, 2
        %v5931 = vrot.slane %v5264, 7
        %v5932 = vrot.slane %v5931, 2
        %v5933 = vrot.slane %v5266, 7
        %v5934 = vrot.slane %v5933, 2
        %v5935 = vrot.slane %v5308, 7
        %v5936 = vrot.slane %v5935, 2
        %v5937 = vrot.slane %v5316, 7
        %v5938 = vrot.slane %v5937, 2
        %v5939 = vrot.slane %v5315, 7
        %v5940 = vrot.slane %v5939, 2
        %v5941 = vrot.slane %v5317, 7
        %v5942 = vrot.slane %v5941, 2
        %v5943 = vrot.slane %v5325, 7
        %v5944 = vrot.slane %v5943, 2
        %v5945 = vrot.slane %v5333, 7
        %v5946 = vrot.slane %v5945, 2
        %v5947 = vrot.slane %v5332, 7
        %v5948 = vrot.slane %v5947, 2
        %v5949 = vrot.slane %v5334, 7
        %v5950 = vrot.slane %v5949, 2
        %v5951 = vrot.slane %v5376, 7
        %v5952 = vrot.slane %v5951, 2
        %v5953 = vrot.slane %v5384, 7
        %v5954 = vrot.slane %v5953, 2
        %v5955 = vrot.slane %v5383, 7
        %v5956 = vrot.slane %v5955, 2
        %v5957 = vrot.slane %v5385, 7
        %v5958 = vrot.slane %v5957, 2
        %v5959 = vrot.slane %v5393, 7
        %v5960 = vrot.slane %v5959, 2
        %v5961 = vrot.slane %v5401, 7
        %v5962 = vrot.slane %v5961, 2
        %v5963 = vrot.slane %v5400, 7
        %v5964 = vrot.slane %v5963, 2
        %v5965 = vrot.slane %v5402, 7
        %v5966 = vrot.slane %v5965, 2
        %v5967 = vrot.slane %v5444, 7
        %v5968 = vrot.slane %v5967, 2
        %v5969 = vrot.slane %v5452, 7
        %v5970 = vrot.slane %v5969, 2
        %v5971 = vrot.slane %v5451, 7
        %v5972 = vrot.slane %v5971, 2
        %v5973 = vrot.slane %v5453, 7
        %v5974 = vrot.slane %v5973, 2
        %v5975 = vrot.slane %v5461, 7
        %v5976 = vrot.slane %v5975, 2
        %v5977 = vrot.slane %v5469, 7
        %v5978 = vrot.slane %v5977, 2
        %v5979 = vrot.slane %v5468, 7
        %v5980 = vrot.slane %v5979, 2
        %v5981 = vrot.slane %v5470, 7
        %v5982 = vrot.slane %v5981, 2
        %v6047 = vmax.f32 %v4968, %v5856
        %v6048 = vmax.f32 %v4976, %v5858
        %v6049 = vmax.f32 %v4975, %v5860
        %v6050 = vmax.f32 %v4977, %v5862
        %v6051 = vmax.f32 %v4985, %v5864
        %v6052 = vmax.f32 %v4993, %v5866
        %v6053 = vmax.f32 %v4992, %v5868
        %v6054 = vmax.f32 %v4994, %v5870
        %v6055 = vmax.f32 %v5036, %v5872
        %v6056 = vmax.f32 %v5044, %v5874
        %v6057 = vmax.f32 %v5043, %v5876
        %v6058 = vmax.f32 %v5045, %v5878
        %v6059 = vmax.f32 %v5053, %v5880
        %v6060 = vmax.f32 %v5061, %v5882
        %v6061 = vmax.f32 %v5060, %v5884
        %v6062 = vmax.f32 %v5062, %v5886
        %v6063 = vmax.f32 %v5104, %v5888
        %v6064 = vmax.f32 %v5112, %v5890
        %v6065 = vmax.f32 %v5111, %v5892
        %v6066 = vmax.f32 %v5113, %v5894
        %v6067 = vmax.f32 %v5121, %v5896
        %v6068 = vmax.f32 %v5129, %v5898
        %v6069 = vmax.f32 %v5128, %v5900
        %v6070 = vmax.f32 %v5130, %v5902
        %v6071 = vmax.f32 %v5172, %v5904
        %v6072 = vmax.f32 %v5180, %v5906
        %v6073 = vmax.f32 %v5179, %v5908
        %v6074 = vmax.f32 %v5181, %v5910
        %v6075 = vmax.f32 %v5189, %v5912
        %v6076 = vmax.f32 %v5197, %v5914
        %v6077 = vmax.f32 %v5196, %v5916
        %v6078 = vmax.f32 %v5198, %v5918
        %v6079 = vmax.f32 %v5240, %v5920
        %v6080 = vmax.f32 %v5248, %v5922
        %v6081 = vmax.f32 %v5247, %v5924
        %v6082 = vmax.f32 %v5249, %v5926
        %v6083 = vmax.f32 %v5257, %v5928
        %v6084 = vmax.f32 %v5265, %v5930
        %v6085 = vmax.f32 %v5264, %v5932
        %v6086 = vmax.f32 %v5266, %v5934
        %v6087 = vmax.f32 %v5308, %v5936
        %v6088 = vmax.f32 %v5316, %v5938
        %v6089 = vmax.f32 %v5315, %v5940
        %v6090 = vmax.f32 %v5317, %v5942
        %v6091 = vmax.f32 %v5325, %v5944
        %v6092 = vmax.f32 %v5333, %v5946
        %v6093 = vmax.f32 %v5332, %v5948
        %v6094 = vmax.f32 %v5334, %v5950
        %v6095 = vmax.f32 %v5376, %v5952
        %v6096 = vmax.f32 %v5384, %v5954
        %v6097 = vmax.f32 %v5383, %v5956
        %v6098 = vmax.f32 %v5385, %v5958
        %v6099 = vmax.f32 %v5393, %v5960
        %v6100 = vmax.f32 %v5401, %v5962
        %v6101 = vmax.f32 %v5400, %v5964
        %v6102 = vmax.f32 %v5402, %v5966
        %v6103 = vmax.f32 %v5444, %v5968
        %v6104 = vmax.f32 %v5452, %v5970
        %v6105 = vmax.f32 %v5451, %v5972
        %v6106 = vmax.f32 %v5453, %v5974
        %v6107 = vmax.f32 %v5461, %v5976
        %v6108 = vmax.f32 %v5469, %v5978
        %v6109 = vmax.f32 %v5468, %v5980
        %v6110 = vmax.f32 %v5470, %v5982
        %v6111 = vmax.f32 %v5791, %v6047
        %v6112 = vmax.f32 %v5792, %v6048
        %v6113 = vmax.f32 %v5793, %v6049
        %v6114 = vmax.f32 %v5794, %v6050
        %v6115 = vmax.f32 %v5795, %v6051
        %v6116 = vmax.f32 %v5796, %v6052
        %v6117 = vmax.f32 %v5797, %v6053
        %v6118 = vmax.f32 %v5798, %v6054
        %v6119 = vmax.f32 %v5799, %v6055
        %v6120 = vmax.f32 %v5800, %v6056
        %v6121 = vmax.f32 %v5801, %v6057
        %v6122 = vmax.f32 %v5802, %v6058
        %v6123 = vmax.f32 %v5803, %v6059
        %v6124 = vmax.f32 %v5804, %v6060
        %v6125 = vmax.f32 %v5805, %v6061
        %v6126 = vmax.f32 %v5806, %v6062
        %v6127 = vmax.f32 %v5807, %v6063
        %v6128 = vmax.f32 %v5808, %v6064
        %v6129 = vmax.f32 %v5809, %v6065
        %v6130 = vmax.f32 %v5810, %v6066
        %v6131 = vmax.f32 %v5811, %v6067
        %v6132 = vmax.f32 %v5812, %v6068
        %v6133 = vmax.f32 %v5813, %v6069
        %v6134 = vmax.f32 %v5814, %v6070
        %v6135 = vmax.f32 %v5815, %v6071
        %v6136 = vmax.f32 %v5816, %v6072
        %v6137 = vmax.f32 %v5817, %v6073
        %v6138 = vmax.f32 %v5818, %v6074
        %v6139 = vmax.f32 %v5819, %v6075
        %v6140 = vmax.f32 %v5820, %v6076
        %v6141 = vmax.f32 %v5821, %v6077
        %v6142 = vmax.f32 %v5822, %v6078
        %v6143 = vmax.f32 %v5823, %v6079
        %v6144 = vmax.f32 %v5824, %v6080
        %v6145 = vmax.f32 %v5825, %v6081
        %v6146 = vmax.f32 %v5826, %v6082
        %v6147 = vmax.f32 %v5827, %v6083
        %v6148 = vmax.f32 %v5828, %v6084
        %v6149 = vmax.f32 %v5829, %v6085
        %v6150 = vmax.f32 %v5830, %v6086
        %v6151 = vmax.f32 %v5831, %v6087
        %v6152 = vmax.f32 %v5832, %v6088
        %v6153 = vmax.f32 %v5833, %v6089
        %v6154 = vmax.f32 %v5834, %v6090
        %v6155 = vmax.f32 %v5835, %v6091
        %v6156 = vmax.f32 %v5836, %v6092
        %v6157 = vmax.f32 %v5837, %v6093
        %v6158 = vmax.f32 %v5838, %v6094
        %v6159 = vmax.f32 %v5839, %v6095
        %v6160 = vmax.f32 %v5840, %v6096
        %v6161 = vmax.f32 %v5841, %v6097
        %v6162 = vmax.f32 %v5842, %v6098
        %v6163 = vmax.f32 %v5843, %v6099
        %v6164 = vmax.f32 %v5844, %v6100
        %v6165 = vmax.f32 %v5845, %v6101
        %v6166 = vmax.f32 %v5846, %v6102
        %v6167 = vmax.f32 %v5847, %v6103
        %v6168 = vmax.f32 %v5848, %v6104
        %v6169 = vmax.f32 %v5849, %v6105
        %v6170 = vmax.f32 %v5850, %v6106
        %v6171 = vmax.f32 %v5851, %v6107
        %v6172 = vmax.f32 %v5852, %v6108
        %v6173 = vmax.f32 %v5853, %v6109
        %v6174 = vmax.f32 %v5854, %v6110
        %v6175 = vmax.f32 %v4934, %v4968
        %v6176 = vmax.f32 %v4942, %v4976
        %v6177 = vmax.f32 %v4941, %v4975
        %v6178 = vmax.f32 %v4943, %v4977
        %v6179 = vmax.f32 %v4951, %v4985
        %v6180 = vmax.f32 %v4959, %v4993
        %v6181 = vmax.f32 %v4958, %v4992
        %v6182 = vmax.f32 %v5002, %v5036
        %v6183 = vmax.f32 %v5010, %v5044
        %v6184 = vmax.f32 %v5009, %v5043
        %v6185 = vmax.f32 %v5011, %v5045
        %v6186 = vmax.f32 %v5019, %v5053
        %v6187 = vmax.f32 %v5027, %v5061
        %v6188 = vmax.f32 %v5026, %v5060
        %v6189 = vmax.f32 %v5070, %v5104
        %v6190 = vmax.f32 %v5078, %v5112
        %v6191 = vmax.f32 %v5077, %v5111
        %v6192 = vmax.f32 %v5079, %v5113
        %v6193 = vmax.f32 %v5087, %v5121
        %v6194 = vmax.f32 %v5095, %v5129
        %v6195 = vmax.f32 %v5094, %v5128
        %v6196 = vmax.f32 %v5138, %v5172
        %v6197 = vmax.f32 %v5146, %v5180
        %v6198 = vmax.f32 %v5145, %v5179
        %v6199 = vmax.f32 %v5147, %v5181
        %v6200 = vmax.f32 %v5155, %v5189
        %v6201 = vmax.f32 %v5163, %v5197
        %v6202 = vmax.f32 %v5162, %v5196
        %v6203 = vmax.f32 %v5206, %v5240
        %v6204 = vmax.f32 %v5214, %v5248
        %v6205 = vmax.f32 %v5213, %v5247
        %v6206 = vmax.f32 %v5215, %v5249
        %v6207 = vmax.f32 %v5223, %v5257
        %v6208 = vmax.f32 %v5231, %v5265
        %v6209 = vmax.f32 %v5230, %v5264
        %v6210 = vmax.f32 %v5274, %v5308
        %v6211 = vmax.f32 %v5282, %v5316
        %v6212 = vmax.f32 %v5281, %v5315
        %v6213 = vmax.f32 %v5283, %v5317
        %v6214 = vmax.f32 %v5291, %v5325
        %v6215 = vmax.f32 %v5299, %v5333
        %v6216 = vmax.f32 %v5298, %v5332
        %v6217 = vmax.f32 %v5342, %v5376
        %v6218 = vmax.f32 %v5350, %v5384
        %v6219 = vmax.f32 %v5349, %v5383
        %v6220 = vmax.f32 %v5351, %v5385
        %v6221 = vmax.f32 %v5359, %v5393
        %v6222 = vmax.f32 %v5367, %v5401
        %v6223 = vmax.f32 %v5366, %v5400
        %v6224 = vmax.f32 %v5410, %v5444
        %v6225 = vmax.f32 %v5418, %v5452
        %v6226 = vmax.f32 %v5417, %v5451
        %v6227 = vmax.f32 %v5419, %v5453
        %v6228 = vmax.f32 %v5427, %v5461
        %v6229 = vmax.f32 %v5435, %v5469
        %v6230 = vmax.f32 %v5434, %v5468
        %v6287 = vlaneseq
        %v6288 = vshrl.u32 %v6287, 7
        %v6289 = vsub.s32 1, %v6288
        %v6290 = vrot.slane %v6175, %v6289
        %v6291 = vlaneseq
        %v6292 = vshrl.u32 %v6291, 7
        %v6293 = vsub.s32 1, %v6292
        %v6294 = vrot.slane %v6176, %v6293
        %v6295 = vlaneseq
        %v6296 = vshrl.u32 %v6295, 7
        %v6297 = vsub.s32 1, %v6296
        %v6298 = vrot.slane %v6177, %v6297
        %v6299 = vlaneseq
        %v6300 = vshrl.u32 %v6299, 7
        %v6301 = vsub.s32 1, %v6300
        %v6302 = vrot.slane %v6178, %v6301
        %v6303 = vlaneseq
        %v6304 = vshrl.u32 %v6303, 7
        %v6305 = vsub.s32 1, %v6304
        %v6306 = vrot.slane %v6179, %v6305
        %v6307 = vlaneseq
        %v6308 = vshrl.u32 %v6307, 7
        %v6309 = vsub.s32 1, %v6308
        %v6310 = vrot.slane %v6180, %v6309
        %v6311 = vlaneseq
        %v6312 = vshrl.u32 %v6311, 7
        %v6313 = vsub.s32 1, %v6312
        %v6314 = vrot.slane %v6181, %v6313
        %v6315 = vlaneseq
        %v6316 = vshrl.u32 %v6315, 7
        %v6317 = vsub.s32 1, %v6316
        %v6318 = vrot.slane %v6182, %v6317
        %v6319 = vlaneseq
        %v6320 = vshrl.u32 %v6319, 7
        %v6321 = vsub.s32 1, %v6320
        %v6322 = vrot.slane %v6183, %v6321
        %v6323 = vlaneseq
        %v6324 = vshrl.u32 %v6323, 7
        %v6325 = vsub.s32 1, %v6324
        %v6326 = vrot.slane %v6184, %v6325
        %v6327 = vlaneseq
        %v6328 = vshrl.u32 %v6327, 7
        %v6329 = vsub.s32 1, %v6328
        %v6330 = vrot.slane %v6185, %v6329
        %v6331 = vlaneseq
        %v6332 = vshrl.u32 %v6331, 7
        %v6333 = vsub.s32 1, %v6332
        %v6334 = vrot.slane %v6186, %v6333
        %v6335 = vlaneseq
        %v6336 = vshrl.u32 %v6335, 7
        %v6337 = vsub.s32 1, %v6336
        %v6338 = vrot.slane %v6187, %v6337
        %v6339 = vlaneseq
        %v6340 = vshrl.u32 %v6339, 7
        %v6341 = vsub.s32 1, %v6340
        %v6342 = vrot.slane %v6188, %v6341
        %v6343 = vlaneseq
        %v6344 = vshrl.u32 %v6343, 7
        %v6345 = vsub.s32 1, %v6344
        %v6346 = vrot.slane %v6189, %v6345
        %v6347 = vlaneseq
        %v6348 = vshrl.u32 %v6347, 7
        %v6349 = vsub.s32 1, %v6348
        %v6350 = vrot.slane %v6190, %v6349
        %v6351 = vlaneseq
        %v6352 = vshrl.u32 %v6351, 7
        %v6353 = vsub.s32 1, %v6352
        %v6354 = vrot.slane %v6191, %v6353
        %v6355 = vlaneseq
        %v6356 = vshrl.u32 %v6355, 7
        %v6357 = vsub.s32 1, %v6356
        %v6358 = vrot.slane %v6192, %v6357
        %v6359 = vlaneseq
        %v6360 = vshrl.u32 %v6359, 7
        %v6361 = vsub.s32 1, %v6360
        %v6362 = vrot.slane %v6193, %v6361
        %v6363 = vlaneseq
        %v6364 = vshrl.u32 %v6363, 7
        %v6365 = vsub.s32 1, %v6364
        %v6366 = vrot.slane %v6194, %v6365
        %v6367 = vlaneseq
        %v6368 = vshrl.u32 %v6367, 7
        %v6369 = vsub.s32 1, %v6368
        %v6370 = vrot.slane %v6195, %v6369
        %v6371 = vlaneseq
        %v6372 = vshrl.u32 %v6371, 7
        %v6373 = vsub.s32 1, %v6372
        %v6374 = vrot.slane %v6196, %v6373
        %v6375 = vlaneseq
        %v6376 = vshrl.u32 %v6375, 7
        %v6377 = vsub.s32 1, %v6376
        %v6378 = vrot.slane %v6197, %v6377
        %v6379 = vlaneseq
        %v6380 = vshrl.u32 %v6379, 7
        %v6381 = vsub.s32 1, %v6380
        %v6382 = vrot.slane %v6198, %v6381
        %v6383 = vlaneseq
        %v6384 = vshrl.u32 %v6383, 7
        %v6385 = vsub.s32 1, %v6384
        %v6386 = vrot.slane %v6199, %v6385
        %v6387 = vlaneseq
        %v6388 = vshrl.u32 %v6387, 7
        %v6389 = vsub.s32 1, %v6388
        %v6390 = vrot.slane %v6200, %v6389
        %v6391 = vlaneseq
        %v6392 = vshrl.u32 %v6391, 7
        %v6393 = vsub.s32 1, %v6392
        %v6394 = vrot.slane %v6201, %v6393
        %v6395 = vlaneseq
        %v6396 = vshrl.u32 %v6395, 7
        %v6397 = vsub.s32 1, %v6396
        %v6398 = vrot.slane %v6202, %v6397
        %v6399 = vlaneseq
        %v6400 = vshrl.u32 %v6399, 7
        %v6401 = vsub.s32 1, %v6400
        %v6402 = vrot.slane %v6203, %v6401
        %v6403 = vlaneseq
        %v6404 = vshrl.u32 %v6403, 7
        %v6405 = vsub.s32 1, %v6404
        %v6406 = vrot.slane %v6204, %v6405
        %v6407 = vlaneseq
        %v6408 = vshrl.u32 %v6407, 7
        %v6409 = vsub.s32 1, %v6408
        %v6410 = vrot.slane %v6205, %v6409
        %v6411 = vlaneseq
        %v6412 = vshrl.u32 %v6411, 7
        %v6413 = vsub.s32 1, %v6412
        %v6414 = vrot.slane %v6206, %v6413
        %v6415 = vlaneseq
        %v6416 = vshrl.u32 %v6415, 7
        %v6417 = vsub.s32 1, %v6416
        %v6418 = vrot.slane %v6207, %v6417
        %v6419 = vlaneseq
        %v6420 = vshrl.u32 %v6419, 7
        %v6421 = vsub.s32 1, %v6420
        %v6422 = vrot.slane %v6208, %v6421
        %v6423 = vlaneseq
        %v6424 = vshrl.u32 %v6423, 7
        %v6425 = vsub.s32 1, %v6424
        %v6426 = vrot.slane %v6209, %v6425
        %v6427 = vlaneseq
        %v6428 = vshrl.u32 %v6427, 7
        %v6429 = vsub.s32 1, %v6428
        %v6430 = vrot.slane %v6210, %v6429
        %v6431 = vlaneseq
        %v6432 = vshrl.u32 %v6431, 7
        %v6433 = vsub.s32 1, %v6432
        %v6434 = vrot.slane %v6211, %v6433
        %v6435 = vlaneseq
        %v6436 = vshrl.u32 %v6435, 7
        %v6437 = vsub.s32 1, %v6436
        %v6438 = vrot.slane %v6212, %v6437
        %v6439 = vlaneseq
        %v6440 = vshrl.u32 %v6439, 7
        %v6441 = vsub.s32 1, %v6440
        %v6442 = vrot.slane %v6213, %v6441
        %v6443 = vlaneseq
        %v6444 = vshrl.u32 %v6443, 7
        %v6445 = vsub.s32 1, %v6444
        %v6446 = vrot.slane %v6214, %v6445
        %v6447 = vlaneseq
        %v6448 = vshrl.u32 %v6447, 7
        %v6449 = vsub.s32 1, %v6448
        %v6450 = vrot.slane %v6215, %v6449
        %v6451 = vlaneseq
        %v6452 = vshrl.u32 %v6451, 7
        %v6453 = vsub.s32 1, %v6452
        %v6454 = vrot.slane %v6216, %v6453
        %v6455 = vlaneseq
        %v6456 = vshrl.u32 %v6455, 7
        %v6457 = vsub.s32 1, %v6456
        %v6458 = vrot.slane %v6217, %v6457
        %v6459 = vlaneseq
        %v6460 = vshrl.u32 %v6459, 7
        %v6461 = vsub.s32 1, %v6460
        %v6462 = vrot.slane %v6218, %v6461
        %v6463 = vlaneseq
        %v6464 = vshrl.u32 %v6463, 7
        %v6465 = vsub.s32 1, %v6464
        %v6466 = vrot.slane %v6219, %v6465
        %v6467 = vlaneseq
        %v6468 = vshrl.u32 %v6467, 7
        %v6469 = vsub.s32 1, %v6468
        %v6470 = vrot.slane %v6220, %v6469
        %v6471 = vlaneseq
        %v6472 = vshrl.u32 %v6471, 7
        %v6473 = vsub.s32 1, %v6472
        %v6474 = vrot.slane %v6221, %v6473
        %v6475 = vlaneseq
        %v6476 = vshrl.u32 %v6475, 7
        %v6477 = vsub.s32 1, %v6476
        %v6478 = vrot.slane %v6222, %v6477
        %v6479 = vlaneseq
        %v6480 = vshrl.u32 %v6479, 7
        %v6481 = vsub.s32 1, %v6480
        %v6482 = vrot.slane %v6223, %v6481
        %v6483 = vlaneseq
        %v6484 = vshrl.u32 %v6483, 7
        %v6485 = vsub.s32 1, %v6484
        %v6486 = vrot.slane %v6224, %v6485
        %v6487 = vlaneseq
        %v6488 = vshrl.u32 %v6487, 7
        %v6489 = vsub.s32 1, %v6488
        %v6490 = vrot.slane %v6225, %v6489
        %v6491 = vlaneseq
        %v6492 = vshrl.u32 %v6491, 7
        %v6493 = vsub.s32 1, %v6492
        %v6494 = vrot.slane %v6226, %v6493
        %v6495 = vlaneseq
        %v6496 = vshrl.u32 %v6495, 7
        %v6497 = vsub.s32 1, %v6496
        %v6498 = vrot.slane %v6227, %v6497
        %v6499 = vlaneseq
        %v6500 = vshrl.u32 %v6499, 7
        %v6501 = vsub.s32 1, %v6500
        %v6502 = vrot.slane %v6228, %v6501
        %v6503 = vlaneseq
        %v6504 = vshrl.u32 %v6503, 7
        %v6505 = vsub.s32 1, %v6504
        %v6506 = vrot.slane %v6229, %v6505
        %v6507 = vlaneseq
        %v6508 = vshrl.u32 %v6507, 7
        %v6509 = vsub.s32 1, %v6508
        %v6510 = vrot.slane %v6230, %v6509
        %vm6511 = vcmask 1042434
        %v6512 = vsel %vm6511, %v6294, %v6290
        %vm6513 = vcmask 1043459
        %v6514 = vsel %vm6513, %v6298, %v6512
        %vm6515 = vcmask 1044484
        %v6516 = vsel %vm6515, %v6302, %v6514
        %vm6517 = vcmask 1045509
        %v6518 = vsel %vm6517, %v6306, %v6516
        %vm6519 = vcmask 1046534
        %v6520 = vsel %vm6519, %v6310, %v6518
        %vm6521 = vcmask 1047559
        %v6522 = vsel %vm6521, %v6314, %v6520
        %v6523 = vsel %vm6511, %v6322, %v6318
        %v6524 = vsel %vm6513, %v6326, %v6523
        %v6525 = vsel %vm6515, %v6330, %v6524
        %v6526 = vsel %vm6517, %v6334, %v6525
        %v6527 = vsel %vm6519, %v6338, %v6526
        %v6528 = vsel %vm6521, %v6342, %v6527
        %v6529 = vsel %vm6511, %v6350, %v6346
        %v6530 = vsel %vm6513, %v6354, %v6529
        %v6531 = vsel %vm6515, %v6358, %v6530
        %v6532 = vsel %vm6517, %v6362, %v6531
        %v6533 = vsel %vm6519, %v6366, %v6532
        %v6534 = vsel %vm6521, %v6370, %v6533
        %v6535 = vsel %vm6511, %v6378, %v6374
        %v6536 = vsel %vm6513, %v6382, %v6535
        %v6537 = vsel %vm6515, %v6386, %v6536
        %v6538 = vsel %vm6517, %v6390, %v6537
        %v6539 = vsel %vm6519, %v6394, %v6538
        %v6540 = vsel %vm6521, %v6398, %v6539
        %v6541 = vsel %vm6511, %v6406, %v6402
        %v6542 = vsel %vm6513, %v6410, %v6541
        %v6543 = vsel %vm6515, %v6414, %v6542
        %v6544 = vsel %vm6517, %v6418, %v6543
        %v6545 = vsel %vm6519, %v6422, %v6544
        %v6546 = vsel %vm6521, %v6426, %v6545
        %v6547 = vsel %vm6511, %v6434, %v6430
        %v6548 = vsel %vm6513, %v6438, %v6547
        %v6549 = vsel %vm6515, %v6442, %v6548
        %v6550 = vsel %vm6517, %v6446, %v6549
        %v6551 = vsel %vm6519, %v6450, %v6550
        %v6552 = vsel %vm6521, %v6454, %v6551
        %v6553 = vsel %vm6511, %v6462, %v6458
        %v6554 = vsel %vm6513, %v6466, %v6553
        %v6555 = vsel %vm6515, %v6470, %v6554
        %v6556 = vsel %vm6517, %v6474, %v6555
        %v6557 = vsel %vm6519, %v6478, %v6556
        %v6558 = vsel %vm6521, %v6482, %v6557
        %v6559 = vsel %vm6511, %v6490, %v6486
        %v6560 = vsel %vm6513, %v6494, %v6559
        %v6561 = vsel %vm6515, %v6498, %v6560
        %v6562 = vsel %vm6517, %v6502, %v6561
        %v6563 = vsel %vm6519, %v6506, %v6562
        %v6564 = vsel %vm6521, %v6510, %v6563
        %vm6573 = vcmask 1040384
        %v6574 = vsel %vm6573, 0.0, %v6522
        %v6575 = vsel %vm6573, 0.0, %v6528
        %v6576 = vsel %vm6573, 0.0, %v6534
        %v6577 = vsel %vm6573, 0.0, %v6540
        %v6578 = vsel %vm6573, 0.0, %v6546
        %v6579 = vsel %vm6573, 0.0, %v6552
        %v6580 = vsel %vm6573, 0.0, %v6558
        %v6581 = vsel %vm6573, 0.0, %v6564
        %v6638 = vlaneseq
        %v6639 = vshrl.u32 %v6638, 7
        %v6640 = vsub.s32 0, %v6639
        %v6641 = vrot.slane %v6047, %v6640
        %v6642 = vlaneseq
        %v6643 = vshrl.u32 %v6642, 7
        %v6644 = vsub.s32 0, %v6643
        %v6645 = vrot.slane %v6048, %v6644
        %v6646 = vlaneseq
        %v6647 = vshrl.u32 %v6646, 7
        %v6648 = vsub.s32 0, %v6647
        %v6649 = vrot.slane %v6049, %v6648
        %v6650 = vlaneseq
        %v6651 = vshrl.u32 %v6650, 7
        %v6652 = vsub.s32 0, %v6651
        %v6653 = vrot.slane %v6050, %v6652
        %v6654 = vlaneseq
        %v6655 = vshrl.u32 %v6654, 7
        %v6656 = vsub.s32 0, %v6655
        %v6657 = vrot.slane %v6051, %v6656
        %v6658 = vlaneseq
        %v6659 = vshrl.u32 %v6658, 7
        %v6660 = vsub.s32 0, %v6659
        %v6661 = vrot.slane %v6052, %v6660
        %v6662 = vlaneseq
        %v6663 = vshrl.u32 %v6662, 7
        %v6664 = vsub.s32 0, %v6663
        %v6665 = vrot.slane %v6053, %v6664
        %v6666 = vlaneseq
        %v6667 = vshrl.u32 %v6666, 7
        %v6668 = vsub.s32 0, %v6667
        %v6669 = vrot.slane %v6054, %v6668
        %v6670 = vlaneseq
        %v6671 = vshrl.u32 %v6670, 7
        %v6672 = vsub.s32 0, %v6671
        %v6673 = vrot.slane %v6055, %v6672
        %v6674 = vlaneseq
        %v6675 = vshrl.u32 %v6674, 7
        %v6676 = vsub.s32 0, %v6675
        %v6677 = vrot.slane %v6056, %v6676
        %v6678 = vlaneseq
        %v6679 = vshrl.u32 %v6678, 7
        %v6680 = vsub.s32 0, %v6679
        %v6681 = vrot.slane %v6057, %v6680
        %v6682 = vlaneseq
        %v6683 = vshrl.u32 %v6682, 7
        %v6684 = vsub.s32 0, %v6683
        %v6685 = vrot.slane %v6058, %v6684
        %v6686 = vlaneseq
        %v6687 = vshrl.u32 %v6686, 7
        %v6688 = vsub.s32 0, %v6687
        %v6689 = vrot.slane %v6059, %v6688
        %v6690 = vlaneseq
        %v6691 = vshrl.u32 %v6690, 7
        %v6692 = vsub.s32 0, %v6691
        %v6693 = vrot.slane %v6060, %v6692
        %v6694 = vlaneseq
        %v6695 = vshrl.u32 %v6694, 7
        %v6696 = vsub.s32 0, %v6695
        %v6697 = vrot.slane %v6061, %v6696
        %v6698 = vlaneseq
        %v6699 = vshrl.u32 %v6698, 7
        %v6700 = vsub.s32 0, %v6699
        %v6701 = vrot.slane %v6062, %v6700
        %v6702 = vlaneseq
        %v6703 = vshrl.u32 %v6702, 7
        %v6704 = vsub.s32 0, %v6703
        %v6705 = vrot.slane %v6063, %v6704
        %v6706 = vlaneseq
        %v6707 = vshrl.u32 %v6706, 7
        %v6708 = vsub.s32 0, %v6707
        %v6709 = vrot.slane %v6064, %v6708
        %v6710 = vlaneseq
        %v6711 = vshrl.u32 %v6710, 7
        %v6712 = vsub.s32 0, %v6711
        %v6713 = vrot.slane %v6065, %v6712
        %v6714 = vlaneseq
        %v6715 = vshrl.u32 %v6714, 7
        %v6716 = vsub.s32 0, %v6715
        %v6717 = vrot.slane %v6066, %v6716
        %v6718 = vlaneseq
        %v6719 = vshrl.u32 %v6718, 7
        %v6720 = vsub.s32 0, %v6719
        %v6721 = vrot.slane %v6067, %v6720
        %v6722 = vlaneseq
        %v6723 = vshrl.u32 %v6722, 7
        %v6724 = vsub.s32 0, %v6723
        %v6725 = vrot.slane %v6068, %v6724
        %v6726 = vlaneseq
        %v6727 = vshrl.u32 %v6726, 7
        %v6728 = vsub.s32 0, %v6727
        %v6729 = vrot.slane %v6069, %v6728
        %v6730 = vlaneseq
        %v6731 = vshrl.u32 %v6730, 7
        %v6732 = vsub.s32 0, %v6731
        %v6733 = vrot.slane %v6070, %v6732
        %v6734 = vlaneseq
        %v6735 = vshrl.u32 %v6734, 7
        %v6736 = vsub.s32 0, %v6735
        %v6737 = vrot.slane %v6071, %v6736
        %v6738 = vlaneseq
        %v6739 = vshrl.u32 %v6738, 7
        %v6740 = vsub.s32 0, %v6739
        %v6741 = vrot.slane %v6072, %v6740
        %v6742 = vlaneseq
        %v6743 = vshrl.u32 %v6742, 7
        %v6744 = vsub.s32 0, %v6743
        %v6745 = vrot.slane %v6073, %v6744
        %v6746 = vlaneseq
        %v6747 = vshrl.u32 %v6746, 7
        %v6748 = vsub.s32 0, %v6747
        %v6749 = vrot.slane %v6074, %v6748
        %v6750 = vlaneseq
        %v6751 = vshrl.u32 %v6750, 7
        %v6752 = vsub.s32 0, %v6751
        %v6753 = vrot.slane %v6075, %v6752
        %v6754 = vlaneseq
        %v6755 = vshrl.u32 %v6754, 7
        %v6756 = vsub.s32 0, %v6755
        %v6757 = vrot.slane %v6076, %v6756
        %v6758 = vlaneseq
        %v6759 = vshrl.u32 %v6758, 7
        %v6760 = vsub.s32 0, %v6759
        %v6761 = vrot.slane %v6077, %v6760
        %v6762 = vlaneseq
        %v6763 = vshrl.u32 %v6762, 7
        %v6764 = vsub.s32 0, %v6763
        %v6765 = vrot.slane %v6078, %v6764
        %v6766 = vlaneseq
        %v6767 = vshrl.u32 %v6766, 7
        %v6768 = vsub.s32 0, %v6767
        %v6769 = vrot.slane %v6079, %v6768
        %v6770 = vlaneseq
        %v6771 = vshrl.u32 %v6770, 7
        %v6772 = vsub.s32 0, %v6771
        %v6773 = vrot.slane %v6080, %v6772
        %v6774 = vlaneseq
        %v6775 = vshrl.u32 %v6774, 7
        %v6776 = vsub.s32 0, %v6775
        %v6777 = vrot.slane %v6081, %v6776
        %v6778 = vlaneseq
        %v6779 = vshrl.u32 %v6778, 7
        %v6780 = vsub.s32 0, %v6779
        %v6781 = vrot.slane %v6082, %v6780
        %v6782 = vlaneseq
        %v6783 = vshrl.u32 %v6782, 7
        %v6784 = vsub.s32 0, %v6783
        %v6785 = vrot.slane %v6083, %v6784
        %v6786 = vlaneseq
        %v6787 = vshrl.u32 %v6786, 7
        %v6788 = vsub.s32 0, %v6787
        %v6789 = vrot.slane %v6084, %v6788
        %v6790 = vlaneseq
        %v6791 = vshrl.u32 %v6790, 7
        %v6792 = vsub.s32 0, %v6791
        %v6793 = vrot.slane %v6085, %v6792
        %v6794 = vlaneseq
        %v6795 = vshrl.u32 %v6794, 7
        %v6796 = vsub.s32 0, %v6795
        %v6797 = vrot.slane %v6086, %v6796
        %v6798 = vlaneseq
        %v6799 = vshrl.u32 %v6798, 7
        %v6800 = vsub.s32 0, %v6799
        %v6801 = vrot.slane %v6087, %v6800
        %v6802 = vlaneseq
        %v6803 = vshrl.u32 %v6802, 7
        %v6804 = vsub.s32 0, %v6803
        %v6805 = vrot.slane %v6088, %v6804
        %v6806 = vlaneseq
        %v6807 = vshrl.u32 %v6806, 7
        %v6808 = vsub.s32 0, %v6807
        %v6809 = vrot.slane %v6089, %v6808
        %v6810 = vlaneseq
        %v6811 = vshrl.u32 %v6810, 7
        %v6812 = vsub.s32 0, %v6811
        %v6813 = vrot.slane %v6090, %v6812
        %v6814 = vlaneseq
        %v6815 = vshrl.u32 %v6814, 7
        %v6816 = vsub.s32 0, %v6815
        %v6817 = vrot.slane %v6091, %v6816
        %v6818 = vlaneseq
        %v6819 = vshrl.u32 %v6818, 7
        %v6820 = vsub.s32 0, %v6819
        %v6821 = vrot.slane %v6092, %v6820
        %v6822 = vlaneseq
        %v6823 = vshrl.u32 %v6822, 7
        %v6824 = vsub.s32 0, %v6823
        %v6825 = vrot.slane %v6093, %v6824
        %v6826 = vlaneseq
        %v6827 = vshrl.u32 %v6826, 7
        %v6828 = vsub.s32 0, %v6827
        %v6829 = vrot.slane %v6094, %v6828
        %v6830 = vlaneseq
        %v6831 = vshrl.u32 %v6830, 7
        %v6832 = vsub.s32 0, %v6831
        %v6833 = vrot.slane %v6095, %v6832
        %v6834 = vlaneseq
        %v6835 = vshrl.u32 %v6834, 7
        %v6836 = vsub.s32 0, %v6835
        %v6837 = vrot.slane %v6096, %v6836
        %v6838 = vlaneseq
        %v6839 = vshrl.u32 %v6838, 7
        %v6840 = vsub.s32 0, %v6839
        %v6841 = vrot.slane %v6097, %v6840
        %v6842 = vlaneseq
        %v6843 = vshrl.u32 %v6842, 7
        %v6844 = vsub.s32 0, %v6843
        %v6845 = vrot.slane %v6098, %v6844
        %v6846 = vlaneseq
        %v6847 = vshrl.u32 %v6846, 7
        %v6848 = vsub.s32 0, %v6847
        %v6849 = vrot.slane %v6099, %v6848
        %v6850 = vlaneseq
        %v6851 = vshrl.u32 %v6850, 7
        %v6852 = vsub.s32 0, %v6851
        %v6853 = vrot.slane %v6100, %v6852
        %v6854 = vlaneseq
        %v6855 = vshrl.u32 %v6854, 7
        %v6856 = vsub.s32 0, %v6855
        %v6857 = vrot.slane %v6101, %v6856
        %v6858 = vlaneseq
        %v6859 = vshrl.u32 %v6858, 7
        %v6860 = vsub.s32 0, %v6859
        %v6861 = vrot.slane %v6102, %v6860
        %vm6862 = vcmask 1041409
        %v6863 = vsel %vm6862, %v6645, %v6641
        %v6864 = vsel %vm6511, %v6649, %v6863
        %v6865 = vsel %vm6513, %v6653, %v6864
        %v6866 = vsel %vm6515, %v6657, %v6865
        %v6867 = vsel %vm6517, %v6661, %v6866
        %v6868 = vsel %vm6519, %v6665, %v6867
        %v6869 = vsel %vm6521, %v6669, %v6868
        %v6870 = vsel %vm6862, %v6677, %v6673
        %v6871 = vsel %vm6511, %v6681, %v6870
        %v6872 = vsel %vm6513, %v6685, %v6871
        %v6873 = vsel %vm6515, %v6689, %v6872
        %v6874 = vsel %vm6517, %v6693, %v6873
        %v6875 = vsel %vm6519, %v6697, %v6874
        %v6876 = vsel %vm6521, %v6701, %v6875
        %v6877 = vsel %vm6862, %v6709, %v6705
        %v6878 = vsel %vm6511, %v6713, %v6877
        %v6879 = vsel %vm6513, %v6717, %v6878
        %v6880 = vsel %vm6515, %v6721, %v6879
        %v6881 = vsel %vm6517, %v6725, %v6880
        %v6882 = vsel %vm6519, %v6729, %v6881
        %v6883 = vsel %vm6521, %v6733, %v6882
        %v6884 = vsel %vm6862, %v6741, %v6737
        %v6885 = vsel %vm6511, %v6745, %v6884
        %v6886 = vsel %vm6513, %v6749, %v6885
        %v6887 = vsel %vm6515, %v6753, %v6886
        %v6888 = vsel %vm6517, %v6757, %v6887
        %v6889 = vsel %vm6519, %v6761, %v6888
        %v6890 = vsel %vm6521, %v6765, %v6889
        %v6891 = vsel %vm6862, %v6773, %v6769
        %v6892 = vsel %vm6511, %v6777, %v6891
        %v6893 = vsel %vm6513, %v6781, %v6892
        %v6894 = vsel %vm6515, %v6785, %v6893
        %v6895 = vsel %vm6517, %v6789, %v6894
        %v6896 = vsel %vm6519, %v6793, %v6895
        %v6897 = vsel %vm6521, %v6797, %v6896
        %v6898 = vsel %vm6862, %v6805, %v6801
        %v6899 = vsel %vm6511, %v6809, %v6898
        %v6900 = vsel %vm6513, %v6813, %v6899
        %v6901 = vsel %vm6515, %v6817, %v6900
        %v6902 = vsel %vm6517, %v6821, %v6901
        %v6903 = vsel %vm6519, %v6825, %v6902
        %v6904 = vsel %vm6521, %v6829, %v6903
        %v6905 = vsel %vm6862, %v6837, %v6833
        %v6906 = vsel %vm6511, %v6841, %v6905
        %v6907 = vsel %vm6513, %v6845, %v6906
        %v6908 = vsel %vm6515, %v6849, %v6907
        %v6909 = vsel %vm6517, %v6853, %v6908
        %v6910 = vsel %vm6519, %v6857, %v6909
        %v6911 = vsel %vm6521, %v6861, %v6910
        %v6919 = vlaneseq
        %v6920 = vshrl.u32 %v6919, 7
        %v6921 = vsub.s32 1, %v6920
        %v6922 = vrot.slane %v4968, %v6921
        %v6923 = vlaneseq
        %v6924 = vshrl.u32 %v6923, 7
        %v6925 = vsub.s32 1, %v6924
        %v6926 = vrot.slane %v4976, %v6925
        %v6927 = vlaneseq
        %v6928 = vshrl.u32 %v6927, 7
        %v6929 = vsub.s32 1, %v6928
        %v6930 = vrot.slane %v4975, %v6929
        %v6931 = vlaneseq
        %v6932 = vshrl.u32 %v6931, 7
        %v6933 = vsub.s32 1, %v6932
        %v6934 = vrot.slane %v4977, %v6933
        %v6935 = vlaneseq
        %v6936 = vshrl.u32 %v6935, 7
        %v6937 = vsub.s32 1, %v6936
        %v6938 = vrot.slane %v4985, %v6937
        %v6939 = vlaneseq
        %v6940 = vshrl.u32 %v6939, 7
        %v6941 = vsub.s32 1, %v6940
        %v6942 = vrot.slane %v4993, %v6941
        %v6943 = vlaneseq
        %v6944 = vshrl.u32 %v6943, 7
        %v6945 = vsub.s32 1, %v6944
        %v6946 = vrot.slane %v4992, %v6945
        %v6947 = vlaneseq
        %v6948 = vshrl.u32 %v6947, 7
        %v6949 = vsub.s32 1, %v6948
        %v6950 = vrot.slane %v5036, %v6949
        %v6951 = vlaneseq
        %v6952 = vshrl.u32 %v6951, 7
        %v6953 = vsub.s32 1, %v6952
        %v6954 = vrot.slane %v5044, %v6953
        %v6955 = vlaneseq
        %v6956 = vshrl.u32 %v6955, 7
        %v6957 = vsub.s32 1, %v6956
        %v6958 = vrot.slane %v5043, %v6957
        %v6959 = vlaneseq
        %v6960 = vshrl.u32 %v6959, 7
        %v6961 = vsub.s32 1, %v6960
        %v6962 = vrot.slane %v5045, %v6961
        %v6963 = vlaneseq
        %v6964 = vshrl.u32 %v6963, 7
        %v6965 = vsub.s32 1, %v6964
        %v6966 = vrot.slane %v5053, %v6965
        %v6967 = vlaneseq
        %v6968 = vshrl.u32 %v6967, 7
        %v6969 = vsub.s32 1, %v6968
        %v6970 = vrot.slane %v5061, %v6969
        %v6971 = vlaneseq
        %v6972 = vshrl.u32 %v6971, 7
        %v6973 = vsub.s32 1, %v6972
        %v6974 = vrot.slane %v5060, %v6973
        %v6975 = vlaneseq
        %v6976 = vshrl.u32 %v6975, 7
        %v6977 = vsub.s32 1, %v6976
        %v6978 = vrot.slane %v5104, %v6977
        %v6979 = vlaneseq
        %v6980 = vshrl.u32 %v6979, 7
        %v6981 = vsub.s32 1, %v6980
        %v6982 = vrot.slane %v5112, %v6981
        %v6983 = vlaneseq
        %v6984 = vshrl.u32 %v6983, 7
        %v6985 = vsub.s32 1, %v6984
        %v6986 = vrot.slane %v5111, %v6985
        %v6987 = vlaneseq
        %v6988 = vshrl.u32 %v6987, 7
        %v6989 = vsub.s32 1, %v6988
        %v6990 = vrot.slane %v5113, %v6989
        %v6991 = vlaneseq
        %v6992 = vshrl.u32 %v6991, 7
        %v6993 = vsub.s32 1, %v6992
        %v6994 = vrot.slane %v5121, %v6993
        %v6995 = vlaneseq
        %v6996 = vshrl.u32 %v6995, 7
        %v6997 = vsub.s32 1, %v6996
        %v6998 = vrot.slane %v5129, %v6997
        %v6999 = vlaneseq
        %v7000 = vshrl.u32 %v6999, 7
        %v7001 = vsub.s32 1, %v7000
        %v7002 = vrot.slane %v5128, %v7001
        %v7003 = vlaneseq
        %v7004 = vshrl.u32 %v7003, 7
        %v7005 = vsub.s32 1, %v7004
        %v7006 = vrot.slane %v5172, %v7005
        %v7007 = vlaneseq
        %v7008 = vshrl.u32 %v7007, 7
        %v7009 = vsub.s32 1, %v7008
        %v7010 = vrot.slane %v5180, %v7009
        %v7011 = vlaneseq
        %v7012 = vshrl.u32 %v7011, 7
        %v7013 = vsub.s32 1, %v7012
        %v7014 = vrot.slane %v5179, %v7013
        %v7015 = vlaneseq
        %v7016 = vshrl.u32 %v7015, 7
        %v7017 = vsub.s32 1, %v7016
        %v7018 = vrot.slane %v5181, %v7017
        %v7019 = vlaneseq
        %v7020 = vshrl.u32 %v7019, 7
        %v7021 = vsub.s32 1, %v7020
        %v7022 = vrot.slane %v5189, %v7021
        %v7023 = vlaneseq
        %v7024 = vshrl.u32 %v7023, 7
        %v7025 = vsub.s32 1, %v7024
        %v7026 = vrot.slane %v5197, %v7025
        %v7027 = vlaneseq
        %v7028 = vshrl.u32 %v7027, 7
        %v7029 = vsub.s32 1, %v7028
        %v7030 = vrot.slane %v5196, %v7029
        %v7031 = vlaneseq
        %v7032 = vshrl.u32 %v7031, 7
        %v7033 = vsub.s32 1, %v7032
        %v7034 = vrot.slane %v5240, %v7033
        %v7035 = vlaneseq
        %v7036 = vshrl.u32 %v7035, 7
        %v7037 = vsub.s32 1, %v7036
        %v7038 = vrot.slane %v5248, %v7037
        %v7039 = vlaneseq
        %v7040 = vshrl.u32 %v7039, 7
        %v7041 = vsub.s32 1, %v7040
        %v7042 = vrot.slane %v5247, %v7041
        %v7043 = vlaneseq
        %v7044 = vshrl.u32 %v7043, 7
        %v7045 = vsub.s32 1, %v7044
        %v7046 = vrot.slane %v5249, %v7045
        %v7047 = vlaneseq
        %v7048 = vshrl.u32 %v7047, 7
        %v7049 = vsub.s32 1, %v7048
        %v7050 = vrot.slane %v5257, %v7049
        %v7051 = vlaneseq
        %v7052 = vshrl.u32 %v7051, 7
        %v7053 = vsub.s32 1, %v7052
        %v7054 = vrot.slane %v5265, %v7053
        %v7055 = vlaneseq
        %v7056 = vshrl.u32 %v7055, 7
        %v7057 = vsub.s32 1, %v7056
        %v7058 = vrot.slane %v5264, %v7057
        %v7059 = vlaneseq
        %v7060 = vshrl.u32 %v7059, 7
        %v7061 = vsub.s32 1, %v7060
        %v7062 = vrot.slane %v5308, %v7061
        %v7063 = vlaneseq
        %v7064 = vshrl.u32 %v7063, 7
        %v7065 = vsub.s32 1, %v7064
        %v7066 = vrot.slane %v5316, %v7065
        %v7067 = vlaneseq
        %v7068 = vshrl.u32 %v7067, 7
        %v7069 = vsub.s32 1, %v7068
        %v7070 = vrot.slane %v5315, %v7069
        %v7071 = vlaneseq
        %v7072 = vshrl.u32 %v7071, 7
        %v7073 = vsub.s32 1, %v7072
        %v7074 = vrot.slane %v5317, %v7073
        %v7075 = vlaneseq
        %v7076 = vshrl.u32 %v7075, 7
        %v7077 = vsub.s32 1, %v7076
        %v7078 = vrot.slane %v5325, %v7077
        %v7079 = vlaneseq
        %v7080 = vshrl.u32 %v7079, 7
        %v7081 = vsub.s32 1, %v7080
        %v7082 = vrot.slane %v5333, %v7081
        %v7083 = vlaneseq
        %v7084 = vshrl.u32 %v7083, 7
        %v7085 = vsub.s32 1, %v7084
        %v7086 = vrot.slane %v5332, %v7085
        %v7087 = vlaneseq
        %v7088 = vshrl.u32 %v7087, 7
        %v7089 = vsub.s32 1, %v7088
        %v7090 = vrot.slane %v5376, %v7089
        %v7091 = vlaneseq
        %v7092 = vshrl.u32 %v7091, 7
        %v7093 = vsub.s32 1, %v7092
        %v7094 = vrot.slane %v5384, %v7093
        %v7095 = vlaneseq
        %v7096 = vshrl.u32 %v7095, 7
        %v7097 = vsub.s32 1, %v7096
        %v7098 = vrot.slane %v5383, %v7097
        %v7099 = vlaneseq
        %v7100 = vshrl.u32 %v7099, 7
        %v7101 = vsub.s32 1, %v7100
        %v7102 = vrot.slane %v5385, %v7101
        %v7103 = vlaneseq
        %v7104 = vshrl.u32 %v7103, 7
        %v7105 = vsub.s32 1, %v7104
        %v7106 = vrot.slane %v5393, %v7105
        %v7107 = vlaneseq
        %v7108 = vshrl.u32 %v7107, 7
        %v7109 = vsub.s32 1, %v7108
        %v7110 = vrot.slane %v5401, %v7109
        %v7111 = vlaneseq
        %v7112 = vshrl.u32 %v7111, 7
        %v7113 = vsub.s32 1, %v7112
        %v7114 = vrot.slane %v5400, %v7113
        %v7115 = vsel %vm6511, %v6926, %v6922
        %v7116 = vsel %vm6513, %v6930, %v7115
        %v7117 = vsel %vm6515, %v6934, %v7116
        %v7118 = vsel %vm6517, %v6938, %v7117
        %v7119 = vsel %vm6519, %v6942, %v7118
        %v7120 = vsel %vm6521, %v6946, %v7119
        %v7121 = vsel %vm6511, %v6954, %v6950
        %v7122 = vsel %vm6513, %v6958, %v7121
        %v7123 = vsel %vm6515, %v6962, %v7122
        %v7124 = vsel %vm6517, %v6966, %v7123
        %v7125 = vsel %vm6519, %v6970, %v7124
        %v7126 = vsel %vm6521, %v6974, %v7125
        %v7127 = vsel %vm6511, %v6982, %v6978
        %v7128 = vsel %vm6513, %v6986, %v7127
        %v7129 = vsel %vm6515, %v6990, %v7128
        %v7130 = vsel %vm6517, %v6994, %v7129
        %v7131 = vsel %vm6519, %v6998, %v7130
        %v7132 = vsel %vm6521, %v7002, %v7131
        %v7133 = vsel %vm6511, %v7010, %v7006
        %v7134 = vsel %vm6513, %v7014, %v7133
        %v7135 = vsel %vm6515, %v7018, %v7134
        %v7136 = vsel %vm6517, %v7022, %v7135
        %v7137 = vsel %vm6519, %v7026, %v7136
        %v7138 = vsel %vm6521, %v7030, %v7137
        %v7139 = vsel %vm6511, %v7038, %v7034
        %v7140 = vsel %vm6513, %v7042, %v7139
        %v7141 = vsel %vm6515, %v7046, %v7140
        %v7142 = vsel %vm6517, %v7050, %v7141
        %v7143 = vsel %vm6519, %v7054, %v7142
        %v7144 = vsel %vm6521, %v7058, %v7143
        %v7145 = vsel %vm6511, %v7066, %v7062
        %v7146 = vsel %vm6513, %v7070, %v7145
        %v7147 = vsel %vm6515, %v7074, %v7146
        %v7148 = vsel %vm6517, %v7078, %v7147
        %v7149 = vsel %vm6519, %v7082, %v7148
        %v7150 = vsel %vm6521, %v7086, %v7149
        %v7151 = vsel %vm6511, %v7094, %v7090
        %v7152 = vsel %vm6513, %v7098, %v7151
        %v7153 = vsel %vm6515, %v7102, %v7152
        %v7154 = vsel %vm6517, %v7106, %v7153
        %v7155 = vsel %vm6519, %v7110, %v7154
        %v7156 = vsel %vm6521, %v7114, %v7155
        %v7164 = vsel %vm6573, 0.0, %v7120
        %v7165 = vsel %vm6573, 0.0, %v7126
        %v7166 = vsel %vm6573, 0.0, %v7132
        %v7167 = vsel %vm6573, 0.0, %v7138
        %v7168 = vsel %vm6573, 0.0, %v7144
        %v7169 = vsel %vm6573, 0.0, %v7150
        %v7170 = vsel %vm6573, 0.0, %v7156
        %v7179 = vcombine.high %v6574, %v6574
        %v7181 = vunpack.c.l.s4 1983009808
        %v7182 = vunpack.c.0.s8 %v7181
        %v7183 = vlaneseq
        %v7184 = vshrl.u32 %v7183, 7
        %v7185 = vsub.s32 %v7182, %v7184
        %v7186 = vrot.slane %v6574, %v7185
        %v7188 = vunpack.c.l.s4 1983009808
        %v7189 = vunpack.c.0.s8 %v7188
        %v7190 = vlaneseq
        %v7191 = vshrl.u32 %v7190, 7
        %v7192 = vsub.s32 %v7189, %v7191
        %v7193 = vrot.slane %v7179, %v7192
        %v7194 = vcombine.high %v7186, %v7186
        %v7195 = vcombine.high %v7193, %v7193
        %v7196 = vcombine.high %v6575, %v6575
        %v7198 = vunpack.c.l.s4 1983009808
        %v7199 = vunpack.c.0.s8 %v7198
        %v7200 = vlaneseq
        %v7201 = vshrl.u32 %v7200, 7
        %v7202 = vsub.s32 %v7199, %v7201
        %v7203 = vrot.slane %v6575, %v7202
        %v7205 = vunpack.c.l.s4 1983009808
        %v7206 = vunpack.c.0.s8 %v7205
        %v7207 = vlaneseq
        %v7208 = vshrl.u32 %v7207, 7
        %v7209 = vsub.s32 %v7206, %v7208
        %v7210 = vrot.slane %v7196, %v7209
        %v7211 = vcombine.high %v7203, %v7203
        %v7212 = vcombine.high %v7210, %v7210
        %v7213 = vcombine.high %v6576, %v6576
        %v7215 = vunpack.c.l.s4 1983009808
        %v7216 = vunpack.c.0.s8 %v7215
        %v7217 = vlaneseq
        %v7218 = vshrl.u32 %v7217, 7
        %v7219 = vsub.s32 %v7216, %v7218
        %v7220 = vrot.slane %v6576, %v7219
        %v7222 = vunpack.c.l.s4 1983009808
        %v7223 = vunpack.c.0.s8 %v7222
        %v7224 = vlaneseq
        %v7225 = vshrl.u32 %v7224, 7
        %v7226 = vsub.s32 %v7223, %v7225
        %v7227 = vrot.slane %v7213, %v7226
        %v7228 = vcombine.high %v7220, %v7220
        %v7229 = vcombine.high %v7227, %v7227
        %v7230 = vcombine.high %v6577, %v6577
        %v7232 = vunpack.c.l.s4 1983009808
        %v7233 = vunpack.c.0.s8 %v7232
        %v7234 = vlaneseq
        %v7235 = vshrl.u32 %v7234, 7
        %v7236 = vsub.s32 %v7233, %v7235
        %v7237 = vrot.slane %v6577, %v7236
        %v7239 = vunpack.c.l.s4 1983009808
        %v7240 = vunpack.c.0.s8 %v7239
        %v7241 = vlaneseq
        %v7242 = vshrl.u32 %v7241, 7
        %v7243 = vsub.s32 %v7240, %v7242
        %v7244 = vrot.slane %v7230, %v7243
        %v7245 = vcombine.high %v7237, %v7237
        %v7246 = vcombine.high %v7244, %v7244
        %v7247 = vcombine.high %v6578, %v6578
        %v7249 = vunpack.c.l.s4 1983009808
        %v7250 = vunpack.c.0.s8 %v7249
        %v7251 = vlaneseq
        %v7252 = vshrl.u32 %v7251, 7
        %v7253 = vsub.s32 %v7250, %v7252
        %v7254 = vrot.slane %v6578, %v7253
        %v7256 = vunpack.c.l.s4 1983009808
        %v7257 = vunpack.c.0.s8 %v7256
        %v7258 = vlaneseq
        %v7259 = vshrl.u32 %v7258, 7
        %v7260 = vsub.s32 %v7257, %v7259
        %v7261 = vrot.slane %v7247, %v7260
        %v7262 = vcombine.high %v7254, %v7254
        %v7263 = vcombine.high %v7261, %v7261
        %v7264 = vcombine.high %v6579, %v6579
        %v7266 = vunpack.c.l.s4 1983009808
        %v7267 = vunpack.c.0.s8 %v7266
        %v7268 = vlaneseq
        %v7269 = vshrl.u32 %v7268, 7
        %v7270 = vsub.s32 %v7267, %v7269
        %v7271 = vrot.slane %v6579, %v7270
        %v7273 = vunpack.c.l.s4 1983009808
        %v7274 = vunpack.c.0.s8 %v7273
        %v7275 = vlaneseq
        %v7276 = vshrl.u32 %v7275, 7
        %v7277 = vsub.s32 %v7274, %v7276
        %v7278 = vrot.slane %v7264, %v7277
        %v7279 = vcombine.high %v7271, %v7271
        %v7280 = vcombine.high %v7278, %v7278
        %v7281 = vcombine.high %v6580, %v6580
        %v7283 = vunpack.c.l.s4 1983009808
        %v7284 = vunpack.c.0.s8 %v7283
        %v7285 = vlaneseq
        %v7286 = vshrl.u32 %v7285, 7
        %v7287 = vsub.s32 %v7284, %v7286
        %v7288 = vrot.slane %v6580, %v7287
        %v7290 = vunpack.c.l.s4 1983009808
        %v7291 = vunpack.c.0.s8 %v7290
        %v7292 = vlaneseq
        %v7293 = vshrl.u32 %v7292, 7
        %v7294 = vsub.s32 %v7291, %v7293
        %v7295 = vrot.slane %v7281, %v7294
        %v7296 = vcombine.high %v7288, %v7288
        %v7297 = vcombine.high %v7295, %v7295
        %v7298 = vcombine.high %v6581, %v6581
        %v7300 = vunpack.c.l.s4 1983009808
        %v7301 = vunpack.c.0.s8 %v7300
        %v7302 = vlaneseq
        %v7303 = vshrl.u32 %v7302, 7
        %v7304 = vsub.s32 %v7301, %v7303
        %v7305 = vrot.slane %v6581, %v7304
        %v7307 = vunpack.c.l.s4 1983009808
        %v7308 = vunpack.c.0.s8 %v7307
        %v7309 = vlaneseq
        %v7310 = vshrl.u32 %v7309, 7
        %v7311 = vsub.s32 %v7308, %v7310
        %v7312 = vrot.slane %v7298, %v7311
        %v7313 = vcombine.high %v7305, %v7305
        %v7314 = vcombine.high %v7312, %v7312
        %v7315 = vrot.slane %v7186, 1
        %v7316 = vrot.slane %v7194, 1
        %v7317 = vrot.slane %v7193, 1
        %v7318 = vrot.slane %v7195, 1
        %v7319 = vrot.slane %v7203, 1
        %v7320 = vrot.slane %v7211, 1
        %v7321 = vrot.slane %v7210, 1
        %v7322 = vrot.slane %v7212, 1
        %v7323 = vrot.slane %v7220, 1
        %v7324 = vrot.slane %v7228, 1
        %v7325 = vrot.slane %v7227, 1
        %v7326 = vrot.slane %v7229, 1
        %v7327 = vrot.slane %v7237, 1
        %v7328 = vrot.slane %v7245, 1
        %v7329 = vrot.slane %v7244, 1
        %v7330 = vrot.slane %v7246, 1
        %v7331 = vrot.slane %v7254, 1
        %v7332 = vrot.slane %v7262, 1
        %v7333 = vrot.slane %v7261, 1
        %v7334 = vrot.slane %v7263, 1
        %v7335 = vrot.slane %v7271, 1
        %v7336 = vrot.slane %v7279, 1
        %v7337 = vrot.slane %v7278, 1
        %v7338 = vrot.slane %v7280, 1
        %v7339 = vrot.slane %v7288, 1
        %v7340 = vrot.slane %v7296, 1
        %v7341 = vrot.slane %v7295, 1
        %v7342 = vrot.slane %v7297, 1
        %v7343 = vrot.slane %v7305, 1
        %v7344 = vrot.slane %v7313, 1
        %v7345 = vrot.slane %v7312, 1
        %v7346 = vrot.slane %v7314, 1
        %v7411 = vmax.f32 %v6111, %v7186
        %v7412 = vmax.f32 %v6112, %v7315
        %v7413 = vmax.f32 %v6113, %v7194
        %v7414 = vmax.f32 %v6114, %v7316
        %v7415 = vmax.f32 %v6115, %v7193
        %v7416 = vmax.f32 %v6116, %v7317
        %v7417 = vmax.f32 %v6117, %v7195
        %v7418 = vmax.f32 %v6118, %v7318
        %v7419 = vmax.f32 %v6119, %v7203
        %v7420 = vmax.f32 %v6120, %v7319
        %v7421 = vmax.f32 %v6121, %v7211
        %v7422 = vmax.f32 %v6122, %v7320
        %v7423 = vmax.f32 %v6123, %v7210
        %v7424 = vmax.f32 %v6124, %v7321
        %v7425 = vmax.f32 %v6125, %v7212
        %v7426 = vmax.f32 %v6126, %v7322
        %v7427 = vmax.f32 %v6127, %v7220
        %v7428 = vmax.f32 %v6128, %v7323
        %v7429 = vmax.f32 %v6129, %v7228
        %v7430 = vmax.f32 %v6130, %v7324
        %v7431 = vmax.f32 %v6131, %v7227
        %v7432 = vmax.f32 %v6132, %v7325
        %v7433 = vmax.f32 %v6133, %v7229
        %v7434 = vmax.f32 %v6134, %v7326
        %v7435 = vmax.f32 %v6135, %v7237
        %v7436 = vmax.f32 %v6136, %v7327
        %v7437 = vmax.f32 %v6137, %v7245
        %v7438 = vmax.f32 %v6138, %v7328
        %v7439 = vmax.f32 %v6139, %v7244
        %v7440 = vmax.f32 %v6140, %v7329
        %v7441 = vmax.f32 %v6141, %v7246
        %v7442 = vmax.f32 %v6142, %v7330
        %v7443 = vmax.f32 %v6143, %v7254
        %v7444 = vmax.f32 %v6144, %v7331
        %v7445 = vmax.f32 %v6145, %v7262
        %v7446 = vmax.f32 %v6146, %v7332
        %v7447 = vmax.f32 %v6147, %v7261
        %v7448 = vmax.f32 %v6148, %v7333
        %v7449 = vmax.f32 %v6149, %v7263
        %v7450 = vmax.f32 %v6150, %v7334
        %v7451 = vmax.f32 %v6151, %v7271
        %v7452 = vmax.f32 %v6152, %v7335
        %v7453 = vmax.f32 %v6153, %v7279
        %v7454 = vmax.f32 %v6154, %v7336
        %v7455 = vmax.f32 %v6155, %v7278
        %v7456 = vmax.f32 %v6156, %v7337
        %v7457 = vmax.f32 %v6157, %v7280
        %v7458 = vmax.f32 %v6158, %v7338
        %v7459 = vmax.f32 %v6159, %v7288
        %v7460 = vmax.f32 %v6160, %v7339
        %v7461 = vmax.f32 %v6161, %v7296
        %v7462 = vmax.f32 %v6162, %v7340
        %v7463 = vmax.f32 %v6163, %v7295
        %v7464 = vmax.f32 %v6164, %v7341
        %v7465 = vmax.f32 %v6165, %v7297
        %v7466 = vmax.f32 %v6166, %v7342
        %v7467 = vmax.f32 %v6167, %v7305
        %v7468 = vmax.f32 %v6168, %v7343
        %v7469 = vmax.f32 %v6169, %v7313
        %v7470 = vmax.f32 %v6170, %v7344
        %v7471 = vmax.f32 %v6171, %v7312
        %v7472 = vmax.f32 %v6172, %v7345
        %v7473 = vmax.f32 %v6173, %v7314
        %v7474 = vmax.f32 %v6174, %v7346
        %v7475 = vmax.f32 %v6869, %v7164
        %v7476 = vmax.f32 %v6876, %v7165
        %v7477 = vmax.f32 %v6883, %v7166
        %v7478 = vmax.f32 %v6890, %v7167
        %v7479 = vmax.f32 %v6897, %v7168
        %v7480 = vmax.f32 %v6904, %v7169
        %v7481 = vmax.f32 %v6911, %v7170
        %v7490 = vcombine.high 0.0, 0.0
        %v7492 = vunpack.c.l.s4 1983009808
        %v7493 = vunpack.c.0.s8 %v7492
        %v7494 = vlaneseq
        %v7495 = vshrl.u32 %v7494, 7
        %v7496 = vsub.s32 %v7493, %v7495
        %v7497 = vrot.slane 0.0, %v7496
        %v7499 = vunpack.c.l.s4 1983009808
        %v7500 = vunpack.c.0.s8 %v7499
        %v7501 = vlaneseq
        %v7502 = vshrl.u32 %v7501, 7
        %v7503 = vsub.s32 %v7500, %v7502
        %v7504 = vrot.slane %v7490, %v7503
        %v7505 = vcombine.high %v7497, %v7497
        %v7506 = vcombine.high %v7504, %v7504
        %v7507 = vcombine.high %v7475, %v7475
        %v7509 = vunpack.c.l.s4 1983009808
        %v7510 = vunpack.c.0.s8 %v7509
        %v7511 = vlaneseq
        %v7512 = vshrl.u32 %v7511, 7
        %v7513 = vsub.s32 %v7510, %v7512
        %v7514 = vrot.slane %v7475, %v7513
        %v7516 = vunpack.c.l.s4 1983009808
        %v7517 = vunpack.c.0.s8 %v7516
        %v7518 = vlaneseq
        %v7519 = vshrl.u32 %v7518, 7
        %v7520 = vsub.s32 %v7517, %v7519
        %v7521 = vrot.slane %v7507, %v7520
        %v7522 = vcombine.high %v7514, %v7514
        %v7523 = vcombine.high %v7521, %v7521
        %v7524 = vcombine.high %v7476, %v7476
        %v7526 = vunpack.c.l.s4 1983009808
        %v7527 = vunpack.c.0.s8 %v7526
        %v7528 = vlaneseq
        %v7529 = vshrl.u32 %v7528, 7
        %v7530 = vsub.s32 %v7527, %v7529
        %v7531 = vrot.slane %v7476, %v7530
        %v7533 = vunpack.c.l.s4 1983009808
        %v7534 = vunpack.c.0.s8 %v7533
        %v7535 = vlaneseq
        %v7536 = vshrl.u32 %v7535, 7
        %v7537 = vsub.s32 %v7534, %v7536
        %v7538 = vrot.slane %v7524, %v7537
        %v7539 = vcombine.high %v7531, %v7531
        %v7540 = vcombine.high %v7538, %v7538
        %v7541 = vcombine.high %v7477, %v7477
        %v7543 = vunpack.c.l.s4 1983009808
        %v7544 = vunpack.c.0.s8 %v7543
        %v7545 = vlaneseq
        %v7546 = vshrl.u32 %v7545, 7
        %v7547 = vsub.s32 %v7544, %v7546
        %v7548 = vrot.slane %v7477, %v7547
        %v7550 = vunpack.c.l.s4 1983009808
        %v7551 = vunpack.c.0.s8 %v7550
        %v7552 = vlaneseq
        %v7553 = vshrl.u32 %v7552, 7
        %v7554 = vsub.s32 %v7551, %v7553
        %v7555 = vrot.slane %v7541, %v7554
        %v7556 = vcombine.high %v7548, %v7548
        %v7557 = vcombine.high %v7555, %v7555
        %v7558 = vcombine.high %v7478, %v7478
        %v7560 = vunpack.c.l.s4 1983009808
        %v7561 = vunpack.c.0.s8 %v7560
        %v7562 = vlaneseq
        %v7563 = vshrl.u32 %v7562, 7
        %v7564 = vsub.s32 %v7561, %v7563
        %v7565 = vrot.slane %v7478, %v7564
        %v7567 = vunpack.c.l.s4 1983009808
        %v7568 = vunpack.c.0.s8 %v7567
        %v7569 = vlaneseq
        %v7570 = vshrl.u32 %v7569, 7
        %v7571 = vsub.s32 %v7568, %v7570
        %v7572 = vrot.slane %v7558, %v7571
        %v7573 = vcombine.high %v7565, %v7565
        %v7574 = vcombine.high %v7572, %v7572
        %v7575 = vcombine.high %v7479, %v7479
        %v7577 = vunpack.c.l.s4 1983009808
        %v7578 = vunpack.c.0.s8 %v7577
        %v7579 = vlaneseq
        %v7580 = vshrl.u32 %v7579, 7
        %v7581 = vsub.s32 %v7578, %v7580
        %v7582 = vrot.slane %v7479, %v7581
        %v7584 = vunpack.c.l.s4 1983009808
        %v7585 = vunpack.c.0.s8 %v7584
        %v7586 = vlaneseq
        %v7587 = vshrl.u32 %v7586, 7
        %v7588 = vsub.s32 %v7585, %v7587
        %v7589 = vrot.slane %v7575, %v7588
        %v7590 = vcombine.high %v7582, %v7582
        %v7591 = vcombine.high %v7589, %v7589
        %v7592 = vcombine.high %v7480, %v7480
        %v7594 = vunpack.c.l.s4 1983009808
        %v7595 = vunpack.c.0.s8 %v7594
        %v7596 = vlaneseq
        %v7597 = vshrl.u32 %v7596, 7
        %v7598 = vsub.s32 %v7595, %v7597
        %v7599 = vrot.slane %v7480, %v7598
        %v7601 = vunpack.c.l.s4 1983009808
        %v7602 = vunpack.c.0.s8 %v7601
        %v7603 = vlaneseq
        %v7604 = vshrl.u32 %v7603, 7
        %v7605 = vsub.s32 %v7602, %v7604
        %v7606 = vrot.slane %v7592, %v7605
        %v7607 = vcombine.high %v7599, %v7599
        %v7608 = vcombine.high %v7606, %v7606
        %v7609 = vcombine.high %v7481, %v7481
        %v7611 = vunpack.c.l.s4 1983009808
        %v7612 = vunpack.c.0.s8 %v7611
        %v7613 = vlaneseq
        %v7614 = vshrl.u32 %v7613, 7
        %v7615 = vsub.s32 %v7612, %v7614
        %v7616 = vrot.slane %v7481, %v7615
        %v7618 = vunpack.c.l.s4 1983009808
        %v7619 = vunpack.c.0.s8 %v7618
        %v7620 = vlaneseq
        %v7621 = vshrl.u32 %v7620, 7
        %v7622 = vsub.s32 %v7619, %v7621
        %v7623 = vrot.slane %v7609, %v7622
        %v7624 = vcombine.high %v7616, %v7616
        %v7625 = vcombine.high %v7623, %v7623
        %v7626 = vrot.slane %v7497, 1
        %v7627 = vrot.slane %v7505, 1
        %v7628 = vrot.slane %v7504, 1
        %v7629 = vrot.slane %v7506, 1
        %v7630 = vrot.slane %v7514, 1
        %v7631 = vrot.slane %v7522, 1
        %v7632 = vrot.slane %v7521, 1
        %v7633 = vrot.slane %v7523, 1
        %v7634 = vrot.slane %v7531, 1
        %v7635 = vrot.slane %v7539, 1
        %v7636 = vrot.slane %v7538, 1
        %v7637 = vrot.slane %v7540, 1
        %v7638 = vrot.slane %v7548, 1
        %v7639 = vrot.slane %v7556, 1
        %v7640 = vrot.slane %v7555, 1
        %v7641 = vrot.slane %v7557, 1
        %v7642 = vrot.slane %v7565, 1
        %v7643 = vrot.slane %v7573, 1
        %v7644 = vrot.slane %v7572, 1
        %v7645 = vrot.slane %v7574, 1
        %v7646 = vrot.slane %v7582, 1
        %v7647 = vrot.slane %v7590, 1
        %v7648 = vrot.slane %v7589, 1
        %v7649 = vrot.slane %v7591, 1
        %v7650 = vrot.slane %v7599, 1
        %v7651 = vrot.slane %v7607, 1
        %v7652 = vrot.slane %v7606, 1
        %v7653 = vrot.slane %v7608, 1
        %v7654 = vrot.slane %v7616, 1
        %v7655 = vrot.slane %v7624, 1
        %v7656 = vrot.slane %v7623, 1
        %v7657 = vrot.slane %v7625, 1
        %v7722 = vmax.f32 %v7411, %v7497
        %v7723 = vmax.f32 %v7412, %v7626
        %v7724 = vmax.f32 %v7413, %v7505
        %v7725 = vmax.f32 %v7414, %v7627
        %v7726 = vmax.f32 %v7415, %v7504
        %v7727 = vmax.f32 %v7416, %v7628
        %v7728 = vmax.f32 %v7417, %v7506
        %v7729 = vmax.f32 %v7418, %v7629
        %v7730 = vmax.f32 %v7419, %v7514
        %v7731 = vmax.f32 %v7420, %v7630
        %v7732 = vmax.f32 %v7421, %v7522
        %v7733 = vmax.f32 %v7422, %v7631
        %v7734 = vmax.f32 %v7423, %v7521
        %v7735 = vmax.f32 %v7424, %v7632
        %v7736 = vmax.f32 %v7425, %v7523
        %v7737 = vmax.f32 %v7426, %v7633
        %v7738 = vmax.f32 %v7427, %v7531
        %v7739 = vmax.f32 %v7428, %v7634
        %v7740 = vmax.f32 %v7429, %v7539
        %v7741 = vmax.f32 %v7430, %v7635
        %v7742 = vmax.f32 %v7431, %v7538
        %v7743 = vmax.f32 %v7432, %v7636
        %v7744 = vmax.f32 %v7433, %v7540
        %v7745 = vmax.f32 %v7434, %v7637
        %v7746 = vmax.f32 %v7435, %v7548
        %v7747 = vmax.f32 %v7436, %v7638
        %v7748 = vmax.f32 %v7437, %v7556
        %v7749 = vmax.f32 %v7438, %v7639
        %v7750 = vmax.f32 %v7439, %v7555
        %v7751 = vmax.f32 %v7440, %v7640
        %v7752 = vmax.f32 %v7441, %v7557
        %v7753 = vmax.f32 %v7442, %v7641
        %v7754 = vmax.f32 %v7443, %v7565
        %v7755 = vmax.f32 %v7444, %v7642
        %v7756 = vmax.f32 %v7445, %v7573
        %v7757 = vmax.f32 %v7446, %v7643
        %v7758 = vmax.f32 %v7447, %v7572
        %v7759 = vmax.f32 %v7448, %v7644
        %v7760 = vmax.f32 %v7449, %v7574
        %v7761 = vmax.f32 %v7450, %v7645
        %v7762 = vmax.f32 %v7451, %v7582
        %v7763 = vmax.f32 %v7452, %v7646
        %v7764 = vmax.f32 %v7453, %v7590
        %v7765 = vmax.f32 %v7454, %v7647
        %v7766 = vmax.f32 %v7455, %v7589
        %v7767 = vmax.f32 %v7456, %v7648
        %v7768 = vmax.f32 %v7457, %v7591
        %v7769 = vmax.f32 %v7458, %v7649
        %v7770 = vmax.f32 %v7459, %v7599
        %v7771 = vmax.f32 %v7460, %v7650
        %v7772 = vmax.f32 %v7461, %v7607
        %v7773 = vmax.f32 %v7462, %v7651
        %v7774 = vmax.f32 %v7463, %v7606
        %v7775 = vmax.f32 %v7464, %v7652
        %v7776 = vmax.f32 %v7465, %v7608
        %v7777 = vmax.f32 %v7466, %v7653
        %v7778 = vmax.f32 %v7467, %v7616
        %v7779 = vmax.f32 %v7468, %v7654
        %v7780 = vmax.f32 %v7469, %v7624
        %v7781 = vmax.f32 %v7470, %v7655
        %v7782 = vmax.f32 %v7471, %v7623
        %v7783 = vmax.f32 %v7472, %v7656
        %v7784 = vmax.f32 %v7473, %v7625
        %v7785 = vmax.f32 %v7474, %v7657
        %v7850 = vsel %vm6515, %v7722, %v7722
        %v7851 = vsel %vm6519, %v7722, %v7850
        %v7852 = vrot.slane %v7723, 7
        %v7853 = vsel %vm6862, %v7852, %v7851
        %v7854 = vsel %vm6513, %v7852, %v7853
        %v7855 = vsel %vm6517, %v7852, %v7854
        %v7856 = vsel %vm6521, %v7852, %v7855
        %v7857 = vsel %vm6515, %v7724, %v7724
        %v7858 = vsel %vm6519, %v7724, %v7857
        %v7859 = vrot.slane %v7725, 7
        %v7860 = vsel %vm6862, %v7859, %v7858
        %v7861 = vsel %vm6513, %v7859, %v7860
        %v7862 = vsel %vm6517, %v7859, %v7861
        %v7863 = vsel %vm6521, %v7859, %v7862
        %v7864 = vsel %vm6515, %v7726, %v7726
        %v7865 = vsel %vm6519, %v7726, %v7864
        %v7866 = vrot.slane %v7727, 7
        %v7867 = vsel %vm6862, %v7866, %v7865
        %v7868 = vsel %vm6513, %v7866, %v7867
        %v7869 = vsel %vm6517, %v7866, %v7868
        %v7870 = vsel %vm6521, %v7866, %v7869
        %v7871 = vsel %vm6515, %v7728, %v7728
        %v7872 = vsel %vm6519, %v7728, %v7871
        %v7873 = vrot.slane %v7729, 7
        %v7874 = vsel %vm6862, %v7873, %v7872
        %v7875 = vsel %vm6513, %v7873, %v7874
        %v7876 = vsel %vm6517, %v7873, %v7875
        %v7877 = vsel %vm6521, %v7873, %v7876
        %v7878 = vsel %vm6515, %v7730, %v7730
        %v7879 = vsel %vm6519, %v7730, %v7878
        %v7880 = vrot.slane %v7731, 7
        %v7881 = vsel %vm6862, %v7880, %v7879
        %v7882 = vsel %vm6513, %v7880, %v7881
        %v7883 = vsel %vm6517, %v7880, %v7882
        %v7884 = vsel %vm6521, %v7880, %v7883
        %v7885 = vsel %vm6515, %v7732, %v7732
        %v7886 = vsel %vm6519, %v7732, %v7885
        %v7887 = vrot.slane %v7733, 7
        %v7888 = vsel %vm6862, %v7887, %v7886
        %v7889 = vsel %vm6513, %v7887, %v7888
        %v7890 = vsel %vm6517, %v7887, %v7889
        %v7891 = vsel %vm6521, %v7887, %v7890
        %v7892 = vsel %vm6515, %v7734, %v7734
        %v7893 = vsel %vm6519, %v7734, %v7892
        %v7894 = vrot.slane %v7735, 7
        %v7895 = vsel %vm6862, %v7894, %v7893
        %v7896 = vsel %vm6513, %v7894, %v7895
        %v7897 = vsel %vm6517, %v7894, %v7896
        %v7898 = vsel %vm6521, %v7894, %v7897
        %v7899 = vsel %vm6515, %v7736, %v7736
        %v7900 = vsel %vm6519, %v7736, %v7899
        %v7901 = vrot.slane %v7737, 7
        %v7902 = vsel %vm6862, %v7901, %v7900
        %v7903 = vsel %vm6513, %v7901, %v7902
        %v7904 = vsel %vm6517, %v7901, %v7903
        %v7905 = vsel %vm6521, %v7901, %v7904
        %v7906 = vsel %vm6515, %v7738, %v7738
        %v7907 = vsel %vm6519, %v7738, %v7906
        %v7908 = vrot.slane %v7739, 7
        %v7909 = vsel %vm6862, %v7908, %v7907
        %v7910 = vsel %vm6513, %v7908, %v7909
        %v7911 = vsel %vm6517, %v7908, %v7910
        %v7912 = vsel %vm6521, %v7908, %v7911
        %v7913 = vsel %vm6515, %v7740, %v7740
        %v7914 = vsel %vm6519, %v7740, %v7913
        %v7915 = vrot.slane %v7741, 7
        %v7916 = vsel %vm6862, %v7915, %v7914
        %v7917 = vsel %vm6513, %v7915, %v7916
        %v7918 = vsel %vm6517, %v7915, %v7917
        %v7919 = vsel %vm6521, %v7915, %v7918
        %v7920 = vsel %vm6515, %v7742, %v7742
        %v7921 = vsel %vm6519, %v7742, %v7920
        %v7922 = vrot.slane %v7743, 7
        %v7923 = vsel %vm6862, %v7922, %v7921
        %v7924 = vsel %vm6513, %v7922, %v7923
        %v7925 = vsel %vm6517, %v7922, %v7924
        %v7926 = vsel %vm6521, %v7922, %v7925
        %v7927 = vsel %vm6515, %v7744, %v7744
        %v7928 = vsel %vm6519, %v7744, %v7927
        %v7929 = vrot.slane %v7745, 7
        %v7930 = vsel %vm6862, %v7929, %v7928
        %v7931 = vsel %vm6513, %v7929, %v7930
        %v7932 = vsel %vm6517, %v7929, %v7931
        %v7933 = vsel %vm6521, %v7929, %v7932
        %v7934 = vsel %vm6515, %v7746, %v7746
        %v7935 = vsel %vm6519, %v7746, %v7934
        %v7936 = vrot.slane %v7747, 7
        %v7937 = vsel %vm6862, %v7936, %v7935
        %v7938 = vsel %vm6513, %v7936, %v7937
        %v7939 = vsel %vm6517, %v7936, %v7938
        %v7940 = vsel %vm6521, %v7936, %v7939
        %v7941 = vsel %vm6515, %v7748, %v7748
        %v7942 = vsel %vm6519, %v7748, %v7941
        %v7943 = vrot.slane %v7749, 7
        %v7944 = vsel %vm6862, %v7943, %v7942
        %v7945 = vsel %vm6513, %v7943, %v7944
        %v7946 = vsel %vm6517, %v7943, %v7945
        %v7947 = vsel %vm6521, %v7943, %v7946
        %v7948 = vsel %vm6515, %v7750, %v7750
        %v7949 = vsel %vm6519, %v7750, %v7948
        %v7950 = vrot.slane %v7751, 7
        %v7951 = vsel %vm6862, %v7950, %v7949
        %v7952 = vsel %vm6513, %v7950, %v7951
        %v7953 = vsel %vm6517, %v7950, %v7952
        %v7954 = vsel %vm6521, %v7950, %v7953
        %v7955 = vsel %vm6515, %v7752, %v7752
        %v7956 = vsel %vm6519, %v7752, %v7955
        %v7957 = vrot.slane %v7753, 7
        %v7958 = vsel %vm6862, %v7957, %v7956
        %v7959 = vsel %vm6513, %v7957, %v7958
        %v7960 = vsel %vm6517, %v7957, %v7959
        %v7961 = vsel %vm6521, %v7957, %v7960
        %v7962 = vsel %vm6515, %v7754, %v7754
        %v7963 = vsel %vm6519, %v7754, %v7962
        %v7964 = vrot.slane %v7755, 7
        %v7965 = vsel %vm6862, %v7964, %v7963
        %v7966 = vsel %vm6513, %v7964, %v7965
        %v7967 = vsel %vm6517, %v7964, %v7966
        %v7968 = vsel %vm6521, %v7964, %v7967
        %v7969 = vsel %vm6515, %v7756, %v7756
        %v7970 = vsel %vm6519, %v7756, %v7969
        %v7971 = vrot.slane %v7757, 7
        %v7972 = vsel %vm6862, %v7971, %v7970
        %v7973 = vsel %vm6513, %v7971, %v7972
        %v7974 = vsel %vm6517, %v7971, %v7973
        %v7975 = vsel %vm6521, %v7971, %v7974
        %v7976 = vsel %vm6515, %v7758, %v7758
        %v7977 = vsel %vm6519, %v7758, %v7976
        %v7978 = vrot.slane %v7759, 7
        %v7979 = vsel %vm6862, %v7978, %v7977
        %v7980 = vsel %vm6513, %v7978, %v7979
        %v7981 = vsel %vm6517, %v7978, %v7980
        %v7982 = vsel %vm6521, %v7978, %v7981
        %v7983 = vsel %vm6515, %v7760, %v7760
        %v7984 = vsel %vm6519, %v7760, %v7983
        %v7985 = vrot.slane %v7761, 7
        %v7986 = vsel %vm6862, %v7985, %v7984
        %v7987 = vsel %vm6513, %v7985, %v7986
        %v7988 = vsel %vm6517, %v7985, %v7987
        %v7989 = vsel %vm6521, %v7985, %v7988
        %v7990 = vsel %vm6515, %v7762, %v7762
        %v7991 = vsel %vm6519, %v7762, %v7990
        %v7992 = vrot.slane %v7763, 7
        %v7993 = vsel %vm6862, %v7992, %v7991
        %v7994 = vsel %vm6513, %v7992, %v7993
        %v7995 = vsel %vm6517, %v7992, %v7994
        %v7996 = vsel %vm6521, %v7992, %v7995
        %v7997 = vsel %vm6515, %v7764, %v7764
        %v7998 = vsel %vm6519, %v7764, %v7997
        %v7999 = vrot.slane %v7765, 7
        %v8000 = vsel %vm6862, %v7999, %v7998
        %v8001 = vsel %vm6513, %v7999, %v8000
        %v8002 = vsel %vm6517, %v7999, %v8001
        %v8003 = vsel %vm6521, %v7999, %v8002
        %v8004 = vsel %vm6515, %v7766, %v7766
        %v8005 = vsel %vm6519, %v7766, %v8004
        %v8006 = vrot.slane %v7767, 7
        %v8007 = vsel %vm6862, %v8006, %v8005
        %v8008 = vsel %vm6513, %v8006, %v8007
        %v8009 = vsel %vm6517, %v8006, %v8008
        %v8010 = vsel %vm6521, %v8006, %v8009
        %v8011 = vsel %vm6515, %v7768, %v7768
        %v8012 = vsel %vm6519, %v7768, %v8011
        %v8013 = vrot.slane %v7769, 7
        %v8014 = vsel %vm6862, %v8013, %v8012
        %v8015 = vsel %vm6513, %v8013, %v8014
        %v8016 = vsel %vm6517, %v8013, %v8015
        %v8017 = vsel %vm6521, %v8013, %v8016
        %v8018 = vsel %vm6515, %v7770, %v7770
        %v8019 = vsel %vm6519, %v7770, %v8018
        %v8020 = vrot.slane %v7771, 7
        %v8021 = vsel %vm6862, %v8020, %v8019
        %v8022 = vsel %vm6513, %v8020, %v8021
        %v8023 = vsel %vm6517, %v8020, %v8022
        %v8024 = vsel %vm6521, %v8020, %v8023
        %v8025 = vsel %vm6515, %v7772, %v7772
        %v8026 = vsel %vm6519, %v7772, %v8025
        %v8027 = vrot.slane %v7773, 7
        %v8028 = vsel %vm6862, %v8027, %v8026
        %v8029 = vsel %vm6513, %v8027, %v8028
        %v8030 = vsel %vm6517, %v8027, %v8029
        %v8031 = vsel %vm6521, %v8027, %v8030
        %v8032 = vsel %vm6515, %v7774, %v7774
        %v8033 = vsel %vm6519, %v7774, %v8032
        %v8034 = vrot.slane %v7775, 7
        %v8035 = vsel %vm6862, %v8034, %v8033
        %v8036 = vsel %vm6513, %v8034, %v8035
        %v8037 = vsel %vm6517, %v8034, %v8036
        %v8038 = vsel %vm6521, %v8034, %v8037
        %v8039 = vsel %vm6515, %v7776, %v7776
        %v8040 = vsel %vm6519, %v7776, %v8039
        %v8041 = vrot.slane %v7777, 7
        %v8042 = vsel %vm6862, %v8041, %v8040
        %v8043 = vsel %vm6513, %v8041, %v8042
        %v8044 = vsel %vm6517, %v8041, %v8043
        %v8045 = vsel %vm6521, %v8041, %v8044
        %v8046 = vsel %vm6515, %v7778, %v7778
        %v8047 = vsel %vm6519, %v7778, %v8046
        %v8048 = vrot.slane %v7779, 7
        %v8049 = vsel %vm6862, %v8048, %v8047
        %v8050 = vsel %vm6513, %v8048, %v8049
        %v8051 = vsel %vm6517, %v8048, %v8050
        %v8052 = vsel %vm6521, %v8048, %v8051
        %v8053 = vsel %vm6515, %v7780, %v7780
        %v8054 = vsel %vm6519, %v7780, %v8053
        %v8055 = vrot.slane %v7781, 7
        %v8056 = vsel %vm6862, %v8055, %v8054
        %v8057 = vsel %vm6513, %v8055, %v8056
        %v8058 = vsel %vm6517, %v8055, %v8057
        %v8059 = vsel %vm6521, %v8055, %v8058
        %v8060 = vsel %vm6515, %v7782, %v7782
        %v8061 = vsel %vm6519, %v7782, %v8060
        %v8062 = vrot.slane %v7783, 7
        %v8063 = vsel %vm6862, %v8062, %v8061
        %v8064 = vsel %vm6513, %v8062, %v8063
        %v8065 = vsel %vm6517, %v8062, %v8064
        %v8066 = vsel %vm6521, %v8062, %v8065
        %v8067 = vsel %vm6515, %v7784, %v7784
        %v8068 = vsel %vm6519, %v7784, %v8067
        %v8069 = vrot.slane %v7785, 7
        %v8070 = vsel %vm6862, %v8069, %v8068
        %v8071 = vsel %vm6513, %v8069, %v8070
        %v8072 = vsel %vm6517, %v8069, %v8071
        %v8073 = vsel %vm6521, %v8069, %v8072
        %v8106 = vcombine.low %v7856, %v7884
        %v8108 = vunpack.c.l.s4 1934713408
        %v8109 = vunpack.c.0.s8 %v8108
        %v8110 = vlaneseq
        %v8111 = vshrl.u32 %v8110, 7
        %v8112 = vsub.s32 %v8109, %v8111
        %v8113 = vrot.slane %v8106, %v8112
        %v8114 = vcombine.high %v8113, 0.0
        %v8115 = vcombine.low %v7912, %v7940
        %v8117 = vunpack.c.l.s4 1934713408
        %v8118 = vunpack.c.0.s8 %v8117
        %v8119 = vlaneseq
        %v8120 = vshrl.u32 %v8119, 7
        %v8121 = vsub.s32 %v8118, %v8120
        %v8122 = vrot.slane %v8115, %v8121
        %v8123 = vcombine.high %v8122, 0.0
        %v8124 = vcombine.low %v7968, %v7996
        %v8126 = vunpack.c.l.s4 1934713408
        %v8127 = vunpack.c.0.s8 %v8126
        %v8128 = vlaneseq
        %v8129 = vshrl.u32 %v8128, 7
        %v8130 = vsub.s32 %v8127, %v8129
        %v8131 = vrot.slane %v8124, %v8130
        %v8132 = vcombine.high %v8131, 0.0
        %v8133 = vcombine.low %v8024, %v8052
        %v8135 = vunpack.c.l.s4 1934713408
        %v8136 = vunpack.c.0.s8 %v8135
        %v8137 = vlaneseq
        %v8138 = vshrl.u32 %v8137, 7
        %v8139 = vsub.s32 %v8136, %v8138
        %v8140 = vrot.slane %v8133, %v8139
        %v8141 = vcombine.high %v8140, 0.0
        %v8142 = vcombine.low %v7863, %v7891
        %v8144 = vunpack.c.l.s4 1934713408
        %v8145 = vunpack.c.0.s8 %v8144
        %v8146 = vlaneseq
        %v8147 = vshrl.u32 %v8146, 7
        %v8148 = vsub.s32 %v8145, %v8147
        %v8149 = vrot.slane %v8142, %v8148
        %v8150 = vcombine.high %v8149, 0.0
        %v8151 = vcombine.low %v7919, %v7947
        %v8153 = vunpack.c.l.s4 1934713408
        %v8154 = vunpack.c.0.s8 %v8153
        %v8155 = vlaneseq
        %v8156 = vshrl.u32 %v8155, 7
        %v8157 = vsub.s32 %v8154, %v8156
        %v8158 = vrot.slane %v8151, %v8157
        %v8159 = vcombine.high %v8158, 0.0
        %v8160 = vcombine.low %v7975, %v8003
        %v8162 = vunpack.c.l.s4 1934713408
        %v8163 = vunpack.c.0.s8 %v8162
        %v8164 = vlaneseq
        %v8165 = vshrl.u32 %v8164, 7
        %v8166 = vsub.s32 %v8163, %v8165
        %v8167 = vrot.slane %v8160, %v8166
        %v8168 = vcombine.high %v8167, 0.0
        %v8169 = vcombine.low %v8031, %v8059
        %v8171 = vunpack.c.l.s4 1934713408
        %v8172 = vunpack.c.0.s8 %v8171
        %v8173 = vlaneseq
        %v8174 = vshrl.u32 %v8173, 7
        %v8175 = vsub.s32 %v8172, %v8174
        %v8176 = vrot.slane %v8169, %v8175
        %v8177 = vcombine.high %v8176, 0.0
        %v8178 = vcombine.low %v7870, %v7898
        %v8180 = vunpack.c.l.s4 1934713408
        %v8181 = vunpack.c.0.s8 %v8180
        %v8182 = vlaneseq
        %v8183 = vshrl.u32 %v8182, 7
        %v8184 = vsub.s32 %v8181, %v8183
        %v8185 = vrot.slane %v8178, %v8184
        %v8186 = vcombine.high %v8185, 0.0
        %v8187 = vcombine.low %v7926, %v7954
        %v8189 = vunpack.c.l.s4 1934713408
        %v8190 = vunpack.c.0.s8 %v8189
        %v8191 = vlaneseq
        %v8192 = vshrl.u32 %v8191, 7
        %v8193 = vsub.s32 %v8190, %v8192
        %v8194 = vrot.slane %v8187, %v8193
        %v8195 = vcombine.high %v8194, 0.0
        %v8196 = vcombine.low %v7982, %v8010
        %v8198 = vunpack.c.l.s4 1934713408
        %v8199 = vunpack.c.0.s8 %v8198
        %v8200 = vlaneseq
        %v8201 = vshrl.u32 %v8200, 7
        %v8202 = vsub.s32 %v8199, %v8201
        %v8203 = vrot.slane %v8196, %v8202
        %v8204 = vcombine.high %v8203, 0.0
        %v8205 = vcombine.low %v8038, %v8066
        %v8207 = vunpack.c.l.s4 1934713408
        %v8208 = vunpack.c.0.s8 %v8207
        %v8209 = vlaneseq
        %v8210 = vshrl.u32 %v8209, 7
        %v8211 = vsub.s32 %v8208, %v8210
        %v8212 = vrot.slane %v8205, %v8211
        %v8213 = vcombine.high %v8212, 0.0
        %v8214 = vcombine.low %v7877, %v7905
        %v8216 = vunpack.c.l.s4 1934713408
        %v8217 = vunpack.c.0.s8 %v8216
        %v8218 = vlaneseq
        %v8219 = vshrl.u32 %v8218, 7
        %v8220 = vsub.s32 %v8217, %v8219
        %v8221 = vrot.slane %v8214, %v8220
        %v8222 = vcombine.high %v8221, 0.0
        %v8223 = vcombine.low %v7933, %v7961
        %v8225 = vunpack.c.l.s4 1934713408
        %v8226 = vunpack.c.0.s8 %v8225
        %v8227 = vlaneseq
        %v8228 = vshrl.u32 %v8227, 7
        %v8229 = vsub.s32 %v8226, %v8228
        %v8230 = vrot.slane %v8223, %v8229
        %v8231 = vcombine.high %v8230, 0.0
        %v8232 = vcombine.low %v7989, %v8017
        %v8234 = vunpack.c.l.s4 1934713408
        %v8235 = vunpack.c.0.s8 %v8234
        %v8236 = vlaneseq
        %v8237 = vshrl.u32 %v8236, 7
        %v8238 = vsub.s32 %v8235, %v8237
        %v8239 = vrot.slane %v8232, %v8238
        %v8240 = vcombine.high %v8239, 0.0
        %v8241 = vcombine.low %v8045, %v8073
        %v8243 = vunpack.c.l.s4 1934713408
        %v8244 = vunpack.c.0.s8 %v8243
        %v8245 = vlaneseq
        %v8246 = vshrl.u32 %v8245, 7
        %v8247 = vsub.s32 %v8244, %v8246
        %v8248 = vrot.slane %v8241, %v8247
        %v8249 = vcombine.high %v8248, 0.0
        %v8254 = vcombine.low %v8113, %v8122
        %v8255 = vcombine.low %v8131, %v8140
        %v8257 = vunpack.c.l.s4 1983009808
        %v8258 = vunpack.c.0.s8 %v8257
        %v8259 = vlaneseq
        %v8260 = vshrl.u32 %v8259, 7
        %v8261 = vsub.s32 %v8258, %v8260
        %v8262 = vrot.slane %v8254, %v8261
        %v8264 = vunpack.c.l.s4 1983009808
        %v8265 = vunpack.c.0.s8 %v8264
        %v8266 = vlaneseq
        %v8267 = vshrl.u32 %v8266, 7
        %v8268 = vsub.s32 %v8265, %v8267
        %v8269 = vrot.slane %v8255, %v8268
        %v8270 = vcombine.low %v8262, %v8269
        %v8276 = vcombine.low %v8114, %v8123
        %v8277 = vcombine.low %v8132, %v8141
        %v8279 = vunpack.c.l.s4 1983009808
        %v8280 = vunpack.c.0.s8 %v8279
        %v8281 = vlaneseq
        %v8282 = vshrl.u32 %v8281, 7
        %v8283 = vsub.s32 %v8280, %v8282
        %v8284 = vrot.slane %v8276, %v8283
        %v8286 = vunpack.c.l.s4 1983009808
        %v8287 = vunpack.c.0.s8 %v8286
        %v8288 = vlaneseq
        %v8289 = vshrl.u32 %v8288, 7
        %v8290 = vsub.s32 %v8287, %v8289
        %v8291 = vrot.slane %v8277, %v8290
        %v8292 = vcombine.low %v8284, %v8291
        %8293 = vrot.lane.b32.xlu0 %v8292, 64
        %v8294 = vpop.permute.xlu0 %8293
        %v8300 = vcombine.low %v8149, %v8158
        %v8301 = vcombine.low %v8167, %v8176
        %v8303 = vunpack.c.l.s4 1983009808
        %v8304 = vunpack.c.0.s8 %v8303
        %v8305 = vlaneseq
        %v8306 = vshrl.u32 %v8305, 7
        %v8307 = vsub.s32 %v8304, %v8306
        %v8308 = vrot.slane %v8300, %v8307
        %v8310 = vunpack.c.l.s4 1983009808
        %v8311 = vunpack.c.0.s8 %v8310
        %v8312 = vlaneseq
        %v8313 = vshrl.u32 %v8312, 7
        %v8314 = vsub.s32 %v8311, %v8313
        %v8315 = vrot.slane %v8301, %v8314
        %v8316 = vcombine.low %v8308, %v8315
        %v8322 = vcombine.low %v8150, %v8159
        %v8323 = vcombine.low %v8168, %v8177
        %v8325 = vunpack.c.l.s4 1983009808
        %v8326 = vunpack.c.0.s8 %v8325
        %v8327 = vlaneseq
        %v8328 = vshrl.u32 %v8327, 7
        %v8329 = vsub.s32 %v8326, %v8328
        %v8330 = vrot.slane %v8322, %v8329
        %v8332 = vunpack.c.l.s4 1983009808
        %v8333 = vunpack.c.0.s8 %v8332
        %v8334 = vlaneseq
        %v8335 = vshrl.u32 %v8334, 7
        %v8336 = vsub.s32 %v8333, %v8335
        %v8337 = vrot.slane %v8323, %v8336
        %v8338 = vcombine.low %v8330, %v8337
        %8339 = vrot.lane.b32.xlu0 %v8338, 64
        %v8340 = vpop.permute.xlu0 %8339
        %v8346 = vcombine.low %v8185, %v8194
        %v8347 = vcombine.low %v8203, %v8212
        %v8349 = vunpack.c.l.s4 1983009808
        %v8350 = vunpack.c.0.s8 %v8349
        %v8351 = vlaneseq
        %v8352 = vshrl.u32 %v8351, 7
        %v8353 = vsub.s32 %v8350, %v8352
        %v8354 = vrot.slane %v8346, %v8353
        %v8356 = vunpack.c.l.s4 1983009808
        %v8357 = vunpack.c.0.s8 %v8356
        %v8358 = vlaneseq
        %v8359 = vshrl.u32 %v8358, 7
        %v8360 = vsub.s32 %v8357, %v8359
        %v8361 = vrot.slane %v8347, %v8360
        %v8362 = vcombine.low %v8354, %v8361
        %v8368 = vcombine.low %v8186, %v8195
        %v8369 = vcombine.low %v8204, %v8213
        %v8371 = vunpack.c.l.s4 1983009808
        %v8372 = vunpack.c.0.s8 %v8371
        %v8373 = vlaneseq
        %v8374 = vshrl.u32 %v8373, 7
        %v8375 = vsub.s32 %v8372, %v8374
        %v8376 = vrot.slane %v8368, %v8375
        %v8378 = vunpack.c.l.s4 1983009808
        %v8379 = vunpack.c.0.s8 %v8378
        %v8380 = vlaneseq
        %v8381 = vshrl.u32 %v8380, 7
        %v8382 = vsub.s32 %v8379, %v8381
        %v8383 = vrot.slane %v8369, %v8382
        %v8384 = vcombine.low %v8376, %v8383
        %8385 = vrot.lane.b32.xlu0 %v8384, 64
        %v8386 = vpop.permute.xlu0 %8385
        %v8392 = vcombine.low %v8221, %v8230
        %v8393 = vcombine.low %v8239, %v8248
        %v8395 = vunpack.c.l.s4 1983009808
        %v8396 = vunpack.c.0.s8 %v8395
        %v8397 = vlaneseq
        %v8398 = vshrl.u32 %v8397, 7
        %v8399 = vsub.s32 %v8396, %v8398
        %v8400 = vrot.slane %v8392, %v8399
        %v8402 = vunpack.c.l.s4 1983009808
        %v8403 = vunpack.c.0.s8 %v8402
        %v8404 = vlaneseq
        %v8405 = vshrl.u32 %v8404, 7
        %v8406 = vsub.s32 %v8403, %v8405
        %v8407 = vrot.slane %v8393, %v8406
        %v8408 = vcombine.low %v8400, %v8407
        %v8414 = vcombine.low %v8222, %v8231
        %v8415 = vcombine.low %v8240, %v8249
        %v8417 = vunpack.c.l.s4 1983009808
        %v8418 = vunpack.c.0.s8 %v8417
        %v8419 = vlaneseq
        %v8420 = vshrl.u32 %v8419, 7
        %v8421 = vsub.s32 %v8418, %v8420
        %v8422 = vrot.slane %v8414, %v8421
        %v8424 = vunpack.c.l.s4 1983009808
        %v8425 = vunpack.c.0.s8 %v8424
        %v8426 = vlaneseq
        %v8427 = vshrl.u32 %v8426, 7
        %v8428 = vsub.s32 %v8425, %v8427
        %v8429 = vrot.slane %v8415, %v8428
        %v8430 = vcombine.low %v8422, %v8429
        %8431 = vrot.lane.b32.xlu0 %v8430, 64
        %v8432 = vpop.permute.xlu0 %8431
        %vm8434 = vcmask 523264
        %v8435 = vsel %vm8434, %v8270, %v8294
        %v8436 = vsel %vm8434, %v8316, %v8340
        %v8437 = vsel %vm8434, %v8362, %v8386
        %v8438 = vsel %vm8434, %v8408, %v8432
        %8439 = vst [vmem:[%s163] sm:$0xff] %v8435
        %8440 = vst [vmem:[%s163 + $0x8] sm:$0xff] %v8436
        %8441 = vst [vmem:[%s163 + $0x10] sm:$0xff] %v8437
        %8442 = vst [vmem:[%s163 + $0x18] sm:$0xff] %v8438
        %s8443 = sand.u32 %s93, 1
        %s8444 = scalar_lea.sflag [#allocation3], %s8443
        %s8445 = sand.u32 %s93, 1
        %s8446 = smul.addr %s8445, 32
        %s8447 = scalar_lea.vmem [#allocation2], %s8446
        // Predicated region
        $region33: #{tpu_custom_call.1} parent=31 // pred_check
          %p8448 = pneg %p103
        $region34: #{tpu_custom_call.1} parent=31 // pred_check_branch
          %8450 = sbr.rel (%p8448) target = $region36
        $region35: #{tpu_custom_call.1} parent=31 // pred_region
          %s8452 = ssub.s32 512, 512
          %8453 = vsyncadd %s8444, %s8452
          %s8454 = smul.addr %s17, 4
          %s8455 = smul.addr %s8454, 128
          %s8456 = scalar_lea.hbm %s3, %s8455
          %s8458 = sshll.u32 %s8447, 4
          %s8459 = int_to_ptr.vmem [resolvable:$true] %s8458
          %8461 = dma.vmem_to_hbm [thread:$0]  %s8459, 512, %s8456, %s8444
        $region36: #{tpu_custom_call.1} parent=31 // pred_fallthru
          _
      $region32: #{tpu_custom_call.1} parent=5 // pred_fallthru
        _
      %p8462 = scmp.le.s32.totalorder 2, %s12
      // Predicated region
      $region37: #{tpu_custom_call.1} parent=5 // pred_check
        %p8463 = pneg %p8462
      $region38: #{tpu_custom_call.1} parent=5 // pred_check_branch
        %8465 = sbr.rel (%p8463) target = $region40
      $region39: #{tpu_custom_call.1} parent=5 // pred_region
        %s8466 = ssub.s32 %s12, 2
        // Predicated region
        $region41: #{tpu_custom_call.1} parent=39 // pred_check
          %p8467 = pneg %p109
        $region42: #{tpu_custom_call.1} parent=39 // pred_check_branch
          %8469 = sbr.rel (%p8467) target = $region44
        $region43: #{tpu_custom_call.1} parent=39 // pred_region
          %s8470 = sand.u32 %s94, 1
          %s8471 = scalar_lea.sflag [#allocation3], %s8470
          %s8472 = sand.u32 %s94, 1
          %s8473 = smul.addr %s8472, 32
          %s8474 = scalar_lea.vmem [#allocation2], %s8473
          %8475 = dma.done %s8471, 512
        $region44: #{tpu_custom_call.1} parent=39 // pred_fallthru
          _
      $region40: #{tpu_custom_call.1} parent=5 // pred_fallthru
        _
    $region6: #{tpu_custom_call.1} parent=1 // loop_footer
      %s16 = sadd.s32 1, %s12
    $region7: #{tpu_custom_call.1} parent=1 // loop_footer_branch
      %11 = sbr.rel target = $region3
    $region8: #{tpu_custom_call.1} parent=1 // loop_exit
      _
    %8476 = vsyncpa [#allocation3], 1
    %s8477 = scalar_lea.sflag [#allocation3], 1
    %8478 = vsyncpa %s8477, 1

</llo_original>
